<compile_context>
chip_gen: v5e
topology: v5e:2x2
jax: 0.10.0
libtpu: 0.0.40
codegen_flags: <defaults>
</compile_context>

<pallas_src>
import jax
import jax.numpy as jnp
from jax.experimental import pallas as pl
from jax.experimental.pallas import tpu as pltpu

LANES = 128   # lane-dense channel padding used for every stage
BT = 8        # images per grid step (multiple of 8 keeps all slabs aligned)


# ----------------------------------------------------------------------------
# Fused kernel: one grid step == BT images (rows interleaved as pos*BT + img)
# ----------------------------------------------------------------------------
def _fused_lenet_kernel(cols_ref, w1_ref, b1_ref, w2_ref, b2_ref,
                        wfc_ref, bfc_ref, out_ref):
    f32 = jnp.float32
    bf16 = jnp.bfloat16
    bt = out_ref.shape[0]          # images per step
    m1 = cols_ref.shape[0]         # 144 * bt  (12x12 pooled positions)
    m2 = 96 * bt                   # 8 rows x 12 cols of the conv2 slab

    # ---- conv1 (+bias, ReLU) and pool1: ONE lane-dense bf16 matmul ----------
    # cols lanes: 32*phase + tap (phase = 2x2 pool offset); w1 is block-diagonal
    # so column block p of z holds conv1 output for pool-phase p.
    z = jnp.dot(cols_ref[...], w1_ref[...], preferred_element_type=f32)  # (m1, 512)
    p1 = jnp.maximum(jnp.maximum(z[:, 0:128], z[:, 128:256]),
                     jnp.maximum(z[:, 256:384], z[:, 384:512]))          # pool1
    p1 = jnp.maximum(p1 + b1_ref[...], 0.0)        # (m1, 128) f32, lanes 0..5 live

    # Zero tail so the kj-shifted slabs below never read past the slab.
    # (Garbage rows only ever feed conv2 rows that pooling/fc never read.)
    p1p = jnp.concatenate([p1, jnp.zeros((4 * bt, LANES), f32)], axis=0)

    # ---- conv2: pack the 5 kj taps into lane blocks 16*kj (XLU rolls),  -----
    # ---- then 5 matmuls (one per ki), each contracting 30 real K lanes  -----
    packed = p1p[0:m1, :]
    for kj in range(1, 5):
        packed = packed + pltpu.roll(p1p[kj * bt:kj * bt + m1, :],
                                     shift=16 * kj, axis=1)
    packed = packed.astype(bf16)                   # single cast before the MXU
    acc2 = None
    for ki in range(5):
        part = jnp.dot(packed[12 * ki * bt:12 * ki * bt + m2, :],
                       w2_ref[ki], preferred_element_type=f32)
        acc2 = part if acc2 is None else acc2 + part
    acc2 = jnp.maximum(acc2 + b2_ref[...], 0.0)    # (m2, 128), lanes 0..15 live

    # ---- pool2 via sublane-aligned shifted-slab maxes ------------------------
    hmax = jnp.maximum(acc2[0:92 * bt, :], acc2[bt:93 * bt, :])          # cols
    vmax = jnp.maximum(hmax[0:80 * bt, :], hmax[12 * bt:92 * bt, :])     # rows
    # pool2 value for (img, ph, pw) sits at vmax row (24*ph + 2*pw)*bt + img.

    # ---- fc1: pack 8 pooled positions x 16 ch per 128-lane row -> 2 matmuls --
    def pack8(ph0):
        acc = None
        for k in range(8):
            ph, pw = ph0 + k // 4, k % 4
            r = (24 * ph + 2 * pw) * bt
            blk = vmax[r:r + bt, :]                        # (bt, 128), ch 0..15
            if k:
                blk = pltpu.roll(blk, shift=16 * k, axis=1)
            acc = blk if acc is None else acc + blk
        return acc.astype(bf16)

    y = (jnp.dot(pack8(0), wfc_ref[0], preferred_element_type=f32)
         + jnp.dot(pack8(2), wfc_ref[1], preferred_element_type=f32)
         + bfc_ref[...])
    out_ref[...] = y                                        # (bt, 128) full-lane


# ----------------------------------------------------------------------------
# Wrapper: layout/weight prep (XLA) + single pallas_call
# ----------------------------------------------------------------------------
def my_model_forward(x_nchw, params, *, bt=BT):
    w1, b1, w2, b2, wfc, bfc = params
    f32, bf16 = jnp.float32, jnp.bfloat16
    B = x_nchw.shape[0]
    assert bt % 8 == 0
    b_pad = ((B + bt - 1) // bt) * bt
    nsteps = b_pad // bt

    # conv1 im2col, pool-phase-packed on lanes (lane = 32*phase + tap), bf16.
    # TODO(synk): could move this im2col in-kernel (DMA raw 28x28) to cut the
    # remaining ~12x HBM inflation on v5e; bf16 already halves it.
    x2 = x_nchw[:, 0].astype(f32)                                     # (B, 28, 28)
    taps = jnp.stack([x2[:, ki:ki + 24, kj:kj + 24]
                      for ki in range(5) for kj in range(5)], axis=-1)  # (B,24,24,25)
    taps = taps.reshape(B, 12, 2, 12, 2, 25).transpose(0, 1, 3, 2, 4, 5)
    cols = jnp.pad(taps.reshape(B, 144, 4, 25), ((0, 0), (0, 0), (0, 0), (0, 7)))
    cols = cols.reshape(B, 144, LANES)
    cols = jnp.pad(cols, ((0, b_pad - B), (0, 0), (0, 0)))
    # Interleave images inside a step: row = s*bt + img  (all in-kernel shifted
    # slab offsets become multiples of 8 sublanes).
    cols = (cols.reshape(nsteps, bt, 144, LANES).transpose(0, 2, 1, 3)
                .reshape(nsteps * 144 * bt, LANES).astype(bf16))

    # conv1 weight: block-diagonal, one 32-lane tap block per pool phase.
    w1u = jnp.pad(w1.reshape(6, 25).T, ((0, 7), (0, LANES - 6)))       # (32, 128)
    w1m = jax.scipy.linalg.block_diag(w1u, w1u, w1u, w1u).astype(bf16)  # (128, 512)
    b1p = jnp.pad(b1, (0, LANES - 6)).reshape(1, LANES).astype(f32)

    # conv2 weight, packed K layout: row = 16*kj + cin, one (128,128) block per ki.
    w2t = jnp.pad(w2.transpose(2, 3, 1, 0), ((0, 0), (0, 0), (0, 10), (0, 0)))  # (5,5,16,16)
    w2k = jnp.pad(w2t.reshape(5, 80, 16),
                  ((0, 0), (0, 48), (0, 112))).astype(bf16)            # (5,128,128)
    b2p = jnp.pad(b2, (0, LANES - 16)).reshape(1, LANES).astype(f32)

    # fc weight, packed K layout: row = 16*(4*ph + pw) + c, split in two halves.
    wf = wfc.reshape(10, 16, 4, 4).transpose(2, 3, 1, 0).reshape(256, 10)
    wf = jnp.pad(wf, ((0, 0), (0, LANES - 10)))                        # (256, 128)
    wfck = jnp.stack([wf[:128], wf[128:]], axis=0).astype(bf16)        # (2,128,128)
    bfcp = jnp.pad(bfc, (0, LANES - 10)).reshape(1, LANES).astype(f32)

    out = pl.pallas_call(
        _fused_lenet_kernel,
        out_shape=jax.ShapeDtypeStruct((b_pad, LANES), f32),
        grid=(nsteps,),
        in_specs=[
            pl.BlockSpec((144 * bt, LANES), lambda i: (i, 0)),    # im2col block (bf16)
            pl.BlockSpec((LANES, 512), lambda i: (0, 0)),         # conv1 weight
            pl.BlockSpec((1, LANES), lambda i: (0, 0)),           # conv1 bias
            pl.BlockSpec((5, LANES, LANES), lambda i: (0, 0, 0)), # conv2 weight (per ki)
            pl.BlockSpec((1, LANES), lambda i: (0, 0)),           # conv2 bias
            pl.BlockSpec((2, LANES, LANES), lambda i: (0, 0, 0)), # fc weight (2 halves)
            pl.BlockSpec((1, LANES), lambda i: (0, 0)),           # fc bias
        ],
        out_specs=pl.BlockSpec((bt, LANES), lambda i: (i, 0)),
        compiler_params=pltpu.CompilerParams(
            dimension_semantics=("parallel",),        # megacore sharding on v7x
            vmem_limit_bytes=32 * 1024 * 1024),       # explicit; ~4 MiB used at BT=8
    )(cols, w1m, b1p, w2k, b2p, wfck, bfcp)

    return out[:B, :10]


# ----------------------------------------------------------------------------
# Pure-JAX reference (correctness check only, full-f32 precision)
# ----------------------------------------------------------------------------
def reference_forward(x_nchw, params):
    w1, b1, w2, b2, wfc, bfc = params
    dn = jax.lax.conv_dimension_numbers(x_nchw.shape, w1.shape,
                                        ("NCHW", "OIHW", "NCHW"))
    hi = jax.lax.Precision.HIGHEST

    def conv(x, w, b):
        y = jax.lax.conv_general_dilated(x, w, (1, 1), "VALID",
                                         dimension_numbers=dn, precision=hi)
        return y + b.reshape(1, -1, 1, 1)

    def pool(x):
        return jax.lax.reduce_window(x, -jnp.inf, jax.lax.max,
                                     (1, 1, 2, 2), (1, 1, 2, 2), "VALID")

    h = pool(jax.nn.relu(conv(x_nchw, w1, b1)))
    h = pool(jax.nn.relu(conv(h, w2, b2)))
    h = h.reshape(h.shape[0], -1)
    return jnp.dot(h, wfc.T, precision=hi) + bfc


# ----------------------------------------------------------------------------
# Main
# ----------------------------------------------------------------------------
if __name__ == "__main__":
    key = jax.random.PRNGKey(0)
    kx, k1, k2, k3, k4, k5, k6 = jax.random.split(key, 7)

    # Deterministic synthetic parameters (shapes per nn.Module __init__).
    w1 = jax.random.normal(k1, (6, 1, 5, 5), jnp.float32) * 0.2
    b1 = jax.random.normal(k2, (6,), jnp.float32) * 0.1
    w2 = jax.random.normal(k3, (16, 6, 5, 5), jnp.float32) * 0.1
    b2 = jax.random.normal(k4, (16,), jnp.float32) * 0.1
    wfc = jax.random.normal(k5, (10, 256), jnp.float32) * 0.05
    bfc = jax.random.normal(k6, (10,), jnp.float32) * 0.1
    params = (w1, b1, w2, b2, wfc, bfc)

    # Input: NCHW (1, 28, 28) so that 16*4*4 = 256 features reach fc1.
    # Batch 16 -> 2 grid steps of BT=8 (keeps the parallel axis >= 2 for v7x).
    x = jax.random.normal(kx, (16, 1, 28, 28), jnp.float32)

    forward = jax.jit(my_model_forward)
    out = jax.block_until_ready(forward(x, params))
    ref = jax.block_until_ready(reference_forward(x, params))

    assert out.shape == (16, 10)
    # Kernel uses bf16 MXU operands with f32 accumulation; reference is full-f32
    # (HIGHEST precision), so allow bf16-level tolerance.
    assert jnp.allclose(out, ref, atol=3e-2, rtol=3e-2), (
        f"max abs diff {jnp.max(jnp.abs(out - ref))}")

    print("KERNEL_OK")
</pallas_src>

<mosaic_0001>
module attributes {stable_mosaic.version = 11 : i64} {
  func.func @_fused_lenet_kernel(%arg0: i32, %arg1: memref<1152x128xbf16, #tpu.memory_space<vmem>>, %arg2: memref<128x512xbf16, #tpu.memory_space<vmem>>, %arg3: memref<1x128xf32, #tpu.memory_space<vmem>>, %arg4: memref<5x128x128xbf16, #tpu.memory_space<vmem>>, %arg5: memref<1x128xf32, #tpu.memory_space<vmem>>, %arg6: memref<2x128x128xbf16, #tpu.memory_space<vmem>>, %arg7: memref<1x128xf32, #tpu.memory_space<vmem>>, %arg8: memref<8x128xf32, #tpu.memory_space<vmem>>) attributes {dimension_semantics = [#tpu.dimension_semantics<parallel>], iteration_bounds = array<i64: 2>, scalar_prefetch = 0 : i64, scratch_operands = 0 : i64, tpu.core_type = #tpu.core_type<tc>, window_params = [{transform_indices = @transform_0, window_bounds = array<i64: 1152, 128>}, {pipeline_mode = #tpu.pipeline_mode<synchronous>, transform_indices = @transform_1, window_bounds = array<i64: 128, 512>}, {pipeline_mode = #tpu.pipeline_mode<synchronous>, transform_indices = @transform_2, window_bounds = array<i64: 1, 128>}, {pipeline_mode = #tpu.pipeline_mode<synchronous>, transform_indices = @transform_3, window_bounds = array<i64: 5, 128, 128>}, {pipeline_mode = #tpu.pipeline_mode<synchronous>, transform_indices = @transform_4, window_bounds = array<i64: 1, 128>}, {pipeline_mode = #tpu.pipeline_mode<synchronous>, transform_indices = @transform_5, window_bounds = array<i64: 2, 128, 128>}, {pipeline_mode = #tpu.pipeline_mode<synchronous>, transform_indices = @transform_6, window_bounds = array<i64: 1, 128>}, {transform_indices = @transform_7, window_bounds = array<i64: 8, 128>}]} {
    %c0 = arith.constant 0 : index
    %c0_0 = arith.constant 0 : index
    %0 = vector.load %arg1[%c0, %c0_0] : memref<1152x128xbf16, #tpu.memory_space<vmem>>, vector<1152x128xbf16>
    %c0_1 = arith.constant 0 : index
    %c0_2 = arith.constant 0 : index
    %1 = vector.load %arg2[%c0_1, %c0_2] : memref<128x512xbf16, #tpu.memory_space<vmem>>, vector<128x512xbf16>
    %cst = arith.constant dense<0.000000e+00> : vector<1152x512xf32>
    %2 = tpu.matmul %0, %1, %cst {dimension_numbers = #tpu.dot_dimension_numbers<[1], [0], [0], [1], [0, 0, 1, 1], [], []>} : vector<1152x128xbf16>, vector<128x512xbf16>, vector<1152x512xf32> -> vector<1152x512xf32>
    %3 = vector.extract_strided_slice %2 {offsets = [0, 0], sizes = [1152, 128], strides = [1, 1]} : vector<1152x512xf32> to vector<1152x128xf32>
    %4 = vector.extract_strided_slice %2 {offsets = [0, 128], sizes = [1152, 128], strides = [1, 1]} : vector<1152x512xf32> to vector<1152x128xf32>
    %5 = arith.maximumf %3, %4 : vector<1152x128xf32>
    %6 = vector.extract_strided_slice %2 {offsets = [0, 256], sizes = [1152, 128], strides = [1, 1]} : vector<1152x512xf32> to vector<1152x128xf32>
    %7 = vector.extract_strided_slice %2 {offsets = [0, 384], sizes = [1152, 128], strides = [1, 1]} : vector<1152x512xf32> to vector<1152x128xf32>
    %8 = arith.maximumf %6, %7 : vector<1152x128xf32>
    %9 = arith.maximumf %5, %8 : vector<1152x128xf32>
    %c0_3 = arith.constant 0 : index
    %c0_4 = arith.constant 0 : index
    %10 = vector.load %arg3[%c0_3, %c0_4] : memref<1x128xf32, #tpu.memory_space<vmem>>, vector<1x128xf32>
    %11 = vector.broadcast %10 : vector<1x128xf32> to vector<1152x128xf32>
    %12 = arith.addf %9, %11 : vector<1152x128xf32>
    %cst_5 = arith.constant 0.000000e+00 : f32
    %13 = vector.broadcast %cst_5 : f32 to vector<1152x128xf32>
    %14 = arith.maximumf %12, %13 : vector<1152x128xf32>
    %cst_6 = arith.constant 0.000000e+00 : f32
    %15 = vector.broadcast %cst_6 : f32 to vector<32x128xf32>
    %16 = tpu.concatenate %14, %15 in 0 : vector<1152x128xf32>, vector<32x128xf32> -> vector<1184x128xf32>
    %17 = vector.extract_strided_slice %16 {offsets = [0, 0], sizes = [1152, 128], strides = [1, 1]} : vector<1184x128xf32> to vector<1152x128xf32>
    %18 = vector.extract_strided_slice %16 {offsets = [8, 0], sizes = [1152, 128], strides = [1, 1]} : vector<1184x128xf32> to vector<1152x128xf32>
    %c16_i32 = arith.constant 16 : i32
    %19 = tpu.dynamic_rotate %18 by %c16_i32 dim 1 : vector<1152x128xf32>, i32 -> vector<1152x128xf32>
    %20 = arith.addf %17, %19 : vector<1152x128xf32>
    %21 = vector.extract_strided_slice %16 {offsets = [16, 0], sizes = [1152, 128], strides = [1, 1]} : vector<1184x128xf32> to vector<1152x128xf32>
    %c32_i32 = arith.constant 32 : i32
    %22 = tpu.dynamic_rotate %21 by %c32_i32 dim 1 : vector<1152x128xf32>, i32 -> vector<1152x128xf32>
    %23 = arith.addf %20, %22 : vector<1152x128xf32>
    %24 = vector.extract_strided_slice %16 {offsets = [24, 0], sizes = [1152, 128], strides = [1, 1]} : vector<1184x128xf32> to vector<1152x128xf32>
    %c48_i32 = arith.constant 48 : i32
    %25 = tpu.dynamic_rotate %24 by %c48_i32 dim 1 : vector<1152x128xf32>, i32 -> vector<1152x128xf32>
    %26 = arith.addf %23, %25 : vector<1152x128xf32>
    %27 = vector.extract_strided_slice %16 {offsets = [32, 0], sizes = [1152, 128], strides = [1, 1]} : vector<1184x128xf32> to vector<1152x128xf32>
    %c64_i32 = arith.constant 64 : i32
    %28 = tpu.dynamic_rotate %27 by %c64_i32 dim 1 : vector<1152x128xf32>, i32 -> vector<1152x128xf32>
    %29 = arith.addf %26, %28 : vector<1152x128xf32>
    %30 = arith.truncf %29 : vector<1152x128xf32> to vector<1152x128xbf16>
    %31 = vector.extract_strided_slice %30 {offsets = [0, 0], sizes = [768, 128], strides = [1, 1]} : vector<1152x128xbf16> to vector<768x128xbf16>
    %c0_7 = arith.constant 0 : index
    %c0_8 = arith.constant 0 : index
    %c0_9 = arith.constant 0 : index
    %32 = vector.load %arg4[%c0_7, %c0_8, %c0_9] : memref<5x128x128xbf16, #tpu.memory_space<vmem>>, vector<1x128x128xbf16>
    %33 = vector.shape_cast %32 : vector<1x128x128xbf16> to vector<128x128xbf16>
    %cst_10 = arith.constant dense<0.000000e+00> : vector<768x128xf32>
    %34 = tpu.matmul %31, %33, %cst_10 {dimension_numbers = #tpu.dot_dimension_numbers<[1], [0], [0], [1], [0, 0, 1, 1], [], []>} : vector<768x128xbf16>, vector<128x128xbf16>, vector<768x128xf32> -> vector<768x128xf32>
    %35 = vector.extract_strided_slice %30 {offsets = [96, 0], sizes = [768, 128], strides = [1, 1]} : vector<1152x128xbf16> to vector<768x128xbf16>
    %c1 = arith.constant 1 : index
    %c0_11 = arith.constant 0 : index
    %c0_12 = arith.constant 0 : index
    %36 = vector.load %arg4[%c1, %c0_11, %c0_12] : memref<5x128x128xbf16, #tpu.memory_space<vmem>>, vector<1x128x128xbf16>
    %37 = vector.shape_cast %36 : vector<1x128x128xbf16> to vector<128x128xbf16>
    %cst_13 = arith.constant dense<0.000000e+00> : vector<768x128xf32>
    %38 = tpu.matmul %35, %37, %cst_13 {dimension_numbers = #tpu.dot_dimension_numbers<[1], [0], [0], [1], [0, 0, 1, 1], [], []>} : vector<768x128xbf16>, vector<128x128xbf16>, vector<768x128xf32> -> vector<768x128xf32>
    %39 = arith.addf %34, %38 : vector<768x128xf32>
    %40 = vector.extract_strided_slice %30 {offsets = [192, 0], sizes = [768, 128], strides = [1, 1]} : vector<1152x128xbf16> to vector<768x128xbf16>
    %c2 = arith.constant 2 : index
    %c0_14 = arith.constant 0 : index
    %c0_15 = arith.constant 0 : index
    %41 = vector.load %arg4[%c2, %c0_14, %c0_15] : memref<5x128x128xbf16, #tpu.memory_space<vmem>>, vector<1x128x128xbf16>
    %42 = vector.shape_cast %41 : vector<1x128x128xbf16> to vector<128x128xbf16>
    %cst_16 = arith.constant dense<0.000000e+00> : vector<768x128xf32>
    %43 = tpu.matmul %40, %42, %cst_16 {dimension_numbers = #tpu.dot_dimension_numbers<[1], [0], [0], [1], [0, 0, 1, 1], [], []>} : vector<768x128xbf16>, vector<128x128xbf16>, vector<768x128xf32> -> vector<768x128xf32>
    %44 = arith.addf %39, %43 : vector<768x128xf32>
    %45 = vector.extract_strided_slice %30 {offsets = [288, 0], sizes = [768, 128], strides = [1, 1]} : vector<1152x128xbf16> to vector<768x128xbf16>
    %c3 = arith.constant 3 : index
    %c0_17 = arith.constant 0 : index
    %c0_18 = arith.constant 0 : index
    %46 = vector.load %arg4[%c3, %c0_17, %c0_18] : memref<5x128x128xbf16, #tpu.memory_space<vmem>>, vector<1x128x128xbf16>
    %47 = vector.shape_cast %46 : vector<1x128x128xbf16> to vector<128x128xbf16>
    %cst_19 = arith.constant dense<0.000000e+00> : vector<768x128xf32>
    %48 = tpu.matmul %45, %47, %cst_19 {dimension_numbers = #tpu.dot_dimension_numbers<[1], [0], [0], [1], [0, 0, 1, 1], [], []>} : vector<768x128xbf16>, vector<128x128xbf16>, vector<768x128xf32> -> vector<768x128xf32>
    %49 = arith.addf %44, %48 : vector<768x128xf32>
    %50 = vector.extract_strided_slice %30 {offsets = [384, 0], sizes = [768, 128], strides = [1, 1]} : vector<1152x128xbf16> to vector<768x128xbf16>
    %c4 = arith.constant 4 : index
    %c0_20 = arith.constant 0 : index
    %c0_21 = arith.constant 0 : index
    %51 = vector.load %arg4[%c4, %c0_20, %c0_21] : memref<5x128x128xbf16, #tpu.memory_space<vmem>>, vector<1x128x128xbf16>
    %52 = vector.shape_cast %51 : vector<1x128x128xbf16> to vector<128x128xbf16>
    %cst_22 = arith.constant dense<0.000000e+00> : vector<768x128xf32>
    %53 = tpu.matmul %50, %52, %cst_22 {dimension_numbers = #tpu.dot_dimension_numbers<[1], [0], [0], [1], [0, 0, 1, 1], [], []>} : vector<768x128xbf16>, vector<128x128xbf16>, vector<768x128xf32> -> vector<768x128xf32>
    %54 = arith.addf %49, %53 : vector<768x128xf32>
    %c0_23 = arith.constant 0 : index
    %c0_24 = arith.constant 0 : index
    %55 = vector.load %arg5[%c0_23, %c0_24] : memref<1x128xf32, #tpu.memory_space<vmem>>, vector<1x128xf32>
    %56 = vector.broadcast %55 : vector<1x128xf32> to vector<768x128xf32>
    %57 = arith.addf %54, %56 : vector<768x128xf32>
    %cst_25 = arith.constant 0.000000e+00 : f32
    %58 = vector.broadcast %cst_25 : f32 to vector<768x128xf32>
    %59 = arith.maximumf %57, %58 : vector<768x128xf32>
    %60 = vector.extract_strided_slice %59 {offsets = [0, 0], sizes = [736, 128], strides = [1, 1]} : vector<768x128xf32> to vector<736x128xf32>
    %61 = vector.extract_strided_slice %59 {offsets = [8, 0], sizes = [736, 128], strides = [1, 1]} : vector<768x128xf32> to vector<736x128xf32>
    %62 = arith.maximumf %60, %61 : vector<736x128xf32>
    %63 = vector.extract_strided_slice %62 {offsets = [0, 0], sizes = [640, 128], strides = [1, 1]} : vector<736x128xf32> to vector<640x128xf32>
    %64 = vector.extract_strided_slice %62 {offsets = [96, 0], sizes = [640, 128], strides = [1, 1]} : vector<736x128xf32> to vector<640x128xf32>
    %65 = arith.maximumf %63, %64 : vector<640x128xf32>
    %66 = vector.extract_strided_slice %65 {offsets = [0, 0], sizes = [8, 128], strides = [1, 1]} : vector<640x128xf32> to vector<8x128xf32>
    %67 = vector.extract_strided_slice %65 {offsets = [16, 0], sizes = [8, 128], strides = [1, 1]} : vector<640x128xf32> to vector<8x128xf32>
    %c16_i32_26 = arith.constant 16 : i32
    %68 = tpu.dynamic_rotate %67 by %c16_i32_26 dim 1 : vector<8x128xf32>, i32 -> vector<8x128xf32>
    %69 = arith.addf %66, %68 : vector<8x128xf32>
    %70 = vector.extract_strided_slice %65 {offsets = [32, 0], sizes = [8, 128], strides = [1, 1]} : vector<640x128xf32> to vector<8x128xf32>
    %c32_i32_27 = arith.constant 32 : i32
    %71 = tpu.dynamic_rotate %70 by %c32_i32_27 dim 1 : vector<8x128xf32>, i32 -> vector<8x128xf32>
    %72 = arith.addf %69, %71 : vector<8x128xf32>
    %73 = vector.extract_strided_slice %65 {offsets = [48, 0], sizes = [8, 128], strides = [1, 1]} : vector<640x128xf32> to vector<8x128xf32>
    %c48_i32_28 = arith.constant 48 : i32
    %74 = tpu.dynamic_rotate %73 by %c48_i32_28 dim 1 : vector<8x128xf32>, i32 -> vector<8x128xf32>
    %75 = arith.addf %72, %74 : vector<8x128xf32>
    %76 = vector.extract_strided_slice %65 {offsets = [192, 0], sizes = [8, 128], strides = [1, 1]} : vector<640x128xf32> to vector<8x128xf32>
    %c64_i32_29 = arith.constant 64 : i32
    %77 = tpu.dynamic_rotate %76 by %c64_i32_29 dim 1 : vector<8x128xf32>, i32 -> vector<8x128xf32>
    %78 = arith.addf %75, %77 : vector<8x128xf32>
    %79 = vector.extract_strided_slice %65 {offsets = [208, 0], sizes = [8, 128], strides = [1, 1]} : vector<640x128xf32> to vector<8x128xf32>
    %c80_i32 = arith.constant 80 : i32
    %80 = tpu.dynamic_rotate %79 by %c80_i32 dim 1 : vector<8x128xf32>, i32 -> vector<8x128xf32>
    %81 = arith.addf %78, %80 : vector<8x128xf32>
    %82 = vector.extract_strided_slice %65 {offsets = [224, 0], sizes = [8, 128], strides = [1, 1]} : vector<640x128xf32> to vector<8x128xf32>
    %c96_i32 = arith.constant 96 : i32
    %83 = tpu.dynamic_rotate %82 by %c96_i32 dim 1 : vector<8x128xf32>, i32 -> vector<8x128xf32>
    %84 = arith.addf %81, %83 : vector<8x128xf32>
    %85 = vector.extract_strided_slice %65 {offsets = [240, 0], sizes = [8, 128], strides = [1, 1]} : vector<640x128xf32> to vector<8x128xf32>
    %c112_i32 = arith.constant 112 : i32
    %86 = tpu.dynamic_rotate %85 by %c112_i32 dim 1 : vector<8x128xf32>, i32 -> vector<8x128xf32>
    %87 = arith.addf %84, %86 : vector<8x128xf32>
    %88 = arith.truncf %87 : vector<8x128xf32> to vector<8x128xbf16>
    %c0_30 = arith.constant 0 : index
    %c0_31 = arith.constant 0 : index
    %c0_32 = arith.constant 0 : index
    %89 = vector.load %arg6[%c0_30, %c0_31, %c0_32] : memref<2x128x128xbf16, #tpu.memory_space<vmem>>, vector<1x128x128xbf16>
    %90 = vector.shape_cast %89 : vector<1x128x128xbf16> to vector<128x128xbf16>
    %cst_33 = arith.constant dense<0.000000e+00> : vector<8x128xf32>
    %91 = tpu.matmul %88, %90, %cst_33 {dimension_numbers = #tpu.dot_dimension_numbers<[1], [0], [0], [1], [0, 0, 1, 1], [], []>} : vector<8x128xbf16>, vector<128x128xbf16>, vector<8x128xf32> -> vector<8x128xf32>
    %92 = vector.extract_strided_slice %65 {offsets = [384, 0], sizes = [8, 128], strides = [1, 1]} : vector<640x128xf32> to vector<8x128xf32>
    %93 = vector.extract_strided_slice %65 {offsets = [400, 0], sizes = [8, 128], strides = [1, 1]} : vector<640x128xf32> to vector<8x128xf32>
    %c16_i32_34 = arith.constant 16 : i32
    %94 = tpu.dynamic_rotate %93 by %c16_i32_34 dim 1 : vector<8x128xf32>, i32 -> vector<8x128xf32>
    %95 = arith.addf %92, %94 : vector<8x128xf32>
    %96 = vector.extract_strided_slice %65 {offsets = [416, 0], sizes = [8, 128], strides = [1, 1]} : vector<640x128xf32> to vector<8x128xf32>
    %c32_i32_35 = arith.constant 32 : i32
    %97 = tpu.dynamic_rotate %96 by %c32_i32_35 dim 1 : vector<8x128xf32>, i32 -> vector<8x128xf32>
    %98 = arith.addf %95, %97 : vector<8x128xf32>
    %99 = vector.extract_strided_slice %65 {offsets = [432, 0], sizes = [8, 128], strides = [1, 1]} : vector<640x128xf32> to vector<8x128xf32>
    %c48_i32_36 = arith.constant 48 : i32
    %100 = tpu.dynamic_rotate %99 by %c48_i32_36 dim 1 : vector<8x128xf32>, i32 -> vector<8x128xf32>
    %101 = arith.addf %98, %100 : vector<8x128xf32>
    %102 = vector.extract_strided_slice %65 {offsets = [576, 0], sizes = [8, 128], strides = [1, 1]} : vector<640x128xf32> to vector<8x128xf32>
    %c64_i32_37 = arith.constant 64 : i32
    %103 = tpu.dynamic_rotate %102 by %c64_i32_37 dim 1 : vector<8x128xf32>, i32 -> vector<8x128xf32>
    %104 = arith.addf %101, %103 : vector<8x128xf32>
    %105 = vector.extract_strided_slice %65 {offsets = [592, 0], sizes = [8, 128], strides = [1, 1]} : vector<640x128xf32> to vector<8x128xf32>
    %c80_i32_38 = arith.constant 80 : i32
    %106 = tpu.dynamic_rotate %105 by %c80_i32_38 dim 1 : vector<8x128xf32>, i32 -> vector<8x128xf32>
    %107 = arith.addf %104, %106 : vector<8x128xf32>
    %108 = vector.extract_strided_slice %65 {offsets = [608, 0], sizes = [8, 128], strides = [1, 1]} : vector<640x128xf32> to vector<8x128xf32>
    %c96_i32_39 = arith.constant 96 : i32
    %109 = tpu.dynamic_rotate %108 by %c96_i32_39 dim 1 : vector<8x128xf32>, i32 -> vector<8x128xf32>
    %110 = arith.addf %107, %109 : vector<8x128xf32>
    %111 = vector.extract_strided_slice %65 {offsets = [624, 0], sizes = [8, 128], strides = [1, 1]} : vector<640x128xf32> to vector<8x128xf32>
    %c112_i32_40 = arith.constant 112 : i32
    %112 = tpu.dynamic_rotate %111 by %c112_i32_40 dim 1 : vector<8x128xf32>, i32 -> vector<8x128xf32>
    %113 = arith.addf %110, %112 : vector<8x128xf32>
    %114 = arith.truncf %113 : vector<8x128xf32> to vector<8x128xbf16>
    %c1_41 = arith.constant 1 : index
    %c0_42 = arith.constant 0 : index
    %c0_43 = arith.constant 0 : index
    %115 = vector.load %arg6[%c1_41, %c0_42, %c0_43] : memref<2x128x128xbf16, #tpu.memory_space<vmem>>, vector<1x128x128xbf16>
    %116 = vector.shape_cast %115 : vector<1x128x128xbf16> to vector<128x128xbf16>
    %cst_44 = arith.constant dense<0.000000e+00> : vector<8x128xf32>
    %117 = tpu.matmul %114, %116, %cst_44 {dimension_numbers = #tpu.dot_dimension_numbers<[1], [0], [0], [1], [0, 0, 1, 1], [], []>} : vector<8x128xbf16>, vector<128x128xbf16>, vector<8x128xf32> -> vector<8x128xf32>
    %118 = arith.addf %91, %117 : vector<8x128xf32>
    %c0_45 = arith.constant 0 : index
    %c0_46 = arith.constant 0 : index
    %119 = vector.load %arg7[%c0_45, %c0_46] : memref<1x128xf32, #tpu.memory_space<vmem>>, vector<1x128xf32>
    %120 = vector.broadcast %119 : vector<1x128xf32> to vector<8x128xf32>
    %121 = arith.addf %118, %120 : vector<8x128xf32>
    %c0_47 = arith.constant 0 : index
    %c0_48 = arith.constant 0 : index
    %122 = vector.load %arg8[%c0_47, %c0_48] : memref<8x128xf32, #tpu.memory_space<vmem>>, vector<8x128xf32>
    tpu.vector_store %arg8[%c0_47, %c0_48], %121 {strides = array<i32>} : memref<8x128xf32, #tpu.memory_space<vmem>>, vector<8x128xf32>,
    return
  }
  func.func @transform_0(%arg0: i32) -> (i32, i32) {
    %c0_i32 = arith.constant 0 : i32
    %c0_i32_0 = arith.constant 0 : i32
    return %arg0, %c0_i32 : i32, i32
  }
  func.func @transform_1(%arg0: i32) -> (i32, i32) {
    %c0_i32 = arith.constant 0 : i32
    %c0_i32_0 = arith.constant 0 : i32
    %c0_i32_1 = arith.constant 0 : i32
    return %c0_i32, %c0_i32_0 : i32, i32
  }
  func.func @transform_2(%arg0: i32) -> (i32, i32) {
    %c0_i32 = arith.constant 0 : i32
    %c0_i32_0 = arith.constant 0 : i32
    %c0_i32_1 = arith.constant 0 : i32
    return %c0_i32, %c0_i32_0 : i32, i32
  }
  func.func @transform_3(%arg0: i32) -> (i32, i32, i32) {
    %c0_i32 = arith.constant 0 : i32
    %c0_i32_0 = arith.constant 0 : i32
    %c0_i32_1 = arith.constant 0 : i32
    %c0_i32_2 = arith.constant 0 : i32
    return %c0_i32, %c0_i32_0, %c0_i32_1 : i32, i32, i32
  }
  func.func @transform_4(%arg0: i32) -> (i32, i32) {
    %c0_i32 = arith.constant 0 : i32
    %c0_i32_0 = arith.constant 0 : i32
    %c0_i32_1 = arith.constant 0 : i32
    return %c0_i32, %c0_i32_0 : i32, i32
  }
  func.func @transform_5(%arg0: i32) -> (i32, i32, i32) {
    %c0_i32 = arith.constant 0 : i32
    %c0_i32_0 = arith.constant 0 : i32
    %c0_i32_1 = arith.constant 0 : i32
    %c0_i32_2 = arith.constant 0 : i32
    return %c0_i32, %c0_i32_0, %c0_i32_1 : i32, i32, i32
  }
  func.func @transform_6(%arg0: i32) -> (i32, i32) {
    %c0_i32 = arith.constant 0 : i32
    %c0_i32_0 = arith.constant 0 : i32
    %c0_i32_1 = arith.constant 0 : i32
    return %c0_i32, %c0_i32_0 : i32, i32
  }
  func.func @transform_7(%arg0: i32) -> (i32, i32) {
    %c0_i32 = arith.constant 0 : i32
    %c0_i32_0 = arith.constant 0 : i32
    return %arg0, %c0_i32 : i32, i32
  }
}

</mosaic_0001>

<llo_original>
// kernel: my_model_forward.1
$region0: #{my_model_forward.1}
  #allocation0 [shape = 'u32[]', space=smem, size = 0x4, offset = 0x4, fixed_abs, tag = 'smem constant byte address 0x4 - core index']
  #allocation1 [shape = 'u32[72,128]{1,0:T(1,128)}', space=vmem, size = 0x9000, scoped, tag = 'internal scratch']
  %s0 = inlined_call_operand.vmem [shape: bf16[2304,128], index: 0, kind: input, shape index: {}]
  %s1 = inlined_call_operand.vmem [shape: bf16[128,512], index: 1, kind: input, shape index: {}]
  %s2 = inlined_call_operand.vmem [shape: f32[1,128], index: 2, kind: input, shape index: {}]
  %s3 = inlined_call_operand.vmem [shape: bf16[5,128,128], index: 3, kind: input, shape index: {}]
  %s4 = inlined_call_operand.vmem [shape: f32[1,128], index: 4, kind: input, shape index: {}]
  %s5 = inlined_call_operand.vmem [shape: bf16[2,128,128], index: 5, kind: input, shape index: {}]
  %s6 = inlined_call_operand.vmem [shape: f32[1,128], index: 6, kind: input, shape index: {}]
  %s7 = inlined_call_operand.hbm [shape: f32[16,128], index: 7, kind: output, shape index: {}]
  %s8 = sld [smem:[#allocation0]]
  $region61: #{my_model_forward.1} parent=0
    _
  %s10 = ssub.s32 1, %s8
  %s11 = scalar_select 0, %s10, %s8
  $region1: #{my_model_forward.1} parent=0
    #allocation2 [shape = 'u8[8192]{0}', space=vmem, size = 0x2000, scoped, tag = 'output window, operand 0']
    #allocation3 [shape = 's32[2]{0}', space=sflag, size = 0x8, scoped, tag = 'scoped memory for my_model_forward.1']
    %12 = vsyncpa [#allocation3], 0
    %s13 = scalar_lea.sflag [#allocation3], 1
    %14 = vsyncpa %s13, 0
    loop: start=0, step=1, limit=4
    $region2: #{my_model_forward.1} parent=1 // loop_pre_header
      _
    $region3: #{my_model_forward.1} parent=1 // loop_header
      %s16 = sphi 0, %s20
      %p17 = scmp.ge.s32.totalorder %s16, 4
      %s26 = sphi 0, %s28
      %s29 = sphi 0, %s26
      %s30 = sphi 0, %s29
      %s46 = sphi 0, %s30
      %s50 = sphi 0, %s50
      %s52 = sphi 0, %s50
      %s53 = sphi 0, %s52
      %s67 = sphi 0, %s53
      %s71 = sphi 0, %s71
      %s73 = sphi 0, %s71
      %s74 = sphi 0, %s73
      %s88 = sphi 0, %s74
      %s92 = sphi 0, %s92
      %s94 = sphi 0, %s92
      %s95 = sphi 0, %s94
      %s109 = sphi 0, %s95
      %s113 = sphi 0, %s113
      %s115 = sphi 0, %s113
      %s116 = sphi 0, %s115
      %s130 = sphi 0, %s116
      %s134 = sphi 0, %s134
      %s136 = sphi 0, %s134
      %s137 = sphi 0, %s136
      %s151 = sphi 0, %s137
      %s155 = sphi 0, %s155
      %s157 = sphi 0, %s155
      %s158 = sphi 0, %s157
      %s172 = sphi 0, %s158
      %s178 = sphi 0, %s180
      %s181 = sphi 0, %s178
      %s182 = sphi 0, %s181
      %s198 = sphi 0, %s182
    $region4: #{my_model_forward.1} parent=1 // loop_header_branch
      %19 = sbr.rel (%p17) target = $region8
    $region5: #{my_model_forward.1} parent=1 // loop_body
      %s21 = ssub.s32 %s16, 1
      %s22 = ssub.s32 %s16, 2
      %s23 = sadd.s32 %s16, 1
      %s24 = ssub.s32 %s16, %s23
      %p25 = scmp.eq.s32.totalorder %s24, 0
      %s27 = sadd.s32 %s26, 1
      %s28 = scalar_select %p25, %s26, %s27
      %p31 = pneg %p25
      %p32 = scmp.eq.s32.totalorder %s16, 1
      %p33 = por %p31, %p32
      %p34 = scmp.ne.s32.totalorder %s26, %s29
      %p35 = scmp.eq.s32.totalorder %s16, 0
      %p36 = por %p34, %p35
      %p37 = scmp.ne.s32.totalorder %s26, %s29
      %p38 = scmp.eq.s32.totalorder %s21, 1
      %p39 = por %p37, %p38
      %p40 = scmp.ne.s32.totalorder %s29, %s30
      %p41 = scmp.eq.s32.totalorder %s21, 0
      %p42 = por %p40, %p41
      %p43 = scmp.ne.s32.totalorder %s29, %s30
      %p44 = scmp.eq.s32.totalorder %s22, 1
      %p45 = por %p43, %p44
      %p47 = scmp.ne.s32.totalorder %s30, %s46
      %p48 = scmp.eq.s32.totalorder %s22, 0
      %p49 = por %p47, %p48
      %s51 = sadd.s32 %s50, 1
      %p54 = scmp.eq.s32.totalorder %s16, 1
      %p55 = scmp.ne.s32.totalorder %s50, %s52
      %p56 = scmp.eq.s32.totalorder %s16, 0
      %p57 = por %p55, %p56
      %p58 = scmp.ne.s32.totalorder %s50, %s52
      %p59 = scmp.eq.s32.totalorder %s21, 1
      %p60 = por %p58, %p59
      %p61 = scmp.ne.s32.totalorder %s52, %s53
      %p62 = scmp.eq.s32.totalorder %s21, 0
      %p63 = por %p61, %p62
      %p64 = scmp.ne.s32.totalorder %s52, %s53
      %p65 = scmp.eq.s32.totalorder %s22, 1
      %p66 = por %p64, %p65
      %p68 = scmp.ne.s32.totalorder %s53, %s67
      %p69 = scmp.eq.s32.totalorder %s22, 0
      %p70 = por %p68, %p69
      %s72 = sadd.s32 %s71, 1
      %p75 = scmp.eq.s32.totalorder %s16, 1
      %p76 = scmp.ne.s32.totalorder %s71, %s73
      %p77 = scmp.eq.s32.totalorder %s16, 0
      %p78 = por %p76, %p77
      %p79 = scmp.ne.s32.totalorder %s71, %s73
      %p80 = scmp.eq.s32.totalorder %s21, 1
      %p81 = por %p79, %p80
      %p82 = scmp.ne.s32.totalorder %s73, %s74
      %p83 = scmp.eq.s32.totalorder %s21, 0
      %p84 = por %p82, %p83
      %p85 = scmp.ne.s32.totalorder %s73, %s74
      %p86 = scmp.eq.s32.totalorder %s22, 1
      %p87 = por %p85, %p86
      %p89 = scmp.ne.s32.totalorder %s74, %s88
      %p90 = scmp.eq.s32.totalorder %s22, 0
      %p91 = por %p89, %p90
      %s93 = sadd.s32 %s92, 1
      %p96 = scmp.eq.s32.totalorder %s16, 1
      %p97 = scmp.ne.s32.totalorder %s92, %s94
      %p98 = scmp.eq.s32.totalorder %s16, 0
      %p99 = por %p97, %p98
      %p100 = scmp.ne.s32.totalorder %s92, %s94
      %p101 = scmp.eq.s32.totalorder %s21, 1
      %p102 = por %p100, %p101
      %p103 = scmp.ne.s32.totalorder %s94, %s95
      %p104 = scmp.eq.s32.totalorder %s21, 0
      %p105 = por %p103, %p104
      %p106 = scmp.ne.s32.totalorder %s94, %s95
      %p107 = scmp.eq.s32.totalorder %s22, 1
      %p108 = por %p106, %p107
      %p110 = scmp.ne.s32.totalorder %s95, %s109
      %p111 = scmp.eq.s32.totalorder %s22, 0
      %p112 = por %p110, %p111
      %s114 = sadd.s32 %s113, 1
      %p117 = scmp.eq.s32.totalorder %s16, 1
      %p118 = scmp.ne.s32.totalorder %s113, %s115
      %p119 = scmp.eq.s32.totalorder %s16, 0
      %p120 = por %p118, %p119
      %p121 = scmp.ne.s32.totalorder %s113, %s115
      %p122 = scmp.eq.s32.totalorder %s21, 1
      %p123 = por %p121, %p122
      %p124 = scmp.ne.s32.totalorder %s115, %s116
      %p125 = scmp.eq.s32.totalorder %s21, 0
      %p126 = por %p124, %p125
      %p127 = scmp.ne.s32.totalorder %s115, %s116
      %p128 = scmp.eq.s32.totalorder %s22, 1
      %p129 = por %p127, %p128
      %p131 = scmp.ne.s32.totalorder %s116, %s130
      %p132 = scmp.eq.s32.totalorder %s22, 0
      %p133 = por %p131, %p132
      %s135 = sadd.s32 %s134, 1
      %p138 = scmp.eq.s32.totalorder %s16, 1
      %p139 = scmp.ne.s32.totalorder %s134, %s136
      %p140 = scmp.eq.s32.totalorder %s16, 0
      %p141 = por %p139, %p140
      %p142 = scmp.ne.s32.totalorder %s134, %s136
      %p143 = scmp.eq.s32.totalorder %s21, 1
      %p144 = por %p142, %p143
      %p145 = scmp.ne.s32.totalorder %s136, %s137
      %p146 = scmp.eq.s32.totalorder %s21, 0
      %p147 = por %p145, %p146
      %p148 = scmp.ne.s32.totalorder %s136, %s137
      %p149 = scmp.eq.s32.totalorder %s22, 1
      %p150 = por %p148, %p149
      %p152 = scmp.ne.s32.totalorder %s137, %s151
      %p153 = scmp.eq.s32.totalorder %s22, 0
      %p154 = por %p152, %p153
      %s156 = sadd.s32 %s155, 1
      %p159 = scmp.eq.s32.totalorder %s16, 1
      %p160 = scmp.ne.s32.totalorder %s155, %s157
      %p161 = scmp.eq.s32.totalorder %s16, 0
      %p162 = por %p160, %p161
      %p163 = scmp.ne.s32.totalorder %s155, %s157
      %p164 = scmp.eq.s32.totalorder %s21, 1
      %p165 = por %p163, %p164
      %p166 = scmp.ne.s32.totalorder %s157, %s158
      %p167 = scmp.eq.s32.totalorder %s21, 0
      %p168 = por %p166, %p167
      %p169 = scmp.ne.s32.totalorder %s157, %s158
      %p170 = scmp.eq.s32.totalorder %s22, 1
      %p171 = por %p169, %p170
      %p173 = scmp.ne.s32.totalorder %s158, %s172
      %p174 = scmp.eq.s32.totalorder %s22, 0
      %p175 = por %p173, %p174
      %s176 = ssub.s32 %s16, %s23
      %p177 = scmp.eq.s32.totalorder %s176, 0
      %s179 = sadd.s32 %s178, 1
      %s180 = scalar_select %p177, %s178, %s179
      %p183 = pneg %p177
      %p184 = scmp.eq.s32.totalorder %s16, 1
      %p185 = por %p183, %p184
      %p186 = scmp.ne.s32.totalorder %s178, %s181
      %p187 = scmp.eq.s32.totalorder %s16, 0
      %p188 = por %p186, %p187
      %p189 = scmp.ne.s32.totalorder %s178, %s181
      %p190 = scmp.eq.s32.totalorder %s21, 1
      %p191 = por %p189, %p190
      %p192 = scmp.ne.s32.totalorder %s181, %s182
      %p193 = scmp.eq.s32.totalorder %s21, 0
      %p194 = por %p192, %p193
      %p195 = scmp.ne.s32.totalorder %s181, %s182
      %p196 = scmp.eq.s32.totalorder %s22, 1
      %p197 = por %p195, %p196
      %p199 = scmp.ne.s32.totalorder %s182, %s198
      %p200 = scmp.eq.s32.totalorder %s22, 0
      %p201 = por %p199, %p200
      %p202 = scmp.le.s32.totalorder 1, %s16
      %p203 = scmp.lt.s32.totalorder %s16, 3
      %p204 = pnand %p202, %p203
      %p205 = pneg %p204
      // Predicated region
      $region9: #{my_model_forward.1} parent=5 // pred_check
        _
      $region10: #{my_model_forward.1} parent=5 // pred_check_branch
        %207 = sbr.rel (%p204) target = $region12
      $region11: #{my_model_forward.1} parent=5 // pred_region
        %s208 = ssub.s32 %s16, 1
        // Predicated region
        $region13: #{my_model_forward.1} parent=11 // pred_check
          %p209 = pneg %p63
        $region14: #{my_model_forward.1} parent=11 // pred_check_branch
          %211 = sbr.rel (%p209) target = $region16
        $region15: #{my_model_forward.1} parent=11 // pred_region
          _
        $region16: #{my_model_forward.1} parent=11 // pred_fallthru
          _
        // Predicated region
        $region17: #{my_model_forward.1} parent=11 // pred_check
          %p212 = pneg %p84
        $region18: #{my_model_forward.1} parent=11 // pred_check_branch
          %214 = sbr.rel (%p212) target = $region20
        $region19: #{my_model_forward.1} parent=11 // pred_region
          _
        $region20: #{my_model_forward.1} parent=11 // pred_fallthru
          _
        // Predicated region
        $region21: #{my_model_forward.1} parent=11 // pred_check
          %p215 = pneg %p105
        $region22: #{my_model_forward.1} parent=11 // pred_check_branch
          %217 = sbr.rel (%p215) target = $region24
        $region23: #{my_model_forward.1} parent=11 // pred_region
          _
        $region24: #{my_model_forward.1} parent=11 // pred_fallthru
          _
        // Predicated region
        $region25: #{my_model_forward.1} parent=11 // pred_check
          %p218 = pneg %p126
        $region26: #{my_model_forward.1} parent=11 // pred_check_branch
          %220 = sbr.rel (%p218) target = $region28
        $region27: #{my_model_forward.1} parent=11 // pred_region
          _
        $region28: #{my_model_forward.1} parent=11 // pred_fallthru
          _
        // Predicated region
        $region29: #{my_model_forward.1} parent=11 // pred_check
          %p221 = pneg %p147
        $region30: #{my_model_forward.1} parent=11 // pred_check_branch
          %223 = sbr.rel (%p221) target = $region32
        $region31: #{my_model_forward.1} parent=11 // pred_region
          _
        $region32: #{my_model_forward.1} parent=11 // pred_fallthru
          _
        // Predicated region
        $region33: #{my_model_forward.1} parent=11 // pred_check
          %p224 = pneg %p168
        $region34: #{my_model_forward.1} parent=11 // pred_check_branch
          %226 = sbr.rel (%p224) target = $region36
        $region35: #{my_model_forward.1} parent=11 // pred_region
          _
        $region36: #{my_model_forward.1} parent=11 // pred_fallthru
          _
      $region12: #{my_model_forward.1} parent=5 // pred_fallthru
        _
      %p227 = scmp.lt.s32.totalorder %s16, 2
      // Predicated region
      $region37: #{my_model_forward.1} parent=5 // pred_check
        %p228 = pneg %p227
      $region38: #{my_model_forward.1} parent=5 // pred_check_branch
        %230 = sbr.rel (%p228) target = $region40
      $region39: #{my_model_forward.1} parent=5 // pred_region
        // Predicated region
        $region41: #{my_model_forward.1} parent=39 // pred_check
          %p231 = pneg %p36
        $region42: #{my_model_forward.1} parent=39 // pred_check_branch
          %233 = sbr.rel (%p231) target = $region44
        $region43: #{my_model_forward.1} parent=39 // pred_region
          %s234 = smul.u32 144, %s16
          %p235 = scmp.lt.s32.totalorder %s234, 287
          %s236 = scalar_select %p235, %s234, 287
          %s237 = smul.addr %s236, 4
          %s238 = scalar_lea.vmem %s0, %s237
          %s239 = smul.u32 144, %s16
        $region44: #{my_model_forward.1} parent=39 // pred_fallthru
          _
      $region40: #{my_model_forward.1} parent=5 // pred_fallthru
        _
      %p240 = scmp.le.s32.totalorder 1, %s16
      %p241 = scmp.lt.s32.totalorder %s16, 3
      %p242 = pnand %p240, %p241
      %p243 = pneg %p242
      // Predicated region
      $region45: #{my_model_forward.1} parent=5 // pred_check
        _
      $region46: #{my_model_forward.1} parent=5 // pred_check_branch
        %245 = sbr.rel (%p242) target = $region48
      $region47: #{my_model_forward.1} parent=5 // pred_region
        %s246 = ssub.s32 %s16, 1
        %s247 = smul.u32 144, %s21
        %p248 = scmp.lt.s32.totalorder %s247, 287
        %s249 = scalar_select %p248, %s247, 287
        %s250 = smul.addr %s249, 4
        %s251 = scalar_lea.vmem %s0, %s250
        %p252 = pneg %p42
        %p253 = pneg %p39
        %p254 = pneg %p63
        %p255 = pneg %p60
        %p256 = pneg %p84
        %p257 = pneg %p81
        %p258 = pneg %p105
        %p259 = pneg %p102
        %p260 = pneg %p126
        %p261 = pneg %p123
        %p262 = pneg %p147
        %p263 = pneg %p144
        %p264 = pneg %p168
        %p265 = pneg %p165
        %p266 = pneg %p194
        %p267 = pneg %p191
        %s268 = sand.u32 %s181, 1
        %s269 = scalar_lea.sflag [#allocation3], %s268
        %s270 = sand.u32 %s181, 1
        %s271 = smul.addr %s270, 8
        %s272 = scalar_lea.vmem [#allocation2], %s271
        %s273 = smul.u32 144, %s21
        %p274 = scmp.lt.s32.totalorder %s273, 287
        %s275 = scalar_select %p274, %s273, 287
        %s276 = smul.addr %s275, 4
        %s277 = scalar_lea.vmem %s0, %s276
        %s278 = smul.u32 144, %s21
        %v279 = vld [vmem:[%s277] sm:$0xf]
        %v280 = vld [vmem:[%s277 + $0x4] sm:$0xf]
        %v281 = vld [vmem:[%s277 + $0x8] sm:$0xf]
        %v282 = vld [vmem:[%s277 + $0xc] sm:$0xf]
        %v283 = vld [vmem:[%s277 + $0x10] sm:$0xf]
        %v284 = vld [vmem:[%s277 + $0x14] sm:$0xf]
        %v285 = vld [vmem:[%s277 + $0x18] sm:$0xf]
        %v286 = vld [vmem:[%s277 + $0x1c] sm:$0xf]
        %v287 = vld [vmem:[%s277 + $0x20] sm:$0xf]
        %v288 = vld [vmem:[%s277 + $0x24] sm:$0xf]
        %v289 = vld [vmem:[%s277 + $0x28] sm:$0xf]
        %v290 = vld [vmem:[%s277 + $0x2c] sm:$0xf]
        %v291 = vld [vmem:[%s277 + $0x30] sm:$0xf]
        %v292 = vld [vmem:[%s277 + $0x34] sm:$0xf]
        %v293 = vld [vmem:[%s277 + $0x38] sm:$0xf]
        %v294 = vld [vmem:[%s277 + $0x3c] sm:$0xf]
        %v295 = vld [vmem:[%s277 + $0x40] sm:$0xf]
        %v296 = vld [vmem:[%s277 + $0x44] sm:$0xf]
        %v297 = vld [vmem:[%s277 + $0x48] sm:$0xf]
        %v298 = vld [vmem:[%s277 + $0x4c] sm:$0xf]
        %v299 = vld [vmem:[%s277 + $0x50] sm:$0xf]
        %v300 = vld [vmem:[%s277 + $0x54] sm:$0xf]
        %v301 = vld [vmem:[%s277 + $0x58] sm:$0xf]
        %v302 = vld [vmem:[%s277 + $0x5c] sm:$0xf]
        %v303 = vld [vmem:[%s277 + $0x60] sm:$0xf]
        %v304 = vld [vmem:[%s277 + $0x64] sm:$0xf]
        %v305 = vld [vmem:[%s277 + $0x68] sm:$0xf]
        %v306 = vld [vmem:[%s277 + $0x6c] sm:$0xf]
        %v307 = vld [vmem:[%s277 + $0x70] sm:$0xf]
        %v308 = vld [vmem:[%s277 + $0x74] sm:$0xf]
        %v309 = vld [vmem:[%s277 + $0x78] sm:$0xf]
        %v310 = vld [vmem:[%s277 + $0x7c] sm:$0xf]
        %v311 = vld [vmem:[%s277 + $0x80] sm:$0xf]
        %v312 = vld [vmem:[%s277 + $0x84] sm:$0xf]
        %v313 = vld [vmem:[%s277 + $0x88] sm:$0xf]
        %v314 = vld [vmem:[%s277 + $0x8c] sm:$0xf]
        %v315 = vld [vmem:[%s277 + $0x90] sm:$0xf]
        %v316 = vld [vmem:[%s277 + $0x94] sm:$0xf]
        %v317 = vld [vmem:[%s277 + $0x98] sm:$0xf]
        %v318 = vld [vmem:[%s277 + $0x9c] sm:$0xf]
        %v319 = vld [vmem:[%s277 + $0xa0] sm:$0xf]
        %v320 = vld [vmem:[%s277 + $0xa4] sm:$0xf]
        %v321 = vld [vmem:[%s277 + $0xa8] sm:$0xf]
        %v322 = vld [vmem:[%s277 + $0xac] sm:$0xf]
        %v323 = vld [vmem:[%s277 + $0xb0] sm:$0xf]
        %v324 = vld [vmem:[%s277 + $0xb4] sm:$0xf]
        %v325 = vld [vmem:[%s277 + $0xb8] sm:$0xf]
        %v326 = vld [vmem:[%s277 + $0xbc] sm:$0xf]
        %v327 = vld [vmem:[%s277 + $0xc0] sm:$0xf]
        %v328 = vld [vmem:[%s277 + $0xc4] sm:$0xf]
        %v329 = vld [vmem:[%s277 + $0xc8] sm:$0xf]
        %v330 = vld [vmem:[%s277 + $0xcc] sm:$0xf]
        %v331 = vld [vmem:[%s277 + $0xd0] sm:$0xf]
        %v332 = vld [vmem:[%s277 + $0xd4] sm:$0xf]
        %v333 = vld [vmem:[%s277 + $0xd8] sm:$0xf]
        %v334 = vld [vmem:[%s277 + $0xdc] sm:$0xf]
        %v335 = vld [vmem:[%s277 + $0xe0] sm:$0xf]
        %v336 = vld [vmem:[%s277 + $0xe4] sm:$0xf]
        %v337 = vld [vmem:[%s277 + $0xe8] sm:$0xf]
        %v338 = vld [vmem:[%s277 + $0xec] sm:$0xf]
        %v339 = vld [vmem:[%s277 + $0xf0] sm:$0xf]
        %v340 = vld [vmem:[%s277 + $0xf4] sm:$0xf]
        %v341 = vld [vmem:[%s277 + $0xf8] sm:$0xf]
        %v342 = vld [vmem:[%s277 + $0xfc] sm:$0xf]
        %v343 = vld [vmem:[%s277 + $0x100] sm:$0xf]
        %v344 = vld [vmem:[%s277 + $0x104] sm:$0xf]
        %v345 = vld [vmem:[%s277 + $0x108] sm:$0xf]
        %v346 = vld [vmem:[%s277 + $0x10c] sm:$0xf]
        %v347 = vld [vmem:[%s277 + $0x110] sm:$0xf]
        %v348 = vld [vmem:[%s277 + $0x114] sm:$0xf]
        %v349 = vld [vmem:[%s277 + $0x118] sm:$0xf]
        %v350 = vld [vmem:[%s277 + $0x11c] sm:$0xf]
        %v351 = vld [vmem:[%s277 + $0x120] sm:$0xf]
        %v352 = vld [vmem:[%s277 + $0x124] sm:$0xf]
        %v353 = vld [vmem:[%s277 + $0x128] sm:$0xf]
        %v354 = vld [vmem:[%s277 + $0x12c] sm:$0xf]
        %v355 = vld [vmem:[%s277 + $0x130] sm:$0xf]
        %v356 = vld [vmem:[%s277 + $0x134] sm:$0xf]
        %v357 = vld [vmem:[%s277 + $0x138] sm:$0xf]
        %v358 = vld [vmem:[%s277 + $0x13c] sm:$0xf]
        %v359 = vld [vmem:[%s277 + $0x140] sm:$0xf]
        %v360 = vld [vmem:[%s277 + $0x144] sm:$0xf]
        %v361 = vld [vmem:[%s277 + $0x148] sm:$0xf]
        %v362 = vld [vmem:[%s277 + $0x14c] sm:$0xf]
        %v363 = vld [vmem:[%s277 + $0x150] sm:$0xf]
        %v364 = vld [vmem:[%s277 + $0x154] sm:$0xf]
        %v365 = vld [vmem:[%s277 + $0x158] sm:$0xf]
        %v366 = vld [vmem:[%s277 + $0x15c] sm:$0xf]
        %v367 = vld [vmem:[%s277 + $0x160] sm:$0xf]
        %v368 = vld [vmem:[%s277 + $0x164] sm:$0xf]
        %v369 = vld [vmem:[%s277 + $0x168] sm:$0xf]
        %v370 = vld [vmem:[%s277 + $0x16c] sm:$0xf]
        %v371 = vld [vmem:[%s277 + $0x170] sm:$0xf]
        %v372 = vld [vmem:[%s277 + $0x174] sm:$0xf]
        %v373 = vld [vmem:[%s277 + $0x178] sm:$0xf]
        %v374 = vld [vmem:[%s277 + $0x17c] sm:$0xf]
        %v375 = vld [vmem:[%s277 + $0x180] sm:$0xf]
        %v376 = vld [vmem:[%s277 + $0x184] sm:$0xf]
        %v377 = vld [vmem:[%s277 + $0x188] sm:$0xf]
        %v378 = vld [vmem:[%s277 + $0x18c] sm:$0xf]
        %v379 = vld [vmem:[%s277 + $0x190] sm:$0xf]
        %v380 = vld [vmem:[%s277 + $0x194] sm:$0xf]
        %v381 = vld [vmem:[%s277 + $0x198] sm:$0xf]
        %v382 = vld [vmem:[%s277 + $0x19c] sm:$0xf]
        %v383 = vld [vmem:[%s277 + $0x1a0] sm:$0xf]
        %v384 = vld [vmem:[%s277 + $0x1a4] sm:$0xf]
        %v385 = vld [vmem:[%s277 + $0x1a8] sm:$0xf]
        %v386 = vld [vmem:[%s277 + $0x1ac] sm:$0xf]
        %v387 = vld [vmem:[%s277 + $0x1b0] sm:$0xf]
        %v388 = vld [vmem:[%s277 + $0x1b4] sm:$0xf]
        %v389 = vld [vmem:[%s277 + $0x1b8] sm:$0xf]
        %v390 = vld [vmem:[%s277 + $0x1bc] sm:$0xf]
        %v391 = vld [vmem:[%s277 + $0x1c0] sm:$0xf]
        %v392 = vld [vmem:[%s277 + $0x1c4] sm:$0xf]
        %v393 = vld [vmem:[%s277 + $0x1c8] sm:$0xf]
        %v394 = vld [vmem:[%s277 + $0x1cc] sm:$0xf]
        %v395 = vld [vmem:[%s277 + $0x1d0] sm:$0xf]
        %v396 = vld [vmem:[%s277 + $0x1d4] sm:$0xf]
        %v397 = vld [vmem:[%s277 + $0x1d8] sm:$0xf]
        %v398 = vld [vmem:[%s277 + $0x1dc] sm:$0xf]
        %v399 = vld [vmem:[%s277 + $0x1e0] sm:$0xf]
        %v400 = vld [vmem:[%s277 + $0x1e4] sm:$0xf]
        %v401 = vld [vmem:[%s277 + $0x1e8] sm:$0xf]
        %v402 = vld [vmem:[%s277 + $0x1ec] sm:$0xf]
        %v403 = vld [vmem:[%s277 + $0x1f0] sm:$0xf]
        %v404 = vld [vmem:[%s277 + $0x1f4] sm:$0xf]
        %v405 = vld [vmem:[%s277 + $0x1f8] sm:$0xf]
        %v406 = vld [vmem:[%s277 + $0x1fc] sm:$0xf]
        %v407 = vld [vmem:[%s277 + $0x200] sm:$0xf]
        %v408 = vld [vmem:[%s277 + $0x204] sm:$0xf]
        %v409 = vld [vmem:[%s277 + $0x208] sm:$0xf]
        %v410 = vld [vmem:[%s277 + $0x20c] sm:$0xf]
        %v411 = vld [vmem:[%s277 + $0x210] sm:$0xf]
        %v412 = vld [vmem:[%s277 + $0x214] sm:$0xf]
        %v413 = vld [vmem:[%s277 + $0x218] sm:$0xf]
        %v414 = vld [vmem:[%s277 + $0x21c] sm:$0xf]
        %v415 = vld [vmem:[%s277 + $0x220] sm:$0xf]
        %v416 = vld [vmem:[%s277 + $0x224] sm:$0xf]
        %v417 = vld [vmem:[%s277 + $0x228] sm:$0xf]
        %v418 = vld [vmem:[%s277 + $0x22c] sm:$0xf]
        %v419 = vld [vmem:[%s277 + $0x230] sm:$0xf]
        %v420 = vld [vmem:[%s277 + $0x234] sm:$0xf]
        %v421 = vld [vmem:[%s277 + $0x238] sm:$0xf]
        %v422 = vld [vmem:[%s277 + $0x23c] sm:$0xf]
        %v423 = vld [vmem:[%s1] sm:$0xff]
        %v424 = vld [vmem:[%s1 + $0x8] sm:$0xff]
        %v425 = vld [vmem:[%s1 + $0x10] sm:$0xff]
        %v426 = vld [vmem:[%s1 + $0x18] sm:$0xff]
        %v427 = vld [vmem:[%s1 + $0x20] sm:$0xff]
        %v428 = vld [vmem:[%s1 + $0x28] sm:$0xff]
        %v429 = vld [vmem:[%s1 + $0x30] sm:$0xff]
        %v430 = vld [vmem:[%s1 + $0x38] sm:$0xff]
        %v431 = vld [vmem:[%s1 + $0x40] sm:$0xff]
        %v432 = vld [vmem:[%s1 + $0x48] sm:$0xff]
        %v433 = vld [vmem:[%s1 + $0x50] sm:$0xff]
        %v434 = vld [vmem:[%s1 + $0x58] sm:$0xff]
        %v435 = vld [vmem:[%s1 + $0x60] sm:$0xff]
        %v436 = vld [vmem:[%s1 + $0x68] sm:$0xff]
        %v437 = vld [vmem:[%s1 + $0x70] sm:$0xff]
        %v438 = vld [vmem:[%s1 + $0x78] sm:$0xff]
        %v439 = vld [vmem:[%s1 + $0x80] sm:$0xff]
        %v440 = vld [vmem:[%s1 + $0x88] sm:$0xff]
        %v441 = vld [vmem:[%s1 + $0x90] sm:$0xff]
        %v442 = vld [vmem:[%s1 + $0x98] sm:$0xff]
        %v443 = vld [vmem:[%s1 + $0xa0] sm:$0xff]
        %v444 = vld [vmem:[%s1 + $0xa8] sm:$0xff]
        %v445 = vld [vmem:[%s1 + $0xb0] sm:$0xff]
        %v446 = vld [vmem:[%s1 + $0xb8] sm:$0xff]
        %v447 = vld [vmem:[%s1 + $0xc0] sm:$0xff]
        %v448 = vld [vmem:[%s1 + $0xc8] sm:$0xff]
        %v449 = vld [vmem:[%s1 + $0xd0] sm:$0xff]
        %v450 = vld [vmem:[%s1 + $0xd8] sm:$0xff]
        %v451 = vld [vmem:[%s1 + $0xe0] sm:$0xff]
        %v452 = vld [vmem:[%s1 + $0xe8] sm:$0xff]
        %v453 = vld [vmem:[%s1 + $0xf0] sm:$0xff]
        %v454 = vld [vmem:[%s1 + $0xf8] sm:$0xff]
        %v599 = vunpack.c.l.b16 %v279
        %v600 = vunpack.c.l.b16 %v280
        %v601 = vunpack.c.l.b16 %v281
        %v602 = vunpack.c.l.b16 %v282
        %v603 = vunpack.c.l.b16 %v283
        %v604 = vunpack.c.l.b16 %v284
        %v605 = vunpack.c.l.b16 %v285
        %v606 = vunpack.c.l.b16 %v286
        %v607 = vunpack.c.l.b16 %v287
        %v608 = vunpack.c.l.b16 %v288
        %v609 = vunpack.c.l.b16 %v289
        %v610 = vunpack.c.l.b16 %v290
        %v611 = vunpack.c.l.b16 %v291
        %v612 = vunpack.c.l.b16 %v292
        %v613 = vunpack.c.l.b16 %v293
        %v614 = vunpack.c.l.b16 %v294
        %v615 = vunpack.c.l.b16 %v295
        %v616 = vunpack.c.l.b16 %v296
        %v617 = vunpack.c.l.b16 %v297
        %v618 = vunpack.c.l.b16 %v298
        %v619 = vunpack.c.l.b16 %v299
        %v620 = vunpack.c.l.b16 %v300
        %v621 = vunpack.c.l.b16 %v301
        %v622 = vunpack.c.l.b16 %v302
        %v623 = vunpack.c.l.b16 %v303
        %v624 = vunpack.c.l.b16 %v304
        %v625 = vunpack.c.l.b16 %v305
        %v626 = vunpack.c.l.b16 %v306
        %v627 = vunpack.c.l.b16 %v307
        %v628 = vunpack.c.l.b16 %v308
        %v629 = vunpack.c.l.b16 %v309
        %v630 = vunpack.c.l.b16 %v310
        %v631 = vunpack.c.l.b16 %v311
        %v632 = vunpack.c.l.b16 %v312
        %v633 = vunpack.c.l.b16 %v313
        %v634 = vunpack.c.l.b16 %v314
        %v635 = vunpack.c.l.b16 %v315
        %v636 = vunpack.c.l.b16 %v316
        %v637 = vunpack.c.l.b16 %v317
        %v638 = vunpack.c.l.b16 %v318
        %v639 = vunpack.c.l.b16 %v319
        %v640 = vunpack.c.l.b16 %v320
        %v641 = vunpack.c.l.b16 %v321
        %v642 = vunpack.c.l.b16 %v322
        %v643 = vunpack.c.l.b16 %v323
        %v644 = vunpack.c.l.b16 %v324
        %v645 = vunpack.c.l.b16 %v325
        %v646 = vunpack.c.l.b16 %v326
        %v647 = vunpack.c.l.b16 %v327
        %v648 = vunpack.c.l.b16 %v328
        %v649 = vunpack.c.l.b16 %v329
        %v650 = vunpack.c.l.b16 %v330
        %v651 = vunpack.c.l.b16 %v331
        %v652 = vunpack.c.l.b16 %v332
        %v653 = vunpack.c.l.b16 %v333
        %v654 = vunpack.c.l.b16 %v334
        %v655 = vunpack.c.l.b16 %v335
        %v656 = vunpack.c.l.b16 %v336
        %v657 = vunpack.c.l.b16 %v337
        %v658 = vunpack.c.l.b16 %v338
        %v659 = vunpack.c.l.b16 %v339
        %v660 = vunpack.c.l.b16 %v340
        %v661 = vunpack.c.l.b16 %v341
        %v662 = vunpack.c.l.b16 %v342
        %v663 = vunpack.c.l.b16 %v343
        %v664 = vunpack.c.l.b16 %v344
        %v665 = vunpack.c.l.b16 %v345
        %v666 = vunpack.c.l.b16 %v346
        %v667 = vunpack.c.l.b16 %v347
        %v668 = vunpack.c.l.b16 %v348
        %v669 = vunpack.c.l.b16 %v349
        %v670 = vunpack.c.l.b16 %v350
        %v671 = vunpack.c.l.b16 %v351
        %v672 = vunpack.c.l.b16 %v352
        %v673 = vunpack.c.l.b16 %v353
        %v674 = vunpack.c.l.b16 %v354
        %v675 = vunpack.c.l.b16 %v355
        %v676 = vunpack.c.l.b16 %v356
        %v677 = vunpack.c.l.b16 %v357
        %v678 = vunpack.c.l.b16 %v358
        %v679 = vunpack.c.l.b16 %v359
        %v680 = vunpack.c.l.b16 %v360
        %v681 = vunpack.c.l.b16 %v361
        %v682 = vunpack.c.l.b16 %v362
        %v683 = vunpack.c.l.b16 %v363
        %v684 = vunpack.c.l.b16 %v364
        %v685 = vunpack.c.l.b16 %v365
        %v686 = vunpack.c.l.b16 %v366
        %v687 = vunpack.c.l.b16 %v367
        %v688 = vunpack.c.l.b16 %v368
        %v689 = vunpack.c.l.b16 %v369
        %v690 = vunpack.c.l.b16 %v370
        %v691 = vunpack.c.l.b16 %v371
        %v692 = vunpack.c.l.b16 %v372
        %v693 = vunpack.c.l.b16 %v373
        %v694 = vunpack.c.l.b16 %v374
        %v695 = vunpack.c.l.b16 %v375
        %v696 = vunpack.c.l.b16 %v376
        %v697 = vunpack.c.l.b16 %v377
        %v698 = vunpack.c.l.b16 %v378
        %v699 = vunpack.c.l.b16 %v379
        %v700 = vunpack.c.l.b16 %v380
        %v701 = vunpack.c.l.b16 %v381
        %v702 = vunpack.c.l.b16 %v382
        %v703 = vunpack.c.l.b16 %v383
        %v704 = vunpack.c.l.b16 %v384
        %v705 = vunpack.c.l.b16 %v385
        %v706 = vunpack.c.l.b16 %v386
        %v707 = vunpack.c.l.b16 %v387
        %v708 = vunpack.c.l.b16 %v388
        %v709 = vunpack.c.l.b16 %v389
        %v710 = vunpack.c.l.b16 %v390
        %v711 = vunpack.c.l.b16 %v391
        %v712 = vunpack.c.l.b16 %v392
        %v713 = vunpack.c.l.b16 %v393
        %v714 = vunpack.c.l.b16 %v394
        %v715 = vunpack.c.l.b16 %v395
        %v716 = vunpack.c.l.b16 %v396
        %v717 = vunpack.c.l.b16 %v397
        %v718 = vunpack.c.l.b16 %v398
        %v719 = vunpack.c.l.b16 %v399
        %v720 = vunpack.c.l.b16 %v400
        %v721 = vunpack.c.l.b16 %v401
        %v722 = vunpack.c.l.b16 %v402
        %v723 = vunpack.c.l.b16 %v403
        %v724 = vunpack.c.l.b16 %v404
        %v725 = vunpack.c.l.b16 %v405
        %v726 = vunpack.c.l.b16 %v406
        %v727 = vunpack.c.l.b16 %v407
        %v728 = vunpack.c.l.b16 %v408
        %v729 = vunpack.c.l.b16 %v409
        %v730 = vunpack.c.l.b16 %v410
        %v731 = vunpack.c.l.b16 %v411
        %v732 = vunpack.c.l.b16 %v412
        %v733 = vunpack.c.l.b16 %v413
        %v734 = vunpack.c.l.b16 %v414
        %v735 = vunpack.c.l.b16 %v415
        %v736 = vunpack.c.l.b16 %v416
        %v737 = vunpack.c.l.b16 %v417
        %v738 = vunpack.c.l.b16 %v418
        %v739 = vunpack.c.l.b16 %v419
        %v740 = vunpack.c.l.b16 %v420
        %v741 = vunpack.c.l.b16 %v421
        %v742 = vunpack.c.l.b16 %v422
        %v743 = vpack.c.b16 %v600, %v599
        %v744 = vpack.c.b16 %v602, %v601
        %v745 = vpack.c.b16 %v604, %v603
        %v746 = vpack.c.b16 %v606, %v605
        %v747 = vpack.c.b16 %v608, %v607
        %v748 = vpack.c.b16 %v610, %v609
        %v749 = vpack.c.b16 %v612, %v611
        %v750 = vpack.c.b16 %v614, %v613
        %v751 = vpack.c.b16 %v616, %v615
        %v752 = vpack.c.b16 %v618, %v617
        %v753 = vpack.c.b16 %v620, %v619
        %v754 = vpack.c.b16 %v622, %v621
        %v755 = vpack.c.b16 %v624, %v623
        %v756 = vpack.c.b16 %v626, %v625
        %v757 = vpack.c.b16 %v628, %v627
        %v758 = vpack.c.b16 %v630, %v629
        %v759 = vpack.c.b16 %v632, %v631
        %v760 = vpack.c.b16 %v634, %v633
        %v761 = vpack.c.b16 %v636, %v635
        %v762 = vpack.c.b16 %v638, %v637
        %v763 = vpack.c.b16 %v640, %v639
        %v764 = vpack.c.b16 %v642, %v641
        %v765 = vpack.c.b16 %v644, %v643
        %v766 = vpack.c.b16 %v646, %v645
        %v767 = vpack.c.b16 %v648, %v647
        %v768 = vpack.c.b16 %v650, %v649
        %v769 = vpack.c.b16 %v652, %v651
        %v770 = vpack.c.b16 %v654, %v653
        %v771 = vpack.c.b16 %v656, %v655
        %v772 = vpack.c.b16 %v658, %v657
        %v773 = vpack.c.b16 %v660, %v659
        %v774 = vpack.c.b16 %v662, %v661
        %v775 = vpack.c.b16 %v664, %v663
        %v776 = vpack.c.b16 %v666, %v665
        %v777 = vpack.c.b16 %v668, %v667
        %v778 = vpack.c.b16 %v670, %v669
        %v779 = vpack.c.b16 %v672, %v671
        %v780 = vpack.c.b16 %v674, %v673
        %v781 = vpack.c.b16 %v676, %v675
        %v782 = vpack.c.b16 %v678, %v677
        %v783 = vpack.c.b16 %v680, %v679
        %v784 = vpack.c.b16 %v682, %v681
        %v785 = vpack.c.b16 %v684, %v683
        %v786 = vpack.c.b16 %v686, %v685
        %v787 = vpack.c.b16 %v688, %v687
        %v788 = vpack.c.b16 %v690, %v689
        %v789 = vpack.c.b16 %v692, %v691
        %v790 = vpack.c.b16 %v694, %v693
        %v791 = vpack.c.b16 %v696, %v695
        %v792 = vpack.c.b16 %v698, %v697
        %v793 = vpack.c.b16 %v700, %v699
        %v794 = vpack.c.b16 %v702, %v701
        %v795 = vpack.c.b16 %v704, %v703
        %v796 = vpack.c.b16 %v706, %v705
        %v797 = vpack.c.b16 %v708, %v707
        %v798 = vpack.c.b16 %v710, %v709
        %v799 = vpack.c.b16 %v712, %v711
        %v800 = vpack.c.b16 %v714, %v713
        %v801 = vpack.c.b16 %v716, %v715
        %v802 = vpack.c.b16 %v718, %v717
        %v803 = vpack.c.b16 %v720, %v719
        %v804 = vpack.c.b16 %v722, %v721
        %v805 = vpack.c.b16 %v724, %v723
        %v806 = vpack.c.b16 %v726, %v725
        %v807 = vpack.c.b16 %v728, %v727
        %v808 = vpack.c.b16 %v730, %v729
        %v809 = vpack.c.b16 %v732, %v731
        %v810 = vpack.c.b16 %v734, %v733
        %v811 = vpack.c.b16 %v736, %v735
        %v812 = vpack.c.b16 %v738, %v737
        %v813 = vpack.c.b16 %v740, %v739
        %v814 = vpack.c.b16 %v742, %v741
        %v919 = vunpack.c.l.b16 %v423
        %v920 = vunpack.c.h.b16 %v423
        %v921 = vunpack.c.l.b16 %v424
        %v922 = vunpack.c.h.b16 %v424
        %v923 = vunpack.c.l.b16 %v425
        %v924 = vunpack.c.h.b16 %v425
        %v925 = vunpack.c.l.b16 %v426
        %v926 = vunpack.c.h.b16 %v426
        %v927 = vunpack.c.l.b16 %v427
        %v928 = vunpack.c.h.b16 %v427
        %v929 = vunpack.c.l.b16 %v428
        %v930 = vunpack.c.h.b16 %v428
        %v931 = vunpack.c.l.b16 %v429
        %v932 = vunpack.c.h.b16 %v429
        %v933 = vunpack.c.l.b16 %v430
        %v934 = vunpack.c.h.b16 %v430
        %v935 = vunpack.c.l.b16 %v431
        %v936 = vunpack.c.h.b16 %v431
        %v937 = vunpack.c.l.b16 %v432
        %v938 = vunpack.c.h.b16 %v432
        %v939 = vunpack.c.l.b16 %v433
        %v940 = vunpack.c.h.b16 %v433
        %v941 = vunpack.c.l.b16 %v434
        %v942 = vunpack.c.h.b16 %v434
        %v943 = vunpack.c.l.b16 %v435
        %v944 = vunpack.c.h.b16 %v435
        %v945 = vunpack.c.l.b16 %v436
        %v946 = vunpack.c.h.b16 %v436
        %v947 = vunpack.c.l.b16 %v437
        %v948 = vunpack.c.h.b16 %v437
        %v949 = vunpack.c.l.b16 %v438
        %v950 = vunpack.c.h.b16 %v438
        %v951 = vunpack.c.l.b16 %v439
        %v952 = vunpack.c.h.b16 %v439
        %v953 = vunpack.c.l.b16 %v440
        %v954 = vunpack.c.h.b16 %v440
        %v955 = vunpack.c.l.b16 %v441
        %v956 = vunpack.c.h.b16 %v441
        %v957 = vunpack.c.l.b16 %v442
        %v958 = vunpack.c.h.b16 %v442
        %v959 = vunpack.c.l.b16 %v443
        %v960 = vunpack.c.h.b16 %v443
        %v961 = vunpack.c.l.b16 %v444
        %v962 = vunpack.c.h.b16 %v444
        %v963 = vunpack.c.l.b16 %v445
        %v964 = vunpack.c.h.b16 %v445
        %v965 = vunpack.c.l.b16 %v446
        %v966 = vunpack.c.h.b16 %v446
        %v967 = vunpack.c.l.b16 %v447
        %v968 = vunpack.c.h.b16 %v447
        %v969 = vunpack.c.l.b16 %v448
        %v970 = vunpack.c.h.b16 %v448
        %v971 = vunpack.c.l.b16 %v449
        %v972 = vunpack.c.h.b16 %v449
        %v973 = vunpack.c.l.b16 %v450
        %v974 = vunpack.c.h.b16 %v450
        %v975 = vunpack.c.l.b16 %v451
        %v976 = vunpack.c.h.b16 %v451
        %v977 = vunpack.c.l.b16 %v452
        %v978 = vunpack.c.h.b16 %v452
        %v979 = vunpack.c.l.b16 %v453
        %v980 = vunpack.c.h.b16 %v453
        %v981 = vunpack.c.l.b16 %v454
        %v982 = vunpack.c.h.b16 %v454
        %v983 = vpack.c.b16 %v923, %v919
        %v984 = vpack.c.b16 %v924, %v920
        %v985 = vpack.c.b16 %v925, %v921
        %v986 = vpack.c.b16 %v926, %v922
        %v987 = vpack.c.b16 %v931, %v927
        %v988 = vpack.c.b16 %v932, %v928
        %v989 = vpack.c.b16 %v933, %v929
        %v990 = vpack.c.b16 %v934, %v930
        %v991 = vpack.c.b16 %v939, %v935
        %v992 = vpack.c.b16 %v940, %v936
        %v993 = vpack.c.b16 %v941, %v937
        %v994 = vpack.c.b16 %v942, %v938
        %v995 = vpack.c.b16 %v947, %v943
        %v996 = vpack.c.b16 %v948, %v944
        %v997 = vpack.c.b16 %v949, %v945
        %v998 = vpack.c.b16 %v950, %v946
        %v999 = vpack.c.b16 %v955, %v951
        %v1000 = vpack.c.b16 %v956, %v952
        %v1001 = vpack.c.b16 %v957, %v953
        %v1002 = vpack.c.b16 %v958, %v954
        %v1003 = vpack.c.b16 %v963, %v959
        %v1004 = vpack.c.b16 %v964, %v960
        %v1005 = vpack.c.b16 %v965, %v961
        %v1006 = vpack.c.b16 %v966, %v962
        %v1007 = vpack.c.b16 %v971, %v967
        %v1008 = vpack.c.b16 %v972, %v968
        %v1009 = vpack.c.b16 %v973, %v969
        %v1010 = vpack.c.b16 %v974, %v970
        %v1011 = vpack.c.b16 %v979, %v975
        %v1012 = vpack.c.b16 %v980, %v976
        %v1013 = vpack.c.b16 %v981, %v977
        %v1014 = vpack.c.b16 %v982, %v978
        %1047 = vmatpush.bf16.msra.mxu0 %v1011
        %1048 = vmatpush.bf16.msra.mxu0 %v1007
        %1049 = vmatpush.bf16.msra.mxu0 %v1003
        %1050 = vmatpush.bf16.msra.mxu0 %v999
        %1051 = vmatpush.bf16.msra.mxu0 %v995
        %1052 = vmatpush.bf16.msra.mxu0 %v991
        %1053 = vmatpush.bf16.msra.mxu0 %v987
        %1054 = vmatpush.bf16.msra.mxu0 %v983
        %1055 = vmatmul.bf16.gmra.mxu0 %v743
        %v1056 = vpop.f32.mrf.mxu0
        %v1057 = vadd.f32 0.0, %v1056
        %v1058 = vpop.f32.mrf.mxu0
        %v1059 = vadd.f32 0.0, %v1058
        %1060 = vmatmul.bf16.gmra.mxu0 %v744
        %v1061 = vpop.f32.mrf.mxu0
        %v1062 = vadd.f32 0.0, %v1061
        %v1063 = vpop.f32.mrf.mxu0
        %v1064 = vadd.f32 0.0, %v1063
        %1065 = vmatmul.bf16.gmra.mxu0 %v745
        %v1066 = vpop.f32.mrf.mxu0
        %v1067 = vadd.f32 0.0, %v1066
        %v1068 = vpop.f32.mrf.mxu0
        %v1069 = vadd.f32 0.0, %v1068
        %1070 = vmatmul.bf16.gmra.mxu0 %v746
        %v1071 = vpop.f32.mrf.mxu0
        %v1072 = vadd.f32 0.0, %v1071
        %v1073 = vpop.f32.mrf.mxu0
        %v1074 = vadd.f32 0.0, %v1073
        %1075 = vmatmul.bf16.gmra.mxu0 %v747
        %v1076 = vpop.f32.mrf.mxu0
        %v1077 = vadd.f32 0.0, %v1076
        %v1078 = vpop.f32.mrf.mxu0
        %v1079 = vadd.f32 0.0, %v1078
        %1080 = vmatmul.bf16.gmra.mxu0 %v748
        %v1081 = vpop.f32.mrf.mxu0
        %v1082 = vadd.f32 0.0, %v1081
        %v1083 = vpop.f32.mrf.mxu0
        %v1084 = vadd.f32 0.0, %v1083
        %1085 = vmatmul.bf16.gmra.mxu0 %v749
        %v1086 = vpop.f32.mrf.mxu0
        %v1087 = vadd.f32 0.0, %v1086
        %v1088 = vpop.f32.mrf.mxu0
        %v1089 = vadd.f32 0.0, %v1088
        %1090 = vmatmul.bf16.gmra.mxu0 %v750
        %v1091 = vpop.f32.mrf.mxu0
        %v1092 = vadd.f32 0.0, %v1091
        %v1093 = vpop.f32.mrf.mxu0
        %v1094 = vadd.f32 0.0, %v1093
        %1095 = vmatmul.bf16.gmra.mxu0 %v751
        %v1096 = vpop.f32.mrf.mxu0
        %v1097 = vadd.f32 0.0, %v1096
        %v1098 = vpop.f32.mrf.mxu0
        %v1099 = vadd.f32 0.0, %v1098
        %1100 = vmatmul.bf16.gmra.mxu0 %v752
        %v1101 = vpop.f32.mrf.mxu0
        %v1102 = vadd.f32 0.0, %v1101
        %v1103 = vpop.f32.mrf.mxu0
        %v1104 = vadd.f32 0.0, %v1103
        %1105 = vmatmul.bf16.gmra.mxu0 %v753
        %v1106 = vpop.f32.mrf.mxu0
        %v1107 = vadd.f32 0.0, %v1106
        %v1108 = vpop.f32.mrf.mxu0
        %v1109 = vadd.f32 0.0, %v1108
        %1110 = vmatmul.bf16.gmra.mxu0 %v754
        %v1111 = vpop.f32.mrf.mxu0
        %v1112 = vadd.f32 0.0, %v1111
        %v1113 = vpop.f32.mrf.mxu0
        %v1114 = vadd.f32 0.0, %v1113
        %1115 = vmatmul.bf16.gmra.mxu0 %v755
        %v1116 = vpop.f32.mrf.mxu0
        %v1117 = vadd.f32 0.0, %v1116
        %v1118 = vpop.f32.mrf.mxu0
        %v1119 = vadd.f32 0.0, %v1118
        %1120 = vmatmul.bf16.gmra.mxu0 %v756
        %v1121 = vpop.f32.mrf.mxu0
        %v1122 = vadd.f32 0.0, %v1121
        %v1123 = vpop.f32.mrf.mxu0
        %v1124 = vadd.f32 0.0, %v1123
        %1125 = vmatmul.bf16.gmra.mxu0 %v757
        %v1126 = vpop.f32.mrf.mxu0
        %v1127 = vadd.f32 0.0, %v1126
        %v1128 = vpop.f32.mrf.mxu0
        %v1129 = vadd.f32 0.0, %v1128
        %1130 = vmatmul.bf16.gmra.mxu0 %v758
        %v1131 = vpop.f32.mrf.mxu0
        %v1132 = vadd.f32 0.0, %v1131
        %v1133 = vpop.f32.mrf.mxu0
        %v1134 = vadd.f32 0.0, %v1133
        %1135 = vmatmul.bf16.gmra.mxu0 %v759
        %v1136 = vpop.f32.mrf.mxu0
        %v1137 = vadd.f32 0.0, %v1136
        %v1138 = vpop.f32.mrf.mxu0
        %v1139 = vadd.f32 0.0, %v1138
        %1140 = vmatmul.bf16.gmra.mxu0 %v760
        %v1141 = vpop.f32.mrf.mxu0
        %v1142 = vadd.f32 0.0, %v1141
        %v1143 = vpop.f32.mrf.mxu0
        %v1144 = vadd.f32 0.0, %v1143
        %1145 = vmatmul.bf16.gmra.mxu0 %v761
        %v1146 = vpop.f32.mrf.mxu0
        %v1147 = vadd.f32 0.0, %v1146
        %v1148 = vpop.f32.mrf.mxu0
        %v1149 = vadd.f32 0.0, %v1148
        %1150 = vmatmul.bf16.gmra.mxu0 %v762
        %v1151 = vpop.f32.mrf.mxu0
        %v1152 = vadd.f32 0.0, %v1151
        %v1153 = vpop.f32.mrf.mxu0
        %v1154 = vadd.f32 0.0, %v1153
        %1155 = vmatmul.bf16.gmra.mxu0 %v763
        %v1156 = vpop.f32.mrf.mxu0
        %v1157 = vadd.f32 0.0, %v1156
        %v1158 = vpop.f32.mrf.mxu0
        %v1159 = vadd.f32 0.0, %v1158
        %1160 = vmatmul.bf16.gmra.mxu0 %v764
        %v1161 = vpop.f32.mrf.mxu0
        %v1162 = vadd.f32 0.0, %v1161
        %v1163 = vpop.f32.mrf.mxu0
        %v1164 = vadd.f32 0.0, %v1163
        %1165 = vmatmul.bf16.gmra.mxu0 %v765
        %v1166 = vpop.f32.mrf.mxu0
        %v1167 = vadd.f32 0.0, %v1166
        %v1168 = vpop.f32.mrf.mxu0
        %v1169 = vadd.f32 0.0, %v1168
        %1170 = vmatmul.bf16.gmra.mxu0 %v766
        %v1171 = vpop.f32.mrf.mxu0
        %v1172 = vadd.f32 0.0, %v1171
        %v1173 = vpop.f32.mrf.mxu0
        %v1174 = vadd.f32 0.0, %v1173
        %1175 = vmatmul.bf16.gmra.mxu0 %v767
        %v1176 = vpop.f32.mrf.mxu0
        %v1177 = vadd.f32 0.0, %v1176
        %v1178 = vpop.f32.mrf.mxu0
        %v1179 = vadd.f32 0.0, %v1178
        %1180 = vmatmul.bf16.gmra.mxu0 %v768
        %v1181 = vpop.f32.mrf.mxu0
        %v1182 = vadd.f32 0.0, %v1181
        %v1183 = vpop.f32.mrf.mxu0
        %v1184 = vadd.f32 0.0, %v1183
        %1185 = vmatmul.bf16.gmra.mxu0 %v769
        %v1186 = vpop.f32.mrf.mxu0
        %v1187 = vadd.f32 0.0, %v1186
        %v1188 = vpop.f32.mrf.mxu0
        %v1189 = vadd.f32 0.0, %v1188
        %1190 = vmatmul.bf16.gmra.mxu0 %v770
        %v1191 = vpop.f32.mrf.mxu0
        %v1192 = vadd.f32 0.0, %v1191
        %v1193 = vpop.f32.mrf.mxu0
        %v1194 = vadd.f32 0.0, %v1193
        %1195 = vmatmul.bf16.gmra.mxu0 %v771
        %v1196 = vpop.f32.mrf.mxu0
        %v1197 = vadd.f32 0.0, %v1196
        %v1198 = vpop.f32.mrf.mxu0
        %v1199 = vadd.f32 0.0, %v1198
        %1200 = vmatmul.bf16.gmra.mxu0 %v772
        %v1201 = vpop.f32.mrf.mxu0
        %v1202 = vadd.f32 0.0, %v1201
        %v1203 = vpop.f32.mrf.mxu0
        %v1204 = vadd.f32 0.0, %v1203
        %1205 = vmatmul.bf16.gmra.mxu0 %v773
        %v1206 = vpop.f32.mrf.mxu0
        %v1207 = vadd.f32 0.0, %v1206
        %v1208 = vpop.f32.mrf.mxu0
        %v1209 = vadd.f32 0.0, %v1208
        %1210 = vmatmul.bf16.gmra.mxu0 %v774
        %v1211 = vpop.f32.mrf.mxu0
        %v1212 = vadd.f32 0.0, %v1211
        %v1213 = vpop.f32.mrf.mxu0
        %v1214 = vadd.f32 0.0, %v1213
        %1215 = vmatmul.bf16.gmra.mxu0 %v775
        %v1216 = vpop.f32.mrf.mxu0
        %v1217 = vadd.f32 0.0, %v1216
        %v1218 = vpop.f32.mrf.mxu0
        %v1219 = vadd.f32 0.0, %v1218
        %1220 = vmatmul.bf16.gmra.mxu0 %v776
        %v1221 = vpop.f32.mrf.mxu0
        %v1222 = vadd.f32 0.0, %v1221
        %v1223 = vpop.f32.mrf.mxu0
        %v1224 = vadd.f32 0.0, %v1223
        %1225 = vmatmul.bf16.gmra.mxu0 %v777
        %v1226 = vpop.f32.mrf.mxu0
        %v1227 = vadd.f32 0.0, %v1226
        %v1228 = vpop.f32.mrf.mxu0
        %v1229 = vadd.f32 0.0, %v1228
        %1230 = vmatmul.bf16.gmra.mxu0 %v778
        %v1231 = vpop.f32.mrf.mxu0
        %v1232 = vadd.f32 0.0, %v1231
        %v1233 = vpop.f32.mrf.mxu0
        %v1234 = vadd.f32 0.0, %v1233
        %1235 = vmatmul.bf16.gmra.mxu0 %v779
        %v1236 = vpop.f32.mrf.mxu0
        %v1237 = vadd.f32 0.0, %v1236
        %v1238 = vpop.f32.mrf.mxu0
        %v1239 = vadd.f32 0.0, %v1238
        %1240 = vmatmul.bf16.gmra.mxu0 %v780
        %v1241 = vpop.f32.mrf.mxu0
        %v1242 = vadd.f32 0.0, %v1241
        %v1243 = vpop.f32.mrf.mxu0
        %v1244 = vadd.f32 0.0, %v1243
        %1245 = vmatmul.bf16.gmra.mxu0 %v781
        %v1246 = vpop.f32.mrf.mxu0
        %v1247 = vadd.f32 0.0, %v1246
        %v1248 = vpop.f32.mrf.mxu0
        %v1249 = vadd.f32 0.0, %v1248
        %1250 = vmatmul.bf16.gmra.mxu0 %v782
        %v1251 = vpop.f32.mrf.mxu0
        %v1252 = vadd.f32 0.0, %v1251
        %v1253 = vpop.f32.mrf.mxu0
        %v1254 = vadd.f32 0.0, %v1253
        %1255 = vmatmul.bf16.gmra.mxu0 %v783
        %v1256 = vpop.f32.mrf.mxu0
        %v1257 = vadd.f32 0.0, %v1256
        %v1258 = vpop.f32.mrf.mxu0
        %v1259 = vadd.f32 0.0, %v1258
        %1260 = vmatmul.bf16.gmra.mxu0 %v784
        %v1261 = vpop.f32.mrf.mxu0
        %v1262 = vadd.f32 0.0, %v1261
        %v1263 = vpop.f32.mrf.mxu0
        %v1264 = vadd.f32 0.0, %v1263
        %1265 = vmatmul.bf16.gmra.mxu0 %v785
        %v1266 = vpop.f32.mrf.mxu0
        %v1267 = vadd.f32 0.0, %v1266
        %v1268 = vpop.f32.mrf.mxu0
        %v1269 = vadd.f32 0.0, %v1268
        %1270 = vmatmul.bf16.gmra.mxu0 %v786
        %v1271 = vpop.f32.mrf.mxu0
        %v1272 = vadd.f32 0.0, %v1271
        %v1273 = vpop.f32.mrf.mxu0
        %v1274 = vadd.f32 0.0, %v1273
        %1275 = vmatmul.bf16.gmra.mxu0 %v787
        %v1276 = vpop.f32.mrf.mxu0
        %v1277 = vadd.f32 0.0, %v1276
        %v1278 = vpop.f32.mrf.mxu0
        %v1279 = vadd.f32 0.0, %v1278
        %1280 = vmatmul.bf16.gmra.mxu0 %v788
        %v1281 = vpop.f32.mrf.mxu0
        %v1282 = vadd.f32 0.0, %v1281
        %v1283 = vpop.f32.mrf.mxu0
        %v1284 = vadd.f32 0.0, %v1283
        %1285 = vmatmul.bf16.gmra.mxu0 %v789
        %v1286 = vpop.f32.mrf.mxu0
        %v1287 = vadd.f32 0.0, %v1286
        %v1288 = vpop.f32.mrf.mxu0
        %v1289 = vadd.f32 0.0, %v1288
        %1290 = vmatmul.bf16.gmra.mxu0 %v790
        %v1291 = vpop.f32.mrf.mxu0
        %v1292 = vadd.f32 0.0, %v1291
        %v1293 = vpop.f32.mrf.mxu0
        %v1294 = vadd.f32 0.0, %v1293
        %1295 = vmatmul.bf16.gmra.mxu0 %v791
        %v1296 = vpop.f32.mrf.mxu0
        %v1297 = vadd.f32 0.0, %v1296
        %v1298 = vpop.f32.mrf.mxu0
        %v1299 = vadd.f32 0.0, %v1298
        %1300 = vmatmul.bf16.gmra.mxu0 %v792
        %v1301 = vpop.f32.mrf.mxu0
        %v1302 = vadd.f32 0.0, %v1301
        %v1303 = vpop.f32.mrf.mxu0
        %v1304 = vadd.f32 0.0, %v1303
        %1305 = vmatmul.bf16.gmra.mxu0 %v793
        %v1306 = vpop.f32.mrf.mxu0
        %v1307 = vadd.f32 0.0, %v1306
        %v1308 = vpop.f32.mrf.mxu0
        %v1309 = vadd.f32 0.0, %v1308
        %1310 = vmatmul.bf16.gmra.mxu0 %v794
        %v1311 = vpop.f32.mrf.mxu0
        %v1312 = vadd.f32 0.0, %v1311
        %v1313 = vpop.f32.mrf.mxu0
        %v1314 = vadd.f32 0.0, %v1313
        %1315 = vmatmul.bf16.gmra.mxu0 %v795
        %v1316 = vpop.f32.mrf.mxu0
        %v1317 = vadd.f32 0.0, %v1316
        %v1318 = vpop.f32.mrf.mxu0
        %v1319 = vadd.f32 0.0, %v1318
        %1320 = vmatmul.bf16.gmra.mxu0 %v796
        %v1321 = vpop.f32.mrf.mxu0
        %v1322 = vadd.f32 0.0, %v1321
        %v1323 = vpop.f32.mrf.mxu0
        %v1324 = vadd.f32 0.0, %v1323
        %1325 = vmatmul.bf16.gmra.mxu0 %v797
        %v1326 = vpop.f32.mrf.mxu0
        %v1327 = vadd.f32 0.0, %v1326
        %v1328 = vpop.f32.mrf.mxu0
        %v1329 = vadd.f32 0.0, %v1328
        %1330 = vmatmul.bf16.gmra.mxu0 %v798
        %v1331 = vpop.f32.mrf.mxu0
        %v1332 = vadd.f32 0.0, %v1331
        %v1333 = vpop.f32.mrf.mxu0
        %v1334 = vadd.f32 0.0, %v1333
        %1335 = vmatmul.bf16.gmra.mxu0 %v799
        %v1336 = vpop.f32.mrf.mxu0
        %v1337 = vadd.f32 0.0, %v1336
        %v1338 = vpop.f32.mrf.mxu0
        %v1339 = vadd.f32 0.0, %v1338
        %1340 = vmatmul.bf16.gmra.mxu0 %v800
        %v1341 = vpop.f32.mrf.mxu0
        %v1342 = vadd.f32 0.0, %v1341
        %v1343 = vpop.f32.mrf.mxu0
        %v1344 = vadd.f32 0.0, %v1343
        %1345 = vmatmul.bf16.gmra.mxu0 %v801
        %v1346 = vpop.f32.mrf.mxu0
        %v1347 = vadd.f32 0.0, %v1346
        %v1348 = vpop.f32.mrf.mxu0
        %v1349 = vadd.f32 0.0, %v1348
        %1350 = vmatmul.bf16.gmra.mxu0 %v802
        %v1351 = vpop.f32.mrf.mxu0
        %v1352 = vadd.f32 0.0, %v1351
        %v1353 = vpop.f32.mrf.mxu0
        %v1354 = vadd.f32 0.0, %v1353
        %1355 = vmatmul.bf16.gmra.mxu0 %v803
        %v1356 = vpop.f32.mrf.mxu0
        %v1357 = vadd.f32 0.0, %v1356
        %v1358 = vpop.f32.mrf.mxu0
        %v1359 = vadd.f32 0.0, %v1358
        %1360 = vmatmul.bf16.gmra.mxu0 %v804
        %v1361 = vpop.f32.mrf.mxu0
        %v1362 = vadd.f32 0.0, %v1361
        %v1363 = vpop.f32.mrf.mxu0
        %v1364 = vadd.f32 0.0, %v1363
        %1365 = vmatmul.bf16.gmra.mxu0 %v805
        %v1366 = vpop.f32.mrf.mxu0
        %v1367 = vadd.f32 0.0, %v1366
        %v1368 = vpop.f32.mrf.mxu0
        %v1369 = vadd.f32 0.0, %v1368
        %1370 = vmatmul.bf16.gmra.mxu0 %v806
        %v1371 = vpop.f32.mrf.mxu0
        %v1372 = vadd.f32 0.0, %v1371
        %v1373 = vpop.f32.mrf.mxu0
        %v1374 = vadd.f32 0.0, %v1373
        %1375 = vmatmul.bf16.gmra.mxu0 %v807
        %v1376 = vpop.f32.mrf.mxu0
        %v1377 = vadd.f32 0.0, %v1376
        %v1378 = vpop.f32.mrf.mxu0
        %v1379 = vadd.f32 0.0, %v1378
        %1380 = vmatmul.bf16.gmra.mxu0 %v808
        %v1381 = vpop.f32.mrf.mxu0
        %v1382 = vadd.f32 0.0, %v1381
        %v1383 = vpop.f32.mrf.mxu0
        %v1384 = vadd.f32 0.0, %v1383
        %1385 = vmatmul.bf16.gmra.mxu0 %v809
        %v1386 = vpop.f32.mrf.mxu0
        %v1387 = vadd.f32 0.0, %v1386
        %v1388 = vpop.f32.mrf.mxu0
        %v1389 = vadd.f32 0.0, %v1388
        %1390 = vmatmul.bf16.gmra.mxu0 %v810
        %v1391 = vpop.f32.mrf.mxu0
        %v1392 = vadd.f32 0.0, %v1391
        %v1393 = vpop.f32.mrf.mxu0
        %v1394 = vadd.f32 0.0, %v1393
        %1395 = vmatmul.bf16.gmra.mxu0 %v811
        %v1396 = vpop.f32.mrf.mxu0
        %v1397 = vadd.f32 0.0, %v1396
        %v1398 = vpop.f32.mrf.mxu0
        %v1399 = vadd.f32 0.0, %v1398
        %1400 = vmatmul.bf16.gmra.mxu0 %v812
        %v1401 = vpop.f32.mrf.mxu0
        %v1402 = vadd.f32 0.0, %v1401
        %v1403 = vpop.f32.mrf.mxu0
        %v1404 = vadd.f32 0.0, %v1403
        %1405 = vmatmul.bf16.gmra.mxu0 %v813
        %v1406 = vpop.f32.mrf.mxu0
        %v1407 = vadd.f32 0.0, %v1406
        %v1408 = vpop.f32.mrf.mxu0
        %v1409 = vadd.f32 0.0, %v1408
        %1410 = vmatmul.bf16.gmra.mxu0 %v814
        %v1411 = vpop.f32.mrf.mxu0
        %v1412 = vadd.f32 0.0, %v1411
        %v1413 = vpop.f32.mrf.mxu0
        %v1414 = vadd.f32 0.0, %v1413
        %1415 = vdwg.mxu0
        %1416 = vmatpush.bf16.msra.mxu0 %v1012
        %1417 = vmatpush.bf16.msra.mxu0 %v1008
        %1418 = vmatpush.bf16.msra.mxu0 %v1004
        %1419 = vmatpush.bf16.msra.mxu0 %v1000
        %1420 = vmatpush.bf16.msra.mxu0 %v996
        %1421 = vmatpush.bf16.msra.mxu0 %v992
        %1422 = vmatpush.bf16.msra.mxu0 %v988
        %1423 = vmatpush.bf16.msra.mxu0 %v984
        %1424 = vmatmul.bf16.gmra.mxu0 %v743
        %v1425 = vpop.f32.mrf.mxu0
        %v1426 = vadd.f32 0.0, %v1425
        %v1427 = vpop.f32.mrf.mxu0
        %v1428 = vadd.f32 0.0, %v1427
        %1429 = vmatmul.bf16.gmra.mxu0 %v744
        %v1430 = vpop.f32.mrf.mxu0
        %v1431 = vadd.f32 0.0, %v1430
        %v1432 = vpop.f32.mrf.mxu0
        %v1433 = vadd.f32 0.0, %v1432
        %1434 = vmatmul.bf16.gmra.mxu0 %v745
        %v1435 = vpop.f32.mrf.mxu0
        %v1436 = vadd.f32 0.0, %v1435
        %v1437 = vpop.f32.mrf.mxu0
        %v1438 = vadd.f32 0.0, %v1437
        %1439 = vmatmul.bf16.gmra.mxu0 %v746
        %v1440 = vpop.f32.mrf.mxu0
        %v1441 = vadd.f32 0.0, %v1440
        %v1442 = vpop.f32.mrf.mxu0
        %v1443 = vadd.f32 0.0, %v1442
        %1444 = vmatmul.bf16.gmra.mxu0 %v747
        %v1445 = vpop.f32.mrf.mxu0
        %v1446 = vadd.f32 0.0, %v1445
        %v1447 = vpop.f32.mrf.mxu0
        %v1448 = vadd.f32 0.0, %v1447
        %1449 = vmatmul.bf16.gmra.mxu0 %v748
        %v1450 = vpop.f32.mrf.mxu0
        %v1451 = vadd.f32 0.0, %v1450
        %v1452 = vpop.f32.mrf.mxu0
        %v1453 = vadd.f32 0.0, %v1452
        %1454 = vmatmul.bf16.gmra.mxu0 %v749
        %v1455 = vpop.f32.mrf.mxu0
        %v1456 = vadd.f32 0.0, %v1455
        %v1457 = vpop.f32.mrf.mxu0
        %v1458 = vadd.f32 0.0, %v1457
        %1459 = vmatmul.bf16.gmra.mxu0 %v750
        %v1460 = vpop.f32.mrf.mxu0
        %v1461 = vadd.f32 0.0, %v1460
        %v1462 = vpop.f32.mrf.mxu0
        %v1463 = vadd.f32 0.0, %v1462
        %1464 = vmatmul.bf16.gmra.mxu0 %v751
        %v1465 = vpop.f32.mrf.mxu0
        %v1466 = vadd.f32 0.0, %v1465
        %v1467 = vpop.f32.mrf.mxu0
        %v1468 = vadd.f32 0.0, %v1467
        %1469 = vmatmul.bf16.gmra.mxu0 %v752
        %v1470 = vpop.f32.mrf.mxu0
        %v1471 = vadd.f32 0.0, %v1470
        %v1472 = vpop.f32.mrf.mxu0
        %v1473 = vadd.f32 0.0, %v1472
        %1474 = vmatmul.bf16.gmra.mxu0 %v753
        %v1475 = vpop.f32.mrf.mxu0
        %v1476 = vadd.f32 0.0, %v1475
        %v1477 = vpop.f32.mrf.mxu0
        %v1478 = vadd.f32 0.0, %v1477
        %1479 = vmatmul.bf16.gmra.mxu0 %v754
        %v1480 = vpop.f32.mrf.mxu0
        %v1481 = vadd.f32 0.0, %v1480
        %v1482 = vpop.f32.mrf.mxu0
        %v1483 = vadd.f32 0.0, %v1482
        %1484 = vmatmul.bf16.gmra.mxu0 %v755
        %v1485 = vpop.f32.mrf.mxu0
        %v1486 = vadd.f32 0.0, %v1485
        %v1487 = vpop.f32.mrf.mxu0
        %v1488 = vadd.f32 0.0, %v1487
        %1489 = vmatmul.bf16.gmra.mxu0 %v756
        %v1490 = vpop.f32.mrf.mxu0
        %v1491 = vadd.f32 0.0, %v1490
        %v1492 = vpop.f32.mrf.mxu0
        %v1493 = vadd.f32 0.0, %v1492
        %1494 = vmatmul.bf16.gmra.mxu0 %v757
        %v1495 = vpop.f32.mrf.mxu0
        %v1496 = vadd.f32 0.0, %v1495
        %v1497 = vpop.f32.mrf.mxu0
        %v1498 = vadd.f32 0.0, %v1497
        %1499 = vmatmul.bf16.gmra.mxu0 %v758
        %v1500 = vpop.f32.mrf.mxu0
        %v1501 = vadd.f32 0.0, %v1500
        %v1502 = vpop.f32.mrf.mxu0
        %v1503 = vadd.f32 0.0, %v1502
        %1504 = vmatmul.bf16.gmra.mxu0 %v759
        %v1505 = vpop.f32.mrf.mxu0
        %v1506 = vadd.f32 0.0, %v1505
        %v1507 = vpop.f32.mrf.mxu0
        %v1508 = vadd.f32 0.0, %v1507
        %1509 = vmatmul.bf16.gmra.mxu0 %v760
        %v1510 = vpop.f32.mrf.mxu0
        %v1511 = vadd.f32 0.0, %v1510
        %v1512 = vpop.f32.mrf.mxu0
        %v1513 = vadd.f32 0.0, %v1512
        %1514 = vmatmul.bf16.gmra.mxu0 %v761
        %v1515 = vpop.f32.mrf.mxu0
        %v1516 = vadd.f32 0.0, %v1515
        %v1517 = vpop.f32.mrf.mxu0
        %v1518 = vadd.f32 0.0, %v1517
        %1519 = vmatmul.bf16.gmra.mxu0 %v762
        %v1520 = vpop.f32.mrf.mxu0
        %v1521 = vadd.f32 0.0, %v1520
        %v1522 = vpop.f32.mrf.mxu0
        %v1523 = vadd.f32 0.0, %v1522
        %1524 = vmatmul.bf16.gmra.mxu0 %v763
        %v1525 = vpop.f32.mrf.mxu0
        %v1526 = vadd.f32 0.0, %v1525
        %v1527 = vpop.f32.mrf.mxu0
        %v1528 = vadd.f32 0.0, %v1527
        %1529 = vmatmul.bf16.gmra.mxu0 %v764
        %v1530 = vpop.f32.mrf.mxu0
        %v1531 = vadd.f32 0.0, %v1530
        %v1532 = vpop.f32.mrf.mxu0
        %v1533 = vadd.f32 0.0, %v1532
        %1534 = vmatmul.bf16.gmra.mxu0 %v765
        %v1535 = vpop.f32.mrf.mxu0
        %v1536 = vadd.f32 0.0, %v1535
        %v1537 = vpop.f32.mrf.mxu0
        %v1538 = vadd.f32 0.0, %v1537
        %1539 = vmatmul.bf16.gmra.mxu0 %v766
        %v1540 = vpop.f32.mrf.mxu0
        %v1541 = vadd.f32 0.0, %v1540
        %v1542 = vpop.f32.mrf.mxu0
        %v1543 = vadd.f32 0.0, %v1542
        %1544 = vmatmul.bf16.gmra.mxu0 %v767
        %v1545 = vpop.f32.mrf.mxu0
        %v1546 = vadd.f32 0.0, %v1545
        %v1547 = vpop.f32.mrf.mxu0
        %v1548 = vadd.f32 0.0, %v1547
        %1549 = vmatmul.bf16.gmra.mxu0 %v768
        %v1550 = vpop.f32.mrf.mxu0
        %v1551 = vadd.f32 0.0, %v1550
        %v1552 = vpop.f32.mrf.mxu0
        %v1553 = vadd.f32 0.0, %v1552
        %1554 = vmatmul.bf16.gmra.mxu0 %v769
        %v1555 = vpop.f32.mrf.mxu0
        %v1556 = vadd.f32 0.0, %v1555
        %v1557 = vpop.f32.mrf.mxu0
        %v1558 = vadd.f32 0.0, %v1557
        %1559 = vmatmul.bf16.gmra.mxu0 %v770
        %v1560 = vpop.f32.mrf.mxu0
        %v1561 = vadd.f32 0.0, %v1560
        %v1562 = vpop.f32.mrf.mxu0
        %v1563 = vadd.f32 0.0, %v1562
        %1564 = vmatmul.bf16.gmra.mxu0 %v771
        %v1565 = vpop.f32.mrf.mxu0
        %v1566 = vadd.f32 0.0, %v1565
        %v1567 = vpop.f32.mrf.mxu0
        %v1568 = vadd.f32 0.0, %v1567
        %1569 = vmatmul.bf16.gmra.mxu0 %v772
        %v1570 = vpop.f32.mrf.mxu0
        %v1571 = vadd.f32 0.0, %v1570
        %v1572 = vpop.f32.mrf.mxu0
        %v1573 = vadd.f32 0.0, %v1572
        %1574 = vmatmul.bf16.gmra.mxu0 %v773
        %v1575 = vpop.f32.mrf.mxu0
        %v1576 = vadd.f32 0.0, %v1575
        %v1577 = vpop.f32.mrf.mxu0
        %v1578 = vadd.f32 0.0, %v1577
        %1579 = vmatmul.bf16.gmra.mxu0 %v774
        %v1580 = vpop.f32.mrf.mxu0
        %v1581 = vadd.f32 0.0, %v1580
        %v1582 = vpop.f32.mrf.mxu0
        %v1583 = vadd.f32 0.0, %v1582
        %1584 = vmatmul.bf16.gmra.mxu0 %v775
        %v1585 = vpop.f32.mrf.mxu0
        %v1586 = vadd.f32 0.0, %v1585
        %v1587 = vpop.f32.mrf.mxu0
        %v1588 = vadd.f32 0.0, %v1587
        %1589 = vmatmul.bf16.gmra.mxu0 %v776
        %v1590 = vpop.f32.mrf.mxu0
        %v1591 = vadd.f32 0.0, %v1590
        %v1592 = vpop.f32.mrf.mxu0
        %v1593 = vadd.f32 0.0, %v1592
        %1594 = vmatmul.bf16.gmra.mxu0 %v777
        %v1595 = vpop.f32.mrf.mxu0
        %v1596 = vadd.f32 0.0, %v1595
        %v1597 = vpop.f32.mrf.mxu0
        %v1598 = vadd.f32 0.0, %v1597
        %1599 = vmatmul.bf16.gmra.mxu0 %v778
        %v1600 = vpop.f32.mrf.mxu0
        %v1601 = vadd.f32 0.0, %v1600
        %v1602 = vpop.f32.mrf.mxu0
        %v1603 = vadd.f32 0.0, %v1602
        %1604 = vmatmul.bf16.gmra.mxu0 %v779
        %v1605 = vpop.f32.mrf.mxu0
        %v1606 = vadd.f32 0.0, %v1605
        %v1607 = vpop.f32.mrf.mxu0
        %v1608 = vadd.f32 0.0, %v1607
        %1609 = vmatmul.bf16.gmra.mxu0 %v780
        %v1610 = vpop.f32.mrf.mxu0
        %v1611 = vadd.f32 0.0, %v1610
        %v1612 = vpop.f32.mrf.mxu0
        %v1613 = vadd.f32 0.0, %v1612
        %1614 = vmatmul.bf16.gmra.mxu0 %v781
        %v1615 = vpop.f32.mrf.mxu0
        %v1616 = vadd.f32 0.0, %v1615
        %v1617 = vpop.f32.mrf.mxu0
        %v1618 = vadd.f32 0.0, %v1617
        %1619 = vmatmul.bf16.gmra.mxu0 %v782
        %v1620 = vpop.f32.mrf.mxu0
        %v1621 = vadd.f32 0.0, %v1620
        %v1622 = vpop.f32.mrf.mxu0
        %v1623 = vadd.f32 0.0, %v1622
        %1624 = vmatmul.bf16.gmra.mxu0 %v783
        %v1625 = vpop.f32.mrf.mxu0
        %v1626 = vadd.f32 0.0, %v1625
        %v1627 = vpop.f32.mrf.mxu0
        %v1628 = vadd.f32 0.0, %v1627
        %1629 = vmatmul.bf16.gmra.mxu0 %v784
        %v1630 = vpop.f32.mrf.mxu0
        %v1631 = vadd.f32 0.0, %v1630
        %v1632 = vpop.f32.mrf.mxu0
        %v1633 = vadd.f32 0.0, %v1632
        %1634 = vmatmul.bf16.gmra.mxu0 %v785
        %v1635 = vpop.f32.mrf.mxu0
        %v1636 = vadd.f32 0.0, %v1635
        %v1637 = vpop.f32.mrf.mxu0
        %v1638 = vadd.f32 0.0, %v1637
        %1639 = vmatmul.bf16.gmra.mxu0 %v786
        %v1640 = vpop.f32.mrf.mxu0
        %v1641 = vadd.f32 0.0, %v1640
        %v1642 = vpop.f32.mrf.mxu0
        %v1643 = vadd.f32 0.0, %v1642
        %1644 = vmatmul.bf16.gmra.mxu0 %v787
        %v1645 = vpop.f32.mrf.mxu0
        %v1646 = vadd.f32 0.0, %v1645
        %v1647 = vpop.f32.mrf.mxu0
        %v1648 = vadd.f32 0.0, %v1647
        %1649 = vmatmul.bf16.gmra.mxu0 %v788
        %v1650 = vpop.f32.mrf.mxu0
        %v1651 = vadd.f32 0.0, %v1650
        %v1652 = vpop.f32.mrf.mxu0
        %v1653 = vadd.f32 0.0, %v1652
        %1654 = vmatmul.bf16.gmra.mxu0 %v789
        %v1655 = vpop.f32.mrf.mxu0
        %v1656 = vadd.f32 0.0, %v1655
        %v1657 = vpop.f32.mrf.mxu0
        %v1658 = vadd.f32 0.0, %v1657
        %1659 = vmatmul.bf16.gmra.mxu0 %v790
        %v1660 = vpop.f32.mrf.mxu0
        %v1661 = vadd.f32 0.0, %v1660
        %v1662 = vpop.f32.mrf.mxu0
        %v1663 = vadd.f32 0.0, %v1662
        %1664 = vmatmul.bf16.gmra.mxu0 %v791
        %v1665 = vpop.f32.mrf.mxu0
        %v1666 = vadd.f32 0.0, %v1665
        %v1667 = vpop.f32.mrf.mxu0
        %v1668 = vadd.f32 0.0, %v1667
        %1669 = vmatmul.bf16.gmra.mxu0 %v792
        %v1670 = vpop.f32.mrf.mxu0
        %v1671 = vadd.f32 0.0, %v1670
        %v1672 = vpop.f32.mrf.mxu0
        %v1673 = vadd.f32 0.0, %v1672
        %1674 = vmatmul.bf16.gmra.mxu0 %v793
        %v1675 = vpop.f32.mrf.mxu0
        %v1676 = vadd.f32 0.0, %v1675
        %v1677 = vpop.f32.mrf.mxu0
        %v1678 = vadd.f32 0.0, %v1677
        %1679 = vmatmul.bf16.gmra.mxu0 %v794
        %v1680 = vpop.f32.mrf.mxu0
        %v1681 = vadd.f32 0.0, %v1680
        %v1682 = vpop.f32.mrf.mxu0
        %v1683 = vadd.f32 0.0, %v1682
        %1684 = vmatmul.bf16.gmra.mxu0 %v795
        %v1685 = vpop.f32.mrf.mxu0
        %v1686 = vadd.f32 0.0, %v1685
        %v1687 = vpop.f32.mrf.mxu0
        %v1688 = vadd.f32 0.0, %v1687
        %1689 = vmatmul.bf16.gmra.mxu0 %v796
        %v1690 = vpop.f32.mrf.mxu0
        %v1691 = vadd.f32 0.0, %v1690
        %v1692 = vpop.f32.mrf.mxu0
        %v1693 = vadd.f32 0.0, %v1692
        %1694 = vmatmul.bf16.gmra.mxu0 %v797
        %v1695 = vpop.f32.mrf.mxu0
        %v1696 = vadd.f32 0.0, %v1695
        %v1697 = vpop.f32.mrf.mxu0
        %v1698 = vadd.f32 0.0, %v1697
        %1699 = vmatmul.bf16.gmra.mxu0 %v798
        %v1700 = vpop.f32.mrf.mxu0
        %v1701 = vadd.f32 0.0, %v1700
        %v1702 = vpop.f32.mrf.mxu0
        %v1703 = vadd.f32 0.0, %v1702
        %1704 = vmatmul.bf16.gmra.mxu0 %v799
        %v1705 = vpop.f32.mrf.mxu0
        %v1706 = vadd.f32 0.0, %v1705
        %v1707 = vpop.f32.mrf.mxu0
        %v1708 = vadd.f32 0.0, %v1707
        %1709 = vmatmul.bf16.gmra.mxu0 %v800
        %v1710 = vpop.f32.mrf.mxu0
        %v1711 = vadd.f32 0.0, %v1710
        %v1712 = vpop.f32.mrf.mxu0
        %v1713 = vadd.f32 0.0, %v1712
        %1714 = vmatmul.bf16.gmra.mxu0 %v801
        %v1715 = vpop.f32.mrf.mxu0
        %v1716 = vadd.f32 0.0, %v1715
        %v1717 = vpop.f32.mrf.mxu0
        %v1718 = vadd.f32 0.0, %v1717
        %1719 = vmatmul.bf16.gmra.mxu0 %v802
        %v1720 = vpop.f32.mrf.mxu0
        %v1721 = vadd.f32 0.0, %v1720
        %v1722 = vpop.f32.mrf.mxu0
        %v1723 = vadd.f32 0.0, %v1722
        %1724 = vmatmul.bf16.gmra.mxu0 %v803
        %v1725 = vpop.f32.mrf.mxu0
        %v1726 = vadd.f32 0.0, %v1725
        %v1727 = vpop.f32.mrf.mxu0
        %v1728 = vadd.f32 0.0, %v1727
        %1729 = vmatmul.bf16.gmra.mxu0 %v804
        %v1730 = vpop.f32.mrf.mxu0
        %v1731 = vadd.f32 0.0, %v1730
        %v1732 = vpop.f32.mrf.mxu0
        %v1733 = vadd.f32 0.0, %v1732
        %1734 = vmatmul.bf16.gmra.mxu0 %v805
        %v1735 = vpop.f32.mrf.mxu0
        %v1736 = vadd.f32 0.0, %v1735
        %v1737 = vpop.f32.mrf.mxu0
        %v1738 = vadd.f32 0.0, %v1737
        %1739 = vmatmul.bf16.gmra.mxu0 %v806
        %v1740 = vpop.f32.mrf.mxu0
        %v1741 = vadd.f32 0.0, %v1740
        %v1742 = vpop.f32.mrf.mxu0
        %v1743 = vadd.f32 0.0, %v1742
        %1744 = vmatmul.bf16.gmra.mxu0 %v807
        %v1745 = vpop.f32.mrf.mxu0
        %v1746 = vadd.f32 0.0, %v1745
        %v1747 = vpop.f32.mrf.mxu0
        %v1748 = vadd.f32 0.0, %v1747
        %1749 = vmatmul.bf16.gmra.mxu0 %v808
        %v1750 = vpop.f32.mrf.mxu0
        %v1751 = vadd.f32 0.0, %v1750
        %v1752 = vpop.f32.mrf.mxu0
        %v1753 = vadd.f32 0.0, %v1752
        %1754 = vmatmul.bf16.gmra.mxu0 %v809
        %v1755 = vpop.f32.mrf.mxu0
        %v1756 = vadd.f32 0.0, %v1755
        %v1757 = vpop.f32.mrf.mxu0
        %v1758 = vadd.f32 0.0, %v1757
        %1759 = vmatmul.bf16.gmra.mxu0 %v810
        %v1760 = vpop.f32.mrf.mxu0
        %v1761 = vadd.f32 0.0, %v1760
        %v1762 = vpop.f32.mrf.mxu0
        %v1763 = vadd.f32 0.0, %v1762
        %1764 = vmatmul.bf16.gmra.mxu0 %v811
        %v1765 = vpop.f32.mrf.mxu0
        %v1766 = vadd.f32 0.0, %v1765
        %v1767 = vpop.f32.mrf.mxu0
        %v1768 = vadd.f32 0.0, %v1767
        %1769 = vmatmul.bf16.gmra.mxu0 %v812
        %v1770 = vpop.f32.mrf.mxu0
        %v1771 = vadd.f32 0.0, %v1770
        %v1772 = vpop.f32.mrf.mxu0
        %v1773 = vadd.f32 0.0, %v1772
        %1774 = vmatmul.bf16.gmra.mxu0 %v813
        %v1775 = vpop.f32.mrf.mxu0
        %v1776 = vadd.f32 0.0, %v1775
        %v1777 = vpop.f32.mrf.mxu0
        %v1778 = vadd.f32 0.0, %v1777
        %1779 = vmatmul.bf16.gmra.mxu0 %v814
        %v1780 = vpop.f32.mrf.mxu0
        %v1781 = vadd.f32 0.0, %v1780
        %v1782 = vpop.f32.mrf.mxu0
        %v1783 = vadd.f32 0.0, %v1782
        %1784 = vdwg.mxu0
        %1785 = vmatpush.bf16.msra.mxu0 %v1013
        %1786 = vmatpush.bf16.msra.mxu0 %v1009
        %1787 = vmatpush.bf16.msra.mxu0 %v1005
        %1788 = vmatpush.bf16.msra.mxu0 %v1001
        %1789 = vmatpush.bf16.msra.mxu0 %v997
        %1790 = vmatpush.bf16.msra.mxu0 %v993
        %1791 = vmatpush.bf16.msra.mxu0 %v989
        %1792 = vmatpush.bf16.msra.mxu0 %v985
        %1793 = vmatmul.bf16.gmra.mxu0 %v743
        %v1794 = vpop.f32.mrf.mxu0
        %v1795 = vadd.f32 0.0, %v1794
        %v1796 = vpop.f32.mrf.mxu0
        %v1797 = vadd.f32 0.0, %v1796
        %1798 = vmatmul.bf16.gmra.mxu0 %v744
        %v1799 = vpop.f32.mrf.mxu0
        %v1800 = vadd.f32 0.0, %v1799
        %v1801 = vpop.f32.mrf.mxu0
        %v1802 = vadd.f32 0.0, %v1801
        %1803 = vmatmul.bf16.gmra.mxu0 %v745
        %v1804 = vpop.f32.mrf.mxu0
        %v1805 = vadd.f32 0.0, %v1804
        %v1806 = vpop.f32.mrf.mxu0
        %v1807 = vadd.f32 0.0, %v1806
        %1808 = vmatmul.bf16.gmra.mxu0 %v746
        %v1809 = vpop.f32.mrf.mxu0
        %v1810 = vadd.f32 0.0, %v1809
        %v1811 = vpop.f32.mrf.mxu0
        %v1812 = vadd.f32 0.0, %v1811
        %1813 = vmatmul.bf16.gmra.mxu0 %v747
        %v1814 = vpop.f32.mrf.mxu0
        %v1815 = vadd.f32 0.0, %v1814
        %v1816 = vpop.f32.mrf.mxu0
        %v1817 = vadd.f32 0.0, %v1816
        %1818 = vmatmul.bf16.gmra.mxu0 %v748
        %v1819 = vpop.f32.mrf.mxu0
        %v1820 = vadd.f32 0.0, %v1819
        %v1821 = vpop.f32.mrf.mxu0
        %v1822 = vadd.f32 0.0, %v1821
        %1823 = vmatmul.bf16.gmra.mxu0 %v749
        %v1824 = vpop.f32.mrf.mxu0
        %v1825 = vadd.f32 0.0, %v1824
        %v1826 = vpop.f32.mrf.mxu0
        %v1827 = vadd.f32 0.0, %v1826
        %1828 = vmatmul.bf16.gmra.mxu0 %v750
        %v1829 = vpop.f32.mrf.mxu0
        %v1830 = vadd.f32 0.0, %v1829
        %v1831 = vpop.f32.mrf.mxu0
        %v1832 = vadd.f32 0.0, %v1831
        %1833 = vmatmul.bf16.gmra.mxu0 %v751
        %v1834 = vpop.f32.mrf.mxu0
        %v1835 = vadd.f32 0.0, %v1834
        %v1836 = vpop.f32.mrf.mxu0
        %v1837 = vadd.f32 0.0, %v1836
        %1838 = vmatmul.bf16.gmra.mxu0 %v752
        %v1839 = vpop.f32.mrf.mxu0
        %v1840 = vadd.f32 0.0, %v1839
        %v1841 = vpop.f32.mrf.mxu0
        %v1842 = vadd.f32 0.0, %v1841
        %1843 = vmatmul.bf16.gmra.mxu0 %v753
        %v1844 = vpop.f32.mrf.mxu0
        %v1845 = vadd.f32 0.0, %v1844
        %v1846 = vpop.f32.mrf.mxu0
        %v1847 = vadd.f32 0.0, %v1846
        %1848 = vmatmul.bf16.gmra.mxu0 %v754
        %v1849 = vpop.f32.mrf.mxu0
        %v1850 = vadd.f32 0.0, %v1849
        %v1851 = vpop.f32.mrf.mxu0
        %v1852 = vadd.f32 0.0, %v1851
        %1853 = vmatmul.bf16.gmra.mxu0 %v755
        %v1854 = vpop.f32.mrf.mxu0
        %v1855 = vadd.f32 0.0, %v1854
        %v1856 = vpop.f32.mrf.mxu0
        %v1857 = vadd.f32 0.0, %v1856
        %1858 = vmatmul.bf16.gmra.mxu0 %v756
        %v1859 = vpop.f32.mrf.mxu0
        %v1860 = vadd.f32 0.0, %v1859
        %v1861 = vpop.f32.mrf.mxu0
        %v1862 = vadd.f32 0.0, %v1861
        %1863 = vmatmul.bf16.gmra.mxu0 %v757
        %v1864 = vpop.f32.mrf.mxu0
        %v1865 = vadd.f32 0.0, %v1864
        %v1866 = vpop.f32.mrf.mxu0
        %v1867 = vadd.f32 0.0, %v1866
        %1868 = vmatmul.bf16.gmra.mxu0 %v758
        %v1869 = vpop.f32.mrf.mxu0
        %v1870 = vadd.f32 0.0, %v1869
        %v1871 = vpop.f32.mrf.mxu0
        %v1872 = vadd.f32 0.0, %v1871
        %1873 = vmatmul.bf16.gmra.mxu0 %v759
        %v1874 = vpop.f32.mrf.mxu0
        %v1875 = vadd.f32 0.0, %v1874
        %v1876 = vpop.f32.mrf.mxu0
        %v1877 = vadd.f32 0.0, %v1876
        %1878 = vmatmul.bf16.gmra.mxu0 %v760
        %v1879 = vpop.f32.mrf.mxu0
        %v1880 = vadd.f32 0.0, %v1879
        %v1881 = vpop.f32.mrf.mxu0
        %v1882 = vadd.f32 0.0, %v1881
        %1883 = vmatmul.bf16.gmra.mxu0 %v761
        %v1884 = vpop.f32.mrf.mxu0
        %v1885 = vadd.f32 0.0, %v1884
        %v1886 = vpop.f32.mrf.mxu0
        %v1887 = vadd.f32 0.0, %v1886
        %1888 = vmatmul.bf16.gmra.mxu0 %v762
        %v1889 = vpop.f32.mrf.mxu0
        %v1890 = vadd.f32 0.0, %v1889
        %v1891 = vpop.f32.mrf.mxu0
        %v1892 = vadd.f32 0.0, %v1891
        %1893 = vmatmul.bf16.gmra.mxu0 %v763
        %v1894 = vpop.f32.mrf.mxu0
        %v1895 = vadd.f32 0.0, %v1894
        %v1896 = vpop.f32.mrf.mxu0
        %v1897 = vadd.f32 0.0, %v1896
        %1898 = vmatmul.bf16.gmra.mxu0 %v764
        %v1899 = vpop.f32.mrf.mxu0
        %v1900 = vadd.f32 0.0, %v1899
        %v1901 = vpop.f32.mrf.mxu0
        %v1902 = vadd.f32 0.0, %v1901
        %1903 = vmatmul.bf16.gmra.mxu0 %v765
        %v1904 = vpop.f32.mrf.mxu0
        %v1905 = vadd.f32 0.0, %v1904
        %v1906 = vpop.f32.mrf.mxu0
        %v1907 = vadd.f32 0.0, %v1906
        %1908 = vmatmul.bf16.gmra.mxu0 %v766
        %v1909 = vpop.f32.mrf.mxu0
        %v1910 = vadd.f32 0.0, %v1909
        %v1911 = vpop.f32.mrf.mxu0
        %v1912 = vadd.f32 0.0, %v1911
        %1913 = vmatmul.bf16.gmra.mxu0 %v767
        %v1914 = vpop.f32.mrf.mxu0
        %v1915 = vadd.f32 0.0, %v1914
        %v1916 = vpop.f32.mrf.mxu0
        %v1917 = vadd.f32 0.0, %v1916
        %1918 = vmatmul.bf16.gmra.mxu0 %v768
        %v1919 = vpop.f32.mrf.mxu0
        %v1920 = vadd.f32 0.0, %v1919
        %v1921 = vpop.f32.mrf.mxu0
        %v1922 = vadd.f32 0.0, %v1921
        %1923 = vmatmul.bf16.gmra.mxu0 %v769
        %v1924 = vpop.f32.mrf.mxu0
        %v1925 = vadd.f32 0.0, %v1924
        %v1926 = vpop.f32.mrf.mxu0
        %v1927 = vadd.f32 0.0, %v1926
        %1928 = vmatmul.bf16.gmra.mxu0 %v770
        %v1929 = vpop.f32.mrf.mxu0
        %v1930 = vadd.f32 0.0, %v1929
        %v1931 = vpop.f32.mrf.mxu0
        %v1932 = vadd.f32 0.0, %v1931
        %1933 = vmatmul.bf16.gmra.mxu0 %v771
        %v1934 = vpop.f32.mrf.mxu0
        %v1935 = vadd.f32 0.0, %v1934
        %v1936 = vpop.f32.mrf.mxu0
        %v1937 = vadd.f32 0.0, %v1936
        %1938 = vmatmul.bf16.gmra.mxu0 %v772
        %v1939 = vpop.f32.mrf.mxu0
        %v1940 = vadd.f32 0.0, %v1939
        %v1941 = vpop.f32.mrf.mxu0
        %v1942 = vadd.f32 0.0, %v1941
        %1943 = vmatmul.bf16.gmra.mxu0 %v773
        %v1944 = vpop.f32.mrf.mxu0
        %v1945 = vadd.f32 0.0, %v1944
        %v1946 = vpop.f32.mrf.mxu0
        %v1947 = vadd.f32 0.0, %v1946
        %1948 = vmatmul.bf16.gmra.mxu0 %v774
        %v1949 = vpop.f32.mrf.mxu0
        %v1950 = vadd.f32 0.0, %v1949
        %v1951 = vpop.f32.mrf.mxu0
        %v1952 = vadd.f32 0.0, %v1951
        %1953 = vmatmul.bf16.gmra.mxu0 %v775
        %v1954 = vpop.f32.mrf.mxu0
        %v1955 = vadd.f32 0.0, %v1954
        %v1956 = vpop.f32.mrf.mxu0
        %v1957 = vadd.f32 0.0, %v1956
        %1958 = vmatmul.bf16.gmra.mxu0 %v776
        %v1959 = vpop.f32.mrf.mxu0
        %v1960 = vadd.f32 0.0, %v1959
        %v1961 = vpop.f32.mrf.mxu0
        %v1962 = vadd.f32 0.0, %v1961
        %1963 = vmatmul.bf16.gmra.mxu0 %v777
        %v1964 = vpop.f32.mrf.mxu0
        %v1965 = vadd.f32 0.0, %v1964
        %v1966 = vpop.f32.mrf.mxu0
        %v1967 = vadd.f32 0.0, %v1966
        %1968 = vmatmul.bf16.gmra.mxu0 %v778
        %v1969 = vpop.f32.mrf.mxu0
        %v1970 = vadd.f32 0.0, %v1969
        %v1971 = vpop.f32.mrf.mxu0
        %v1972 = vadd.f32 0.0, %v1971
        %1973 = vmatmul.bf16.gmra.mxu0 %v779
        %v1974 = vpop.f32.mrf.mxu0
        %v1975 = vadd.f32 0.0, %v1974
        %v1976 = vpop.f32.mrf.mxu0
        %v1977 = vadd.f32 0.0, %v1976
        %1978 = vmatmul.bf16.gmra.mxu0 %v780
        %v1979 = vpop.f32.mrf.mxu0
        %v1980 = vadd.f32 0.0, %v1979
        %v1981 = vpop.f32.mrf.mxu0
        %v1982 = vadd.f32 0.0, %v1981
        %1983 = vmatmul.bf16.gmra.mxu0 %v781
        %v1984 = vpop.f32.mrf.mxu0
        %v1985 = vadd.f32 0.0, %v1984
        %v1986 = vpop.f32.mrf.mxu0
        %v1987 = vadd.f32 0.0, %v1986
        %1988 = vmatmul.bf16.gmra.mxu0 %v782
        %v1989 = vpop.f32.mrf.mxu0
        %v1990 = vadd.f32 0.0, %v1989
        %v1991 = vpop.f32.mrf.mxu0
        %v1992 = vadd.f32 0.0, %v1991
        %1993 = vmatmul.bf16.gmra.mxu0 %v783
        %v1994 = vpop.f32.mrf.mxu0
        %v1995 = vadd.f32 0.0, %v1994
        %v1996 = vpop.f32.mrf.mxu0
        %v1997 = vadd.f32 0.0, %v1996
        %1998 = vmatmul.bf16.gmra.mxu0 %v784
        %v1999 = vpop.f32.mrf.mxu0
        %v2000 = vadd.f32 0.0, %v1999
        %v2001 = vpop.f32.mrf.mxu0
        %v2002 = vadd.f32 0.0, %v2001
        %2003 = vmatmul.bf16.gmra.mxu0 %v785
        %v2004 = vpop.f32.mrf.mxu0
        %v2005 = vadd.f32 0.0, %v2004
        %v2006 = vpop.f32.mrf.mxu0
        %v2007 = vadd.f32 0.0, %v2006
        %2008 = vmatmul.bf16.gmra.mxu0 %v786
        %v2009 = vpop.f32.mrf.mxu0
        %v2010 = vadd.f32 0.0, %v2009
        %v2011 = vpop.f32.mrf.mxu0
        %v2012 = vadd.f32 0.0, %v2011
        %2013 = vmatmul.bf16.gmra.mxu0 %v787
        %v2014 = vpop.f32.mrf.mxu0
        %v2015 = vadd.f32 0.0, %v2014
        %v2016 = vpop.f32.mrf.mxu0
        %v2017 = vadd.f32 0.0, %v2016
        %2018 = vmatmul.bf16.gmra.mxu0 %v788
        %v2019 = vpop.f32.mrf.mxu0
        %v2020 = vadd.f32 0.0, %v2019
        %v2021 = vpop.f32.mrf.mxu0
        %v2022 = vadd.f32 0.0, %v2021
        %2023 = vmatmul.bf16.gmra.mxu0 %v789
        %v2024 = vpop.f32.mrf.mxu0
        %v2025 = vadd.f32 0.0, %v2024
        %v2026 = vpop.f32.mrf.mxu0
        %v2027 = vadd.f32 0.0, %v2026
        %2028 = vmatmul.bf16.gmra.mxu0 %v790
        %v2029 = vpop.f32.mrf.mxu0
        %v2030 = vadd.f32 0.0, %v2029
        %v2031 = vpop.f32.mrf.mxu0
        %v2032 = vadd.f32 0.0, %v2031
        %2033 = vmatmul.bf16.gmra.mxu0 %v791
        %v2034 = vpop.f32.mrf.mxu0
        %v2035 = vadd.f32 0.0, %v2034
        %v2036 = vpop.f32.mrf.mxu0
        %v2037 = vadd.f32 0.0, %v2036
        %2038 = vmatmul.bf16.gmra.mxu0 %v792
        %v2039 = vpop.f32.mrf.mxu0
        %v2040 = vadd.f32 0.0, %v2039
        %v2041 = vpop.f32.mrf.mxu0
        %v2042 = vadd.f32 0.0, %v2041
        %2043 = vmatmul.bf16.gmra.mxu0 %v793
        %v2044 = vpop.f32.mrf.mxu0
        %v2045 = vadd.f32 0.0, %v2044
        %v2046 = vpop.f32.mrf.mxu0
        %v2047 = vadd.f32 0.0, %v2046
        %2048 = vmatmul.bf16.gmra.mxu0 %v794
        %v2049 = vpop.f32.mrf.mxu0
        %v2050 = vadd.f32 0.0, %v2049
        %v2051 = vpop.f32.mrf.mxu0
        %v2052 = vadd.f32 0.0, %v2051
        %2053 = vmatmul.bf16.gmra.mxu0 %v795
        %v2054 = vpop.f32.mrf.mxu0
        %v2055 = vadd.f32 0.0, %v2054
        %v2056 = vpop.f32.mrf.mxu0
        %v2057 = vadd.f32 0.0, %v2056
        %2058 = vmatmul.bf16.gmra.mxu0 %v796
        %v2059 = vpop.f32.mrf.mxu0
        %v2060 = vadd.f32 0.0, %v2059
        %v2061 = vpop.f32.mrf.mxu0
        %v2062 = vadd.f32 0.0, %v2061
        %2063 = vmatmul.bf16.gmra.mxu0 %v797
        %v2064 = vpop.f32.mrf.mxu0
        %v2065 = vadd.f32 0.0, %v2064
        %v2066 = vpop.f32.mrf.mxu0
        %v2067 = vadd.f32 0.0, %v2066
        %2068 = vmatmul.bf16.gmra.mxu0 %v798
        %v2069 = vpop.f32.mrf.mxu0
        %v2070 = vadd.f32 0.0, %v2069
        %v2071 = vpop.f32.mrf.mxu0
        %v2072 = vadd.f32 0.0, %v2071
        %2073 = vmatmul.bf16.gmra.mxu0 %v799
        %v2074 = vpop.f32.mrf.mxu0
        %v2075 = vadd.f32 0.0, %v2074
        %v2076 = vpop.f32.mrf.mxu0
        %v2077 = vadd.f32 0.0, %v2076
        %2078 = vmatmul.bf16.gmra.mxu0 %v800
        %v2079 = vpop.f32.mrf.mxu0
        %v2080 = vadd.f32 0.0, %v2079
        %v2081 = vpop.f32.mrf.mxu0
        %v2082 = vadd.f32 0.0, %v2081
        %2083 = vmatmul.bf16.gmra.mxu0 %v801
        %v2084 = vpop.f32.mrf.mxu0
        %v2085 = vadd.f32 0.0, %v2084
        %v2086 = vpop.f32.mrf.mxu0
        %v2087 = vadd.f32 0.0, %v2086
        %2088 = vmatmul.bf16.gmra.mxu0 %v802
        %v2089 = vpop.f32.mrf.mxu0
        %v2090 = vadd.f32 0.0, %v2089
        %v2091 = vpop.f32.mrf.mxu0
        %v2092 = vadd.f32 0.0, %v2091
        %2093 = vmatmul.bf16.gmra.mxu0 %v803
        %v2094 = vpop.f32.mrf.mxu0
        %v2095 = vadd.f32 0.0, %v2094
        %v2096 = vpop.f32.mrf.mxu0
        %v2097 = vadd.f32 0.0, %v2096
        %2098 = vmatmul.bf16.gmra.mxu0 %v804
        %v2099 = vpop.f32.mrf.mxu0
        %v2100 = vadd.f32 0.0, %v2099
        %v2101 = vpop.f32.mrf.mxu0
        %v2102 = vadd.f32 0.0, %v2101
        %2103 = vmatmul.bf16.gmra.mxu0 %v805
        %v2104 = vpop.f32.mrf.mxu0
        %v2105 = vadd.f32 0.0, %v2104
        %v2106 = vpop.f32.mrf.mxu0
        %v2107 = vadd.f32 0.0, %v2106
        %2108 = vmatmul.bf16.gmra.mxu0 %v806
        %v2109 = vpop.f32.mrf.mxu0
        %v2110 = vadd.f32 0.0, %v2109
        %v2111 = vpop.f32.mrf.mxu0
        %v2112 = vadd.f32 0.0, %v2111
        %2113 = vmatmul.bf16.gmra.mxu0 %v807
        %v2114 = vpop.f32.mrf.mxu0
        %v2115 = vadd.f32 0.0, %v2114
        %v2116 = vpop.f32.mrf.mxu0
        %v2117 = vadd.f32 0.0, %v2116
        %2118 = vmatmul.bf16.gmra.mxu0 %v808
        %v2119 = vpop.f32.mrf.mxu0
        %v2120 = vadd.f32 0.0, %v2119
        %v2121 = vpop.f32.mrf.mxu0
        %v2122 = vadd.f32 0.0, %v2121
        %2123 = vmatmul.bf16.gmra.mxu0 %v809
        %v2124 = vpop.f32.mrf.mxu0
        %v2125 = vadd.f32 0.0, %v2124
        %v2126 = vpop.f32.mrf.mxu0
        %v2127 = vadd.f32 0.0, %v2126
        %2128 = vmatmul.bf16.gmra.mxu0 %v810
        %v2129 = vpop.f32.mrf.mxu0
        %v2130 = vadd.f32 0.0, %v2129
        %v2131 = vpop.f32.mrf.mxu0
        %v2132 = vadd.f32 0.0, %v2131
        %2133 = vmatmul.bf16.gmra.mxu0 %v811
        %v2134 = vpop.f32.mrf.mxu0
        %v2135 = vadd.f32 0.0, %v2134
        %v2136 = vpop.f32.mrf.mxu0
        %v2137 = vadd.f32 0.0, %v2136
        %2138 = vmatmul.bf16.gmra.mxu0 %v812
        %v2139 = vpop.f32.mrf.mxu0
        %v2140 = vadd.f32 0.0, %v2139
        %v2141 = vpop.f32.mrf.mxu0
        %v2142 = vadd.f32 0.0, %v2141
        %2143 = vmatmul.bf16.gmra.mxu0 %v813
        %v2144 = vpop.f32.mrf.mxu0
        %v2145 = vadd.f32 0.0, %v2144
        %v2146 = vpop.f32.mrf.mxu0
        %v2147 = vadd.f32 0.0, %v2146
        %2148 = vmatmul.bf16.gmra.mxu0 %v814
        %v2149 = vpop.f32.mrf.mxu0
        %v2150 = vadd.f32 0.0, %v2149
        %v2151 = vpop.f32.mrf.mxu0
        %v2152 = vadd.f32 0.0, %v2151
        %2153 = vdwg.mxu0
        %2154 = vmatpush.bf16.msra.mxu0 %v1014
        %2155 = vmatpush.bf16.msra.mxu0 %v1010
        %2156 = vmatpush.bf16.msra.mxu0 %v1006
        %2157 = vmatpush.bf16.msra.mxu0 %v1002
        %2158 = vmatpush.bf16.msra.mxu0 %v998
        %2159 = vmatpush.bf16.msra.mxu0 %v994
        %2160 = vmatpush.bf16.msra.mxu0 %v990
        %2161 = vmatpush.bf16.msra.mxu0 %v986
        %2162 = vmatmul.bf16.gmra.mxu0 %v743
        %v2163 = vpop.f32.mrf.mxu0
        %v2164 = vadd.f32 0.0, %v2163
        %v2165 = vpop.f32.mrf.mxu0
        %v2166 = vadd.f32 0.0, %v2165
        %2167 = vmatmul.bf16.gmra.mxu0 %v744
        %v2168 = vpop.f32.mrf.mxu0
        %v2169 = vadd.f32 0.0, %v2168
        %v2170 = vpop.f32.mrf.mxu0
        %v2171 = vadd.f32 0.0, %v2170
        %2172 = vmatmul.bf16.gmra.mxu0 %v745
        %v2173 = vpop.f32.mrf.mxu0
        %v2174 = vadd.f32 0.0, %v2173
        %v2175 = vpop.f32.mrf.mxu0
        %v2176 = vadd.f32 0.0, %v2175
        %2177 = vmatmul.bf16.gmra.mxu0 %v746
        %v2178 = vpop.f32.mrf.mxu0
        %v2179 = vadd.f32 0.0, %v2178
        %v2180 = vpop.f32.mrf.mxu0
        %v2181 = vadd.f32 0.0, %v2180
        %2182 = vmatmul.bf16.gmra.mxu0 %v747
        %v2183 = vpop.f32.mrf.mxu0
        %v2184 = vadd.f32 0.0, %v2183
        %v2185 = vpop.f32.mrf.mxu0
        %v2186 = vadd.f32 0.0, %v2185
        %2187 = vmatmul.bf16.gmra.mxu0 %v748
        %v2188 = vpop.f32.mrf.mxu0
        %v2189 = vadd.f32 0.0, %v2188
        %v2190 = vpop.f32.mrf.mxu0
        %v2191 = vadd.f32 0.0, %v2190
        %2192 = vmatmul.bf16.gmra.mxu0 %v749
        %v2193 = vpop.f32.mrf.mxu0
        %v2194 = vadd.f32 0.0, %v2193
        %v2195 = vpop.f32.mrf.mxu0
        %v2196 = vadd.f32 0.0, %v2195
        %2197 = vmatmul.bf16.gmra.mxu0 %v750
        %v2198 = vpop.f32.mrf.mxu0
        %v2199 = vadd.f32 0.0, %v2198
        %v2200 = vpop.f32.mrf.mxu0
        %v2201 = vadd.f32 0.0, %v2200
        %2202 = vmatmul.bf16.gmra.mxu0 %v751
        %v2203 = vpop.f32.mrf.mxu0
        %v2204 = vadd.f32 0.0, %v2203
        %v2205 = vpop.f32.mrf.mxu0
        %v2206 = vadd.f32 0.0, %v2205
        %2207 = vmatmul.bf16.gmra.mxu0 %v752
        %v2208 = vpop.f32.mrf.mxu0
        %v2209 = vadd.f32 0.0, %v2208
        %v2210 = vpop.f32.mrf.mxu0
        %v2211 = vadd.f32 0.0, %v2210
        %2212 = vmatmul.bf16.gmra.mxu0 %v753
        %v2213 = vpop.f32.mrf.mxu0
        %v2214 = vadd.f32 0.0, %v2213
        %v2215 = vpop.f32.mrf.mxu0
        %v2216 = vadd.f32 0.0, %v2215
        %2217 = vmatmul.bf16.gmra.mxu0 %v754
        %v2218 = vpop.f32.mrf.mxu0
        %v2219 = vadd.f32 0.0, %v2218
        %v2220 = vpop.f32.mrf.mxu0
        %v2221 = vadd.f32 0.0, %v2220
        %2222 = vmatmul.bf16.gmra.mxu0 %v755
        %v2223 = vpop.f32.mrf.mxu0
        %v2224 = vadd.f32 0.0, %v2223
        %v2225 = vpop.f32.mrf.mxu0
        %v2226 = vadd.f32 0.0, %v2225
        %2227 = vmatmul.bf16.gmra.mxu0 %v756
        %v2228 = vpop.f32.mrf.mxu0
        %v2229 = vadd.f32 0.0, %v2228
        %v2230 = vpop.f32.mrf.mxu0
        %v2231 = vadd.f32 0.0, %v2230
        %2232 = vmatmul.bf16.gmra.mxu0 %v757
        %v2233 = vpop.f32.mrf.mxu0
        %v2234 = vadd.f32 0.0, %v2233
        %v2235 = vpop.f32.mrf.mxu0
        %v2236 = vadd.f32 0.0, %v2235
        %2237 = vmatmul.bf16.gmra.mxu0 %v758
        %v2238 = vpop.f32.mrf.mxu0
        %v2239 = vadd.f32 0.0, %v2238
        %v2240 = vpop.f32.mrf.mxu0
        %v2241 = vadd.f32 0.0, %v2240
        %2242 = vmatmul.bf16.gmra.mxu0 %v759
        %v2243 = vpop.f32.mrf.mxu0
        %v2244 = vadd.f32 0.0, %v2243
        %v2245 = vpop.f32.mrf.mxu0
        %v2246 = vadd.f32 0.0, %v2245
        %2247 = vmatmul.bf16.gmra.mxu0 %v760
        %v2248 = vpop.f32.mrf.mxu0
        %v2249 = vadd.f32 0.0, %v2248
        %v2250 = vpop.f32.mrf.mxu0
        %v2251 = vadd.f32 0.0, %v2250
        %2252 = vmatmul.bf16.gmra.mxu0 %v761
        %v2253 = vpop.f32.mrf.mxu0
        %v2254 = vadd.f32 0.0, %v2253
        %v2255 = vpop.f32.mrf.mxu0
        %v2256 = vadd.f32 0.0, %v2255
        %2257 = vmatmul.bf16.gmra.mxu0 %v762
        %v2258 = vpop.f32.mrf.mxu0
        %v2259 = vadd.f32 0.0, %v2258
        %v2260 = vpop.f32.mrf.mxu0
        %v2261 = vadd.f32 0.0, %v2260
        %2262 = vmatmul.bf16.gmra.mxu0 %v763
        %v2263 = vpop.f32.mrf.mxu0
        %v2264 = vadd.f32 0.0, %v2263
        %v2265 = vpop.f32.mrf.mxu0
        %v2266 = vadd.f32 0.0, %v2265
        %2267 = vmatmul.bf16.gmra.mxu0 %v764
        %v2268 = vpop.f32.mrf.mxu0
        %v2269 = vadd.f32 0.0, %v2268
        %v2270 = vpop.f32.mrf.mxu0
        %v2271 = vadd.f32 0.0, %v2270
        %2272 = vmatmul.bf16.gmra.mxu0 %v765
        %v2273 = vpop.f32.mrf.mxu0
        %v2274 = vadd.f32 0.0, %v2273
        %v2275 = vpop.f32.mrf.mxu0
        %v2276 = vadd.f32 0.0, %v2275
        %2277 = vmatmul.bf16.gmra.mxu0 %v766
        %v2278 = vpop.f32.mrf.mxu0
        %v2279 = vadd.f32 0.0, %v2278
        %v2280 = vpop.f32.mrf.mxu0
        %v2281 = vadd.f32 0.0, %v2280
        %2282 = vmatmul.bf16.gmra.mxu0 %v767
        %v2283 = vpop.f32.mrf.mxu0
        %v2284 = vadd.f32 0.0, %v2283
        %v2285 = vpop.f32.mrf.mxu0
        %v2286 = vadd.f32 0.0, %v2285
        %2287 = vmatmul.bf16.gmra.mxu0 %v768
        %v2288 = vpop.f32.mrf.mxu0
        %v2289 = vadd.f32 0.0, %v2288
        %v2290 = vpop.f32.mrf.mxu0
        %v2291 = vadd.f32 0.0, %v2290
        %2292 = vmatmul.bf16.gmra.mxu0 %v769
        %v2293 = vpop.f32.mrf.mxu0
        %v2294 = vadd.f32 0.0, %v2293
        %v2295 = vpop.f32.mrf.mxu0
        %v2296 = vadd.f32 0.0, %v2295
        %2297 = vmatmul.bf16.gmra.mxu0 %v770
        %v2298 = vpop.f32.mrf.mxu0
        %v2299 = vadd.f32 0.0, %v2298
        %v2300 = vpop.f32.mrf.mxu0
        %v2301 = vadd.f32 0.0, %v2300
        %2302 = vmatmul.bf16.gmra.mxu0 %v771
        %v2303 = vpop.f32.mrf.mxu0
        %v2304 = vadd.f32 0.0, %v2303
        %v2305 = vpop.f32.mrf.mxu0
        %v2306 = vadd.f32 0.0, %v2305
        %2307 = vmatmul.bf16.gmra.mxu0 %v772
        %v2308 = vpop.f32.mrf.mxu0
        %v2309 = vadd.f32 0.0, %v2308
        %v2310 = vpop.f32.mrf.mxu0
        %v2311 = vadd.f32 0.0, %v2310
        %2312 = vmatmul.bf16.gmra.mxu0 %v773
        %v2313 = vpop.f32.mrf.mxu0
        %v2314 = vadd.f32 0.0, %v2313
        %v2315 = vpop.f32.mrf.mxu0
        %v2316 = vadd.f32 0.0, %v2315
        %2317 = vmatmul.bf16.gmra.mxu0 %v774
        %v2318 = vpop.f32.mrf.mxu0
        %v2319 = vadd.f32 0.0, %v2318
        %v2320 = vpop.f32.mrf.mxu0
        %v2321 = vadd.f32 0.0, %v2320
        %2322 = vmatmul.bf16.gmra.mxu0 %v775
        %v2323 = vpop.f32.mrf.mxu0
        %v2324 = vadd.f32 0.0, %v2323
        %v2325 = vpop.f32.mrf.mxu0
        %v2326 = vadd.f32 0.0, %v2325
        %2327 = vmatmul.bf16.gmra.mxu0 %v776
        %v2328 = vpop.f32.mrf.mxu0
        %v2329 = vadd.f32 0.0, %v2328
        %v2330 = vpop.f32.mrf.mxu0
        %v2331 = vadd.f32 0.0, %v2330
        %2332 = vmatmul.bf16.gmra.mxu0 %v777
        %v2333 = vpop.f32.mrf.mxu0
        %v2334 = vadd.f32 0.0, %v2333
        %v2335 = vpop.f32.mrf.mxu0
        %v2336 = vadd.f32 0.0, %v2335
        %2337 = vmatmul.bf16.gmra.mxu0 %v778
        %v2338 = vpop.f32.mrf.mxu0
        %v2339 = vadd.f32 0.0, %v2338
        %v2340 = vpop.f32.mrf.mxu0
        %v2341 = vadd.f32 0.0, %v2340
        %2342 = vmatmul.bf16.gmra.mxu0 %v779
        %v2343 = vpop.f32.mrf.mxu0
        %v2344 = vadd.f32 0.0, %v2343
        %v2345 = vpop.f32.mrf.mxu0
        %v2346 = vadd.f32 0.0, %v2345
        %2347 = vmatmul.bf16.gmra.mxu0 %v780
        %v2348 = vpop.f32.mrf.mxu0
        %v2349 = vadd.f32 0.0, %v2348
        %v2350 = vpop.f32.mrf.mxu0
        %v2351 = vadd.f32 0.0, %v2350
        %2352 = vmatmul.bf16.gmra.mxu0 %v781
        %v2353 = vpop.f32.mrf.mxu0
        %v2354 = vadd.f32 0.0, %v2353
        %v2355 = vpop.f32.mrf.mxu0
        %v2356 = vadd.f32 0.0, %v2355
        %2357 = vmatmul.bf16.gmra.mxu0 %v782
        %v2358 = vpop.f32.mrf.mxu0
        %v2359 = vadd.f32 0.0, %v2358
        %v2360 = vpop.f32.mrf.mxu0
        %v2361 = vadd.f32 0.0, %v2360
        %2362 = vmatmul.bf16.gmra.mxu0 %v783
        %v2363 = vpop.f32.mrf.mxu0
        %v2364 = vadd.f32 0.0, %v2363
        %v2365 = vpop.f32.mrf.mxu0
        %v2366 = vadd.f32 0.0, %v2365
        %2367 = vmatmul.bf16.gmra.mxu0 %v784
        %v2368 = vpop.f32.mrf.mxu0
        %v2369 = vadd.f32 0.0, %v2368
        %v2370 = vpop.f32.mrf.mxu0
        %v2371 = vadd.f32 0.0, %v2370
        %2372 = vmatmul.bf16.gmra.mxu0 %v785
        %v2373 = vpop.f32.mrf.mxu0
        %v2374 = vadd.f32 0.0, %v2373
        %v2375 = vpop.f32.mrf.mxu0
        %v2376 = vadd.f32 0.0, %v2375
        %2377 = vmatmul.bf16.gmra.mxu0 %v786
        %v2378 = vpop.f32.mrf.mxu0
        %v2379 = vadd.f32 0.0, %v2378
        %v2380 = vpop.f32.mrf.mxu0
        %v2381 = vadd.f32 0.0, %v2380
        %2382 = vmatmul.bf16.gmra.mxu0 %v787
        %v2383 = vpop.f32.mrf.mxu0
        %v2384 = vadd.f32 0.0, %v2383
        %v2385 = vpop.f32.mrf.mxu0
        %v2386 = vadd.f32 0.0, %v2385
        %2387 = vmatmul.bf16.gmra.mxu0 %v788
        %v2388 = vpop.f32.mrf.mxu0
        %v2389 = vadd.f32 0.0, %v2388
        %v2390 = vpop.f32.mrf.mxu0
        %v2391 = vadd.f32 0.0, %v2390
        %2392 = vmatmul.bf16.gmra.mxu0 %v789
        %v2393 = vpop.f32.mrf.mxu0
        %v2394 = vadd.f32 0.0, %v2393
        %v2395 = vpop.f32.mrf.mxu0
        %v2396 = vadd.f32 0.0, %v2395
        %2397 = vmatmul.bf16.gmra.mxu0 %v790
        %v2398 = vpop.f32.mrf.mxu0
        %v2399 = vadd.f32 0.0, %v2398
        %v2400 = vpop.f32.mrf.mxu0
        %v2401 = vadd.f32 0.0, %v2400
        %2402 = vmatmul.bf16.gmra.mxu0 %v791
        %v2403 = vpop.f32.mrf.mxu0
        %v2404 = vadd.f32 0.0, %v2403
        %v2405 = vpop.f32.mrf.mxu0
        %v2406 = vadd.f32 0.0, %v2405
        %2407 = vmatmul.bf16.gmra.mxu0 %v792
        %v2408 = vpop.f32.mrf.mxu0
        %v2409 = vadd.f32 0.0, %v2408
        %v2410 = vpop.f32.mrf.mxu0
        %v2411 = vadd.f32 0.0, %v2410
        %2412 = vmatmul.bf16.gmra.mxu0 %v793
        %v2413 = vpop.f32.mrf.mxu0
        %v2414 = vadd.f32 0.0, %v2413
        %v2415 = vpop.f32.mrf.mxu0
        %v2416 = vadd.f32 0.0, %v2415
        %2417 = vmatmul.bf16.gmra.mxu0 %v794
        %v2418 = vpop.f32.mrf.mxu0
        %v2419 = vadd.f32 0.0, %v2418
        %v2420 = vpop.f32.mrf.mxu0
        %v2421 = vadd.f32 0.0, %v2420
        %2422 = vmatmul.bf16.gmra.mxu0 %v795
        %v2423 = vpop.f32.mrf.mxu0
        %v2424 = vadd.f32 0.0, %v2423
        %v2425 = vpop.f32.mrf.mxu0
        %v2426 = vadd.f32 0.0, %v2425
        %2427 = vmatmul.bf16.gmra.mxu0 %v796
        %v2428 = vpop.f32.mrf.mxu0
        %v2429 = vadd.f32 0.0, %v2428
        %v2430 = vpop.f32.mrf.mxu0
        %v2431 = vadd.f32 0.0, %v2430
        %2432 = vmatmul.bf16.gmra.mxu0 %v797
        %v2433 = vpop.f32.mrf.mxu0
        %v2434 = vadd.f32 0.0, %v2433
        %v2435 = vpop.f32.mrf.mxu0
        %v2436 = vadd.f32 0.0, %v2435
        %2437 = vmatmul.bf16.gmra.mxu0 %v798
        %v2438 = vpop.f32.mrf.mxu0
        %v2439 = vadd.f32 0.0, %v2438
        %v2440 = vpop.f32.mrf.mxu0
        %v2441 = vadd.f32 0.0, %v2440
        %2442 = vmatmul.bf16.gmra.mxu0 %v799
        %v2443 = vpop.f32.mrf.mxu0
        %v2444 = vadd.f32 0.0, %v2443
        %v2445 = vpop.f32.mrf.mxu0
        %v2446 = vadd.f32 0.0, %v2445
        %2447 = vmatmul.bf16.gmra.mxu0 %v800
        %v2448 = vpop.f32.mrf.mxu0
        %v2449 = vadd.f32 0.0, %v2448
        %v2450 = vpop.f32.mrf.mxu0
        %v2451 = vadd.f32 0.0, %v2450
        %2452 = vmatmul.bf16.gmra.mxu0 %v801
        %v2453 = vpop.f32.mrf.mxu0
        %v2454 = vadd.f32 0.0, %v2453
        %v2455 = vpop.f32.mrf.mxu0
        %v2456 = vadd.f32 0.0, %v2455
        %2457 = vmatmul.bf16.gmra.mxu0 %v802
        %v2458 = vpop.f32.mrf.mxu0
        %v2459 = vadd.f32 0.0, %v2458
        %v2460 = vpop.f32.mrf.mxu0
        %v2461 = vadd.f32 0.0, %v2460
        %2462 = vmatmul.bf16.gmra.mxu0 %v803
        %v2463 = vpop.f32.mrf.mxu0
        %v2464 = vadd.f32 0.0, %v2463
        %v2465 = vpop.f32.mrf.mxu0
        %v2466 = vadd.f32 0.0, %v2465
        %2467 = vmatmul.bf16.gmra.mxu0 %v804
        %v2468 = vpop.f32.mrf.mxu0
        %v2469 = vadd.f32 0.0, %v2468
        %v2470 = vpop.f32.mrf.mxu0
        %v2471 = vadd.f32 0.0, %v2470
        %2472 = vmatmul.bf16.gmra.mxu0 %v805
        %v2473 = vpop.f32.mrf.mxu0
        %v2474 = vadd.f32 0.0, %v2473
        %v2475 = vpop.f32.mrf.mxu0
        %v2476 = vadd.f32 0.0, %v2475
        %2477 = vmatmul.bf16.gmra.mxu0 %v806
        %v2478 = vpop.f32.mrf.mxu0
        %v2479 = vadd.f32 0.0, %v2478
        %v2480 = vpop.f32.mrf.mxu0
        %v2481 = vadd.f32 0.0, %v2480
        %2482 = vmatmul.bf16.gmra.mxu0 %v807
        %v2483 = vpop.f32.mrf.mxu0
        %v2484 = vadd.f32 0.0, %v2483
        %v2485 = vpop.f32.mrf.mxu0
        %v2486 = vadd.f32 0.0, %v2485
        %2487 = vmatmul.bf16.gmra.mxu0 %v808
        %v2488 = vpop.f32.mrf.mxu0
        %v2489 = vadd.f32 0.0, %v2488
        %v2490 = vpop.f32.mrf.mxu0
        %v2491 = vadd.f32 0.0, %v2490
        %2492 = vmatmul.bf16.gmra.mxu0 %v809
        %v2493 = vpop.f32.mrf.mxu0
        %v2494 = vadd.f32 0.0, %v2493
        %v2495 = vpop.f32.mrf.mxu0
        %v2496 = vadd.f32 0.0, %v2495
        %2497 = vmatmul.bf16.gmra.mxu0 %v810
        %v2498 = vpop.f32.mrf.mxu0
        %v2499 = vadd.f32 0.0, %v2498
        %v2500 = vpop.f32.mrf.mxu0
        %v2501 = vadd.f32 0.0, %v2500
        %2502 = vmatmul.bf16.gmra.mxu0 %v811
        %v2503 = vpop.f32.mrf.mxu0
        %v2504 = vadd.f32 0.0, %v2503
        %v2505 = vpop.f32.mrf.mxu0
        %v2506 = vadd.f32 0.0, %v2505
        %2507 = vmatmul.bf16.gmra.mxu0 %v812
        %v2508 = vpop.f32.mrf.mxu0
        %v2509 = vadd.f32 0.0, %v2508
        %v2510 = vpop.f32.mrf.mxu0
        %v2511 = vadd.f32 0.0, %v2510
        %2512 = vmatmul.bf16.gmra.mxu0 %v813
        %v2513 = vpop.f32.mrf.mxu0
        %v2514 = vadd.f32 0.0, %v2513
        %v2515 = vpop.f32.mrf.mxu0
        %v2516 = vadd.f32 0.0, %v2515
        %2517 = vmatmul.bf16.gmra.mxu0 %v814
        %v2518 = vpop.f32.mrf.mxu0
        %v2519 = vadd.f32 0.0, %v2518
        %v2520 = vpop.f32.mrf.mxu0
        %v2521 = vadd.f32 0.0, %v2520
        %2522 = vdwg.mxu0
        %v2523 = vmax.f32 %v1057, %v1426
        %v2524 = vmax.f32 %v1059, %v1428
        %v2525 = vmax.f32 %v1062, %v1431
        %v2526 = vmax.f32 %v1064, %v1433
        %v2527 = vmax.f32 %v1067, %v1436
        %v2528 = vmax.f32 %v1069, %v1438
        %v2529 = vmax.f32 %v1072, %v1441
        %v2530 = vmax.f32 %v1074, %v1443
        %v2531 = vmax.f32 %v1077, %v1446
        %v2532 = vmax.f32 %v1079, %v1448
        %v2533 = vmax.f32 %v1082, %v1451
        %v2534 = vmax.f32 %v1084, %v1453
        %v2535 = vmax.f32 %v1087, %v1456
        %v2536 = vmax.f32 %v1089, %v1458
        %v2537 = vmax.f32 %v1092, %v1461
        %v2538 = vmax.f32 %v1094, %v1463
        %v2539 = vmax.f32 %v1097, %v1466
        %v2540 = vmax.f32 %v1099, %v1468
        %v2541 = vmax.f32 %v1102, %v1471
        %v2542 = vmax.f32 %v1104, %v1473
        %v2543 = vmax.f32 %v1107, %v1476
        %v2544 = vmax.f32 %v1109, %v1478
        %v2545 = vmax.f32 %v1112, %v1481
        %v2546 = vmax.f32 %v1114, %v1483
        %v2547 = vmax.f32 %v1117, %v1486
        %v2548 = vmax.f32 %v1119, %v1488
        %v2549 = vmax.f32 %v1122, %v1491
        %v2550 = vmax.f32 %v1124, %v1493
        %v2551 = vmax.f32 %v1127, %v1496
        %v2552 = vmax.f32 %v1129, %v1498
        %v2553 = vmax.f32 %v1132, %v1501
        %v2554 = vmax.f32 %v1134, %v1503
        %v2555 = vmax.f32 %v1137, %v1506
        %v2556 = vmax.f32 %v1139, %v1508
        %v2557 = vmax.f32 %v1142, %v1511
        %v2558 = vmax.f32 %v1144, %v1513
        %v2559 = vmax.f32 %v1147, %v1516
        %v2560 = vmax.f32 %v1149, %v1518
        %v2561 = vmax.f32 %v1152, %v1521
        %v2562 = vmax.f32 %v1154, %v1523
        %v2563 = vmax.f32 %v1157, %v1526
        %v2564 = vmax.f32 %v1159, %v1528
        %v2565 = vmax.f32 %v1162, %v1531
        %v2566 = vmax.f32 %v1164, %v1533
        %v2567 = vmax.f32 %v1167, %v1536
        %v2568 = vmax.f32 %v1169, %v1538
        %v2569 = vmax.f32 %v1172, %v1541
        %v2570 = vmax.f32 %v1174, %v1543
        %v2571 = vmax.f32 %v1177, %v1546
        %v2572 = vmax.f32 %v1179, %v1548
        %v2573 = vmax.f32 %v1182, %v1551
        %v2574 = vmax.f32 %v1184, %v1553
        %v2575 = vmax.f32 %v1187, %v1556
        %v2576 = vmax.f32 %v1189, %v1558
        %v2577 = vmax.f32 %v1192, %v1561
        %v2578 = vmax.f32 %v1194, %v1563
        %v2579 = vmax.f32 %v1197, %v1566
        %v2580 = vmax.f32 %v1199, %v1568
        %v2581 = vmax.f32 %v1202, %v1571
        %v2582 = vmax.f32 %v1204, %v1573
        %v2583 = vmax.f32 %v1207, %v1576
        %v2584 = vmax.f32 %v1209, %v1578
        %v2585 = vmax.f32 %v1212, %v1581
        %v2586 = vmax.f32 %v1214, %v1583
        %v2587 = vmax.f32 %v1217, %v1586
        %v2588 = vmax.f32 %v1219, %v1588
        %v2589 = vmax.f32 %v1222, %v1591
        %v2590 = vmax.f32 %v1224, %v1593
        %v2591 = vmax.f32 %v1227, %v1596
        %v2592 = vmax.f32 %v1229, %v1598
        %v2593 = vmax.f32 %v1232, %v1601
        %v2594 = vmax.f32 %v1234, %v1603
        %v2595 = vmax.f32 %v1237, %v1606
        %v2596 = vmax.f32 %v1239, %v1608
        %v2597 = vmax.f32 %v1242, %v1611
        %v2598 = vmax.f32 %v1244, %v1613
        %v2599 = vmax.f32 %v1247, %v1616
        %v2600 = vmax.f32 %v1249, %v1618
        %v2601 = vmax.f32 %v1252, %v1621
        %v2602 = vmax.f32 %v1254, %v1623
        %v2603 = vmax.f32 %v1257, %v1626
        %v2604 = vmax.f32 %v1259, %v1628
        %v2605 = vmax.f32 %v1262, %v1631
        %v2606 = vmax.f32 %v1264, %v1633
        %v2607 = vmax.f32 %v1267, %v1636
        %v2608 = vmax.f32 %v1269, %v1638
        %v2609 = vmax.f32 %v1272, %v1641
        %v2610 = vmax.f32 %v1274, %v1643
        %v2611 = vmax.f32 %v1277, %v1646
        %v2612 = vmax.f32 %v1279, %v1648
        %v2613 = vmax.f32 %v1282, %v1651
        %v2614 = vmax.f32 %v1284, %v1653
        %v2615 = vmax.f32 %v1287, %v1656
        %v2616 = vmax.f32 %v1289, %v1658
        %v2617 = vmax.f32 %v1292, %v1661
        %v2618 = vmax.f32 %v1294, %v1663
        %v2619 = vmax.f32 %v1297, %v1666
        %v2620 = vmax.f32 %v1299, %v1668
        %v2621 = vmax.f32 %v1302, %v1671
        %v2622 = vmax.f32 %v1304, %v1673
        %v2623 = vmax.f32 %v1307, %v1676
        %v2624 = vmax.f32 %v1309, %v1678
        %v2625 = vmax.f32 %v1312, %v1681
        %v2626 = vmax.f32 %v1314, %v1683
        %v2627 = vmax.f32 %v1317, %v1686
        %v2628 = vmax.f32 %v1319, %v1688
        %v2629 = vmax.f32 %v1322, %v1691
        %v2630 = vmax.f32 %v1324, %v1693
        %v2631 = vmax.f32 %v1327, %v1696
        %v2632 = vmax.f32 %v1329, %v1698
        %v2633 = vmax.f32 %v1332, %v1701
        %v2634 = vmax.f32 %v1334, %v1703
        %v2635 = vmax.f32 %v1337, %v1706
        %v2636 = vmax.f32 %v1339, %v1708
        %v2637 = vmax.f32 %v1342, %v1711
        %v2638 = vmax.f32 %v1344, %v1713
        %v2639 = vmax.f32 %v1347, %v1716
        %v2640 = vmax.f32 %v1349, %v1718
        %v2641 = vmax.f32 %v1352, %v1721
        %v2642 = vmax.f32 %v1354, %v1723
        %v2643 = vmax.f32 %v1357, %v1726
        %v2644 = vmax.f32 %v1359, %v1728
        %v2645 = vmax.f32 %v1362, %v1731
        %v2646 = vmax.f32 %v1364, %v1733
        %v2647 = vmax.f32 %v1367, %v1736
        %v2648 = vmax.f32 %v1369, %v1738
        %v2649 = vmax.f32 %v1372, %v1741
        %v2650 = vmax.f32 %v1374, %v1743
        %v2651 = vmax.f32 %v1377, %v1746
        %v2652 = vmax.f32 %v1379, %v1748
        %v2653 = vmax.f32 %v1382, %v1751
        %v2654 = vmax.f32 %v1384, %v1753
        %v2655 = vmax.f32 %v1387, %v1756
        %v2656 = vmax.f32 %v1389, %v1758
        %v2657 = vmax.f32 %v1392, %v1761
        %v2658 = vmax.f32 %v1394, %v1763
        %v2659 = vmax.f32 %v1397, %v1766
        %v2660 = vmax.f32 %v1399, %v1768
        %v2661 = vmax.f32 %v1402, %v1771
        %v2662 = vmax.f32 %v1404, %v1773
        %v2663 = vmax.f32 %v1407, %v1776
        %v2664 = vmax.f32 %v1409, %v1778
        %v2665 = vmax.f32 %v1412, %v1781
        %v2666 = vmax.f32 %v1414, %v1783
        %v2667 = vmax.f32 %v1795, %v2164
        %v2668 = vmax.f32 %v1797, %v2166
        %v2669 = vmax.f32 %v1800, %v2169
        %v2670 = vmax.f32 %v1802, %v2171
        %v2671 = vmax.f32 %v1805, %v2174
        %v2672 = vmax.f32 %v1807, %v2176
        %v2673 = vmax.f32 %v1810, %v2179
        %v2674 = vmax.f32 %v1812, %v2181
        %v2675 = vmax.f32 %v1815, %v2184
        %v2676 = vmax.f32 %v1817, %v2186
        %v2677 = vmax.f32 %v1820, %v2189
        %v2678 = vmax.f32 %v1822, %v2191
        %v2679 = vmax.f32 %v1825, %v2194
        %v2680 = vmax.f32 %v1827, %v2196
        %v2681 = vmax.f32 %v1830, %v2199
        %v2682 = vmax.f32 %v1832, %v2201
        %v2683 = vmax.f32 %v1835, %v2204
        %v2684 = vmax.f32 %v1837, %v2206
        %v2685 = vmax.f32 %v1840, %v2209
        %v2686 = vmax.f32 %v1842, %v2211
        %v2687 = vmax.f32 %v1845, %v2214
        %v2688 = vmax.f32 %v1847, %v2216
        %v2689 = vmax.f32 %v1850, %v2219
        %v2690 = vmax.f32 %v1852, %v2221
        %v2691 = vmax.f32 %v1855, %v2224
        %v2692 = vmax.f32 %v1857, %v2226
        %v2693 = vmax.f32 %v1860, %v2229
        %v2694 = vmax.f32 %v1862, %v2231
        %v2695 = vmax.f32 %v1865, %v2234
        %v2696 = vmax.f32 %v1867, %v2236
        %v2697 = vmax.f32 %v1870, %v2239
        %v2698 = vmax.f32 %v1872, %v2241
        %v2699 = vmax.f32 %v1875, %v2244
        %v2700 = vmax.f32 %v1877, %v2246
        %v2701 = vmax.f32 %v1880, %v2249
        %v2702 = vmax.f32 %v1882, %v2251
        %v2703 = vmax.f32 %v1885, %v2254
        %v2704 = vmax.f32 %v1887, %v2256
        %v2705 = vmax.f32 %v1890, %v2259
        %v2706 = vmax.f32 %v1892, %v2261
        %v2707 = vmax.f32 %v1895, %v2264
        %v2708 = vmax.f32 %v1897, %v2266
        %v2709 = vmax.f32 %v1900, %v2269
        %v2710 = vmax.f32 %v1902, %v2271
        %v2711 = vmax.f32 %v1905, %v2274
        %v2712 = vmax.f32 %v1907, %v2276
        %v2713 = vmax.f32 %v1910, %v2279
        %v2714 = vmax.f32 %v1912, %v2281
        %v2715 = vmax.f32 %v1915, %v2284
        %v2716 = vmax.f32 %v1917, %v2286
        %v2717 = vmax.f32 %v1920, %v2289
        %v2718 = vmax.f32 %v1922, %v2291
        %v2719 = vmax.f32 %v1925, %v2294
        %v2720 = vmax.f32 %v1927, %v2296
        %v2721 = vmax.f32 %v1930, %v2299
        %v2722 = vmax.f32 %v1932, %v2301
        %v2723 = vmax.f32 %v1935, %v2304
        %v2724 = vmax.f32 %v1937, %v2306
        %v2725 = vmax.f32 %v1940, %v2309
        %v2726 = vmax.f32 %v1942, %v2311
        %v2727 = vmax.f32 %v1945, %v2314
        %v2728 = vmax.f32 %v1947, %v2316
        %v2729 = vmax.f32 %v1950, %v2319
        %v2730 = vmax.f32 %v1952, %v2321
        %v2731 = vmax.f32 %v1955, %v2324
        %v2732 = vmax.f32 %v1957, %v2326
        %v2733 = vmax.f32 %v1960, %v2329
        %v2734 = vmax.f32 %v1962, %v2331
        %v2735 = vmax.f32 %v1965, %v2334
        %v2736 = vmax.f32 %v1967, %v2336
        %v2737 = vmax.f32 %v1970, %v2339
        %v2738 = vmax.f32 %v1972, %v2341
        %v2739 = vmax.f32 %v1975, %v2344
        %v2740 = vmax.f32 %v1977, %v2346
        %v2741 = vmax.f32 %v1980, %v2349
        %v2742 = vmax.f32 %v1982, %v2351
        %v2743 = vmax.f32 %v1985, %v2354
        %v2744 = vmax.f32 %v1987, %v2356
        %v2745 = vmax.f32 %v1990, %v2359
        %v2746 = vmax.f32 %v1992, %v2361
        %v2747 = vmax.f32 %v1995, %v2364
        %v2748 = vmax.f32 %v1997, %v2366
        %v2749 = vmax.f32 %v2000, %v2369
        %v2750 = vmax.f32 %v2002, %v2371
        %v2751 = vmax.f32 %v2005, %v2374
        %v2752 = vmax.f32 %v2007, %v2376
        %v2753 = vmax.f32 %v2010, %v2379
        %v2754 = vmax.f32 %v2012, %v2381
        %v2755 = vmax.f32 %v2015, %v2384
        %v2756 = vmax.f32 %v2017, %v2386
        %v2757 = vmax.f32 %v2020, %v2389
        %v2758 = vmax.f32 %v2022, %v2391
        %v2759 = vmax.f32 %v2025, %v2394
        %v2760 = vmax.f32 %v2027, %v2396
        %v2761 = vmax.f32 %v2030, %v2399
        %v2762 = vmax.f32 %v2032, %v2401
        %v2763 = vmax.f32 %v2035, %v2404
        %v2764 = vmax.f32 %v2037, %v2406
        %v2765 = vmax.f32 %v2040, %v2409
        %v2766 = vmax.f32 %v2042, %v2411
        %v2767 = vmax.f32 %v2045, %v2414
        %v2768 = vmax.f32 %v2047, %v2416
        %v2769 = vmax.f32 %v2050, %v2419
        %v2770 = vmax.f32 %v2052, %v2421
        %v2771 = vmax.f32 %v2055, %v2424
        %v2772 = vmax.f32 %v2057, %v2426
        %v2773 = vmax.f32 %v2060, %v2429
        %v2774 = vmax.f32 %v2062, %v2431
        %v2775 = vmax.f32 %v2065, %v2434
        %v2776 = vmax.f32 %v2067, %v2436
        %v2777 = vmax.f32 %v2070, %v2439
        %v2778 = vmax.f32 %v2072, %v2441
        %v2779 = vmax.f32 %v2075, %v2444
        %v2780 = vmax.f32 %v2077, %v2446
        %v2781 = vmax.f32 %v2080, %v2449
        %v2782 = vmax.f32 %v2082, %v2451
        %v2783 = vmax.f32 %v2085, %v2454
        %v2784 = vmax.f32 %v2087, %v2456
        %v2785 = vmax.f32 %v2090, %v2459
        %v2786 = vmax.f32 %v2092, %v2461
        %v2787 = vmax.f32 %v2095, %v2464
        %v2788 = vmax.f32 %v2097, %v2466
        %v2789 = vmax.f32 %v2100, %v2469
        %v2790 = vmax.f32 %v2102, %v2471
        %v2791 = vmax.f32 %v2105, %v2474
        %v2792 = vmax.f32 %v2107, %v2476
        %v2793 = vmax.f32 %v2110, %v2479
        %v2794 = vmax.f32 %v2112, %v2481
        %v2795 = vmax.f32 %v2115, %v2484
        %v2796 = vmax.f32 %v2117, %v2486
        %v2797 = vmax.f32 %v2120, %v2489
        %v2798 = vmax.f32 %v2122, %v2491
        %v2799 = vmax.f32 %v2125, %v2494
        %v2800 = vmax.f32 %v2127, %v2496
        %v2801 = vmax.f32 %v2130, %v2499
        %v2802 = vmax.f32 %v2132, %v2501
        %v2803 = vmax.f32 %v2135, %v2504
        %v2804 = vmax.f32 %v2137, %v2506
        %v2805 = vmax.f32 %v2140, %v2509
        %v2806 = vmax.f32 %v2142, %v2511
        %v2807 = vmax.f32 %v2145, %v2514
        %v2808 = vmax.f32 %v2147, %v2516
        %v2809 = vmax.f32 %v2150, %v2519
        %v2810 = vmax.f32 %v2152, %v2521
        %v2811 = vmax.f32 %v2523, %v2667
        %v2812 = vmax.f32 %v2524, %v2668
        %v2813 = vmax.f32 %v2525, %v2669
        %v2814 = vmax.f32 %v2526, %v2670
        %v2815 = vmax.f32 %v2527, %v2671
        %v2816 = vmax.f32 %v2528, %v2672
        %v2817 = vmax.f32 %v2529, %v2673
        %v2818 = vmax.f32 %v2530, %v2674
        %v2819 = vmax.f32 %v2531, %v2675
        %v2820 = vmax.f32 %v2532, %v2676
        %v2821 = vmax.f32 %v2533, %v2677
        %v2822 = vmax.f32 %v2534, %v2678
        %v2823 = vmax.f32 %v2535, %v2679
        %v2824 = vmax.f32 %v2536, %v2680
        %v2825 = vmax.f32 %v2537, %v2681
        %v2826 = vmax.f32 %v2538, %v2682
        %v2827 = vmax.f32 %v2539, %v2683
        %v2828 = vmax.f32 %v2540, %v2684
        %v2829 = vmax.f32 %v2541, %v2685
        %v2830 = vmax.f32 %v2542, %v2686
        %v2831 = vmax.f32 %v2543, %v2687
        %v2832 = vmax.f32 %v2544, %v2688
        %v2833 = vmax.f32 %v2545, %v2689
        %v2834 = vmax.f32 %v2546, %v2690
        %v2835 = vmax.f32 %v2547, %v2691
        %v2836 = vmax.f32 %v2548, %v2692
        %v2837 = vmax.f32 %v2549, %v2693
        %v2838 = vmax.f32 %v2550, %v2694
        %v2839 = vmax.f32 %v2551, %v2695
        %v2840 = vmax.f32 %v2552, %v2696
        %v2841 = vmax.f32 %v2553, %v2697
        %v2842 = vmax.f32 %v2554, %v2698
        %v2843 = vmax.f32 %v2555, %v2699
        %v2844 = vmax.f32 %v2556, %v2700
        %v2845 = vmax.f32 %v2557, %v2701
        %v2846 = vmax.f32 %v2558, %v2702
        %v2847 = vmax.f32 %v2559, %v2703
        %v2848 = vmax.f32 %v2560, %v2704
        %v2849 = vmax.f32 %v2561, %v2705
        %v2850 = vmax.f32 %v2562, %v2706
        %v2851 = vmax.f32 %v2563, %v2707
        %v2852 = vmax.f32 %v2564, %v2708
        %v2853 = vmax.f32 %v2565, %v2709
        %v2854 = vmax.f32 %v2566, %v2710
        %v2855 = vmax.f32 %v2567, %v2711
        %v2856 = vmax.f32 %v2568, %v2712
        %v2857 = vmax.f32 %v2569, %v2713
        %v2858 = vmax.f32 %v2570, %v2714
        %v2859 = vmax.f32 %v2571, %v2715
        %v2860 = vmax.f32 %v2572, %v2716
        %v2861 = vmax.f32 %v2573, %v2717
        %v2862 = vmax.f32 %v2574, %v2718
        %v2863 = vmax.f32 %v2575, %v2719
        %v2864 = vmax.f32 %v2576, %v2720
        %v2865 = vmax.f32 %v2577, %v2721
        %v2866 = vmax.f32 %v2578, %v2722
        %v2867 = vmax.f32 %v2579, %v2723
        %v2868 = vmax.f32 %v2580, %v2724
        %v2869 = vmax.f32 %v2581, %v2725
        %v2870 = vmax.f32 %v2582, %v2726
        %v2871 = vmax.f32 %v2583, %v2727
        %v2872 = vmax.f32 %v2584, %v2728
        %v2873 = vmax.f32 %v2585, %v2729
        %v2874 = vmax.f32 %v2586, %v2730
        %v2875 = vmax.f32 %v2587, %v2731
        %v2876 = vmax.f32 %v2588, %v2732
        %v2877 = vmax.f32 %v2589, %v2733
        %v2878 = vmax.f32 %v2590, %v2734
        %v2879 = vmax.f32 %v2591, %v2735
        %v2880 = vmax.f32 %v2592, %v2736
        %v2881 = vmax.f32 %v2593, %v2737
        %v2882 = vmax.f32 %v2594, %v2738
        %v2883 = vmax.f32 %v2595, %v2739
        %v2884 = vmax.f32 %v2596, %v2740
        %v2885 = vmax.f32 %v2597, %v2741
        %v2886 = vmax.f32 %v2598, %v2742
        %v2887 = vmax.f32 %v2599, %v2743
        %v2888 = vmax.f32 %v2600, %v2744
        %v2889 = vmax.f32 %v2601, %v2745
        %v2890 = vmax.f32 %v2602, %v2746
        %v2891 = vmax.f32 %v2603, %v2747
        %v2892 = vmax.f32 %v2604, %v2748
        %v2893 = vmax.f32 %v2605, %v2749
        %v2894 = vmax.f32 %v2606, %v2750
        %v2895 = vmax.f32 %v2607, %v2751
        %v2896 = vmax.f32 %v2608, %v2752
        %v2897 = vmax.f32 %v2609, %v2753
        %v2898 = vmax.f32 %v2610, %v2754
        %v2899 = vmax.f32 %v2611, %v2755
        %v2900 = vmax.f32 %v2612, %v2756
        %v2901 = vmax.f32 %v2613, %v2757
        %v2902 = vmax.f32 %v2614, %v2758
        %v2903 = vmax.f32 %v2615, %v2759
        %v2904 = vmax.f32 %v2616, %v2760
        %v2905 = vmax.f32 %v2617, %v2761
        %v2906 = vmax.f32 %v2618, %v2762
        %v2907 = vmax.f32 %v2619, %v2763
        %v2908 = vmax.f32 %v2620, %v2764
        %v2909 = vmax.f32 %v2621, %v2765
        %v2910 = vmax.f32 %v2622, %v2766
        %v2911 = vmax.f32 %v2623, %v2767
        %v2912 = vmax.f32 %v2624, %v2768
        %v2913 = vmax.f32 %v2625, %v2769
        %v2914 = vmax.f32 %v2626, %v2770
        %v2915 = vmax.f32 %v2627, %v2771
        %v2916 = vmax.f32 %v2628, %v2772
        %v2917 = vmax.f32 %v2629, %v2773
        %v2918 = vmax.f32 %v2630, %v2774
        %v2919 = vmax.f32 %v2631, %v2775
        %v2920 = vmax.f32 %v2632, %v2776
        %v2921 = vmax.f32 %v2633, %v2777
        %v2922 = vmax.f32 %v2634, %v2778
        %v2923 = vmax.f32 %v2635, %v2779
        %v2924 = vmax.f32 %v2636, %v2780
        %v2925 = vmax.f32 %v2637, %v2781
        %v2926 = vmax.f32 %v2638, %v2782
        %v2927 = vmax.f32 %v2639, %v2783
        %v2928 = vmax.f32 %v2640, %v2784
        %v2929 = vmax.f32 %v2641, %v2785
        %v2930 = vmax.f32 %v2642, %v2786
        %v2931 = vmax.f32 %v2643, %v2787
        %v2932 = vmax.f32 %v2644, %v2788
        %v2933 = vmax.f32 %v2645, %v2789
        %v2934 = vmax.f32 %v2646, %v2790
        %v2935 = vmax.f32 %v2647, %v2791
        %v2936 = vmax.f32 %v2648, %v2792
        %v2937 = vmax.f32 %v2649, %v2793
        %v2938 = vmax.f32 %v2650, %v2794
        %v2939 = vmax.f32 %v2651, %v2795
        %v2940 = vmax.f32 %v2652, %v2796
        %v2941 = vmax.f32 %v2653, %v2797
        %v2942 = vmax.f32 %v2654, %v2798
        %v2943 = vmax.f32 %v2655, %v2799
        %v2944 = vmax.f32 %v2656, %v2800
        %v2945 = vmax.f32 %v2657, %v2801
        %v2946 = vmax.f32 %v2658, %v2802
        %v2947 = vmax.f32 %v2659, %v2803
        %v2948 = vmax.f32 %v2660, %v2804
        %v2949 = vmax.f32 %v2661, %v2805
        %v2950 = vmax.f32 %v2662, %v2806
        %v2951 = vmax.f32 %v2663, %v2807
        %v2952 = vmax.f32 %v2664, %v2808
        %v2953 = vmax.f32 %v2665, %v2809
        %v2954 = vmax.f32 %v2666, %v2810
        %v2955 = vld [vmem:[%s2] sm:$0x1]
        %v2957 = vperm.slane %v2955, 0
        %v2959 = vadd.f32 %v2811, %v2957
        %v2960 = vadd.f32 %v2812, %v2957
        %v2961 = vadd.f32 %v2813, %v2957
        %v2962 = vadd.f32 %v2814, %v2957
        %v2963 = vadd.f32 %v2815, %v2957
        %v2964 = vadd.f32 %v2816, %v2957
        %v2965 = vadd.f32 %v2817, %v2957
        %v2966 = vadd.f32 %v2818, %v2957
        %v2967 = vadd.f32 %v2819, %v2957
        %v2968 = vadd.f32 %v2820, %v2957
        %v2969 = vadd.f32 %v2821, %v2957
        %v2970 = vadd.f32 %v2822, %v2957
        %v2971 = vadd.f32 %v2823, %v2957
        %v2972 = vadd.f32 %v2824, %v2957
        %v2973 = vadd.f32 %v2825, %v2957
        %v2974 = vadd.f32 %v2826, %v2957
        %v2975 = vadd.f32 %v2827, %v2957
        %v2976 = vadd.f32 %v2828, %v2957
        %v2977 = vadd.f32 %v2829, %v2957
        %v2978 = vadd.f32 %v2830, %v2957
        %v2979 = vadd.f32 %v2831, %v2957
        %v2980 = vadd.f32 %v2832, %v2957
        %v2981 = vadd.f32 %v2833, %v2957
        %v2982 = vadd.f32 %v2834, %v2957
        %v2983 = vadd.f32 %v2835, %v2957
        %v2984 = vadd.f32 %v2836, %v2957
        %v2985 = vadd.f32 %v2837, %v2957
        %v2986 = vadd.f32 %v2838, %v2957
        %v2987 = vadd.f32 %v2839, %v2957
        %v2988 = vadd.f32 %v2840, %v2957
        %v2989 = vadd.f32 %v2841, %v2957
        %v2990 = vadd.f32 %v2842, %v2957
        %v2991 = vadd.f32 %v2843, %v2957
        %v2992 = vadd.f32 %v2844, %v2957
        %v2993 = vadd.f32 %v2845, %v2957
        %v2994 = vadd.f32 %v2846, %v2957
        %v2995 = vadd.f32 %v2847, %v2957
        %v2996 = vadd.f32 %v2848, %v2957
        %v2997 = vadd.f32 %v2849, %v2957
        %v2998 = vadd.f32 %v2850, %v2957
        %v2999 = vadd.f32 %v2851, %v2957
        %v3000 = vadd.f32 %v2852, %v2957
        %v3001 = vadd.f32 %v2853, %v2957
        %v3002 = vadd.f32 %v2854, %v2957
        %v3003 = vadd.f32 %v2855, %v2957
        %v3004 = vadd.f32 %v2856, %v2957
        %v3005 = vadd.f32 %v2857, %v2957
        %v3006 = vadd.f32 %v2858, %v2957
        %v3007 = vadd.f32 %v2859, %v2957
        %v3008 = vadd.f32 %v2860, %v2957
        %v3009 = vadd.f32 %v2861, %v2957
        %v3010 = vadd.f32 %v2862, %v2957
        %v3011 = vadd.f32 %v2863, %v2957
        %v3012 = vadd.f32 %v2864, %v2957
        %v3013 = vadd.f32 %v2865, %v2957
        %v3014 = vadd.f32 %v2866, %v2957
        %v3015 = vadd.f32 %v2867, %v2957
        %v3016 = vadd.f32 %v2868, %v2957
        %v3017 = vadd.f32 %v2869, %v2957
        %v3018 = vadd.f32 %v2870, %v2957
        %v3019 = vadd.f32 %v2871, %v2957
        %v3020 = vadd.f32 %v2872, %v2957
        %v3021 = vadd.f32 %v2873, %v2957
        %v3022 = vadd.f32 %v2874, %v2957
        %v3023 = vadd.f32 %v2875, %v2957
        %v3024 = vadd.f32 %v2876, %v2957
        %v3025 = vadd.f32 %v2877, %v2957
        %v3026 = vadd.f32 %v2878, %v2957
        %v3027 = vadd.f32 %v2879, %v2957
        %v3028 = vadd.f32 %v2880, %v2957
        %v3029 = vadd.f32 %v2881, %v2957
        %v3030 = vadd.f32 %v2882, %v2957
        %v3031 = vadd.f32 %v2883, %v2957
        %v3032 = vadd.f32 %v2884, %v2957
        %v3033 = vadd.f32 %v2885, %v2957
        %v3034 = vadd.f32 %v2886, %v2957
        %v3035 = vadd.f32 %v2887, %v2957
        %v3036 = vadd.f32 %v2888, %v2957
        %v3037 = vadd.f32 %v2889, %v2957
        %v3038 = vadd.f32 %v2890, %v2957
        %v3039 = vadd.f32 %v2891, %v2957
        %v3040 = vadd.f32 %v2892, %v2957
        %v3041 = vadd.f32 %v2893, %v2957
        %v3042 = vadd.f32 %v2894, %v2957
        %v3043 = vadd.f32 %v2895, %v2957
        %v3044 = vadd.f32 %v2896, %v2957
        %v3045 = vadd.f32 %v2897, %v2957
        %v3046 = vadd.f32 %v2898, %v2957
        %v3047 = vadd.f32 %v2899, %v2957
        %v3048 = vadd.f32 %v2900, %v2957
        %v3049 = vadd.f32 %v2901, %v2957
        %v3050 = vadd.f32 %v2902, %v2957
        %v3051 = vadd.f32 %v2903, %v2957
        %v3052 = vadd.f32 %v2904, %v2957
        %v3053 = vadd.f32 %v2905, %v2957
        %v3054 = vadd.f32 %v2906, %v2957
        %v3055 = vadd.f32 %v2907, %v2957
        %v3056 = vadd.f32 %v2908, %v2957
        %v3057 = vadd.f32 %v2909, %v2957
        %v3058 = vadd.f32 %v2910, %v2957
        %v3059 = vadd.f32 %v2911, %v2957
        %v3060 = vadd.f32 %v2912, %v2957
        %v3061 = vadd.f32 %v2913, %v2957
        %v3062 = vadd.f32 %v2914, %v2957
        %v3063 = vadd.f32 %v2915, %v2957
        %v3064 = vadd.f32 %v2916, %v2957
        %v3065 = vadd.f32 %v2917, %v2957
        %v3066 = vadd.f32 %v2918, %v2957
        %v3067 = vadd.f32 %v2919, %v2957
        %v3068 = vadd.f32 %v2920, %v2957
        %v3069 = vadd.f32 %v2921, %v2957
        %v3070 = vadd.f32 %v2922, %v2957
        %v3071 = vadd.f32 %v2923, %v2957
        %v3072 = vadd.f32 %v2924, %v2957
        %v3073 = vadd.f32 %v2925, %v2957
        %v3074 = vadd.f32 %v2926, %v2957
        %v3075 = vadd.f32 %v2927, %v2957
        %v3076 = vadd.f32 %v2928, %v2957
        %v3077 = vadd.f32 %v2929, %v2957
        %v3078 = vadd.f32 %v2930, %v2957
        %v3079 = vadd.f32 %v2931, %v2957
        %v3080 = vadd.f32 %v2932, %v2957
        %v3081 = vadd.f32 %v2933, %v2957
        %v3082 = vadd.f32 %v2934, %v2957
        %v3083 = vadd.f32 %v2935, %v2957
        %v3084 = vadd.f32 %v2936, %v2957
        %v3085 = vadd.f32 %v2937, %v2957
        %v3086 = vadd.f32 %v2938, %v2957
        %v3087 = vadd.f32 %v2939, %v2957
        %v3088 = vadd.f32 %v2940, %v2957
        %v3089 = vadd.f32 %v2941, %v2957
        %v3090 = vadd.f32 %v2942, %v2957
        %v3091 = vadd.f32 %v2943, %v2957
        %v3092 = vadd.f32 %v2944, %v2957
        %v3093 = vadd.f32 %v2945, %v2957
        %v3094 = vadd.f32 %v2946, %v2957
        %v3095 = vadd.f32 %v2947, %v2957
        %v3096 = vadd.f32 %v2948, %v2957
        %v3097 = vadd.f32 %v2949, %v2957
        %v3098 = vadd.f32 %v2950, %v2957
        %v3099 = vadd.f32 %v2951, %v2957
        %v3100 = vadd.f32 %v2952, %v2957
        %v3101 = vadd.f32 %v2953, %v2957
        %v3102 = vadd.f32 %v2954, %v2957
        %v3103 = vmax.f32 %v2959, 0.0
        %v3104 = vmax.f32 %v2960, 0.0
        %v3105 = vmax.f32 %v2961, 0.0
        %v3106 = vmax.f32 %v2962, 0.0
        %v3107 = vmax.f32 %v2963, 0.0
        %v3108 = vmax.f32 %v2964, 0.0
        %v3109 = vmax.f32 %v2965, 0.0
        %v3110 = vmax.f32 %v2966, 0.0
        %v3111 = vmax.f32 %v2967, 0.0
        %v3112 = vmax.f32 %v2968, 0.0
        %v3113 = vmax.f32 %v2969, 0.0
        %v3114 = vmax.f32 %v2970, 0.0
        %v3115 = vmax.f32 %v2971, 0.0
        %v3116 = vmax.f32 %v2972, 0.0
        %v3117 = vmax.f32 %v2973, 0.0
        %v3118 = vmax.f32 %v2974, 0.0
        %v3119 = vmax.f32 %v2975, 0.0
        %v3120 = vmax.f32 %v2976, 0.0
        %v3121 = vmax.f32 %v2977, 0.0
        %v3122 = vmax.f32 %v2978, 0.0
        %v3123 = vmax.f32 %v2979, 0.0
        %v3124 = vmax.f32 %v2980, 0.0
        %v3125 = vmax.f32 %v2981, 0.0
        %v3126 = vmax.f32 %v2982, 0.0
        %v3127 = vmax.f32 %v2983, 0.0
        %v3128 = vmax.f32 %v2984, 0.0
        %v3129 = vmax.f32 %v2985, 0.0
        %v3130 = vmax.f32 %v2986, 0.0
        %v3131 = vmax.f32 %v2987, 0.0
        %v3132 = vmax.f32 %v2988, 0.0
        %v3133 = vmax.f32 %v2989, 0.0
        %v3134 = vmax.f32 %v2990, 0.0
        %v3135 = vmax.f32 %v2991, 0.0
        %v3136 = vmax.f32 %v2992, 0.0
        %v3137 = vmax.f32 %v2993, 0.0
        %v3138 = vmax.f32 %v2994, 0.0
        %v3139 = vmax.f32 %v2995, 0.0
        %v3140 = vmax.f32 %v2996, 0.0
        %v3141 = vmax.f32 %v2997, 0.0
        %v3142 = vmax.f32 %v2998, 0.0
        %v3143 = vmax.f32 %v2999, 0.0
        %v3144 = vmax.f32 %v3000, 0.0
        %v3145 = vmax.f32 %v3001, 0.0
        %v3146 = vmax.f32 %v3002, 0.0
        %v3147 = vmax.f32 %v3003, 0.0
        %v3148 = vmax.f32 %v3004, 0.0
        %v3149 = vmax.f32 %v3005, 0.0
        %v3150 = vmax.f32 %v3006, 0.0
        %v3151 = vmax.f32 %v3007, 0.0
        %v3152 = vmax.f32 %v3008, 0.0
        %v3153 = vmax.f32 %v3009, 0.0
        %v3154 = vmax.f32 %v3010, 0.0
        %v3155 = vmax.f32 %v3011, 0.0
        %v3156 = vmax.f32 %v3012, 0.0
        %v3157 = vmax.f32 %v3013, 0.0
        %v3158 = vmax.f32 %v3014, 0.0
        %v3159 = vmax.f32 %v3015, 0.0
        %v3160 = vmax.f32 %v3016, 0.0
        %v3161 = vmax.f32 %v3017, 0.0
        %v3162 = vmax.f32 %v3018, 0.0
        %v3163 = vmax.f32 %v3019, 0.0
        %v3164 = vmax.f32 %v3020, 0.0
        %v3165 = vmax.f32 %v3021, 0.0
        %v3166 = vmax.f32 %v3022, 0.0
        %v3167 = vmax.f32 %v3023, 0.0
        %v3168 = vmax.f32 %v3024, 0.0
        %v3169 = vmax.f32 %v3025, 0.0
        %v3170 = vmax.f32 %v3026, 0.0
        %v3171 = vmax.f32 %v3027, 0.0
        %v3172 = vmax.f32 %v3028, 0.0
        %v3173 = vmax.f32 %v3029, 0.0
        %v3174 = vmax.f32 %v3030, 0.0
        %v3175 = vmax.f32 %v3031, 0.0
        %v3176 = vmax.f32 %v3032, 0.0
        %v3177 = vmax.f32 %v3033, 0.0
        %v3178 = vmax.f32 %v3034, 0.0
        %v3179 = vmax.f32 %v3035, 0.0
        %v3180 = vmax.f32 %v3036, 0.0
        %v3181 = vmax.f32 %v3037, 0.0
        %v3182 = vmax.f32 %v3038, 0.0
        %v3183 = vmax.f32 %v3039, 0.0
        %v3184 = vmax.f32 %v3040, 0.0
        %v3185 = vmax.f32 %v3041, 0.0
        %v3186 = vmax.f32 %v3042, 0.0
        %v3187 = vmax.f32 %v3043, 0.0
        %v3188 = vmax.f32 %v3044, 0.0
        %v3189 = vmax.f32 %v3045, 0.0
        %v3190 = vmax.f32 %v3046, 0.0
        %v3191 = vmax.f32 %v3047, 0.0
        %v3192 = vmax.f32 %v3048, 0.0
        %v3193 = vmax.f32 %v3049, 0.0
        %v3194 = vmax.f32 %v3050, 0.0
        %v3195 = vmax.f32 %v3051, 0.0
        %v3196 = vmax.f32 %v3052, 0.0
        %v3197 = vmax.f32 %v3053, 0.0
        %v3198 = vmax.f32 %v3054, 0.0
        %v3199 = vmax.f32 %v3055, 0.0
        %v3200 = vmax.f32 %v3056, 0.0
        %v3201 = vmax.f32 %v3057, 0.0
        %v3202 = vmax.f32 %v3058, 0.0
        %v3203 = vmax.f32 %v3059, 0.0
        %v3204 = vmax.f32 %v3060, 0.0
        %v3205 = vmax.f32 %v3061, 0.0
        %v3206 = vmax.f32 %v3062, 0.0
        %v3207 = vmax.f32 %v3063, 0.0
        %v3208 = vmax.f32 %v3064, 0.0
        %v3209 = vmax.f32 %v3065, 0.0
        %v3210 = vmax.f32 %v3066, 0.0
        %v3211 = vmax.f32 %v3067, 0.0
        %v3212 = vmax.f32 %v3068, 0.0
        %v3213 = vmax.f32 %v3069, 0.0
        %v3214 = vmax.f32 %v3070, 0.0
        %v3215 = vmax.f32 %v3071, 0.0
        %v3216 = vmax.f32 %v3072, 0.0
        %v3217 = vmax.f32 %v3073, 0.0
        %v3218 = vmax.f32 %v3074, 0.0
        %v3219 = vmax.f32 %v3075, 0.0
        %v3220 = vmax.f32 %v3076, 0.0
        %v3221 = vmax.f32 %v3077, 0.0
        %v3222 = vmax.f32 %v3078, 0.0
        %v3223 = vmax.f32 %v3079, 0.0
        %v3224 = vmax.f32 %v3080, 0.0
        %v3225 = vmax.f32 %v3081, 0.0
        %v3226 = vmax.f32 %v3082, 0.0
        %v3227 = vmax.f32 %v3083, 0.0
        %v3228 = vmax.f32 %v3084, 0.0
        %v3229 = vmax.f32 %v3085, 0.0
        %v3230 = vmax.f32 %v3086, 0.0
        %v3231 = vmax.f32 %v3087, 0.0
        %v3232 = vmax.f32 %v3088, 0.0
        %v3233 = vmax.f32 %v3089, 0.0
        %v3234 = vmax.f32 %v3090, 0.0
        %v3235 = vmax.f32 %v3091, 0.0
        %v3236 = vmax.f32 %v3092, 0.0
        %v3237 = vmax.f32 %v3093, 0.0
        %v3238 = vmax.f32 %v3094, 0.0
        %v3239 = vmax.f32 %v3095, 0.0
        %v3240 = vmax.f32 %v3096, 0.0
        %v3241 = vmax.f32 %v3097, 0.0
        %v3242 = vmax.f32 %v3098, 0.0
        %v3243 = vmax.f32 %v3099, 0.0
        %v3244 = vmax.f32 %v3100, 0.0
        %v3245 = vmax.f32 %v3101, 0.0
        %v3246 = vmax.f32 %v3102, 0.0
        %3247 = vrot.lane.b32.xlu0 %v3104, 16
        %v3248 = vpop.permute.xlu0 %3247
        %3249 = vrot.lane.b32.xlu0 %v3105, 16
        %v3250 = vpop.permute.xlu0 %3249
        %3251 = vrot.lane.b32.xlu0 %v3106, 16
        %v3252 = vpop.permute.xlu0 %3251
        %3253 = vrot.lane.b32.xlu0 %v3107, 16
        %v3254 = vpop.permute.xlu0 %3253
        %3255 = vrot.lane.b32.xlu0 %v3108, 16
        %v3256 = vpop.permute.xlu0 %3255
        %3257 = vrot.lane.b32.xlu0 %v3109, 16
        %v3258 = vpop.permute.xlu0 %3257
        %3259 = vrot.lane.b32.xlu0 %v3110, 16
        %v3260 = vpop.permute.xlu0 %3259
        %3261 = vrot.lane.b32.xlu0 %v3111, 16
        %v3262 = vpop.permute.xlu0 %3261
        %3263 = vrot.lane.b32.xlu0 %v3112, 16
        %v3264 = vpop.permute.xlu0 %3263
        %3265 = vrot.lane.b32.xlu0 %v3113, 16
        %v3266 = vpop.permute.xlu0 %3265
        %3267 = vrot.lane.b32.xlu0 %v3114, 16
        %v3268 = vpop.permute.xlu0 %3267
        %3269 = vrot.lane.b32.xlu0 %v3115, 16
        %v3270 = vpop.permute.xlu0 %3269
        %3271 = vrot.lane.b32.xlu0 %v3116, 16
        %v3272 = vpop.permute.xlu0 %3271
        %3273 = vrot.lane.b32.xlu0 %v3117, 16
        %v3274 = vpop.permute.xlu0 %3273
        %3275 = vrot.lane.b32.xlu0 %v3118, 16
        %v3276 = vpop.permute.xlu0 %3275
        %3277 = vrot.lane.b32.xlu0 %v3119, 16
        %v3278 = vpop.permute.xlu0 %3277
        %3279 = vrot.lane.b32.xlu0 %v3120, 16
        %v3280 = vpop.permute.xlu0 %3279
        %3281 = vrot.lane.b32.xlu0 %v3121, 16
        %v3282 = vpop.permute.xlu0 %3281
        %3283 = vrot.lane.b32.xlu0 %v3122, 16
        %v3284 = vpop.permute.xlu0 %3283
        %3285 = vrot.lane.b32.xlu0 %v3123, 16
        %v3286 = vpop.permute.xlu0 %3285
        %3287 = vrot.lane.b32.xlu0 %v3124, 16
        %v3288 = vpop.permute.xlu0 %3287
        %3289 = vrot.lane.b32.xlu0 %v3125, 16
        %v3290 = vpop.permute.xlu0 %3289
        %3291 = vrot.lane.b32.xlu0 %v3126, 16
        %v3292 = vpop.permute.xlu0 %3291
        %3293 = vrot.lane.b32.xlu0 %v3127, 16
        %v3294 = vpop.permute.xlu0 %3293
        %3295 = vrot.lane.b32.xlu0 %v3128, 16
        %v3296 = vpop.permute.xlu0 %3295
        %3297 = vrot.lane.b32.xlu0 %v3129, 16
        %v3298 = vpop.permute.xlu0 %3297
        %3299 = vrot.lane.b32.xlu0 %v3130, 16
        %v3300 = vpop.permute.xlu0 %3299
        %3301 = vrot.lane.b32.xlu0 %v3131, 16
        %v3302 = vpop.permute.xlu0 %3301
        %3303 = vrot.lane.b32.xlu0 %v3132, 16
        %v3304 = vpop.permute.xlu0 %3303
        %3305 = vrot.lane.b32.xlu0 %v3133, 16
        %v3306 = vpop.permute.xlu0 %3305
        %3307 = vrot.lane.b32.xlu0 %v3134, 16
        %v3308 = vpop.permute.xlu0 %3307
        %3309 = vrot.lane.b32.xlu0 %v3135, 16
        %v3310 = vpop.permute.xlu0 %3309
        %3311 = vrot.lane.b32.xlu0 %v3136, 16
        %v3312 = vpop.permute.xlu0 %3311
        %3313 = vrot.lane.b32.xlu0 %v3137, 16
        %v3314 = vpop.permute.xlu0 %3313
        %3315 = vrot.lane.b32.xlu0 %v3138, 16
        %v3316 = vpop.permute.xlu0 %3315
        %3317 = vrot.lane.b32.xlu0 %v3139, 16
        %v3318 = vpop.permute.xlu0 %3317
        %3319 = vrot.lane.b32.xlu0 %v3140, 16
        %v3320 = vpop.permute.xlu0 %3319
        %3321 = vrot.lane.b32.xlu0 %v3141, 16
        %v3322 = vpop.permute.xlu0 %3321
        %3323 = vrot.lane.b32.xlu0 %v3142, 16
        %v3324 = vpop.permute.xlu0 %3323
        %3325 = vrot.lane.b32.xlu0 %v3143, 16
        %v3326 = vpop.permute.xlu0 %3325
        %3327 = vrot.lane.b32.xlu0 %v3144, 16
        %v3328 = vpop.permute.xlu0 %3327
        %3329 = vrot.lane.b32.xlu0 %v3145, 16
        %v3330 = vpop.permute.xlu0 %3329
        %3331 = vrot.lane.b32.xlu0 %v3146, 16
        %v3332 = vpop.permute.xlu0 %3331
        %3333 = vrot.lane.b32.xlu0 %v3147, 16
        %v3334 = vpop.permute.xlu0 %3333
        %3335 = vrot.lane.b32.xlu0 %v3148, 16
        %v3336 = vpop.permute.xlu0 %3335
        %3337 = vrot.lane.b32.xlu0 %v3149, 16
        %v3338 = vpop.permute.xlu0 %3337
        %3339 = vrot.lane.b32.xlu0 %v3150, 16
        %v3340 = vpop.permute.xlu0 %3339
        %3341 = vrot.lane.b32.xlu0 %v3151, 16
        %v3342 = vpop.permute.xlu0 %3341
        %3343 = vrot.lane.b32.xlu0 %v3152, 16
        %v3344 = vpop.permute.xlu0 %3343
        %3345 = vrot.lane.b32.xlu0 %v3153, 16
        %v3346 = vpop.permute.xlu0 %3345
        %3347 = vrot.lane.b32.xlu0 %v3154, 16
        %v3348 = vpop.permute.xlu0 %3347
        %3349 = vrot.lane.b32.xlu0 %v3155, 16
        %v3350 = vpop.permute.xlu0 %3349
        %3351 = vrot.lane.b32.xlu0 %v3156, 16
        %v3352 = vpop.permute.xlu0 %3351
        %3353 = vrot.lane.b32.xlu0 %v3157, 16
        %v3354 = vpop.permute.xlu0 %3353
        %3355 = vrot.lane.b32.xlu0 %v3158, 16
        %v3356 = vpop.permute.xlu0 %3355
        %3357 = vrot.lane.b32.xlu0 %v3159, 16
        %v3358 = vpop.permute.xlu0 %3357
        %3359 = vrot.lane.b32.xlu0 %v3160, 16
        %v3360 = vpop.permute.xlu0 %3359
        %3361 = vrot.lane.b32.xlu0 %v3161, 16
        %v3362 = vpop.permute.xlu0 %3361
        %3363 = vrot.lane.b32.xlu0 %v3162, 16
        %v3364 = vpop.permute.xlu0 %3363
        %3365 = vrot.lane.b32.xlu0 %v3163, 16
        %v3366 = vpop.permute.xlu0 %3365
        %3367 = vrot.lane.b32.xlu0 %v3164, 16
        %v3368 = vpop.permute.xlu0 %3367
        %3369 = vrot.lane.b32.xlu0 %v3165, 16
        %v3370 = vpop.permute.xlu0 %3369
        %3371 = vrot.lane.b32.xlu0 %v3166, 16
        %v3372 = vpop.permute.xlu0 %3371
        %3373 = vrot.lane.b32.xlu0 %v3167, 16
        %v3374 = vpop.permute.xlu0 %3373
        %3375 = vrot.lane.b32.xlu0 %v3168, 16
        %v3376 = vpop.permute.xlu0 %3375
        %3377 = vrot.lane.b32.xlu0 %v3169, 16
        %v3378 = vpop.permute.xlu0 %3377
        %3379 = vrot.lane.b32.xlu0 %v3170, 16
        %v3380 = vpop.permute.xlu0 %3379
        %3381 = vrot.lane.b32.xlu0 %v3171, 16
        %v3382 = vpop.permute.xlu0 %3381
        %3383 = vrot.lane.b32.xlu0 %v3172, 16
        %v3384 = vpop.permute.xlu0 %3383
        %3385 = vrot.lane.b32.xlu0 %v3173, 16
        %v3386 = vpop.permute.xlu0 %3385
        %3387 = vrot.lane.b32.xlu0 %v3174, 16
        %v3388 = vpop.permute.xlu0 %3387
        %3389 = vrot.lane.b32.xlu0 %v3175, 16
        %v3390 = vpop.permute.xlu0 %3389
        %3391 = vrot.lane.b32.xlu0 %v3176, 16
        %v3392 = vpop.permute.xlu0 %3391
        %3393 = vrot.lane.b32.xlu0 %v3177, 16
        %v3394 = vpop.permute.xlu0 %3393
        %3395 = vrot.lane.b32.xlu0 %v3178, 16
        %v3396 = vpop.permute.xlu0 %3395
        %3397 = vrot.lane.b32.xlu0 %v3179, 16
        %v3398 = vpop.permute.xlu0 %3397
        %3399 = vrot.lane.b32.xlu0 %v3180, 16
        %v3400 = vpop.permute.xlu0 %3399
        %3401 = vrot.lane.b32.xlu0 %v3181, 16
        %v3402 = vpop.permute.xlu0 %3401
        %3403 = vrot.lane.b32.xlu0 %v3182, 16
        %v3404 = vpop.permute.xlu0 %3403
        %3405 = vrot.lane.b32.xlu0 %v3183, 16
        %v3406 = vpop.permute.xlu0 %3405
        %3407 = vrot.lane.b32.xlu0 %v3184, 16
        %v3408 = vpop.permute.xlu0 %3407
        %3409 = vrot.lane.b32.xlu0 %v3185, 16
        %v3410 = vpop.permute.xlu0 %3409
        %3411 = vrot.lane.b32.xlu0 %v3186, 16
        %v3412 = vpop.permute.xlu0 %3411
        %3413 = vrot.lane.b32.xlu0 %v3187, 16
        %v3414 = vpop.permute.xlu0 %3413
        %3415 = vrot.lane.b32.xlu0 %v3188, 16
        %v3416 = vpop.permute.xlu0 %3415
        %3417 = vrot.lane.b32.xlu0 %v3189, 16
        %v3418 = vpop.permute.xlu0 %3417
        %3419 = vrot.lane.b32.xlu0 %v3190, 16
        %v3420 = vpop.permute.xlu0 %3419
        %3421 = vrot.lane.b32.xlu0 %v3191, 16
        %v3422 = vpop.permute.xlu0 %3421
        %3423 = vrot.lane.b32.xlu0 %v3192, 16
        %v3424 = vpop.permute.xlu0 %3423
        %3425 = vrot.lane.b32.xlu0 %v3193, 16
        %v3426 = vpop.permute.xlu0 %3425
        %3427 = vrot.lane.b32.xlu0 %v3194, 16
        %v3428 = vpop.permute.xlu0 %3427
        %3429 = vrot.lane.b32.xlu0 %v3195, 16
        %v3430 = vpop.permute.xlu0 %3429
        %3431 = vrot.lane.b32.xlu0 %v3196, 16
        %v3432 = vpop.permute.xlu0 %3431
        %3433 = vrot.lane.b32.xlu0 %v3197, 16
        %v3434 = vpop.permute.xlu0 %3433
        %3435 = vrot.lane.b32.xlu0 %v3198, 16
        %v3436 = vpop.permute.xlu0 %3435
        %3437 = vrot.lane.b32.xlu0 %v3199, 16
        %v3438 = vpop.permute.xlu0 %3437
        %3439 = vrot.lane.b32.xlu0 %v3200, 16
        %v3440 = vpop.permute.xlu0 %3439
        %3441 = vrot.lane.b32.xlu0 %v3201, 16
        %v3442 = vpop.permute.xlu0 %3441
        %3443 = vrot.lane.b32.xlu0 %v3202, 16
        %v3444 = vpop.permute.xlu0 %3443
        %3445 = vrot.lane.b32.xlu0 %v3203, 16
        %v3446 = vpop.permute.xlu0 %3445
        %3447 = vrot.lane.b32.xlu0 %v3204, 16
        %v3448 = vpop.permute.xlu0 %3447
        %3449 = vrot.lane.b32.xlu0 %v3205, 16
        %v3450 = vpop.permute.xlu0 %3449
        %3451 = vrot.lane.b32.xlu0 %v3206, 16
        %v3452 = vpop.permute.xlu0 %3451
        %3453 = vrot.lane.b32.xlu0 %v3207, 16
        %v3454 = vpop.permute.xlu0 %3453
        %3455 = vrot.lane.b32.xlu0 %v3208, 16
        %v3456 = vpop.permute.xlu0 %3455
        %3457 = vrot.lane.b32.xlu0 %v3209, 16
        %v3458 = vpop.permute.xlu0 %3457
        %3459 = vrot.lane.b32.xlu0 %v3210, 16
        %v3460 = vpop.permute.xlu0 %3459
        %3461 = vrot.lane.b32.xlu0 %v3211, 16
        %v3462 = vpop.permute.xlu0 %3461
        %3463 = vrot.lane.b32.xlu0 %v3212, 16
        %v3464 = vpop.permute.xlu0 %3463
        %3465 = vrot.lane.b32.xlu0 %v3213, 16
        %v3466 = vpop.permute.xlu0 %3465
        %3467 = vrot.lane.b32.xlu0 %v3214, 16
        %v3468 = vpop.permute.xlu0 %3467
        %3469 = vrot.lane.b32.xlu0 %v3215, 16
        %v3470 = vpop.permute.xlu0 %3469
        %3471 = vrot.lane.b32.xlu0 %v3216, 16
        %v3472 = vpop.permute.xlu0 %3471
        %3473 = vrot.lane.b32.xlu0 %v3217, 16
        %v3474 = vpop.permute.xlu0 %3473
        %3475 = vrot.lane.b32.xlu0 %v3218, 16
        %v3476 = vpop.permute.xlu0 %3475
        %3477 = vrot.lane.b32.xlu0 %v3219, 16
        %v3478 = vpop.permute.xlu0 %3477
        %3479 = vrot.lane.b32.xlu0 %v3220, 16
        %v3480 = vpop.permute.xlu0 %3479
        %3481 = vrot.lane.b32.xlu0 %v3221, 16
        %v3482 = vpop.permute.xlu0 %3481
        %3483 = vrot.lane.b32.xlu0 %v3222, 16
        %v3484 = vpop.permute.xlu0 %3483
        %3485 = vrot.lane.b32.xlu0 %v3223, 16
        %v3486 = vpop.permute.xlu0 %3485
        %3487 = vrot.lane.b32.xlu0 %v3224, 16
        %v3488 = vpop.permute.xlu0 %3487
        %3489 = vrot.lane.b32.xlu0 %v3225, 16
        %v3490 = vpop.permute.xlu0 %3489
        %3491 = vrot.lane.b32.xlu0 %v3226, 16
        %v3492 = vpop.permute.xlu0 %3491
        %3493 = vrot.lane.b32.xlu0 %v3227, 16
        %v3494 = vpop.permute.xlu0 %3493
        %3495 = vrot.lane.b32.xlu0 %v3228, 16
        %v3496 = vpop.permute.xlu0 %3495
        %3497 = vrot.lane.b32.xlu0 %v3229, 16
        %v3498 = vpop.permute.xlu0 %3497
        %3499 = vrot.lane.b32.xlu0 %v3230, 16
        %v3500 = vpop.permute.xlu0 %3499
        %3501 = vrot.lane.b32.xlu0 %v3231, 16
        %v3502 = vpop.permute.xlu0 %3501
        %3503 = vrot.lane.b32.xlu0 %v3232, 16
        %v3504 = vpop.permute.xlu0 %3503
        %3505 = vrot.lane.b32.xlu0 %v3233, 16
        %v3506 = vpop.permute.xlu0 %3505
        %3507 = vrot.lane.b32.xlu0 %v3234, 16
        %v3508 = vpop.permute.xlu0 %3507
        %3509 = vrot.lane.b32.xlu0 %v3235, 16
        %v3510 = vpop.permute.xlu0 %3509
        %3511 = vrot.lane.b32.xlu0 %v3236, 16
        %v3512 = vpop.permute.xlu0 %3511
        %3513 = vrot.lane.b32.xlu0 %v3237, 16
        %v3514 = vpop.permute.xlu0 %3513
        %3515 = vrot.lane.b32.xlu0 %v3238, 16
        %v3516 = vpop.permute.xlu0 %3515
        %3517 = vrot.lane.b32.xlu0 %v3239, 16
        %v3518 = vpop.permute.xlu0 %3517
        %3519 = vrot.lane.b32.xlu0 %v3240, 16
        %v3520 = vpop.permute.xlu0 %3519
        %3521 = vrot.lane.b32.xlu0 %v3241, 16
        %v3522 = vpop.permute.xlu0 %3521
        %3523 = vrot.lane.b32.xlu0 %v3242, 16
        %v3524 = vpop.permute.xlu0 %3523
        %3525 = vrot.lane.b32.xlu0 %v3243, 16
        %v3526 = vpop.permute.xlu0 %3525
        %3527 = vrot.lane.b32.xlu0 %v3244, 16
        %v3528 = vpop.permute.xlu0 %3527
        %3529 = vrot.lane.b32.xlu0 %v3245, 16
        %v3530 = vpop.permute.xlu0 %3529
        %3531 = vrot.lane.b32.xlu0 %v3246, 16
        %v3532 = vpop.permute.xlu0 %3531
        %3533 = vrot.lane.b32.xlu0 0.0, 16
        %v3534 = vpop.permute.xlu0 %3533
        %v3535 = vadd.f32 %v3103, %v3248
        %v3536 = vadd.f32 %v3104, %v3250
        %v3537 = vadd.f32 %v3105, %v3252
        %v3538 = vadd.f32 %v3106, %v3254
        %v3539 = vadd.f32 %v3107, %v3256
        %v3540 = vadd.f32 %v3108, %v3258
        %v3541 = vadd.f32 %v3109, %v3260
        %v3542 = vadd.f32 %v3110, %v3262
        %v3543 = vadd.f32 %v3111, %v3264
        %v3544 = vadd.f32 %v3112, %v3266
        %v3545 = vadd.f32 %v3113, %v3268
        %v3546 = vadd.f32 %v3114, %v3270
        %v3547 = vadd.f32 %v3115, %v3272
        %v3548 = vadd.f32 %v3116, %v3274
        %v3549 = vadd.f32 %v3117, %v3276
        %v3550 = vadd.f32 %v3118, %v3278
        %v3551 = vadd.f32 %v3119, %v3280
        %v3552 = vadd.f32 %v3120, %v3282
        %v3553 = vadd.f32 %v3121, %v3284
        %v3554 = vadd.f32 %v3122, %v3286
        %v3555 = vadd.f32 %v3123, %v3288
        %v3556 = vadd.f32 %v3124, %v3290
        %v3557 = vadd.f32 %v3125, %v3292
        %v3558 = vadd.f32 %v3126, %v3294
        %v3559 = vadd.f32 %v3127, %v3296
        %v3560 = vadd.f32 %v3128, %v3298
        %v3561 = vadd.f32 %v3129, %v3300
        %v3562 = vadd.f32 %v3130, %v3302
        %v3563 = vadd.f32 %v3131, %v3304
        %v3564 = vadd.f32 %v3132, %v3306
        %v3565 = vadd.f32 %v3133, %v3308
        %v3566 = vadd.f32 %v3134, %v3310
        %v3567 = vadd.f32 %v3135, %v3312
        %v3568 = vadd.f32 %v3136, %v3314
        %v3569 = vadd.f32 %v3137, %v3316
        %v3570 = vadd.f32 %v3138, %v3318
        %v3571 = vadd.f32 %v3139, %v3320
        %v3572 = vadd.f32 %v3140, %v3322
        %v3573 = vadd.f32 %v3141, %v3324
        %v3574 = vadd.f32 %v3142, %v3326
        %v3575 = vadd.f32 %v3143, %v3328
        %v3576 = vadd.f32 %v3144, %v3330
        %v3577 = vadd.f32 %v3145, %v3332
        %v3578 = vadd.f32 %v3146, %v3334
        %v3579 = vadd.f32 %v3147, %v3336
        %v3580 = vadd.f32 %v3148, %v3338
        %v3581 = vadd.f32 %v3149, %v3340
        %v3582 = vadd.f32 %v3150, %v3342
        %v3583 = vadd.f32 %v3151, %v3344
        %v3584 = vadd.f32 %v3152, %v3346
        %v3585 = vadd.f32 %v3153, %v3348
        %v3586 = vadd.f32 %v3154, %v3350
        %v3587 = vadd.f32 %v3155, %v3352
        %v3588 = vadd.f32 %v3156, %v3354
        %v3589 = vadd.f32 %v3157, %v3356
        %v3590 = vadd.f32 %v3158, %v3358
        %v3591 = vadd.f32 %v3159, %v3360
        %v3592 = vadd.f32 %v3160, %v3362
        %v3593 = vadd.f32 %v3161, %v3364
        %v3594 = vadd.f32 %v3162, %v3366
        %v3595 = vadd.f32 %v3163, %v3368
        %v3596 = vadd.f32 %v3164, %v3370
        %v3597 = vadd.f32 %v3165, %v3372
        %v3598 = vadd.f32 %v3166, %v3374
        %v3599 = vadd.f32 %v3167, %v3376
        %v3600 = vadd.f32 %v3168, %v3378
        %v3601 = vadd.f32 %v3169, %v3380
        %v3602 = vadd.f32 %v3170, %v3382
        %v3603 = vadd.f32 %v3171, %v3384
        %v3604 = vadd.f32 %v3172, %v3386
        %v3605 = vadd.f32 %v3173, %v3388
        %v3606 = vadd.f32 %v3174, %v3390
        %v3607 = vadd.f32 %v3175, %v3392
        %v3608 = vadd.f32 %v3176, %v3394
        %v3609 = vadd.f32 %v3177, %v3396
        %v3610 = vadd.f32 %v3178, %v3398
        %v3611 = vadd.f32 %v3179, %v3400
        %v3612 = vadd.f32 %v3180, %v3402
        %v3613 = vadd.f32 %v3181, %v3404
        %v3614 = vadd.f32 %v3182, %v3406
        %v3615 = vadd.f32 %v3183, %v3408
        %v3616 = vadd.f32 %v3184, %v3410
        %v3617 = vadd.f32 %v3185, %v3412
        %v3618 = vadd.f32 %v3186, %v3414
        %v3619 = vadd.f32 %v3187, %v3416
        %v3620 = vadd.f32 %v3188, %v3418
        %v3621 = vadd.f32 %v3189, %v3420
        %v3622 = vadd.f32 %v3190, %v3422
        %v3623 = vadd.f32 %v3191, %v3424
        %v3624 = vadd.f32 %v3192, %v3426
        %v3625 = vadd.f32 %v3193, %v3428
        %v3626 = vadd.f32 %v3194, %v3430
        %v3627 = vadd.f32 %v3195, %v3432
        %v3628 = vadd.f32 %v3196, %v3434
        %v3629 = vadd.f32 %v3197, %v3436
        %v3630 = vadd.f32 %v3198, %v3438
        %v3631 = vadd.f32 %v3199, %v3440
        %v3632 = vadd.f32 %v3200, %v3442
        %v3633 = vadd.f32 %v3201, %v3444
        %v3634 = vadd.f32 %v3202, %v3446
        %v3635 = vadd.f32 %v3203, %v3448
        %v3636 = vadd.f32 %v3204, %v3450
        %v3637 = vadd.f32 %v3205, %v3452
        %v3638 = vadd.f32 %v3206, %v3454
        %v3639 = vadd.f32 %v3207, %v3456
        %v3640 = vadd.f32 %v3208, %v3458
        %v3641 = vadd.f32 %v3209, %v3460
        %v3642 = vadd.f32 %v3210, %v3462
        %v3643 = vadd.f32 %v3211, %v3464
        %v3644 = vadd.f32 %v3212, %v3466
        %v3645 = vadd.f32 %v3213, %v3468
        %v3646 = vadd.f32 %v3214, %v3470
        %v3647 = vadd.f32 %v3215, %v3472
        %v3648 = vadd.f32 %v3216, %v3474
        %v3649 = vadd.f32 %v3217, %v3476
        %v3650 = vadd.f32 %v3218, %v3478
        %v3651 = vadd.f32 %v3219, %v3480
        %v3652 = vadd.f32 %v3220, %v3482
        %v3653 = vadd.f32 %v3221, %v3484
        %v3654 = vadd.f32 %v3222, %v3486
        %v3655 = vadd.f32 %v3223, %v3488
        %v3656 = vadd.f32 %v3224, %v3490
        %v3657 = vadd.f32 %v3225, %v3492
        %v3658 = vadd.f32 %v3226, %v3494
        %v3659 = vadd.f32 %v3227, %v3496
        %v3660 = vadd.f32 %v3228, %v3498
        %v3661 = vadd.f32 %v3229, %v3500
        %v3662 = vadd.f32 %v3230, %v3502
        %v3663 = vadd.f32 %v3231, %v3504
        %v3664 = vadd.f32 %v3232, %v3506
        %v3665 = vadd.f32 %v3233, %v3508
        %v3666 = vadd.f32 %v3234, %v3510
        %v3667 = vadd.f32 %v3235, %v3512
        %v3668 = vadd.f32 %v3236, %v3514
        %v3669 = vadd.f32 %v3237, %v3516
        %v3670 = vadd.f32 %v3238, %v3518
        %v3671 = vadd.f32 %v3239, %v3520
        %v3672 = vadd.f32 %v3240, %v3522
        %v3673 = vadd.f32 %v3241, %v3524
        %v3674 = vadd.f32 %v3242, %v3526
        %v3675 = vadd.f32 %v3243, %v3528
        %v3676 = vadd.f32 %v3244, %v3530
        %v3677 = vadd.f32 %v3245, %v3532
        %v3678 = vadd.f32 %v3246, %v3534
        %3679 = vrot.lane.b32.xlu0 %v3105, 32
        %v3680 = vpop.permute.xlu0 %3679
        %3681 = vrot.lane.b32.xlu0 %v3106, 32
        %v3682 = vpop.permute.xlu0 %3681
        %3683 = vrot.lane.b32.xlu0 %v3107, 32
        %v3684 = vpop.permute.xlu0 %3683
        %3685 = vrot.lane.b32.xlu0 %v3108, 32
        %v3686 = vpop.permute.xlu0 %3685
        %3687 = vrot.lane.b32.xlu0 %v3109, 32
        %v3688 = vpop.permute.xlu0 %3687
        %3689 = vrot.lane.b32.xlu0 %v3110, 32
        %v3690 = vpop.permute.xlu0 %3689
        %3691 = vrot.lane.b32.xlu0 %v3111, 32
        %v3692 = vpop.permute.xlu0 %3691
        %3693 = vrot.lane.b32.xlu0 %v3112, 32
        %v3694 = vpop.permute.xlu0 %3693
        %3695 = vrot.lane.b32.xlu0 %v3113, 32
        %v3696 = vpop.permute.xlu0 %3695
        %3697 = vrot.lane.b32.xlu0 %v3114, 32
        %v3698 = vpop.permute.xlu0 %3697
        %3699 = vrot.lane.b32.xlu0 %v3115, 32
        %v3700 = vpop.permute.xlu0 %3699
        %3701 = vrot.lane.b32.xlu0 %v3116, 32
        %v3702 = vpop.permute.xlu0 %3701
        %3703 = vrot.lane.b32.xlu0 %v3117, 32
        %v3704 = vpop.permute.xlu0 %3703
        %3705 = vrot.lane.b32.xlu0 %v3118, 32
        %v3706 = vpop.permute.xlu0 %3705
        %3707 = vrot.lane.b32.xlu0 %v3119, 32
        %v3708 = vpop.permute.xlu0 %3707
        %3709 = vrot.lane.b32.xlu0 %v3120, 32
        %v3710 = vpop.permute.xlu0 %3709
        %3711 = vrot.lane.b32.xlu0 %v3121, 32
        %v3712 = vpop.permute.xlu0 %3711
        %3713 = vrot.lane.b32.xlu0 %v3122, 32
        %v3714 = vpop.permute.xlu0 %3713
        %3715 = vrot.lane.b32.xlu0 %v3123, 32
        %v3716 = vpop.permute.xlu0 %3715
        %3717 = vrot.lane.b32.xlu0 %v3124, 32
        %v3718 = vpop.permute.xlu0 %3717
        %3719 = vrot.lane.b32.xlu0 %v3125, 32
        %v3720 = vpop.permute.xlu0 %3719
        %3721 = vrot.lane.b32.xlu0 %v3126, 32
        %v3722 = vpop.permute.xlu0 %3721
        %3723 = vrot.lane.b32.xlu0 %v3127, 32
        %v3724 = vpop.permute.xlu0 %3723
        %3725 = vrot.lane.b32.xlu0 %v3128, 32
        %v3726 = vpop.permute.xlu0 %3725
        %3727 = vrot.lane.b32.xlu0 %v3129, 32
        %v3728 = vpop.permute.xlu0 %3727
        %3729 = vrot.lane.b32.xlu0 %v3130, 32
        %v3730 = vpop.permute.xlu0 %3729
        %3731 = vrot.lane.b32.xlu0 %v3131, 32
        %v3732 = vpop.permute.xlu0 %3731
        %3733 = vrot.lane.b32.xlu0 %v3132, 32
        %v3734 = vpop.permute.xlu0 %3733
        %3735 = vrot.lane.b32.xlu0 %v3133, 32
        %v3736 = vpop.permute.xlu0 %3735
        %3737 = vrot.lane.b32.xlu0 %v3134, 32
        %v3738 = vpop.permute.xlu0 %3737
        %3739 = vrot.lane.b32.xlu0 %v3135, 32
        %v3740 = vpop.permute.xlu0 %3739
        %3741 = vrot.lane.b32.xlu0 %v3136, 32
        %v3742 = vpop.permute.xlu0 %3741
        %3743 = vrot.lane.b32.xlu0 %v3137, 32
        %v3744 = vpop.permute.xlu0 %3743
        %3745 = vrot.lane.b32.xlu0 %v3138, 32
        %v3746 = vpop.permute.xlu0 %3745
        %3747 = vrot.lane.b32.xlu0 %v3139, 32
        %v3748 = vpop.permute.xlu0 %3747
        %3749 = vrot.lane.b32.xlu0 %v3140, 32
        %v3750 = vpop.permute.xlu0 %3749
        %3751 = vrot.lane.b32.xlu0 %v3141, 32
        %v3752 = vpop.permute.xlu0 %3751
        %3753 = vrot.lane.b32.xlu0 %v3142, 32
        %v3754 = vpop.permute.xlu0 %3753
        %3755 = vrot.lane.b32.xlu0 %v3143, 32
        %v3756 = vpop.permute.xlu0 %3755
        %3757 = vrot.lane.b32.xlu0 %v3144, 32
        %v3758 = vpop.permute.xlu0 %3757
        %3759 = vrot.lane.b32.xlu0 %v3145, 32
        %v3760 = vpop.permute.xlu0 %3759
        %3761 = vrot.lane.b32.xlu0 %v3146, 32
        %v3762 = vpop.permute.xlu0 %3761
        %3763 = vrot.lane.b32.xlu0 %v3147, 32
        %v3764 = vpop.permute.xlu0 %3763
        %3765 = vrot.lane.b32.xlu0 %v3148, 32
        %v3766 = vpop.permute.xlu0 %3765
        %3767 = vrot.lane.b32.xlu0 %v3149, 32
        %v3768 = vpop.permute.xlu0 %3767
        %3769 = vrot.lane.b32.xlu0 %v3150, 32
        %v3770 = vpop.permute.xlu0 %3769
        %3771 = vrot.lane.b32.xlu0 %v3151, 32
        %v3772 = vpop.permute.xlu0 %3771
        %3773 = vrot.lane.b32.xlu0 %v3152, 32
        %v3774 = vpop.permute.xlu0 %3773
        %3775 = vrot.lane.b32.xlu0 %v3153, 32
        %v3776 = vpop.permute.xlu0 %3775
        %3777 = vrot.lane.b32.xlu0 %v3154, 32
        %v3778 = vpop.permute.xlu0 %3777
        %3779 = vrot.lane.b32.xlu0 %v3155, 32
        %v3780 = vpop.permute.xlu0 %3779
        %3781 = vrot.lane.b32.xlu0 %v3156, 32
        %v3782 = vpop.permute.xlu0 %3781
        %3783 = vrot.lane.b32.xlu0 %v3157, 32
        %v3784 = vpop.permute.xlu0 %3783
        %3785 = vrot.lane.b32.xlu0 %v3158, 32
        %v3786 = vpop.permute.xlu0 %3785
        %3787 = vrot.lane.b32.xlu0 %v3159, 32
        %v3788 = vpop.permute.xlu0 %3787
        %3789 = vrot.lane.b32.xlu0 %v3160, 32
        %v3790 = vpop.permute.xlu0 %3789
        %3791 = vrot.lane.b32.xlu0 %v3161, 32
        %v3792 = vpop.permute.xlu0 %3791
        %3793 = vrot.lane.b32.xlu0 %v3162, 32
        %v3794 = vpop.permute.xlu0 %3793
        %3795 = vrot.lane.b32.xlu0 %v3163, 32
        %v3796 = vpop.permute.xlu0 %3795
        %3797 = vrot.lane.b32.xlu0 %v3164, 32
        %v3798 = vpop.permute.xlu0 %3797
        %3799 = vrot.lane.b32.xlu0 %v3165, 32
        %v3800 = vpop.permute.xlu0 %3799
        %3801 = vrot.lane.b32.xlu0 %v3166, 32
        %v3802 = vpop.permute.xlu0 %3801
        %3803 = vrot.lane.b32.xlu0 %v3167, 32
        %v3804 = vpop.permute.xlu0 %3803
        %3805 = vrot.lane.b32.xlu0 %v3168, 32
        %v3806 = vpop.permute.xlu0 %3805
        %3807 = vrot.lane.b32.xlu0 %v3169, 32
        %v3808 = vpop.permute.xlu0 %3807
        %3809 = vrot.lane.b32.xlu0 %v3170, 32
        %v3810 = vpop.permute.xlu0 %3809
        %3811 = vrot.lane.b32.xlu0 %v3171, 32
        %v3812 = vpop.permute.xlu0 %3811
        %3813 = vrot.lane.b32.xlu0 %v3172, 32
        %v3814 = vpop.permute.xlu0 %3813
        %3815 = vrot.lane.b32.xlu0 %v3173, 32
        %v3816 = vpop.permute.xlu0 %3815
        %3817 = vrot.lane.b32.xlu0 %v3174, 32
        %v3818 = vpop.permute.xlu0 %3817
        %3819 = vrot.lane.b32.xlu0 %v3175, 32
        %v3820 = vpop.permute.xlu0 %3819
        %3821 = vrot.lane.b32.xlu0 %v3176, 32
        %v3822 = vpop.permute.xlu0 %3821
        %3823 = vrot.lane.b32.xlu0 %v3177, 32
        %v3824 = vpop.permute.xlu0 %3823
        %3825 = vrot.lane.b32.xlu0 %v3178, 32
        %v3826 = vpop.permute.xlu0 %3825
        %3827 = vrot.lane.b32.xlu0 %v3179, 32
        %v3828 = vpop.permute.xlu0 %3827
        %3829 = vrot.lane.b32.xlu0 %v3180, 32
        %v3830 = vpop.permute.xlu0 %3829
        %3831 = vrot.lane.b32.xlu0 %v3181, 32
        %v3832 = vpop.permute.xlu0 %3831
        %3833 = vrot.lane.b32.xlu0 %v3182, 32
        %v3834 = vpop.permute.xlu0 %3833
        %3835 = vrot.lane.b32.xlu0 %v3183, 32
        %v3836 = vpop.permute.xlu0 %3835
        %3837 = vrot.lane.b32.xlu0 %v3184, 32
        %v3838 = vpop.permute.xlu0 %3837
        %3839 = vrot.lane.b32.xlu0 %v3185, 32
        %v3840 = vpop.permute.xlu0 %3839
        %3841 = vrot.lane.b32.xlu0 %v3186, 32
        %v3842 = vpop.permute.xlu0 %3841
        %3843 = vrot.lane.b32.xlu0 %v3187, 32
        %v3844 = vpop.permute.xlu0 %3843
        %3845 = vrot.lane.b32.xlu0 %v3188, 32
        %v3846 = vpop.permute.xlu0 %3845
        %3847 = vrot.lane.b32.xlu0 %v3189, 32
        %v3848 = vpop.permute.xlu0 %3847
        %3849 = vrot.lane.b32.xlu0 %v3190, 32
        %v3850 = vpop.permute.xlu0 %3849
        %3851 = vrot.lane.b32.xlu0 %v3191, 32
        %v3852 = vpop.permute.xlu0 %3851
        %3853 = vrot.lane.b32.xlu0 %v3192, 32
        %v3854 = vpop.permute.xlu0 %3853
        %3855 = vrot.lane.b32.xlu0 %v3193, 32
        %v3856 = vpop.permute.xlu0 %3855
        %3857 = vrot.lane.b32.xlu0 %v3194, 32
        %v3858 = vpop.permute.xlu0 %3857
        %3859 = vrot.lane.b32.xlu0 %v3195, 32
        %v3860 = vpop.permute.xlu0 %3859
        %3861 = vrot.lane.b32.xlu0 %v3196, 32
        %v3862 = vpop.permute.xlu0 %3861
        %3863 = vrot.lane.b32.xlu0 %v3197, 32
        %v3864 = vpop.permute.xlu0 %3863
        %3865 = vrot.lane.b32.xlu0 %v3198, 32
        %v3866 = vpop.permute.xlu0 %3865
        %3867 = vrot.lane.b32.xlu0 %v3199, 32
        %v3868 = vpop.permute.xlu0 %3867
        %3869 = vrot.lane.b32.xlu0 %v3200, 32
        %v3870 = vpop.permute.xlu0 %3869
        %3871 = vrot.lane.b32.xlu0 %v3201, 32
        %v3872 = vpop.permute.xlu0 %3871
        %3873 = vrot.lane.b32.xlu0 %v3202, 32
        %v3874 = vpop.permute.xlu0 %3873
        %3875 = vrot.lane.b32.xlu0 %v3203, 32
        %v3876 = vpop.permute.xlu0 %3875
        %3877 = vrot.lane.b32.xlu0 %v3204, 32
        %v3878 = vpop.permute.xlu0 %3877
        %3879 = vrot.lane.b32.xlu0 %v3205, 32
        %v3880 = vpop.permute.xlu0 %3879
        %3881 = vrot.lane.b32.xlu0 %v3206, 32
        %v3882 = vpop.permute.xlu0 %3881
        %3883 = vrot.lane.b32.xlu0 %v3207, 32
        %v3884 = vpop.permute.xlu0 %3883
        %3885 = vrot.lane.b32.xlu0 %v3208, 32
        %v3886 = vpop.permute.xlu0 %3885
        %3887 = vrot.lane.b32.xlu0 %v3209, 32
        %v3888 = vpop.permute.xlu0 %3887
        %3889 = vrot.lane.b32.xlu0 %v3210, 32
        %v3890 = vpop.permute.xlu0 %3889
        %3891 = vrot.lane.b32.xlu0 %v3211, 32
        %v3892 = vpop.permute.xlu0 %3891
        %3893 = vrot.lane.b32.xlu0 %v3212, 32
        %v3894 = vpop.permute.xlu0 %3893
        %3895 = vrot.lane.b32.xlu0 %v3213, 32
        %v3896 = vpop.permute.xlu0 %3895
        %3897 = vrot.lane.b32.xlu0 %v3214, 32
        %v3898 = vpop.permute.xlu0 %3897
        %3899 = vrot.lane.b32.xlu0 %v3215, 32
        %v3900 = vpop.permute.xlu0 %3899
        %3901 = vrot.lane.b32.xlu0 %v3216, 32
        %v3902 = vpop.permute.xlu0 %3901
        %3903 = vrot.lane.b32.xlu0 %v3217, 32
        %v3904 = vpop.permute.xlu0 %3903
        %3905 = vrot.lane.b32.xlu0 %v3218, 32
        %v3906 = vpop.permute.xlu0 %3905
        %3907 = vrot.lane.b32.xlu0 %v3219, 32
        %v3908 = vpop.permute.xlu0 %3907
        %3909 = vrot.lane.b32.xlu0 %v3220, 32
        %v3910 = vpop.permute.xlu0 %3909
        %3911 = vrot.lane.b32.xlu0 %v3221, 32
        %v3912 = vpop.permute.xlu0 %3911
        %3913 = vrot.lane.b32.xlu0 %v3222, 32
        %v3914 = vpop.permute.xlu0 %3913
        %3915 = vrot.lane.b32.xlu0 %v3223, 32
        %v3916 = vpop.permute.xlu0 %3915
        %3917 = vrot.lane.b32.xlu0 %v3224, 32
        %v3918 = vpop.permute.xlu0 %3917
        %3919 = vrot.lane.b32.xlu0 %v3225, 32
        %v3920 = vpop.permute.xlu0 %3919
        %3921 = vrot.lane.b32.xlu0 %v3226, 32
        %v3922 = vpop.permute.xlu0 %3921
        %3923 = vrot.lane.b32.xlu0 %v3227, 32
        %v3924 = vpop.permute.xlu0 %3923
        %3925 = vrot.lane.b32.xlu0 %v3228, 32
        %v3926 = vpop.permute.xlu0 %3925
        %3927 = vrot.lane.b32.xlu0 %v3229, 32
        %v3928 = vpop.permute.xlu0 %3927
        %3929 = vrot.lane.b32.xlu0 %v3230, 32
        %v3930 = vpop.permute.xlu0 %3929
        %3931 = vrot.lane.b32.xlu0 %v3231, 32
        %v3932 = vpop.permute.xlu0 %3931
        %3933 = vrot.lane.b32.xlu0 %v3232, 32
        %v3934 = vpop.permute.xlu0 %3933
        %3935 = vrot.lane.b32.xlu0 %v3233, 32
        %v3936 = vpop.permute.xlu0 %3935
        %3937 = vrot.lane.b32.xlu0 %v3234, 32
        %v3938 = vpop.permute.xlu0 %3937
        %3939 = vrot.lane.b32.xlu0 %v3235, 32
        %v3940 = vpop.permute.xlu0 %3939
        %3941 = vrot.lane.b32.xlu0 %v3236, 32
        %v3942 = vpop.permute.xlu0 %3941
        %3943 = vrot.lane.b32.xlu0 %v3237, 32
        %v3944 = vpop.permute.xlu0 %3943
        %3945 = vrot.lane.b32.xlu0 %v3238, 32
        %v3946 = vpop.permute.xlu0 %3945
        %3947 = vrot.lane.b32.xlu0 %v3239, 32
        %v3948 = vpop.permute.xlu0 %3947
        %3949 = vrot.lane.b32.xlu0 %v3240, 32
        %v3950 = vpop.permute.xlu0 %3949
        %3951 = vrot.lane.b32.xlu0 %v3241, 32
        %v3952 = vpop.permute.xlu0 %3951
        %3953 = vrot.lane.b32.xlu0 %v3242, 32
        %v3954 = vpop.permute.xlu0 %3953
        %3955 = vrot.lane.b32.xlu0 %v3243, 32
        %v3956 = vpop.permute.xlu0 %3955
        %3957 = vrot.lane.b32.xlu0 %v3244, 32
        %v3958 = vpop.permute.xlu0 %3957
        %3959 = vrot.lane.b32.xlu0 %v3245, 32
        %v3960 = vpop.permute.xlu0 %3959
        %3961 = vrot.lane.b32.xlu0 %v3246, 32
        %v3962 = vpop.permute.xlu0 %3961
        %3963 = vrot.lane.b32.xlu0 0.0, 32
        %v3964 = vpop.permute.xlu0 %3963
        %v3965 = vadd.f32 %v3535, %v3680
        %v3966 = vadd.f32 %v3536, %v3682
        %v3967 = vadd.f32 %v3537, %v3684
        %v3968 = vadd.f32 %v3538, %v3686
        %v3969 = vadd.f32 %v3539, %v3688
        %v3970 = vadd.f32 %v3540, %v3690
        %v3971 = vadd.f32 %v3541, %v3692
        %v3972 = vadd.f32 %v3542, %v3694
        %v3973 = vadd.f32 %v3543, %v3696
        %v3974 = vadd.f32 %v3544, %v3698
        %v3975 = vadd.f32 %v3545, %v3700
        %v3976 = vadd.f32 %v3546, %v3702
        %v3977 = vadd.f32 %v3547, %v3704
        %v3978 = vadd.f32 %v3548, %v3706
        %v3979 = vadd.f32 %v3549, %v3708
        %v3980 = vadd.f32 %v3550, %v3710
        %v3981 = vadd.f32 %v3551, %v3712
        %v3982 = vadd.f32 %v3552, %v3714
        %v3983 = vadd.f32 %v3553, %v3716
        %v3984 = vadd.f32 %v3554, %v3718
        %v3985 = vadd.f32 %v3555, %v3720
        %v3986 = vadd.f32 %v3556, %v3722
        %v3987 = vadd.f32 %v3557, %v3724
        %v3988 = vadd.f32 %v3558, %v3726
        %v3989 = vadd.f32 %v3559, %v3728
        %v3990 = vadd.f32 %v3560, %v3730
        %v3991 = vadd.f32 %v3561, %v3732
        %v3992 = vadd.f32 %v3562, %v3734
        %v3993 = vadd.f32 %v3563, %v3736
        %v3994 = vadd.f32 %v3564, %v3738
        %v3995 = vadd.f32 %v3565, %v3740
        %v3996 = vadd.f32 %v3566, %v3742
        %v3997 = vadd.f32 %v3567, %v3744
        %v3998 = vadd.f32 %v3568, %v3746
        %v3999 = vadd.f32 %v3569, %v3748
        %v4000 = vadd.f32 %v3570, %v3750
        %v4001 = vadd.f32 %v3571, %v3752
        %v4002 = vadd.f32 %v3572, %v3754
        %v4003 = vadd.f32 %v3573, %v3756
        %v4004 = vadd.f32 %v3574, %v3758
        %v4005 = vadd.f32 %v3575, %v3760
        %v4006 = vadd.f32 %v3576, %v3762
        %v4007 = vadd.f32 %v3577, %v3764
        %v4008 = vadd.f32 %v3578, %v3766
        %v4009 = vadd.f32 %v3579, %v3768
        %v4010 = vadd.f32 %v3580, %v3770
        %v4011 = vadd.f32 %v3581, %v3772
        %v4012 = vadd.f32 %v3582, %v3774
        %v4013 = vadd.f32 %v3583, %v3776
        %v4014 = vadd.f32 %v3584, %v3778
        %v4015 = vadd.f32 %v3585, %v3780
        %v4016 = vadd.f32 %v3586, %v3782
        %v4017 = vadd.f32 %v3587, %v3784
        %v4018 = vadd.f32 %v3588, %v3786
        %v4019 = vadd.f32 %v3589, %v3788
        %v4020 = vadd.f32 %v3590, %v3790
        %v4021 = vadd.f32 %v3591, %v3792
        %v4022 = vadd.f32 %v3592, %v3794
        %v4023 = vadd.f32 %v3593, %v3796
        %v4024 = vadd.f32 %v3594, %v3798
        %v4025 = vadd.f32 %v3595, %v3800
        %v4026 = vadd.f32 %v3596, %v3802
        %v4027 = vadd.f32 %v3597, %v3804
        %v4028 = vadd.f32 %v3598, %v3806
        %v4029 = vadd.f32 %v3599, %v3808
        %v4030 = vadd.f32 %v3600, %v3810
        %v4031 = vadd.f32 %v3601, %v3812
        %v4032 = vadd.f32 %v3602, %v3814
        %v4033 = vadd.f32 %v3603, %v3816
        %v4034 = vadd.f32 %v3604, %v3818
        %v4035 = vadd.f32 %v3605, %v3820
        %v4036 = vadd.f32 %v3606, %v3822
        %v4037 = vadd.f32 %v3607, %v3824
        %v4038 = vadd.f32 %v3608, %v3826
        %v4039 = vadd.f32 %v3609, %v3828
        %v4040 = vadd.f32 %v3610, %v3830
        %v4041 = vadd.f32 %v3611, %v3832
        %v4042 = vadd.f32 %v3612, %v3834
        %v4043 = vadd.f32 %v3613, %v3836
        %v4044 = vadd.f32 %v3614, %v3838
        %v4045 = vadd.f32 %v3615, %v3840
        %v4046 = vadd.f32 %v3616, %v3842
        %v4047 = vadd.f32 %v3617, %v3844
        %v4048 = vadd.f32 %v3618, %v3846
        %v4049 = vadd.f32 %v3619, %v3848
        %v4050 = vadd.f32 %v3620, %v3850
        %v4051 = vadd.f32 %v3621, %v3852
        %v4052 = vadd.f32 %v3622, %v3854
        %v4053 = vadd.f32 %v3623, %v3856
        %v4054 = vadd.f32 %v3624, %v3858
        %v4055 = vadd.f32 %v3625, %v3860
        %v4056 = vadd.f32 %v3626, %v3862
        %v4057 = vadd.f32 %v3627, %v3864
        %v4058 = vadd.f32 %v3628, %v3866
        %v4059 = vadd.f32 %v3629, %v3868
        %v4060 = vadd.f32 %v3630, %v3870
        %v4061 = vadd.f32 %v3631, %v3872
        %v4062 = vadd.f32 %v3632, %v3874
        %v4063 = vadd.f32 %v3633, %v3876
        %v4064 = vadd.f32 %v3634, %v3878
        %v4065 = vadd.f32 %v3635, %v3880
        %v4066 = vadd.f32 %v3636, %v3882
        %v4067 = vadd.f32 %v3637, %v3884
        %v4068 = vadd.f32 %v3638, %v3886
        %v4069 = vadd.f32 %v3639, %v3888
        %v4070 = vadd.f32 %v3640, %v3890
        %v4071 = vadd.f32 %v3641, %v3892
        %v4072 = vadd.f32 %v3642, %v3894
        %v4073 = vadd.f32 %v3643, %v3896
        %v4074 = vadd.f32 %v3644, %v3898
        %v4075 = vadd.f32 %v3645, %v3900
        %v4076 = vadd.f32 %v3646, %v3902
        %v4077 = vadd.f32 %v3647, %v3904
        %v4078 = vadd.f32 %v3648, %v3906
        %v4079 = vadd.f32 %v3649, %v3908
        %v4080 = vadd.f32 %v3650, %v3910
        %v4081 = vadd.f32 %v3651, %v3912
        %v4082 = vadd.f32 %v3652, %v3914
        %v4083 = vadd.f32 %v3653, %v3916
        %v4084 = vadd.f32 %v3654, %v3918
        %v4085 = vadd.f32 %v3655, %v3920
        %v4086 = vadd.f32 %v3656, %v3922
        %v4087 = vadd.f32 %v3657, %v3924
        %v4088 = vadd.f32 %v3658, %v3926
        %v4089 = vadd.f32 %v3659, %v3928
        %v4090 = vadd.f32 %v3660, %v3930
        %v4091 = vadd.f32 %v3661, %v3932
        %v4092 = vadd.f32 %v3662, %v3934
        %v4093 = vadd.f32 %v3663, %v3936
        %v4094 = vadd.f32 %v3664, %v3938
        %v4095 = vadd.f32 %v3665, %v3940
        %v4096 = vadd.f32 %v3666, %v3942
        %v4097 = vadd.f32 %v3667, %v3944
        %v4098 = vadd.f32 %v3668, %v3946
        %v4099 = vadd.f32 %v3669, %v3948
        %v4100 = vadd.f32 %v3670, %v3950
        %v4101 = vadd.f32 %v3671, %v3952
        %v4102 = vadd.f32 %v3672, %v3954
        %v4103 = vadd.f32 %v3673, %v3956
        %v4104 = vadd.f32 %v3674, %v3958
        %v4105 = vadd.f32 %v3675, %v3960
        %v4106 = vadd.f32 %v3676, %v3962
        %v4107 = vadd.f32 %v3677, %v3964
        %v4108 = vadd.f32 %v3678, %v3964
        %4109 = vrot.lane.b32.xlu0 %v3106, 48
        %v4110 = vpop.permute.xlu0 %4109
        %4111 = vrot.lane.b32.xlu0 %v3107, 48
        %v4112 = vpop.permute.xlu0 %4111
        %4113 = vrot.lane.b32.xlu0 %v3108, 48
        %v4114 = vpop.permute.xlu0 %4113
        %4115 = vrot.lane.b32.xlu0 %v3109, 48
        %v4116 = vpop.permute.xlu0 %4115
        %4117 = vrot.lane.b32.xlu0 %v3110, 48
        %v4118 = vpop.permute.xlu0 %4117
        %4119 = vrot.lane.b32.xlu0 %v3111, 48
        %v4120 = vpop.permute.xlu0 %4119
        %4121 = vrot.lane.b32.xlu0 %v3112, 48
        %v4122 = vpop.permute.xlu0 %4121
        %4123 = vrot.lane.b32.xlu0 %v3113, 48
        %v4124 = vpop.permute.xlu0 %4123
        %4125 = vrot.lane.b32.xlu0 %v3114, 48
        %v4126 = vpop.permute.xlu0 %4125
        %4127 = vrot.lane.b32.xlu0 %v3115, 48
        %v4128 = vpop.permute.xlu0 %4127
        %4129 = vrot.lane.b32.xlu0 %v3116, 48
        %v4130 = vpop.permute.xlu0 %4129
        %4131 = vrot.lane.b32.xlu0 %v3117, 48
        %v4132 = vpop.permute.xlu0 %4131
        %4133 = vrot.lane.b32.xlu0 %v3118, 48
        %v4134 = vpop.permute.xlu0 %4133
        %4135 = vrot.lane.b32.xlu0 %v3119, 48
        %v4136 = vpop.permute.xlu0 %4135
        %4137 = vrot.lane.b32.xlu0 %v3120, 48
        %v4138 = vpop.permute.xlu0 %4137
        %4139 = vrot.lane.b32.xlu0 %v3121, 48
        %v4140 = vpop.permute.xlu0 %4139
        %4141 = vrot.lane.b32.xlu0 %v3122, 48
        %v4142 = vpop.permute.xlu0 %4141
        %4143 = vrot.lane.b32.xlu0 %v3123, 48
        %v4144 = vpop.permute.xlu0 %4143
        %4145 = vrot.lane.b32.xlu0 %v3124, 48
        %v4146 = vpop.permute.xlu0 %4145
        %4147 = vrot.lane.b32.xlu0 %v3125, 48
        %v4148 = vpop.permute.xlu0 %4147
        %4149 = vrot.lane.b32.xlu0 %v3126, 48
        %v4150 = vpop.permute.xlu0 %4149
        %4151 = vrot.lane.b32.xlu0 %v3127, 48
        %v4152 = vpop.permute.xlu0 %4151
        %4153 = vrot.lane.b32.xlu0 %v3128, 48
        %v4154 = vpop.permute.xlu0 %4153
        %4155 = vrot.lane.b32.xlu0 %v3129, 48
        %v4156 = vpop.permute.xlu0 %4155
        %4157 = vrot.lane.b32.xlu0 %v3130, 48
        %v4158 = vpop.permute.xlu0 %4157
        %4159 = vrot.lane.b32.xlu0 %v3131, 48
        %v4160 = vpop.permute.xlu0 %4159
        %4161 = vrot.lane.b32.xlu0 %v3132, 48
        %v4162 = vpop.permute.xlu0 %4161
        %4163 = vrot.lane.b32.xlu0 %v3133, 48
        %v4164 = vpop.permute.xlu0 %4163
        %4165 = vrot.lane.b32.xlu0 %v3134, 48
        %v4166 = vpop.permute.xlu0 %4165
        %4167 = vrot.lane.b32.xlu0 %v3135, 48
        %v4168 = vpop.permute.xlu0 %4167
        %4169 = vrot.lane.b32.xlu0 %v3136, 48
        %v4170 = vpop.permute.xlu0 %4169
        %4171 = vrot.lane.b32.xlu0 %v3137, 48
        %v4172 = vpop.permute.xlu0 %4171
        %4173 = vrot.lane.b32.xlu0 %v3138, 48
        %v4174 = vpop.permute.xlu0 %4173
        %4175 = vrot.lane.b32.xlu0 %v3139, 48
        %v4176 = vpop.permute.xlu0 %4175
        %4177 = vrot.lane.b32.xlu0 %v3140, 48
        %v4178 = vpop.permute.xlu0 %4177
        %4179 = vrot.lane.b32.xlu0 %v3141, 48
        %v4180 = vpop.permute.xlu0 %4179
        %4181 = vrot.lane.b32.xlu0 %v3142, 48
        %v4182 = vpop.permute.xlu0 %4181
        %4183 = vrot.lane.b32.xlu0 %v3143, 48
        %v4184 = vpop.permute.xlu0 %4183
        %4185 = vrot.lane.b32.xlu0 %v3144, 48
        %v4186 = vpop.permute.xlu0 %4185
        %4187 = vrot.lane.b32.xlu0 %v3145, 48
        %v4188 = vpop.permute.xlu0 %4187
        %4189 = vrot.lane.b32.xlu0 %v3146, 48
        %v4190 = vpop.permute.xlu0 %4189
        %4191 = vrot.lane.b32.xlu0 %v3147, 48
        %v4192 = vpop.permute.xlu0 %4191
        %4193 = vrot.lane.b32.xlu0 %v3148, 48
        %v4194 = vpop.permute.xlu0 %4193
        %4195 = vrot.lane.b32.xlu0 %v3149, 48
        %v4196 = vpop.permute.xlu0 %4195
        %4197 = vrot.lane.b32.xlu0 %v3150, 48
        %v4198 = vpop.permute.xlu0 %4197
        %4199 = vrot.lane.b32.xlu0 %v3151, 48
        %v4200 = vpop.permute.xlu0 %4199
        %4201 = vrot.lane.b32.xlu0 %v3152, 48
        %v4202 = vpop.permute.xlu0 %4201
        %4203 = vrot.lane.b32.xlu0 %v3153, 48
        %v4204 = vpop.permute.xlu0 %4203
        %4205 = vrot.lane.b32.xlu0 %v3154, 48
        %v4206 = vpop.permute.xlu0 %4205
        %4207 = vrot.lane.b32.xlu0 %v3155, 48
        %v4208 = vpop.permute.xlu0 %4207
        %4209 = vrot.lane.b32.xlu0 %v3156, 48
        %v4210 = vpop.permute.xlu0 %4209
        %4211 = vrot.lane.b32.xlu0 %v3157, 48
        %v4212 = vpop.permute.xlu0 %4211
        %4213 = vrot.lane.b32.xlu0 %v3158, 48
        %v4214 = vpop.permute.xlu0 %4213
        %4215 = vrot.lane.b32.xlu0 %v3159, 48
        %v4216 = vpop.permute.xlu0 %4215
        %4217 = vrot.lane.b32.xlu0 %v3160, 48
        %v4218 = vpop.permute.xlu0 %4217
        %4219 = vrot.lane.b32.xlu0 %v3161, 48
        %v4220 = vpop.permute.xlu0 %4219
        %4221 = vrot.lane.b32.xlu0 %v3162, 48
        %v4222 = vpop.permute.xlu0 %4221
        %4223 = vrot.lane.b32.xlu0 %v3163, 48
        %v4224 = vpop.permute.xlu0 %4223
        %4225 = vrot.lane.b32.xlu0 %v3164, 48
        %v4226 = vpop.permute.xlu0 %4225
        %4227 = vrot.lane.b32.xlu0 %v3165, 48
        %v4228 = vpop.permute.xlu0 %4227
        %4229 = vrot.lane.b32.xlu0 %v3166, 48
        %v4230 = vpop.permute.xlu0 %4229
        %4231 = vrot.lane.b32.xlu0 %v3167, 48
        %v4232 = vpop.permute.xlu0 %4231
        %4233 = vrot.lane.b32.xlu0 %v3168, 48
        %v4234 = vpop.permute.xlu0 %4233
        %4235 = vrot.lane.b32.xlu0 %v3169, 48
        %v4236 = vpop.permute.xlu0 %4235
        %4237 = vrot.lane.b32.xlu0 %v3170, 48
        %v4238 = vpop.permute.xlu0 %4237
        %4239 = vrot.lane.b32.xlu0 %v3171, 48
        %v4240 = vpop.permute.xlu0 %4239
        %4241 = vrot.lane.b32.xlu0 %v3172, 48
        %v4242 = vpop.permute.xlu0 %4241
        %4243 = vrot.lane.b32.xlu0 %v3173, 48
        %v4244 = vpop.permute.xlu0 %4243
        %4245 = vrot.lane.b32.xlu0 %v3174, 48
        %v4246 = vpop.permute.xlu0 %4245
        %4247 = vrot.lane.b32.xlu0 %v3175, 48
        %v4248 = vpop.permute.xlu0 %4247
        %4249 = vrot.lane.b32.xlu0 %v3176, 48
        %v4250 = vpop.permute.xlu0 %4249
        %4251 = vrot.lane.b32.xlu0 %v3177, 48
        %v4252 = vpop.permute.xlu0 %4251
        %4253 = vrot.lane.b32.xlu0 %v3178, 48
        %v4254 = vpop.permute.xlu0 %4253
        %4255 = vrot.lane.b32.xlu0 %v3179, 48
        %v4256 = vpop.permute.xlu0 %4255
        %4257 = vrot.lane.b32.xlu0 %v3180, 48
        %v4258 = vpop.permute.xlu0 %4257
        %4259 = vrot.lane.b32.xlu0 %v3181, 48
        %v4260 = vpop.permute.xlu0 %4259
        %4261 = vrot.lane.b32.xlu0 %v3182, 48
        %v4262 = vpop.permute.xlu0 %4261
        %4263 = vrot.lane.b32.xlu0 %v3183, 48
        %v4264 = vpop.permute.xlu0 %4263
        %4265 = vrot.lane.b32.xlu0 %v3184, 48
        %v4266 = vpop.permute.xlu0 %4265
        %4267 = vrot.lane.b32.xlu0 %v3185, 48
        %v4268 = vpop.permute.xlu0 %4267
        %4269 = vrot.lane.b32.xlu0 %v3186, 48
        %v4270 = vpop.permute.xlu0 %4269
        %4271 = vrot.lane.b32.xlu0 %v3187, 48
        %v4272 = vpop.permute.xlu0 %4271
        %4273 = vrot.lane.b32.xlu0 %v3188, 48
        %v4274 = vpop.permute.xlu0 %4273
        %4275 = vrot.lane.b32.xlu0 %v3189, 48
        %v4276 = vpop.permute.xlu0 %4275
        %4277 = vrot.lane.b32.xlu0 %v3190, 48
        %v4278 = vpop.permute.xlu0 %4277
        %4279 = vrot.lane.b32.xlu0 %v3191, 48
        %v4280 = vpop.permute.xlu0 %4279
        %4281 = vrot.lane.b32.xlu0 %v3192, 48
        %v4282 = vpop.permute.xlu0 %4281
        %4283 = vrot.lane.b32.xlu0 %v3193, 48
        %v4284 = vpop.permute.xlu0 %4283
        %4285 = vrot.lane.b32.xlu0 %v3194, 48
        %v4286 = vpop.permute.xlu0 %4285
        %4287 = vrot.lane.b32.xlu0 %v3195, 48
        %v4288 = vpop.permute.xlu0 %4287
        %4289 = vrot.lane.b32.xlu0 %v3196, 48
        %v4290 = vpop.permute.xlu0 %4289
        %4291 = vrot.lane.b32.xlu0 %v3197, 48
        %v4292 = vpop.permute.xlu0 %4291
        %4293 = vrot.lane.b32.xlu0 %v3198, 48
        %v4294 = vpop.permute.xlu0 %4293
        %4295 = vrot.lane.b32.xlu0 %v3199, 48
        %v4296 = vpop.permute.xlu0 %4295
        %4297 = vrot.lane.b32.xlu0 %v3200, 48
        %v4298 = vpop.permute.xlu0 %4297
        %4299 = vrot.lane.b32.xlu0 %v3201, 48
        %v4300 = vpop.permute.xlu0 %4299
        %4301 = vrot.lane.b32.xlu0 %v3202, 48
        %v4302 = vpop.permute.xlu0 %4301
        %4303 = vrot.lane.b32.xlu0 %v3203, 48
        %v4304 = vpop.permute.xlu0 %4303
        %4305 = vrot.lane.b32.xlu0 %v3204, 48
        %v4306 = vpop.permute.xlu0 %4305
        %4307 = vrot.lane.b32.xlu0 %v3205, 48
        %v4308 = vpop.permute.xlu0 %4307
        %4309 = vrot.lane.b32.xlu0 %v3206, 48
        %v4310 = vpop.permute.xlu0 %4309
        %4311 = vrot.lane.b32.xlu0 %v3207, 48
        %v4312 = vpop.permute.xlu0 %4311
        %4313 = vrot.lane.b32.xlu0 %v3208, 48
        %v4314 = vpop.permute.xlu0 %4313
        %4315 = vrot.lane.b32.xlu0 %v3209, 48
        %v4316 = vpop.permute.xlu0 %4315
        %4317 = vrot.lane.b32.xlu0 %v3210, 48
        %v4318 = vpop.permute.xlu0 %4317
        %4319 = vrot.lane.b32.xlu0 %v3211, 48
        %v4320 = vpop.permute.xlu0 %4319
        %4321 = vrot.lane.b32.xlu0 %v3212, 48
        %v4322 = vpop.permute.xlu0 %4321
        %4323 = vrot.lane.b32.xlu0 %v3213, 48
        %v4324 = vpop.permute.xlu0 %4323
        %4325 = vrot.lane.b32.xlu0 %v3214, 48
        %v4326 = vpop.permute.xlu0 %4325
        %4327 = vrot.lane.b32.xlu0 %v3215, 48
        %v4328 = vpop.permute.xlu0 %4327
        %4329 = vrot.lane.b32.xlu0 %v3216, 48
        %v4330 = vpop.permute.xlu0 %4329
        %4331 = vrot.lane.b32.xlu0 %v3217, 48
        %v4332 = vpop.permute.xlu0 %4331
        %4333 = vrot.lane.b32.xlu0 %v3218, 48
        %v4334 = vpop.permute.xlu0 %4333
        %4335 = vrot.lane.b32.xlu0 %v3219, 48
        %v4336 = vpop.permute.xlu0 %4335
        %4337 = vrot.lane.b32.xlu0 %v3220, 48
        %v4338 = vpop.permute.xlu0 %4337
        %4339 = vrot.lane.b32.xlu0 %v3221, 48
        %v4340 = vpop.permute.xlu0 %4339
        %4341 = vrot.lane.b32.xlu0 %v3222, 48
        %v4342 = vpop.permute.xlu0 %4341
        %4343 = vrot.lane.b32.xlu0 %v3223, 48
        %v4344 = vpop.permute.xlu0 %4343
        %4345 = vrot.lane.b32.xlu0 %v3224, 48
        %v4346 = vpop.permute.xlu0 %4345
        %4347 = vrot.lane.b32.xlu0 %v3225, 48
        %v4348 = vpop.permute.xlu0 %4347
        %4349 = vrot.lane.b32.xlu0 %v3226, 48
        %v4350 = vpop.permute.xlu0 %4349
        %4351 = vrot.lane.b32.xlu0 %v3227, 48
        %v4352 = vpop.permute.xlu0 %4351
        %4353 = vrot.lane.b32.xlu0 %v3228, 48
        %v4354 = vpop.permute.xlu0 %4353
        %4355 = vrot.lane.b32.xlu0 %v3229, 48
        %v4356 = vpop.permute.xlu0 %4355
        %4357 = vrot.lane.b32.xlu0 %v3230, 48
        %v4358 = vpop.permute.xlu0 %4357
        %4359 = vrot.lane.b32.xlu0 %v3231, 48
        %v4360 = vpop.permute.xlu0 %4359
        %4361 = vrot.lane.b32.xlu0 %v3232, 48
        %v4362 = vpop.permute.xlu0 %4361
        %4363 = vrot.lane.b32.xlu0 %v3233, 48
        %v4364 = vpop.permute.xlu0 %4363
        %4365 = vrot.lane.b32.xlu0 %v3234, 48
        %v4366 = vpop.permute.xlu0 %4365
        %4367 = vrot.lane.b32.xlu0 %v3235, 48
        %v4368 = vpop.permute.xlu0 %4367
        %4369 = vrot.lane.b32.xlu0 %v3236, 48
        %v4370 = vpop.permute.xlu0 %4369
        %4371 = vrot.lane.b32.xlu0 %v3237, 48
        %v4372 = vpop.permute.xlu0 %4371
        %4373 = vrot.lane.b32.xlu0 %v3238, 48
        %v4374 = vpop.permute.xlu0 %4373
        %4375 = vrot.lane.b32.xlu0 %v3239, 48
        %v4376 = vpop.permute.xlu0 %4375
        %4377 = vrot.lane.b32.xlu0 %v3240, 48
        %v4378 = vpop.permute.xlu0 %4377
        %4379 = vrot.lane.b32.xlu0 %v3241, 48
        %v4380 = vpop.permute.xlu0 %4379
        %4381 = vrot.lane.b32.xlu0 %v3242, 48
        %v4382 = vpop.permute.xlu0 %4381
        %4383 = vrot.lane.b32.xlu0 %v3243, 48
        %v4384 = vpop.permute.xlu0 %4383
        %4385 = vrot.lane.b32.xlu0 %v3244, 48
        %v4386 = vpop.permute.xlu0 %4385
        %4387 = vrot.lane.b32.xlu0 %v3245, 48
        %v4388 = vpop.permute.xlu0 %4387
        %4389 = vrot.lane.b32.xlu0 %v3246, 48
        %v4390 = vpop.permute.xlu0 %4389
        %4391 = vrot.lane.b32.xlu0 0.0, 48
        %v4392 = vpop.permute.xlu0 %4391
        %v4393 = vadd.f32 %v3965, %v4110
        %v4394 = vadd.f32 %v3966, %v4112
        %v4395 = vadd.f32 %v3967, %v4114
        %v4396 = vadd.f32 %v3968, %v4116
        %v4397 = vadd.f32 %v3969, %v4118
        %v4398 = vadd.f32 %v3970, %v4120
        %v4399 = vadd.f32 %v3971, %v4122
        %v4400 = vadd.f32 %v3972, %v4124
        %v4401 = vadd.f32 %v3973, %v4126
        %v4402 = vadd.f32 %v3974, %v4128
        %v4403 = vadd.f32 %v3975, %v4130
        %v4404 = vadd.f32 %v3976, %v4132
        %v4405 = vadd.f32 %v3977, %v4134
        %v4406 = vadd.f32 %v3978, %v4136
        %v4407 = vadd.f32 %v3979, %v4138
        %v4408 = vadd.f32 %v3980, %v4140
        %v4409 = vadd.f32 %v3981, %v4142
        %v4410 = vadd.f32 %v3982, %v4144
        %v4411 = vadd.f32 %v3983, %v4146
        %v4412 = vadd.f32 %v3984, %v4148
        %v4413 = vadd.f32 %v3985, %v4150
        %v4414 = vadd.f32 %v3986, %v4152
        %v4415 = vadd.f32 %v3987, %v4154
        %v4416 = vadd.f32 %v3988, %v4156
        %v4417 = vadd.f32 %v3989, %v4158
        %v4418 = vadd.f32 %v3990, %v4160
        %v4419 = vadd.f32 %v3991, %v4162
        %v4420 = vadd.f32 %v3992, %v4164
        %v4421 = vadd.f32 %v3993, %v4166
        %v4422 = vadd.f32 %v3994, %v4168
        %v4423 = vadd.f32 %v3995, %v4170
        %v4424 = vadd.f32 %v3996, %v4172
        %v4425 = vadd.f32 %v3997, %v4174
        %v4426 = vadd.f32 %v3998, %v4176
        %v4427 = vadd.f32 %v3999, %v4178
        %v4428 = vadd.f32 %v4000, %v4180
        %v4429 = vadd.f32 %v4001, %v4182
        %v4430 = vadd.f32 %v4002, %v4184
        %v4431 = vadd.f32 %v4003, %v4186
        %v4432 = vadd.f32 %v4004, %v4188
        %v4433 = vadd.f32 %v4005, %v4190
        %v4434 = vadd.f32 %v4006, %v4192
        %v4435 = vadd.f32 %v4007, %v4194
        %v4436 = vadd.f32 %v4008, %v4196
        %v4437 = vadd.f32 %v4009, %v4198
        %v4438 = vadd.f32 %v4010, %v4200
        %v4439 = vadd.f32 %v4011, %v4202
        %v4440 = vadd.f32 %v4012, %v4204
        %v4441 = vadd.f32 %v4013, %v4206
        %v4442 = vadd.f32 %v4014, %v4208
        %v4443 = vadd.f32 %v4015, %v4210
        %v4444 = vadd.f32 %v4016, %v4212
        %v4445 = vadd.f32 %v4017, %v4214
        %v4446 = vadd.f32 %v4018, %v4216
        %v4447 = vadd.f32 %v4019, %v4218
        %v4448 = vadd.f32 %v4020, %v4220
        %v4449 = vadd.f32 %v4021, %v4222
        %v4450 = vadd.f32 %v4022, %v4224
        %v4451 = vadd.f32 %v4023, %v4226
        %v4452 = vadd.f32 %v4024, %v4228
        %v4453 = vadd.f32 %v4025, %v4230
        %v4454 = vadd.f32 %v4026, %v4232
        %v4455 = vadd.f32 %v4027, %v4234
        %v4456 = vadd.f32 %v4028, %v4236
        %v4457 = vadd.f32 %v4029, %v4238
        %v4458 = vadd.f32 %v4030, %v4240
        %v4459 = vadd.f32 %v4031, %v4242
        %v4460 = vadd.f32 %v4032, %v4244
        %v4461 = vadd.f32 %v4033, %v4246
        %v4462 = vadd.f32 %v4034, %v4248
        %v4463 = vadd.f32 %v4035, %v4250
        %v4464 = vadd.f32 %v4036, %v4252
        %v4465 = vadd.f32 %v4037, %v4254
        %v4466 = vadd.f32 %v4038, %v4256
        %v4467 = vadd.f32 %v4039, %v4258
        %v4468 = vadd.f32 %v4040, %v4260
        %v4469 = vadd.f32 %v4041, %v4262
        %v4470 = vadd.f32 %v4042, %v4264
        %v4471 = vadd.f32 %v4043, %v4266
        %v4472 = vadd.f32 %v4044, %v4268
        %v4473 = vadd.f32 %v4045, %v4270
        %v4474 = vadd.f32 %v4046, %v4272
        %v4475 = vadd.f32 %v4047, %v4274
        %v4476 = vadd.f32 %v4048, %v4276
        %v4477 = vadd.f32 %v4049, %v4278
        %v4478 = vadd.f32 %v4050, %v4280
        %v4479 = vadd.f32 %v4051, %v4282
        %v4480 = vadd.f32 %v4052, %v4284
        %v4481 = vadd.f32 %v4053, %v4286
        %v4482 = vadd.f32 %v4054, %v4288
        %v4483 = vadd.f32 %v4055, %v4290
        %v4484 = vadd.f32 %v4056, %v4292
        %v4485 = vadd.f32 %v4057, %v4294
        %v4486 = vadd.f32 %v4058, %v4296
        %v4487 = vadd.f32 %v4059, %v4298
        %v4488 = vadd.f32 %v4060, %v4300
        %v4489 = vadd.f32 %v4061, %v4302
        %v4490 = vadd.f32 %v4062, %v4304
        %v4491 = vadd.f32 %v4063, %v4306
        %v4492 = vadd.f32 %v4064, %v4308
        %v4493 = vadd.f32 %v4065, %v4310
        %v4494 = vadd.f32 %v4066, %v4312
        %v4495 = vadd.f32 %v4067, %v4314
        %v4496 = vadd.f32 %v4068, %v4316
        %v4497 = vadd.f32 %v4069, %v4318
        %v4498 = vadd.f32 %v4070, %v4320
        %v4499 = vadd.f32 %v4071, %v4322
        %v4500 = vadd.f32 %v4072, %v4324
        %v4501 = vadd.f32 %v4073, %v4326
        %v4502 = vadd.f32 %v4074, %v4328
        %v4503 = vadd.f32 %v4075, %v4330
        %v4504 = vadd.f32 %v4076, %v4332
        %v4505 = vadd.f32 %v4077, %v4334
        %v4506 = vadd.f32 %v4078, %v4336
        %v4507 = vadd.f32 %v4079, %v4338
        %v4508 = vadd.f32 %v4080, %v4340
        %v4509 = vadd.f32 %v4081, %v4342
        %v4510 = vadd.f32 %v4082, %v4344
        %v4511 = vadd.f32 %v4083, %v4346
        %v4512 = vadd.f32 %v4084, %v4348
        %v4513 = vadd.f32 %v4085, %v4350
        %v4514 = vadd.f32 %v4086, %v4352
        %v4515 = vadd.f32 %v4087, %v4354
        %v4516 = vadd.f32 %v4088, %v4356
        %v4517 = vadd.f32 %v4089, %v4358
        %v4518 = vadd.f32 %v4090, %v4360
        %v4519 = vadd.f32 %v4091, %v4362
        %v4520 = vadd.f32 %v4092, %v4364
        %v4521 = vadd.f32 %v4093, %v4366
        %v4522 = vadd.f32 %v4094, %v4368
        %v4523 = vadd.f32 %v4095, %v4370
        %v4524 = vadd.f32 %v4096, %v4372
        %v4525 = vadd.f32 %v4097, %v4374
        %v4526 = vadd.f32 %v4098, %v4376
        %v4527 = vadd.f32 %v4099, %v4378
        %v4528 = vadd.f32 %v4100, %v4380
        %v4529 = vadd.f32 %v4101, %v4382
        %v4530 = vadd.f32 %v4102, %v4384
        %v4531 = vadd.f32 %v4103, %v4386
        %v4532 = vadd.f32 %v4104, %v4388
        %v4533 = vadd.f32 %v4105, %v4390
        %v4534 = vadd.f32 %v4106, %v4392
        %v4535 = vadd.f32 %v4107, %v4392
        %v4536 = vadd.f32 %v4108, %v4392
        %4537 = vrot.lane.b32.xlu0 %v3107, 64
        %v4538 = vpop.permute.xlu0 %4537
        %4539 = vrot.lane.b32.xlu0 %v3108, 64
        %v4540 = vpop.permute.xlu0 %4539
        %4541 = vrot.lane.b32.xlu0 %v3109, 64
        %v4542 = vpop.permute.xlu0 %4541
        %4543 = vrot.lane.b32.xlu0 %v3110, 64
        %v4544 = vpop.permute.xlu0 %4543
        %4545 = vrot.lane.b32.xlu0 %v3111, 64
        %v4546 = vpop.permute.xlu0 %4545
        %4547 = vrot.lane.b32.xlu0 %v3112, 64
        %v4548 = vpop.permute.xlu0 %4547
        %4549 = vrot.lane.b32.xlu0 %v3113, 64
        %v4550 = vpop.permute.xlu0 %4549
        %4551 = vrot.lane.b32.xlu0 %v3114, 64
        %v4552 = vpop.permute.xlu0 %4551
        %4553 = vrot.lane.b32.xlu0 %v3115, 64
        %v4554 = vpop.permute.xlu0 %4553
        %4555 = vrot.lane.b32.xlu0 %v3116, 64
        %v4556 = vpop.permute.xlu0 %4555
        %4557 = vrot.lane.b32.xlu0 %v3117, 64
        %v4558 = vpop.permute.xlu0 %4557
        %4559 = vrot.lane.b32.xlu0 %v3118, 64
        %v4560 = vpop.permute.xlu0 %4559
        %4561 = vrot.lane.b32.xlu0 %v3119, 64
        %v4562 = vpop.permute.xlu0 %4561
        %4563 = vrot.lane.b32.xlu0 %v3120, 64
        %v4564 = vpop.permute.xlu0 %4563
        %4565 = vrot.lane.b32.xlu0 %v3121, 64
        %v4566 = vpop.permute.xlu0 %4565
        %4567 = vrot.lane.b32.xlu0 %v3122, 64
        %v4568 = vpop.permute.xlu0 %4567
        %4569 = vrot.lane.b32.xlu0 %v3123, 64
        %v4570 = vpop.permute.xlu0 %4569
        %4571 = vrot.lane.b32.xlu0 %v3124, 64
        %v4572 = vpop.permute.xlu0 %4571
        %4573 = vrot.lane.b32.xlu0 %v3125, 64
        %v4574 = vpop.permute.xlu0 %4573
        %4575 = vrot.lane.b32.xlu0 %v3126, 64
        %v4576 = vpop.permute.xlu0 %4575
        %4577 = vrot.lane.b32.xlu0 %v3127, 64
        %v4578 = vpop.permute.xlu0 %4577
        %4579 = vrot.lane.b32.xlu0 %v3128, 64
        %v4580 = vpop.permute.xlu0 %4579
        %4581 = vrot.lane.b32.xlu0 %v3129, 64
        %v4582 = vpop.permute.xlu0 %4581
        %4583 = vrot.lane.b32.xlu0 %v3130, 64
        %v4584 = vpop.permute.xlu0 %4583
        %4585 = vrot.lane.b32.xlu0 %v3131, 64
        %v4586 = vpop.permute.xlu0 %4585
        %4587 = vrot.lane.b32.xlu0 %v3132, 64
        %v4588 = vpop.permute.xlu0 %4587
        %4589 = vrot.lane.b32.xlu0 %v3133, 64
        %v4590 = vpop.permute.xlu0 %4589
        %4591 = vrot.lane.b32.xlu0 %v3134, 64
        %v4592 = vpop.permute.xlu0 %4591
        %4593 = vrot.lane.b32.xlu0 %v3135, 64
        %v4594 = vpop.permute.xlu0 %4593
        %4595 = vrot.lane.b32.xlu0 %v3136, 64
        %v4596 = vpop.permute.xlu0 %4595
        %4597 = vrot.lane.b32.xlu0 %v3137, 64
        %v4598 = vpop.permute.xlu0 %4597
        %4599 = vrot.lane.b32.xlu0 %v3138, 64
        %v4600 = vpop.permute.xlu0 %4599
        %4601 = vrot.lane.b32.xlu0 %v3139, 64
        %v4602 = vpop.permute.xlu0 %4601
        %4603 = vrot.lane.b32.xlu0 %v3140, 64
        %v4604 = vpop.permute.xlu0 %4603
        %4605 = vrot.lane.b32.xlu0 %v3141, 64
        %v4606 = vpop.permute.xlu0 %4605
        %4607 = vrot.lane.b32.xlu0 %v3142, 64
        %v4608 = vpop.permute.xlu0 %4607
        %4609 = vrot.lane.b32.xlu0 %v3143, 64
        %v4610 = vpop.permute.xlu0 %4609
        %4611 = vrot.lane.b32.xlu0 %v3144, 64
        %v4612 = vpop.permute.xlu0 %4611
        %4613 = vrot.lane.b32.xlu0 %v3145, 64
        %v4614 = vpop.permute.xlu0 %4613
        %4615 = vrot.lane.b32.xlu0 %v3146, 64
        %v4616 = vpop.permute.xlu0 %4615
        %4617 = vrot.lane.b32.xlu0 %v3147, 64
        %v4618 = vpop.permute.xlu0 %4617
        %4619 = vrot.lane.b32.xlu0 %v3148, 64
        %v4620 = vpop.permute.xlu0 %4619
        %4621 = vrot.lane.b32.xlu0 %v3149, 64
        %v4622 = vpop.permute.xlu0 %4621
        %4623 = vrot.lane.b32.xlu0 %v3150, 64
        %v4624 = vpop.permute.xlu0 %4623
        %4625 = vrot.lane.b32.xlu0 %v3151, 64
        %v4626 = vpop.permute.xlu0 %4625
        %4627 = vrot.lane.b32.xlu0 %v3152, 64
        %v4628 = vpop.permute.xlu0 %4627
        %4629 = vrot.lane.b32.xlu0 %v3153, 64
        %v4630 = vpop.permute.xlu0 %4629
        %4631 = vrot.lane.b32.xlu0 %v3154, 64
        %v4632 = vpop.permute.xlu0 %4631
        %4633 = vrot.lane.b32.xlu0 %v3155, 64
        %v4634 = vpop.permute.xlu0 %4633
        %4635 = vrot.lane.b32.xlu0 %v3156, 64
        %v4636 = vpop.permute.xlu0 %4635
        %4637 = vrot.lane.b32.xlu0 %v3157, 64
        %v4638 = vpop.permute.xlu0 %4637
        %4639 = vrot.lane.b32.xlu0 %v3158, 64
        %v4640 = vpop.permute.xlu0 %4639
        %4641 = vrot.lane.b32.xlu0 %v3159, 64
        %v4642 = vpop.permute.xlu0 %4641
        %4643 = vrot.lane.b32.xlu0 %v3160, 64
        %v4644 = vpop.permute.xlu0 %4643
        %4645 = vrot.lane.b32.xlu0 %v3161, 64
        %v4646 = vpop.permute.xlu0 %4645
        %4647 = vrot.lane.b32.xlu0 %v3162, 64
        %v4648 = vpop.permute.xlu0 %4647
        %4649 = vrot.lane.b32.xlu0 %v3163, 64
        %v4650 = vpop.permute.xlu0 %4649
        %4651 = vrot.lane.b32.xlu0 %v3164, 64
        %v4652 = vpop.permute.xlu0 %4651
        %4653 = vrot.lane.b32.xlu0 %v3165, 64
        %v4654 = vpop.permute.xlu0 %4653
        %4655 = vrot.lane.b32.xlu0 %v3166, 64
        %v4656 = vpop.permute.xlu0 %4655
        %4657 = vrot.lane.b32.xlu0 %v3167, 64
        %v4658 = vpop.permute.xlu0 %4657
        %4659 = vrot.lane.b32.xlu0 %v3168, 64
        %v4660 = vpop.permute.xlu0 %4659
        %4661 = vrot.lane.b32.xlu0 %v3169, 64
        %v4662 = vpop.permute.xlu0 %4661
        %4663 = vrot.lane.b32.xlu0 %v3170, 64
        %v4664 = vpop.permute.xlu0 %4663
        %4665 = vrot.lane.b32.xlu0 %v3171, 64
        %v4666 = vpop.permute.xlu0 %4665
        %4667 = vrot.lane.b32.xlu0 %v3172, 64
        %v4668 = vpop.permute.xlu0 %4667
        %4669 = vrot.lane.b32.xlu0 %v3173, 64
        %v4670 = vpop.permute.xlu0 %4669
        %4671 = vrot.lane.b32.xlu0 %v3174, 64
        %v4672 = vpop.permute.xlu0 %4671
        %4673 = vrot.lane.b32.xlu0 %v3175, 64
        %v4674 = vpop.permute.xlu0 %4673
        %4675 = vrot.lane.b32.xlu0 %v3176, 64
        %v4676 = vpop.permute.xlu0 %4675
        %4677 = vrot.lane.b32.xlu0 %v3177, 64
        %v4678 = vpop.permute.xlu0 %4677
        %4679 = vrot.lane.b32.xlu0 %v3178, 64
        %v4680 = vpop.permute.xlu0 %4679
        %4681 = vrot.lane.b32.xlu0 %v3179, 64
        %v4682 = vpop.permute.xlu0 %4681
        %4683 = vrot.lane.b32.xlu0 %v3180, 64
        %v4684 = vpop.permute.xlu0 %4683
        %4685 = vrot.lane.b32.xlu0 %v3181, 64
        %v4686 = vpop.permute.xlu0 %4685
        %4687 = vrot.lane.b32.xlu0 %v3182, 64
        %v4688 = vpop.permute.xlu0 %4687
        %4689 = vrot.lane.b32.xlu0 %v3183, 64
        %v4690 = vpop.permute.xlu0 %4689
        %4691 = vrot.lane.b32.xlu0 %v3184, 64
        %v4692 = vpop.permute.xlu0 %4691
        %4693 = vrot.lane.b32.xlu0 %v3185, 64
        %v4694 = vpop.permute.xlu0 %4693
        %4695 = vrot.lane.b32.xlu0 %v3186, 64
        %v4696 = vpop.permute.xlu0 %4695
        %4697 = vrot.lane.b32.xlu0 %v3187, 64
        %v4698 = vpop.permute.xlu0 %4697
        %4699 = vrot.lane.b32.xlu0 %v3188, 64
        %v4700 = vpop.permute.xlu0 %4699
        %4701 = vrot.lane.b32.xlu0 %v3189, 64
        %v4702 = vpop.permute.xlu0 %4701
        %4703 = vrot.lane.b32.xlu0 %v3190, 64
        %v4704 = vpop.permute.xlu0 %4703
        %4705 = vrot.lane.b32.xlu0 %v3191, 64
        %v4706 = vpop.permute.xlu0 %4705
        %4707 = vrot.lane.b32.xlu0 %v3192, 64
        %v4708 = vpop.permute.xlu0 %4707
        %4709 = vrot.lane.b32.xlu0 %v3193, 64
        %v4710 = vpop.permute.xlu0 %4709
        %4711 = vrot.lane.b32.xlu0 %v3194, 64
        %v4712 = vpop.permute.xlu0 %4711
        %4713 = vrot.lane.b32.xlu0 %v3195, 64
        %v4714 = vpop.permute.xlu0 %4713
        %4715 = vrot.lane.b32.xlu0 %v3196, 64
        %v4716 = vpop.permute.xlu0 %4715
        %4717 = vrot.lane.b32.xlu0 %v3197, 64
        %v4718 = vpop.permute.xlu0 %4717
        %4719 = vrot.lane.b32.xlu0 %v3198, 64
        %v4720 = vpop.permute.xlu0 %4719
        %4721 = vrot.lane.b32.xlu0 %v3199, 64
        %v4722 = vpop.permute.xlu0 %4721
        %4723 = vrot.lane.b32.xlu0 %v3200, 64
        %v4724 = vpop.permute.xlu0 %4723
        %4725 = vrot.lane.b32.xlu0 %v3201, 64
        %v4726 = vpop.permute.xlu0 %4725
        %4727 = vrot.lane.b32.xlu0 %v3202, 64
        %v4728 = vpop.permute.xlu0 %4727
        %4729 = vrot.lane.b32.xlu0 %v3203, 64
        %v4730 = vpop.permute.xlu0 %4729
        %4731 = vrot.lane.b32.xlu0 %v3204, 64
        %v4732 = vpop.permute.xlu0 %4731
        %4733 = vrot.lane.b32.xlu0 %v3205, 64
        %v4734 = vpop.permute.xlu0 %4733
        %4735 = vrot.lane.b32.xlu0 %v3206, 64
        %v4736 = vpop.permute.xlu0 %4735
        %4737 = vrot.lane.b32.xlu0 %v3207, 64
        %v4738 = vpop.permute.xlu0 %4737
        %4739 = vrot.lane.b32.xlu0 %v3208, 64
        %v4740 = vpop.permute.xlu0 %4739
        %4741 = vrot.lane.b32.xlu0 %v3209, 64
        %v4742 = vpop.permute.xlu0 %4741
        %4743 = vrot.lane.b32.xlu0 %v3210, 64
        %v4744 = vpop.permute.xlu0 %4743
        %4745 = vrot.lane.b32.xlu0 %v3211, 64
        %v4746 = vpop.permute.xlu0 %4745
        %4747 = vrot.lane.b32.xlu0 %v3212, 64
        %v4748 = vpop.permute.xlu0 %4747
        %4749 = vrot.lane.b32.xlu0 %v3213, 64
        %v4750 = vpop.permute.xlu0 %4749
        %4751 = vrot.lane.b32.xlu0 %v3214, 64
        %v4752 = vpop.permute.xlu0 %4751
        %4753 = vrot.lane.b32.xlu0 %v3215, 64
        %v4754 = vpop.permute.xlu0 %4753
        %4755 = vrot.lane.b32.xlu0 %v3216, 64
        %v4756 = vpop.permute.xlu0 %4755
        %4757 = vrot.lane.b32.xlu0 %v3217, 64
        %v4758 = vpop.permute.xlu0 %4757
        %4759 = vrot.lane.b32.xlu0 %v3218, 64
        %v4760 = vpop.permute.xlu0 %4759
        %4761 = vrot.lane.b32.xlu0 %v3219, 64
        %v4762 = vpop.permute.xlu0 %4761
        %4763 = vrot.lane.b32.xlu0 %v3220, 64
        %v4764 = vpop.permute.xlu0 %4763
        %4765 = vrot.lane.b32.xlu0 %v3221, 64
        %v4766 = vpop.permute.xlu0 %4765
        %4767 = vrot.lane.b32.xlu0 %v3222, 64
        %v4768 = vpop.permute.xlu0 %4767
        %4769 = vrot.lane.b32.xlu0 %v3223, 64
        %v4770 = vpop.permute.xlu0 %4769
        %4771 = vrot.lane.b32.xlu0 %v3224, 64
        %v4772 = vpop.permute.xlu0 %4771
        %4773 = vrot.lane.b32.xlu0 %v3225, 64
        %v4774 = vpop.permute.xlu0 %4773
        %4775 = vrot.lane.b32.xlu0 %v3226, 64
        %v4776 = vpop.permute.xlu0 %4775
        %4777 = vrot.lane.b32.xlu0 %v3227, 64
        %v4778 = vpop.permute.xlu0 %4777
        %4779 = vrot.lane.b32.xlu0 %v3228, 64
        %v4780 = vpop.permute.xlu0 %4779
        %4781 = vrot.lane.b32.xlu0 %v3229, 64
        %v4782 = vpop.permute.xlu0 %4781
        %4783 = vrot.lane.b32.xlu0 %v3230, 64
        %v4784 = vpop.permute.xlu0 %4783
        %4785 = vrot.lane.b32.xlu0 %v3231, 64
        %v4786 = vpop.permute.xlu0 %4785
        %4787 = vrot.lane.b32.xlu0 %v3232, 64
        %v4788 = vpop.permute.xlu0 %4787
        %4789 = vrot.lane.b32.xlu0 %v3233, 64
        %v4790 = vpop.permute.xlu0 %4789
        %4791 = vrot.lane.b32.xlu0 %v3234, 64
        %v4792 = vpop.permute.xlu0 %4791
        %4793 = vrot.lane.b32.xlu0 %v3235, 64
        %v4794 = vpop.permute.xlu0 %4793
        %4795 = vrot.lane.b32.xlu0 %v3236, 64
        %v4796 = vpop.permute.xlu0 %4795
        %4797 = vrot.lane.b32.xlu0 %v3237, 64
        %v4798 = vpop.permute.xlu0 %4797
        %4799 = vrot.lane.b32.xlu0 %v3238, 64
        %v4800 = vpop.permute.xlu0 %4799
        %4801 = vrot.lane.b32.xlu0 %v3239, 64
        %v4802 = vpop.permute.xlu0 %4801
        %4803 = vrot.lane.b32.xlu0 %v3240, 64
        %v4804 = vpop.permute.xlu0 %4803
        %4805 = vrot.lane.b32.xlu0 %v3241, 64
        %v4806 = vpop.permute.xlu0 %4805
        %4807 = vrot.lane.b32.xlu0 %v3242, 64
        %v4808 = vpop.permute.xlu0 %4807
        %4809 = vrot.lane.b32.xlu0 %v3243, 64
        %v4810 = vpop.permute.xlu0 %4809
        %4811 = vrot.lane.b32.xlu0 %v3244, 64
        %v4812 = vpop.permute.xlu0 %4811
        %4813 = vrot.lane.b32.xlu0 %v3245, 64
        %v4814 = vpop.permute.xlu0 %4813
        %4815 = vrot.lane.b32.xlu0 %v3246, 64
        %v4816 = vpop.permute.xlu0 %4815
        %4817 = vrot.lane.b32.xlu0 0.0, 64
        %v4818 = vpop.permute.xlu0 %4817
        %v4819 = vadd.f32 %v4393, %v4538
        %v4820 = vadd.f32 %v4394, %v4540
        %v4821 = vadd.f32 %v4395, %v4542
        %v4822 = vadd.f32 %v4396, %v4544
        %v4823 = vadd.f32 %v4397, %v4546
        %v4824 = vadd.f32 %v4398, %v4548
        %v4825 = vadd.f32 %v4399, %v4550
        %v4826 = vadd.f32 %v4400, %v4552
        %v4827 = vadd.f32 %v4401, %v4554
        %v4828 = vadd.f32 %v4402, %v4556
        %v4829 = vadd.f32 %v4403, %v4558
        %v4830 = vadd.f32 %v4404, %v4560
        %v4831 = vadd.f32 %v4405, %v4562
        %v4832 = vadd.f32 %v4406, %v4564
        %v4833 = vadd.f32 %v4407, %v4566
        %v4834 = vadd.f32 %v4408, %v4568
        %v4835 = vadd.f32 %v4409, %v4570
        %v4836 = vadd.f32 %v4410, %v4572
        %v4837 = vadd.f32 %v4411, %v4574
        %v4838 = vadd.f32 %v4412, %v4576
        %v4839 = vadd.f32 %v4413, %v4578
        %v4840 = vadd.f32 %v4414, %v4580
        %v4841 = vadd.f32 %v4415, %v4582
        %v4842 = vadd.f32 %v4416, %v4584
        %v4843 = vadd.f32 %v4417, %v4586
        %v4844 = vadd.f32 %v4418, %v4588
        %v4845 = vadd.f32 %v4419, %v4590
        %v4846 = vadd.f32 %v4420, %v4592
        %v4847 = vadd.f32 %v4421, %v4594
        %v4848 = vadd.f32 %v4422, %v4596
        %v4849 = vadd.f32 %v4423, %v4598
        %v4850 = vadd.f32 %v4424, %v4600
        %v4851 = vadd.f32 %v4425, %v4602
        %v4852 = vadd.f32 %v4426, %v4604
        %v4853 = vadd.f32 %v4427, %v4606
        %v4854 = vadd.f32 %v4428, %v4608
        %v4855 = vadd.f32 %v4429, %v4610
        %v4856 = vadd.f32 %v4430, %v4612
        %v4857 = vadd.f32 %v4431, %v4614
        %v4858 = vadd.f32 %v4432, %v4616
        %v4859 = vadd.f32 %v4433, %v4618
        %v4860 = vadd.f32 %v4434, %v4620
        %v4861 = vadd.f32 %v4435, %v4622
        %v4862 = vadd.f32 %v4436, %v4624
        %v4863 = vadd.f32 %v4437, %v4626
        %v4864 = vadd.f32 %v4438, %v4628
        %v4865 = vadd.f32 %v4439, %v4630
        %v4866 = vadd.f32 %v4440, %v4632
        %v4867 = vadd.f32 %v4441, %v4634
        %v4868 = vadd.f32 %v4442, %v4636
        %v4869 = vadd.f32 %v4443, %v4638
        %v4870 = vadd.f32 %v4444, %v4640
        %v4871 = vadd.f32 %v4445, %v4642
        %v4872 = vadd.f32 %v4446, %v4644
        %v4873 = vadd.f32 %v4447, %v4646
        %v4874 = vadd.f32 %v4448, %v4648
        %v4875 = vadd.f32 %v4449, %v4650
        %v4876 = vadd.f32 %v4450, %v4652
        %v4877 = vadd.f32 %v4451, %v4654
        %v4878 = vadd.f32 %v4452, %v4656
        %v4879 = vadd.f32 %v4453, %v4658
        %v4880 = vadd.f32 %v4454, %v4660
        %v4881 = vadd.f32 %v4455, %v4662
        %v4882 = vadd.f32 %v4456, %v4664
        %v4883 = vadd.f32 %v4457, %v4666
        %v4884 = vadd.f32 %v4458, %v4668
        %v4885 = vadd.f32 %v4459, %v4670
        %v4886 = vadd.f32 %v4460, %v4672
        %v4887 = vadd.f32 %v4461, %v4674
        %v4888 = vadd.f32 %v4462, %v4676
        %v4889 = vadd.f32 %v4463, %v4678
        %v4890 = vadd.f32 %v4464, %v4680
        %v4891 = vadd.f32 %v4465, %v4682
        %v4892 = vadd.f32 %v4466, %v4684
        %v4893 = vadd.f32 %v4467, %v4686
        %v4894 = vadd.f32 %v4468, %v4688
        %v4895 = vadd.f32 %v4469, %v4690
        %v4896 = vadd.f32 %v4470, %v4692
        %v4897 = vadd.f32 %v4471, %v4694
        %v4898 = vadd.f32 %v4472, %v4696
        %v4899 = vadd.f32 %v4473, %v4698
        %v4900 = vadd.f32 %v4474, %v4700
        %v4901 = vadd.f32 %v4475, %v4702
        %v4902 = vadd.f32 %v4476, %v4704
        %v4903 = vadd.f32 %v4477, %v4706
        %v4904 = vadd.f32 %v4478, %v4708
        %v4905 = vadd.f32 %v4479, %v4710
        %v4906 = vadd.f32 %v4480, %v4712
        %v4907 = vadd.f32 %v4481, %v4714
        %v4908 = vadd.f32 %v4482, %v4716
        %v4909 = vadd.f32 %v4483, %v4718
        %v4910 = vadd.f32 %v4484, %v4720
        %v4911 = vadd.f32 %v4485, %v4722
        %v4912 = vadd.f32 %v4486, %v4724
        %v4913 = vadd.f32 %v4487, %v4726
        %v4914 = vadd.f32 %v4488, %v4728
        %v4915 = vadd.f32 %v4489, %v4730
        %v4916 = vadd.f32 %v4490, %v4732
        %v4917 = vadd.f32 %v4491, %v4734
        %v4918 = vadd.f32 %v4492, %v4736
        %v4919 = vadd.f32 %v4493, %v4738
        %v4920 = vadd.f32 %v4494, %v4740
        %v4921 = vadd.f32 %v4495, %v4742
        %v4922 = vadd.f32 %v4496, %v4744
        %v4923 = vadd.f32 %v4497, %v4746
        %v4924 = vadd.f32 %v4498, %v4748
        %v4925 = vadd.f32 %v4499, %v4750
        %v4926 = vadd.f32 %v4500, %v4752
        %v4927 = vadd.f32 %v4501, %v4754
        %v4928 = vadd.f32 %v4502, %v4756
        %v4929 = vadd.f32 %v4503, %v4758
        %v4930 = vadd.f32 %v4504, %v4760
        %v4931 = vadd.f32 %v4505, %v4762
        %v4932 = vadd.f32 %v4506, %v4764
        %v4933 = vadd.f32 %v4507, %v4766
        %v4934 = vadd.f32 %v4508, %v4768
        %v4935 = vadd.f32 %v4509, %v4770
        %v4936 = vadd.f32 %v4510, %v4772
        %v4937 = vadd.f32 %v4511, %v4774
        %v4938 = vadd.f32 %v4512, %v4776
        %v4939 = vadd.f32 %v4513, %v4778
        %v4940 = vadd.f32 %v4514, %v4780
        %v4941 = vadd.f32 %v4515, %v4782
        %v4942 = vadd.f32 %v4516, %v4784
        %v4943 = vadd.f32 %v4517, %v4786
        %v4944 = vadd.f32 %v4518, %v4788
        %v4945 = vadd.f32 %v4519, %v4790
        %v4946 = vadd.f32 %v4520, %v4792
        %v4947 = vadd.f32 %v4521, %v4794
        %v4948 = vadd.f32 %v4522, %v4796
        %v4949 = vadd.f32 %v4523, %v4798
        %v4950 = vadd.f32 %v4524, %v4800
        %v4951 = vadd.f32 %v4525, %v4802
        %v4952 = vadd.f32 %v4526, %v4804
        %v4953 = vadd.f32 %v4527, %v4806
        %v4954 = vadd.f32 %v4528, %v4808
        %v4955 = vadd.f32 %v4529, %v4810
        %v4956 = vadd.f32 %v4530, %v4812
        %v4957 = vadd.f32 %v4531, %v4814
        %v4958 = vadd.f32 %v4532, %v4816
        %v4959 = vadd.f32 %v4533, %v4818
        %v4960 = vadd.f32 %v4534, %v4818
        %v4961 = vadd.f32 %v4535, %v4818
        %v4962 = vadd.f32 %v4536, %v4818
        %v4963 = vpack.c.bf16 %v4819, %v4819
        %v4964 = vpack.c.bf16 %v4820, %v4820
        %v4965 = vpack.c.bf16 %v4821, %v4821
        %v4966 = vpack.c.bf16 %v4822, %v4822
        %v4967 = vpack.c.bf16 %v4823, %v4823
        %v4968 = vpack.c.bf16 %v4824, %v4824
        %v4969 = vpack.c.bf16 %v4825, %v4825
        %v4970 = vpack.c.bf16 %v4826, %v4826
        %v4971 = vpack.c.bf16 %v4827, %v4827
        %v4972 = vpack.c.bf16 %v4828, %v4828
        %v4973 = vpack.c.bf16 %v4829, %v4829
        %v4974 = vpack.c.bf16 %v4830, %v4830
        %v4975 = vpack.c.bf16 %v4831, %v4831
        %v4976 = vpack.c.bf16 %v4832, %v4832
        %v4977 = vpack.c.bf16 %v4833, %v4833
        %v4978 = vpack.c.bf16 %v4834, %v4834
        %v4979 = vpack.c.bf16 %v4835, %v4835
        %v4980 = vpack.c.bf16 %v4836, %v4836
        %v4981 = vpack.c.bf16 %v4837, %v4837
        %v4982 = vpack.c.bf16 %v4838, %v4838
        %v4983 = vpack.c.bf16 %v4839, %v4839
        %v4984 = vpack.c.bf16 %v4840, %v4840
        %v4985 = vpack.c.bf16 %v4841, %v4841
        %v4986 = vpack.c.bf16 %v4842, %v4842
        %v4987 = vpack.c.bf16 %v4843, %v4843
        %v4988 = vpack.c.bf16 %v4844, %v4844
        %v4989 = vpack.c.bf16 %v4845, %v4845
        %v4990 = vpack.c.bf16 %v4846, %v4846
        %v4991 = vpack.c.bf16 %v4847, %v4847
        %v4992 = vpack.c.bf16 %v4848, %v4848
        %v4993 = vpack.c.bf16 %v4849, %v4849
        %v4994 = vpack.c.bf16 %v4850, %v4850
        %v4995 = vpack.c.bf16 %v4851, %v4851
        %v4996 = vpack.c.bf16 %v4852, %v4852
        %v4997 = vpack.c.bf16 %v4853, %v4853
        %v4998 = vpack.c.bf16 %v4854, %v4854
        %v4999 = vpack.c.bf16 %v4855, %v4855
        %v5000 = vpack.c.bf16 %v4856, %v4856
        %v5001 = vpack.c.bf16 %v4857, %v4857
        %v5002 = vpack.c.bf16 %v4858, %v4858
        %v5003 = vpack.c.bf16 %v4859, %v4859
        %v5004 = vpack.c.bf16 %v4860, %v4860
        %v5005 = vpack.c.bf16 %v4861, %v4861
        %v5006 = vpack.c.bf16 %v4862, %v4862
        %v5007 = vpack.c.bf16 %v4863, %v4863
        %v5008 = vpack.c.bf16 %v4864, %v4864
        %v5009 = vpack.c.bf16 %v4865, %v4865
        %v5010 = vpack.c.bf16 %v4866, %v4866
        %v5011 = vpack.c.bf16 %v4867, %v4867
        %v5012 = vpack.c.bf16 %v4868, %v4868
        %v5013 = vpack.c.bf16 %v4869, %v4869
        %v5014 = vpack.c.bf16 %v4870, %v4870
        %v5015 = vpack.c.bf16 %v4871, %v4871
        %v5016 = vpack.c.bf16 %v4872, %v4872
        %v5017 = vpack.c.bf16 %v4873, %v4873
        %v5018 = vpack.c.bf16 %v4874, %v4874
        %v5019 = vpack.c.bf16 %v4875, %v4875
        %v5020 = vpack.c.bf16 %v4876, %v4876
        %v5021 = vpack.c.bf16 %v4877, %v4877
        %v5022 = vpack.c.bf16 %v4878, %v4878
        %v5023 = vpack.c.bf16 %v4879, %v4879
        %v5024 = vpack.c.bf16 %v4880, %v4880
        %v5025 = vpack.c.bf16 %v4881, %v4881
        %v5026 = vpack.c.bf16 %v4882, %v4882
        %v5027 = vpack.c.bf16 %v4883, %v4883
        %v5028 = vpack.c.bf16 %v4884, %v4884
        %v5029 = vpack.c.bf16 %v4885, %v4885
        %v5030 = vpack.c.bf16 %v4886, %v4886
        %v5031 = vpack.c.bf16 %v4887, %v4887
        %v5032 = vpack.c.bf16 %v4888, %v4888
        %v5033 = vpack.c.bf16 %v4889, %v4889
        %v5034 = vpack.c.bf16 %v4890, %v4890
        %v5035 = vpack.c.bf16 %v4891, %v4891
        %v5036 = vpack.c.bf16 %v4892, %v4892
        %v5037 = vpack.c.bf16 %v4893, %v4893
        %v5038 = vpack.c.bf16 %v4894, %v4894
        %v5039 = vpack.c.bf16 %v4895, %v4895
        %v5040 = vpack.c.bf16 %v4896, %v4896
        %v5041 = vpack.c.bf16 %v4897, %v4897
        %v5042 = vpack.c.bf16 %v4898, %v4898
        %v5043 = vpack.c.bf16 %v4899, %v4899
        %v5044 = vpack.c.bf16 %v4900, %v4900
        %v5045 = vpack.c.bf16 %v4901, %v4901
        %v5046 = vpack.c.bf16 %v4902, %v4902
        %v5047 = vpack.c.bf16 %v4903, %v4903
        %v5048 = vpack.c.bf16 %v4904, %v4904
        %v5049 = vpack.c.bf16 %v4905, %v4905
        %v5050 = vpack.c.bf16 %v4906, %v4906
        %v5051 = vpack.c.bf16 %v4907, %v4907
        %v5052 = vpack.c.bf16 %v4908, %v4908
        %v5053 = vpack.c.bf16 %v4909, %v4909
        %v5054 = vpack.c.bf16 %v4910, %v4910
        %v5055 = vpack.c.bf16 %v4911, %v4911
        %v5056 = vpack.c.bf16 %v4912, %v4912
        %v5057 = vpack.c.bf16 %v4913, %v4913
        %v5058 = vpack.c.bf16 %v4914, %v4914
        %v5059 = vpack.c.bf16 %v4915, %v4915
        %v5060 = vpack.c.bf16 %v4916, %v4916
        %v5061 = vpack.c.bf16 %v4917, %v4917
        %v5062 = vpack.c.bf16 %v4918, %v4918
        %v5063 = vpack.c.bf16 %v4919, %v4919
        %v5064 = vpack.c.bf16 %v4920, %v4920
        %v5065 = vpack.c.bf16 %v4921, %v4921
        %v5066 = vpack.c.bf16 %v4922, %v4922
        %v5067 = vpack.c.bf16 %v4923, %v4923
        %v5068 = vpack.c.bf16 %v4924, %v4924
        %v5069 = vpack.c.bf16 %v4925, %v4925
        %v5070 = vpack.c.bf16 %v4926, %v4926
        %v5071 = vpack.c.bf16 %v4927, %v4927
        %v5072 = vpack.c.bf16 %v4928, %v4928
        %v5073 = vpack.c.bf16 %v4929, %v4929
        %v5074 = vpack.c.bf16 %v4930, %v4930
        %v5075 = vpack.c.bf16 %v4931, %v4931
        %v5076 = vpack.c.bf16 %v4932, %v4932
        %v5077 = vpack.c.bf16 %v4933, %v4933
        %v5078 = vpack.c.bf16 %v4934, %v4934
        %v5079 = vpack.c.bf16 %v4935, %v4935
        %v5080 = vpack.c.bf16 %v4936, %v4936
        %v5081 = vpack.c.bf16 %v4937, %v4937
        %v5082 = vpack.c.bf16 %v4938, %v4938
        %v5083 = vpack.c.bf16 %v4939, %v4939
        %v5084 = vpack.c.bf16 %v4940, %v4940
        %v5085 = vpack.c.bf16 %v4941, %v4941
        %v5086 = vpack.c.bf16 %v4942, %v4942
        %v5087 = vpack.c.bf16 %v4943, %v4943
        %v5088 = vpack.c.bf16 %v4944, %v4944
        %v5089 = vpack.c.bf16 %v4945, %v4945
        %v5090 = vpack.c.bf16 %v4946, %v4946
        %v5091 = vpack.c.bf16 %v4947, %v4947
        %v5092 = vpack.c.bf16 %v4948, %v4948
        %v5093 = vpack.c.bf16 %v4949, %v4949
        %v5094 = vpack.c.bf16 %v4950, %v4950
        %v5095 = vpack.c.bf16 %v4951, %v4951
        %v5096 = vpack.c.bf16 %v4952, %v4952
        %v5097 = vpack.c.bf16 %v4953, %v4953
        %v5098 = vpack.c.bf16 %v4954, %v4954
        %v5099 = vpack.c.bf16 %v4955, %v4955
        %v5100 = vpack.c.bf16 %v4956, %v4956
        %v5101 = vpack.c.bf16 %v4957, %v4957
        %v5102 = vpack.c.bf16 %v4958, %v4958
        %v5103 = vpack.c.bf16 %v4959, %v4959
        %v5104 = vpack.c.bf16 %v4960, %v4960
        %v5105 = vpack.c.bf16 %v4961, %v4961
        %v5106 = vpack.c.bf16 %v4962, %v4962
        %v5107 = vld [vmem:[%s3] sm:$0xf]
        %v5108 = vld [vmem:[%s3 + $0x4] sm:$0xf]
        %v5109 = vld [vmem:[%s3 + $0x8] sm:$0xf]
        %v5110 = vld [vmem:[%s3 + $0xc] sm:$0xf]
        %v5111 = vld [vmem:[%s3 + $0x10] sm:$0xf]
        %v5112 = vld [vmem:[%s3 + $0x14] sm:$0xf]
        %v5113 = vld [vmem:[%s3 + $0x18] sm:$0xf]
        %v5114 = vld [vmem:[%s3 + $0x1c] sm:$0xf]
        %v5115 = vld [vmem:[%s3 + $0x20] sm:$0xf]
        %v5116 = vld [vmem:[%s3 + $0x24] sm:$0xf]
        %v5117 = vld [vmem:[%s3 + $0x28] sm:$0xf]
        %v5118 = vld [vmem:[%s3 + $0x2c] sm:$0xf]
        %v5119 = vld [vmem:[%s3 + $0x30] sm:$0xf]
        %v5120 = vld [vmem:[%s3 + $0x34] sm:$0xf]
        %v5121 = vld [vmem:[%s3 + $0x38] sm:$0xf]
        %v5122 = vld [vmem:[%s3 + $0x3c] sm:$0xf]
        %s5123 = scalar_lea.vmem %s3, 64
        %v5124 = vld [vmem:[%s5123] sm:$0xf]
        %v5125 = vld [vmem:[%s5123 + $0x4] sm:$0xf]
        %v5126 = vld [vmem:[%s5123 + $0x8] sm:$0xf]
        %v5127 = vld [vmem:[%s5123 + $0xc] sm:$0xf]
        %v5128 = vld [vmem:[%s5123 + $0x10] sm:$0xf]
        %v5129 = vld [vmem:[%s5123 + $0x14] sm:$0xf]
        %v5130 = vld [vmem:[%s5123 + $0x18] sm:$0xf]
        %v5131 = vld [vmem:[%s5123 + $0x1c] sm:$0xf]
        %v5132 = vld [vmem:[%s5123 + $0x20] sm:$0xf]
        %v5133 = vld [vmem:[%s5123 + $0x24] sm:$0xf]
        %v5134 = vld [vmem:[%s5123 + $0x28] sm:$0xf]
        %v5135 = vld [vmem:[%s5123 + $0x2c] sm:$0xf]
        %v5136 = vld [vmem:[%s5123 + $0x30] sm:$0xf]
        %v5137 = vld [vmem:[%s5123 + $0x34] sm:$0xf]
        %v5138 = vld [vmem:[%s5123 + $0x38] sm:$0xf]
        %v5139 = vld [vmem:[%s5123 + $0x3c] sm:$0xf]
        %v5236 = vunpack.c.l.b16 %v4975
        %v5237 = vunpack.c.l.b16 %v4976
        %v5238 = vunpack.c.l.b16 %v4977
        %v5239 = vunpack.c.l.b16 %v4978
        %v5240 = vunpack.c.l.b16 %v4979
        %v5241 = vunpack.c.l.b16 %v4980
        %v5242 = vunpack.c.l.b16 %v4981
        %v5243 = vunpack.c.l.b16 %v4982
        %v5244 = vunpack.c.l.b16 %v4983
        %v5245 = vunpack.c.l.b16 %v4984
        %v5246 = vunpack.c.l.b16 %v4985
        %v5247 = vunpack.c.l.b16 %v4986
        %v5248 = vunpack.c.l.b16 %v4987
        %v5249 = vunpack.c.l.b16 %v4988
        %v5250 = vunpack.c.l.b16 %v4989
        %v5251 = vunpack.c.l.b16 %v4990
        %v5252 = vunpack.c.l.b16 %v4991
        %v5253 = vunpack.c.l.b16 %v4992
        %v5254 = vunpack.c.l.b16 %v4993
        %v5255 = vunpack.c.l.b16 %v4994
        %v5256 = vunpack.c.l.b16 %v4995
        %v5257 = vunpack.c.l.b16 %v4996
        %v5258 = vunpack.c.l.b16 %v4997
        %v5259 = vunpack.c.l.b16 %v4998
        %v5260 = vunpack.c.l.b16 %v4999
        %v5261 = vunpack.c.l.b16 %v5000
        %v5262 = vunpack.c.l.b16 %v5001
        %v5263 = vunpack.c.l.b16 %v5002
        %v5264 = vunpack.c.l.b16 %v5003
        %v5265 = vunpack.c.l.b16 %v5004
        %v5266 = vunpack.c.l.b16 %v5005
        %v5267 = vunpack.c.l.b16 %v5006
        %v5268 = vunpack.c.l.b16 %v5007
        %v5269 = vunpack.c.l.b16 %v5008
        %v5270 = vunpack.c.l.b16 %v5009
        %v5271 = vunpack.c.l.b16 %v5010
        %v5272 = vunpack.c.l.b16 %v5011
        %v5273 = vunpack.c.l.b16 %v5012
        %v5274 = vunpack.c.l.b16 %v5013
        %v5275 = vunpack.c.l.b16 %v5014
        %v5276 = vunpack.c.l.b16 %v5015
        %v5277 = vunpack.c.l.b16 %v5016
        %v5278 = vunpack.c.l.b16 %v5017
        %v5279 = vunpack.c.l.b16 %v5018
        %v5280 = vunpack.c.l.b16 %v5019
        %v5281 = vunpack.c.l.b16 %v5020
        %v5282 = vunpack.c.l.b16 %v5021
        %v5283 = vunpack.c.l.b16 %v5022
        %v5284 = vunpack.c.l.b16 %v5023
        %v5285 = vunpack.c.l.b16 %v5024
        %v5286 = vunpack.c.l.b16 %v5025
        %v5287 = vunpack.c.l.b16 %v5026
        %v5288 = vunpack.c.l.b16 %v5027
        %v5289 = vunpack.c.l.b16 %v5028
        %v5290 = vunpack.c.l.b16 %v5029
        %v5291 = vunpack.c.l.b16 %v5030
        %v5292 = vunpack.c.l.b16 %v5031
        %v5293 = vunpack.c.l.b16 %v5032
        %v5294 = vunpack.c.l.b16 %v5033
        %v5295 = vunpack.c.l.b16 %v5034
        %v5296 = vunpack.c.l.b16 %v5035
        %v5297 = vunpack.c.l.b16 %v5036
        %v5298 = vunpack.c.l.b16 %v5037
        %v5299 = vunpack.c.l.b16 %v5038
        %v5300 = vunpack.c.l.b16 %v5039
        %v5301 = vunpack.c.l.b16 %v5040
        %v5302 = vunpack.c.l.b16 %v5041
        %v5303 = vunpack.c.l.b16 %v5042
        %v5304 = vunpack.c.l.b16 %v5043
        %v5305 = vunpack.c.l.b16 %v5044
        %v5306 = vunpack.c.l.b16 %v5045
        %v5307 = vunpack.c.l.b16 %v5046
        %v5308 = vunpack.c.l.b16 %v5047
        %v5309 = vunpack.c.l.b16 %v5048
        %v5310 = vunpack.c.l.b16 %v5049
        %v5311 = vunpack.c.l.b16 %v5050
        %v5312 = vunpack.c.l.b16 %v5051
        %v5313 = vunpack.c.l.b16 %v5052
        %v5314 = vunpack.c.l.b16 %v5053
        %v5315 = vunpack.c.l.b16 %v5054
        %v5316 = vunpack.c.l.b16 %v5055
        %v5317 = vunpack.c.l.b16 %v5056
        %v5318 = vunpack.c.l.b16 %v5057
        %v5319 = vunpack.c.l.b16 %v5058
        %v5320 = vunpack.c.l.b16 %v5059
        %v5321 = vunpack.c.l.b16 %v5060
        %v5322 = vunpack.c.l.b16 %v5061
        %v5323 = vunpack.c.l.b16 %v5062
        %v5324 = vunpack.c.l.b16 %v5063
        %v5325 = vunpack.c.l.b16 %v5064
        %v5326 = vunpack.c.l.b16 %v5065
        %v5327 = vunpack.c.l.b16 %v5066
        %v5328 = vunpack.c.l.b16 %v5067
        %v5329 = vunpack.c.l.b16 %v5068
        %v5330 = vunpack.c.l.b16 %v5069
        %v5331 = vunpack.c.l.b16 %v5070
        %v5332 = vpack.c.b16 %v5237, %v5236
        %v5333 = vpack.c.b16 %v5239, %v5238
        %v5334 = vpack.c.b16 %v5241, %v5240
        %v5335 = vpack.c.b16 %v5243, %v5242
        %v5336 = vpack.c.b16 %v5245, %v5244
        %v5337 = vpack.c.b16 %v5247, %v5246
        %v5338 = vpack.c.b16 %v5249, %v5248
        %v5339 = vpack.c.b16 %v5251, %v5250
        %v5340 = vpack.c.b16 %v5253, %v5252
        %v5341 = vpack.c.b16 %v5255, %v5254
        %v5342 = vpack.c.b16 %v5257, %v5256
        %v5343 = vpack.c.b16 %v5259, %v5258
        %v5344 = vpack.c.b16 %v5261, %v5260
        %v5345 = vpack.c.b16 %v5263, %v5262
        %v5346 = vpack.c.b16 %v5265, %v5264
        %v5347 = vpack.c.b16 %v5267, %v5266
        %v5348 = vpack.c.b16 %v5269, %v5268
        %v5349 = vpack.c.b16 %v5271, %v5270
        %v5350 = vpack.c.b16 %v5273, %v5272
        %v5351 = vpack.c.b16 %v5275, %v5274
        %v5352 = vpack.c.b16 %v5277, %v5276
        %v5353 = vpack.c.b16 %v5279, %v5278
        %v5354 = vpack.c.b16 %v5281, %v5280
        %v5355 = vpack.c.b16 %v5283, %v5282
        %v5356 = vpack.c.b16 %v5285, %v5284
        %v5357 = vpack.c.b16 %v5287, %v5286
        %v5358 = vpack.c.b16 %v5289, %v5288
        %v5359 = vpack.c.b16 %v5291, %v5290
        %v5360 = vpack.c.b16 %v5293, %v5292
        %v5361 = vpack.c.b16 %v5295, %v5294
        %v5362 = vpack.c.b16 %v5297, %v5296
        %v5363 = vpack.c.b16 %v5299, %v5298
        %v5364 = vpack.c.b16 %v5301, %v5300
        %v5365 = vpack.c.b16 %v5303, %v5302
        %v5366 = vpack.c.b16 %v5305, %v5304
        %v5367 = vpack.c.b16 %v5307, %v5306
        %v5368 = vpack.c.b16 %v5309, %v5308
        %v5369 = vpack.c.b16 %v5311, %v5310
        %v5370 = vpack.c.b16 %v5313, %v5312
        %v5371 = vpack.c.b16 %v5315, %v5314
        %v5372 = vpack.c.b16 %v5317, %v5316
        %v5373 = vpack.c.b16 %v5319, %v5318
        %v5374 = vpack.c.b16 %v5321, %v5320
        %v5375 = vpack.c.b16 %v5323, %v5322
        %v5376 = vpack.c.b16 %v5325, %v5324
        %v5377 = vpack.c.b16 %v5327, %v5326
        %v5378 = vpack.c.b16 %v5329, %v5328
        %v5379 = vpack.c.b16 %v5331, %v5330
        %v5444 = vunpack.c.l.b16 %v5124
        %v5445 = vunpack.c.l.b16 %v5125
        %v5446 = vunpack.c.l.b16 %v5126
        %v5447 = vunpack.c.l.b16 %v5127
        %v5448 = vunpack.c.l.b16 %v5128
        %v5449 = vunpack.c.l.b16 %v5129
        %v5450 = vunpack.c.l.b16 %v5130
        %v5451 = vunpack.c.l.b16 %v5131
        %v5452 = vunpack.c.l.b16 %v5132
        %v5453 = vunpack.c.l.b16 %v5133
        %v5454 = vunpack.c.l.b16 %v5134
        %v5455 = vunpack.c.l.b16 %v5135
        %v5456 = vunpack.c.l.b16 %v5136
        %v5457 = vunpack.c.l.b16 %v5137
        %v5458 = vunpack.c.l.b16 %v5138
        %v5459 = vunpack.c.l.b16 %v5139
        %v5460 = vpack.c.b16 %v5445, %v5444
        %v5461 = vpack.c.b16 %v5447, %v5446
        %v5462 = vpack.c.b16 %v5449, %v5448
        %v5463 = vpack.c.b16 %v5451, %v5450
        %v5464 = vpack.c.b16 %v5453, %v5452
        %v5465 = vpack.c.b16 %v5455, %v5454
        %v5466 = vpack.c.b16 %v5457, %v5456
        %v5467 = vpack.c.b16 %v5459, %v5458
        %5476 = vmatpush.bf16.msra.mxu0 %v5467
        %5477 = vmatpush.bf16.msra.mxu0 %v5466
        %5478 = vmatpush.bf16.msra.mxu0 %v5465
        %5479 = vmatpush.bf16.msra.mxu0 %v5464
        %5480 = vmatpush.bf16.msra.mxu0 %v5463
        %5481 = vmatpush.bf16.msra.mxu0 %v5462
        %5482 = vmatpush.bf16.msra.mxu0 %v5461
        %5483 = vmatpush.bf16.msra.mxu0 %v5460
        %5484 = vmatmul.bf16.gmra.mxu0 %v5332
        %v5485 = vpop.f32.mrf.mxu0
        %v5486 = vadd.f32 0.0, %v5485
        %v5487 = vpop.f32.mrf.mxu0
        %v5488 = vadd.f32 0.0, %v5487
        %5489 = vmatmul.bf16.gmra.mxu0 %v5333
        %v5490 = vpop.f32.mrf.mxu0
        %v5491 = vadd.f32 0.0, %v5490
        %v5492 = vpop.f32.mrf.mxu0
        %v5493 = vadd.f32 0.0, %v5492
        %5494 = vmatmul.bf16.gmra.mxu0 %v5334
        %v5495 = vpop.f32.mrf.mxu0
        %v5496 = vadd.f32 0.0, %v5495
        %v5497 = vpop.f32.mrf.mxu0
        %v5498 = vadd.f32 0.0, %v5497
        %5499 = vmatmul.bf16.gmra.mxu0 %v5335
        %v5500 = vpop.f32.mrf.mxu0
        %v5501 = vadd.f32 0.0, %v5500
        %v5502 = vpop.f32.mrf.mxu0
        %v5503 = vadd.f32 0.0, %v5502
        %5504 = vmatmul.bf16.gmra.mxu0 %v5336
        %v5505 = vpop.f32.mrf.mxu0
        %v5506 = vpop.f32.mrf.mxu0
        %5507 = vmatmul.bf16.gmra.mxu0 %v5337
        %v5508 = vpop.f32.mrf.mxu0
        %v5509 = vpop.f32.mrf.mxu0
        %5510 = vmatmul.bf16.gmra.mxu0 %v5338
        %v5511 = vpop.f32.mrf.mxu0
        %v5512 = vadd.f32 0.0, %v5511
        %v5513 = vpop.f32.mrf.mxu0
        %v5514 = vadd.f32 0.0, %v5513
        %5515 = vmatmul.bf16.gmra.mxu0 %v5339
        %v5516 = vpop.f32.mrf.mxu0
        %v5517 = vadd.f32 0.0, %v5516
        %v5518 = vpop.f32.mrf.mxu0
        %v5519 = vadd.f32 0.0, %v5518
        %5520 = vmatmul.bf16.gmra.mxu0 %v5340
        %v5521 = vpop.f32.mrf.mxu0
        %v5522 = vadd.f32 0.0, %v5521
        %v5523 = vpop.f32.mrf.mxu0
        %v5524 = vadd.f32 0.0, %v5523
        %5525 = vmatmul.bf16.gmra.mxu0 %v5341
        %v5526 = vpop.f32.mrf.mxu0
        %v5527 = vadd.f32 0.0, %v5526
        %v5528 = vpop.f32.mrf.mxu0
        %v5529 = vadd.f32 0.0, %v5528
        %5530 = vmatmul.bf16.gmra.mxu0 %v5342
        %v5531 = vpop.f32.mrf.mxu0
        %v5532 = vpop.f32.mrf.mxu0
        %5533 = vmatmul.bf16.gmra.mxu0 %v5343
        %v5534 = vpop.f32.mrf.mxu0
        %v5535 = vpop.f32.mrf.mxu0
        %5536 = vmatmul.bf16.gmra.mxu0 %v5344
        %v5537 = vpop.f32.mrf.mxu0
        %v5538 = vadd.f32 0.0, %v5537
        %v5539 = vpop.f32.mrf.mxu0
        %v5540 = vadd.f32 0.0, %v5539
        %5541 = vmatmul.bf16.gmra.mxu0 %v5345
        %v5542 = vpop.f32.mrf.mxu0
        %v5543 = vadd.f32 0.0, %v5542
        %v5544 = vpop.f32.mrf.mxu0
        %v5545 = vadd.f32 0.0, %v5544
        %5546 = vmatmul.bf16.gmra.mxu0 %v5346
        %v5547 = vpop.f32.mrf.mxu0
        %v5548 = vadd.f32 0.0, %v5547
        %v5549 = vpop.f32.mrf.mxu0
        %v5550 = vadd.f32 0.0, %v5549
        %5551 = vmatmul.bf16.gmra.mxu0 %v5347
        %v5552 = vpop.f32.mrf.mxu0
        %v5553 = vadd.f32 0.0, %v5552
        %v5554 = vpop.f32.mrf.mxu0
        %v5555 = vadd.f32 0.0, %v5554
        %5556 = vmatmul.bf16.gmra.mxu0 %v5348
        %v5557 = vpop.f32.mrf.mxu0
        %v5558 = vpop.f32.mrf.mxu0
        %5559 = vmatmul.bf16.gmra.mxu0 %v5349
        %v5560 = vpop.f32.mrf.mxu0
        %v5561 = vpop.f32.mrf.mxu0
        %5562 = vmatmul.bf16.gmra.mxu0 %v5350
        %v5563 = vpop.f32.mrf.mxu0
        %v5564 = vadd.f32 0.0, %v5563
        %v5565 = vpop.f32.mrf.mxu0
        %v5566 = vadd.f32 0.0, %v5565
        %5567 = vmatmul.bf16.gmra.mxu0 %v5351
        %v5568 = vpop.f32.mrf.mxu0
        %v5569 = vadd.f32 0.0, %v5568
        %v5570 = vpop.f32.mrf.mxu0
        %v5571 = vadd.f32 0.0, %v5570
        %5572 = vmatmul.bf16.gmra.mxu0 %v5352
        %v5573 = vpop.f32.mrf.mxu0
        %v5574 = vadd.f32 0.0, %v5573
        %v5575 = vpop.f32.mrf.mxu0
        %v5576 = vadd.f32 0.0, %v5575
        %5577 = vmatmul.bf16.gmra.mxu0 %v5353
        %v5578 = vpop.f32.mrf.mxu0
        %v5579 = vadd.f32 0.0, %v5578
        %v5580 = vpop.f32.mrf.mxu0
        %v5581 = vadd.f32 0.0, %v5580
        %5582 = vmatmul.bf16.gmra.mxu0 %v5354
        %v5583 = vpop.f32.mrf.mxu0
        %v5584 = vpop.f32.mrf.mxu0
        %5585 = vmatmul.bf16.gmra.mxu0 %v5355
        %v5586 = vpop.f32.mrf.mxu0
        %v5587 = vpop.f32.mrf.mxu0
        %5588 = vmatmul.bf16.gmra.mxu0 %v5356
        %v5589 = vpop.f32.mrf.mxu0
        %v5590 = vadd.f32 0.0, %v5589
        %v5591 = vpop.f32.mrf.mxu0
        %v5592 = vadd.f32 0.0, %v5591
        %5593 = vmatmul.bf16.gmra.mxu0 %v5357
        %v5594 = vpop.f32.mrf.mxu0
        %v5595 = vadd.f32 0.0, %v5594
        %v5596 = vpop.f32.mrf.mxu0
        %v5597 = vadd.f32 0.0, %v5596
        %5598 = vmatmul.bf16.gmra.mxu0 %v5358
        %v5599 = vpop.f32.mrf.mxu0
        %v5600 = vadd.f32 0.0, %v5599
        %v5601 = vpop.f32.mrf.mxu0
        %v5602 = vadd.f32 0.0, %v5601
        %5603 = vmatmul.bf16.gmra.mxu0 %v5359
        %v5604 = vpop.f32.mrf.mxu0
        %v5605 = vadd.f32 0.0, %v5604
        %v5606 = vpop.f32.mrf.mxu0
        %v5607 = vadd.f32 0.0, %v5606
        %5608 = vmatmul.bf16.gmra.mxu0 %v5360
        %v5609 = vpop.f32.mrf.mxu0
        %v5610 = vpop.f32.mrf.mxu0
        %5611 = vmatmul.bf16.gmra.mxu0 %v5361
        %v5612 = vpop.f32.mrf.mxu0
        %v5613 = vpop.f32.mrf.mxu0
        %5614 = vmatmul.bf16.gmra.mxu0 %v5362
        %v5615 = vpop.f32.mrf.mxu0
        %v5616 = vadd.f32 0.0, %v5615
        %v5617 = vpop.f32.mrf.mxu0
        %v5618 = vadd.f32 0.0, %v5617
        %5619 = vmatmul.bf16.gmra.mxu0 %v5363
        %v5620 = vpop.f32.mrf.mxu0
        %v5621 = vadd.f32 0.0, %v5620
        %v5622 = vpop.f32.mrf.mxu0
        %v5623 = vadd.f32 0.0, %v5622
        %5624 = vmatmul.bf16.gmra.mxu0 %v5364
        %v5625 = vpop.f32.mrf.mxu0
        %v5626 = vadd.f32 0.0, %v5625
        %v5627 = vpop.f32.mrf.mxu0
        %v5628 = vadd.f32 0.0, %v5627
        %5629 = vmatmul.bf16.gmra.mxu0 %v5365
        %v5630 = vpop.f32.mrf.mxu0
        %v5631 = vadd.f32 0.0, %v5630
        %v5632 = vpop.f32.mrf.mxu0
        %v5633 = vadd.f32 0.0, %v5632
        %5634 = vmatmul.bf16.gmra.mxu0 %v5366
        %v5635 = vpop.f32.mrf.mxu0
        %v5636 = vpop.f32.mrf.mxu0
        %5637 = vmatmul.bf16.gmra.mxu0 %v5367
        %v5638 = vpop.f32.mrf.mxu0
        %v5639 = vpop.f32.mrf.mxu0
        %5640 = vmatmul.bf16.gmra.mxu0 %v5368
        %v5641 = vpop.f32.mrf.mxu0
        %v5642 = vadd.f32 0.0, %v5641
        %v5643 = vpop.f32.mrf.mxu0
        %v5644 = vadd.f32 0.0, %v5643
        %5645 = vmatmul.bf16.gmra.mxu0 %v5369
        %v5646 = vpop.f32.mrf.mxu0
        %v5647 = vadd.f32 0.0, %v5646
        %v5648 = vpop.f32.mrf.mxu0
        %v5649 = vadd.f32 0.0, %v5648
        %5650 = vmatmul.bf16.gmra.mxu0 %v5370
        %v5651 = vpop.f32.mrf.mxu0
        %v5652 = vadd.f32 0.0, %v5651
        %v5653 = vpop.f32.mrf.mxu0
        %v5654 = vadd.f32 0.0, %v5653
        %5655 = vmatmul.bf16.gmra.mxu0 %v5371
        %v5656 = vpop.f32.mrf.mxu0
        %v5657 = vadd.f32 0.0, %v5656
        %v5658 = vpop.f32.mrf.mxu0
        %v5659 = vadd.f32 0.0, %v5658
        %5660 = vmatmul.bf16.gmra.mxu0 %v5372
        %v5661 = vpop.f32.mrf.mxu0
        %v5662 = vpop.f32.mrf.mxu0
        %5663 = vmatmul.bf16.gmra.mxu0 %v5373
        %v5664 = vpop.f32.mrf.mxu0
        %v5665 = vpop.f32.mrf.mxu0
        %5666 = vmatmul.bf16.gmra.mxu0 %v5374
        %v5667 = vpop.f32.mrf.mxu0
        %v5668 = vadd.f32 0.0, %v5667
        %v5669 = vpop.f32.mrf.mxu0
        %v5670 = vadd.f32 0.0, %v5669
        %5671 = vmatmul.bf16.gmra.mxu0 %v5375
        %v5672 = vpop.f32.mrf.mxu0
        %v5673 = vadd.f32 0.0, %v5672
        %v5674 = vpop.f32.mrf.mxu0
        %v5675 = vadd.f32 0.0, %v5674
        %5676 = vmatmul.bf16.gmra.mxu0 %v5376
        %v5677 = vpop.f32.mrf.mxu0
        %v5678 = vadd.f32 0.0, %v5677
        %v5679 = vpop.f32.mrf.mxu0
        %v5680 = vadd.f32 0.0, %v5679
        %5681 = vmatmul.bf16.gmra.mxu0 %v5377
        %v5682 = vpop.f32.mrf.mxu0
        %v5683 = vadd.f32 0.0, %v5682
        %v5684 = vpop.f32.mrf.mxu0
        %v5685 = vadd.f32 0.0, %v5684
        %5686 = vmatmul.bf16.gmra.mxu0 %v5378
        %v5687 = vpop.f32.mrf.mxu0
        %v5688 = vpop.f32.mrf.mxu0
        %5689 = vmatmul.bf16.gmra.mxu0 %v5379
        %v5690 = vpop.f32.mrf.mxu0
        %v5691 = vpop.f32.mrf.mxu0
        %5692 = vdwg.mxu0
        %v5705 = vunpack.c.l.b16 %v4963
        %v5706 = vunpack.c.l.b16 %v4964
        %v5707 = vunpack.c.l.b16 %v4965
        %v5708 = vunpack.c.l.b16 %v4966
        %v5709 = vunpack.c.l.b16 %v4967
        %v5710 = vunpack.c.l.b16 %v4968
        %v5711 = vunpack.c.l.b16 %v4969
        %v5712 = vunpack.c.l.b16 %v4970
        %v5713 = vunpack.c.l.b16 %v4971
        %v5714 = vunpack.c.l.b16 %v4972
        %v5715 = vunpack.c.l.b16 %v4973
        %v5716 = vunpack.c.l.b16 %v4974
        %v5717 = vpack.c.b16 %v5706, %v5705
        %v5718 = vpack.c.b16 %v5708, %v5707
        %v5719 = vpack.c.b16 %v5710, %v5709
        %v5720 = vpack.c.b16 %v5712, %v5711
        %v5721 = vpack.c.b16 %v5714, %v5713
        %v5722 = vpack.c.b16 %v5716, %v5715
        %v5745 = vunpack.c.l.b16 %v5107
        %v5746 = vunpack.c.l.b16 %v5108
        %v5747 = vunpack.c.l.b16 %v5109
        %v5748 = vunpack.c.l.b16 %v5110
        %v5749 = vunpack.c.l.b16 %v5111
        %v5750 = vunpack.c.l.b16 %v5112
        %v5751 = vunpack.c.l.b16 %v5113
        %v5752 = vunpack.c.l.b16 %v5114
        %v5753 = vunpack.c.l.b16 %v5115
        %v5754 = vunpack.c.l.b16 %v5116
        %v5755 = vunpack.c.l.b16 %v5117
        %v5756 = vunpack.c.l.b16 %v5118
        %v5757 = vunpack.c.l.b16 %v5119
        %v5758 = vunpack.c.l.b16 %v5120
        %v5759 = vunpack.c.l.b16 %v5121
        %v5760 = vunpack.c.l.b16 %v5122
        %v5761 = vpack.c.b16 %v5746, %v5745
        %v5762 = vpack.c.b16 %v5748, %v5747
        %v5763 = vpack.c.b16 %v5750, %v5749
        %v5764 = vpack.c.b16 %v5752, %v5751
        %v5765 = vpack.c.b16 %v5754, %v5753
        %v5766 = vpack.c.b16 %v5756, %v5755
        %v5767 = vpack.c.b16 %v5758, %v5757
        %v5768 = vpack.c.b16 %v5760, %v5759
        %5777 = vmatpush.bf16.msra.mxu0 %v5768
        %5778 = vmatpush.bf16.msra.mxu0 %v5767
        %5779 = vmatpush.bf16.msra.mxu0 %v5766
        %5780 = vmatpush.bf16.msra.mxu0 %v5765
        %5781 = vmatpush.bf16.msra.mxu0 %v5764
        %5782 = vmatpush.bf16.msra.mxu0 %v5763
        %5783 = vmatpush.bf16.msra.mxu0 %v5762
        %5784 = vmatpush.bf16.msra.mxu0 %v5761
        %5785 = vmatmul.bf16.gmra.mxu0 %v5717
        %v5786 = vpop.f32.mrf.mxu0
        %v5787 = vadd.f32 %v5486, %v5786
        %v5788 = vpop.f32.mrf.mxu0
        %v5789 = vadd.f32 %v5488, %v5788
        %5790 = vmatmul.bf16.gmra.mxu0 %v5718
        %v5791 = vpop.f32.mrf.mxu0
        %v5792 = vadd.f32 %v5491, %v5791
        %v5793 = vpop.f32.mrf.mxu0
        %v5794 = vadd.f32 %v5493, %v5793
        %5795 = vmatmul.bf16.gmra.mxu0 %v5719
        %v5796 = vpop.f32.mrf.mxu0
        %v5797 = vadd.f32 %v5496, %v5796
        %v5798 = vpop.f32.mrf.mxu0
        %v5799 = vadd.f32 %v5498, %v5798
        %5800 = vmatmul.bf16.gmra.mxu0 %v5720
        %v5801 = vpop.f32.mrf.mxu0
        %v5802 = vadd.f32 %v5501, %v5801
        %v5803 = vpop.f32.mrf.mxu0
        %v5804 = vadd.f32 %v5503, %v5803
        %5805 = vmatmul.bf16.gmra.mxu0 %v5721
        %v5806 = vpop.f32.mrf.mxu0
        %v5807 = vpop.f32.mrf.mxu0
        %5808 = vmatmul.bf16.gmra.mxu0 %v5722
        %v5809 = vpop.f32.mrf.mxu0
        %v5810 = vpop.f32.mrf.mxu0
        %5811 = vmatmul.bf16.gmra.mxu0 %v5332
        %v5812 = vpop.f32.mrf.mxu0
        %v5813 = vadd.f32 %v5512, %v5812
        %v5814 = vpop.f32.mrf.mxu0
        %v5815 = vadd.f32 %v5514, %v5814
        %5816 = vmatmul.bf16.gmra.mxu0 %v5333
        %v5817 = vpop.f32.mrf.mxu0
        %v5818 = vadd.f32 %v5517, %v5817
        %v5819 = vpop.f32.mrf.mxu0
        %v5820 = vadd.f32 %v5519, %v5819
        %5821 = vmatmul.bf16.gmra.mxu0 %v5334
        %v5822 = vpop.f32.mrf.mxu0
        %v5823 = vadd.f32 %v5522, %v5822
        %v5824 = vpop.f32.mrf.mxu0
        %v5825 = vadd.f32 %v5524, %v5824
        %5826 = vmatmul.bf16.gmra.mxu0 %v5335
        %v5827 = vpop.f32.mrf.mxu0
        %v5828 = vadd.f32 %v5527, %v5827
        %v5829 = vpop.f32.mrf.mxu0
        %v5830 = vadd.f32 %v5529, %v5829
        %5831 = vmatmul.bf16.gmra.mxu0 %v5336
        %v5832 = vpop.f32.mrf.mxu0
        %v5833 = vpop.f32.mrf.mxu0
        %5834 = vmatmul.bf16.gmra.mxu0 %v5337
        %v5835 = vpop.f32.mrf.mxu0
        %v5836 = vpop.f32.mrf.mxu0
        %5837 = vmatmul.bf16.gmra.mxu0 %v5338
        %v5838 = vpop.f32.mrf.mxu0
        %v5839 = vadd.f32 %v5538, %v5838
        %v5840 = vpop.f32.mrf.mxu0
        %v5841 = vadd.f32 %v5540, %v5840
        %5842 = vmatmul.bf16.gmra.mxu0 %v5339
        %v5843 = vpop.f32.mrf.mxu0
        %v5844 = vadd.f32 %v5543, %v5843
        %v5845 = vpop.f32.mrf.mxu0
        %v5846 = vadd.f32 %v5545, %v5845
        %5847 = vmatmul.bf16.gmra.mxu0 %v5340
        %v5848 = vpop.f32.mrf.mxu0
        %v5849 = vadd.f32 %v5548, %v5848
        %v5850 = vpop.f32.mrf.mxu0
        %v5851 = vadd.f32 %v5550, %v5850
        %5852 = vmatmul.bf16.gmra.mxu0 %v5341
        %v5853 = vpop.f32.mrf.mxu0
        %v5854 = vadd.f32 %v5553, %v5853
        %v5855 = vpop.f32.mrf.mxu0
        %v5856 = vadd.f32 %v5555, %v5855
        %5857 = vmatmul.bf16.gmra.mxu0 %v5342
        %v5858 = vpop.f32.mrf.mxu0
        %v5859 = vpop.f32.mrf.mxu0
        %5860 = vmatmul.bf16.gmra.mxu0 %v5343
        %v5861 = vpop.f32.mrf.mxu0
        %v5862 = vpop.f32.mrf.mxu0
        %5863 = vmatmul.bf16.gmra.mxu0 %v5344
        %v5864 = vpop.f32.mrf.mxu0
        %v5865 = vadd.f32 %v5564, %v5864
        %v5866 = vpop.f32.mrf.mxu0
        %v5867 = vadd.f32 %v5566, %v5866
        %5868 = vmatmul.bf16.gmra.mxu0 %v5345
        %v5869 = vpop.f32.mrf.mxu0
        %v5870 = vadd.f32 %v5569, %v5869
        %v5871 = vpop.f32.mrf.mxu0
        %v5872 = vadd.f32 %v5571, %v5871
        %5873 = vmatmul.bf16.gmra.mxu0 %v5346
        %v5874 = vpop.f32.mrf.mxu0
        %v5875 = vadd.f32 %v5574, %v5874
        %v5876 = vpop.f32.mrf.mxu0
        %v5877 = vadd.f32 %v5576, %v5876
        %5878 = vmatmul.bf16.gmra.mxu0 %v5347
        %v5879 = vpop.f32.mrf.mxu0
        %v5880 = vadd.f32 %v5579, %v5879
        %v5881 = vpop.f32.mrf.mxu0
        %v5882 = vadd.f32 %v5581, %v5881
        %5883 = vmatmul.bf16.gmra.mxu0 %v5348
        %v5884 = vpop.f32.mrf.mxu0
        %v5885 = vpop.f32.mrf.mxu0
        %5886 = vmatmul.bf16.gmra.mxu0 %v5349
        %v5887 = vpop.f32.mrf.mxu0
        %v5888 = vpop.f32.mrf.mxu0
        %5889 = vmatmul.bf16.gmra.mxu0 %v5350
        %v5890 = vpop.f32.mrf.mxu0
        %v5891 = vadd.f32 %v5590, %v5890
        %v5892 = vpop.f32.mrf.mxu0
        %v5893 = vadd.f32 %v5592, %v5892
        %5894 = vmatmul.bf16.gmra.mxu0 %v5351
        %v5895 = vpop.f32.mrf.mxu0
        %v5896 = vadd.f32 %v5595, %v5895
        %v5897 = vpop.f32.mrf.mxu0
        %v5898 = vadd.f32 %v5597, %v5897
        %5899 = vmatmul.bf16.gmra.mxu0 %v5352
        %v5900 = vpop.f32.mrf.mxu0
        %v5901 = vadd.f32 %v5600, %v5900
        %v5902 = vpop.f32.mrf.mxu0
        %v5903 = vadd.f32 %v5602, %v5902
        %5904 = vmatmul.bf16.gmra.mxu0 %v5353
        %v5905 = vpop.f32.mrf.mxu0
        %v5906 = vadd.f32 %v5605, %v5905
        %v5907 = vpop.f32.mrf.mxu0
        %v5908 = vadd.f32 %v5607, %v5907
        %5909 = vmatmul.bf16.gmra.mxu0 %v5354
        %v5910 = vpop.f32.mrf.mxu0
        %v5911 = vpop.f32.mrf.mxu0
        %5912 = vmatmul.bf16.gmra.mxu0 %v5355
        %v5913 = vpop.f32.mrf.mxu0
        %v5914 = vpop.f32.mrf.mxu0
        %5915 = vmatmul.bf16.gmra.mxu0 %v5356
        %v5916 = vpop.f32.mrf.mxu0
        %v5917 = vadd.f32 %v5616, %v5916
        %v5918 = vpop.f32.mrf.mxu0
        %v5919 = vadd.f32 %v5618, %v5918
        %5920 = vmatmul.bf16.gmra.mxu0 %v5357
        %v5921 = vpop.f32.mrf.mxu0
        %v5922 = vadd.f32 %v5621, %v5921
        %v5923 = vpop.f32.mrf.mxu0
        %v5924 = vadd.f32 %v5623, %v5923
        %5925 = vmatmul.bf16.gmra.mxu0 %v5358
        %v5926 = vpop.f32.mrf.mxu0
        %v5927 = vadd.f32 %v5626, %v5926
        %v5928 = vpop.f32.mrf.mxu0
        %v5929 = vadd.f32 %v5628, %v5928
        %5930 = vmatmul.bf16.gmra.mxu0 %v5359
        %v5931 = vpop.f32.mrf.mxu0
        %v5932 = vadd.f32 %v5631, %v5931
        %v5933 = vpop.f32.mrf.mxu0
        %v5934 = vadd.f32 %v5633, %v5933
        %5935 = vmatmul.bf16.gmra.mxu0 %v5360
        %v5936 = vpop.f32.mrf.mxu0
        %v5937 = vpop.f32.mrf.mxu0
        %5938 = vmatmul.bf16.gmra.mxu0 %v5361
        %v5939 = vpop.f32.mrf.mxu0
        %v5940 = vpop.f32.mrf.mxu0
        %5941 = vmatmul.bf16.gmra.mxu0 %v5362
        %v5942 = vpop.f32.mrf.mxu0
        %v5943 = vadd.f32 %v5642, %v5942
        %v5944 = vpop.f32.mrf.mxu0
        %v5945 = vadd.f32 %v5644, %v5944
        %5946 = vmatmul.bf16.gmra.mxu0 %v5363
        %v5947 = vpop.f32.mrf.mxu0
        %v5948 = vadd.f32 %v5647, %v5947
        %v5949 = vpop.f32.mrf.mxu0
        %v5950 = vadd.f32 %v5649, %v5949
        %5951 = vmatmul.bf16.gmra.mxu0 %v5364
        %v5952 = vpop.f32.mrf.mxu0
        %v5953 = vadd.f32 %v5652, %v5952
        %v5954 = vpop.f32.mrf.mxu0
        %v5955 = vadd.f32 %v5654, %v5954
        %5956 = vmatmul.bf16.gmra.mxu0 %v5365
        %v5957 = vpop.f32.mrf.mxu0
        %v5958 = vadd.f32 %v5657, %v5957
        %v5959 = vpop.f32.mrf.mxu0
        %v5960 = vadd.f32 %v5659, %v5959
        %5961 = vmatmul.bf16.gmra.mxu0 %v5366
        %v5962 = vpop.f32.mrf.mxu0
        %v5963 = vpop.f32.mrf.mxu0
        %5964 = vmatmul.bf16.gmra.mxu0 %v5367
        %v5965 = vpop.f32.mrf.mxu0
        %v5966 = vpop.f32.mrf.mxu0
        %5967 = vmatmul.bf16.gmra.mxu0 %v5368
        %v5968 = vpop.f32.mrf.mxu0
        %v5969 = vadd.f32 %v5668, %v5968
        %v5970 = vpop.f32.mrf.mxu0
        %v5971 = vadd.f32 %v5670, %v5970
        %5972 = vmatmul.bf16.gmra.mxu0 %v5369
        %v5973 = vpop.f32.mrf.mxu0
        %v5974 = vadd.f32 %v5673, %v5973
        %v5975 = vpop.f32.mrf.mxu0
        %v5976 = vadd.f32 %v5675, %v5975
        %5977 = vmatmul.bf16.gmra.mxu0 %v5370
        %v5978 = vpop.f32.mrf.mxu0
        %v5979 = vadd.f32 %v5678, %v5978
        %v5980 = vpop.f32.mrf.mxu0
        %v5981 = vadd.f32 %v5680, %v5980
        %5982 = vmatmul.bf16.gmra.mxu0 %v5371
        %v5983 = vpop.f32.mrf.mxu0
        %v5984 = vadd.f32 %v5683, %v5983
        %v5985 = vpop.f32.mrf.mxu0
        %v5986 = vadd.f32 %v5685, %v5985
        %5987 = vmatmul.bf16.gmra.mxu0 %v5372
        %v5988 = vpop.f32.mrf.mxu0
        %v5989 = vpop.f32.mrf.mxu0
        %5990 = vmatmul.bf16.gmra.mxu0 %v5373
        %v5991 = vpop.f32.mrf.mxu0
        %v5992 = vpop.f32.mrf.mxu0
        %5993 = vdwg.mxu0
        %s5994 = scalar_lea.vmem %s3, 128
        %v5995 = vld [vmem:[%s5994] sm:$0xf]
        %v5996 = vld [vmem:[%s5994 + $0x4] sm:$0xf]
        %v5997 = vld [vmem:[%s5994 + $0x8] sm:$0xf]
        %v5998 = vld [vmem:[%s5994 + $0xc] sm:$0xf]
        %v5999 = vld [vmem:[%s5994 + $0x10] sm:$0xf]
        %v6000 = vld [vmem:[%s5994 + $0x14] sm:$0xf]
        %v6001 = vld [vmem:[%s5994 + $0x18] sm:$0xf]
        %v6002 = vld [vmem:[%s5994 + $0x1c] sm:$0xf]
        %v6003 = vld [vmem:[%s5994 + $0x20] sm:$0xf]
        %v6004 = vld [vmem:[%s5994 + $0x24] sm:$0xf]
        %v6005 = vld [vmem:[%s5994 + $0x28] sm:$0xf]
        %v6006 = vld [vmem:[%s5994 + $0x2c] sm:$0xf]
        %v6007 = vld [vmem:[%s5994 + $0x30] sm:$0xf]
        %v6008 = vld [vmem:[%s5994 + $0x34] sm:$0xf]
        %v6009 = vld [vmem:[%s5994 + $0x38] sm:$0xf]
        %v6010 = vld [vmem:[%s5994 + $0x3c] sm:$0xf]
        %v6023 = vunpack.c.l.b16 %v5071
        %v6024 = vunpack.c.l.b16 %v5072
        %v6025 = vunpack.c.l.b16 %v5073
        %v6026 = vunpack.c.l.b16 %v5074
        %v6027 = vunpack.c.l.b16 %v5075
        %v6028 = vunpack.c.l.b16 %v5076
        %v6029 = vunpack.c.l.b16 %v5077
        %v6030 = vunpack.c.l.b16 %v5078
        %v6031 = vunpack.c.l.b16 %v5079
        %v6032 = vunpack.c.l.b16 %v5080
        %v6033 = vunpack.c.l.b16 %v5081
        %v6034 = vunpack.c.l.b16 %v5082
        %v6035 = vpack.c.b16 %v6024, %v6023
        %v6036 = vpack.c.b16 %v6026, %v6025
        %v6037 = vpack.c.b16 %v6028, %v6027
        %v6038 = vpack.c.b16 %v6030, %v6029
        %v6039 = vpack.c.b16 %v6032, %v6031
        %v6040 = vpack.c.b16 %v6034, %v6033
        %v6063 = vunpack.c.l.b16 %v5995
        %v6064 = vunpack.c.l.b16 %v5996
        %v6065 = vunpack.c.l.b16 %v5997
        %v6066 = vunpack.c.l.b16 %v5998
        %v6067 = vunpack.c.l.b16 %v5999
        %v6068 = vunpack.c.l.b16 %v6000
        %v6069 = vunpack.c.l.b16 %v6001
        %v6070 = vunpack.c.l.b16 %v6002
        %v6071 = vunpack.c.l.b16 %v6003
        %v6072 = vunpack.c.l.b16 %v6004
        %v6073 = vunpack.c.l.b16 %v6005
        %v6074 = vunpack.c.l.b16 %v6006
        %v6075 = vunpack.c.l.b16 %v6007
        %v6076 = vunpack.c.l.b16 %v6008
        %v6077 = vunpack.c.l.b16 %v6009
        %v6078 = vunpack.c.l.b16 %v6010
        %v6079 = vpack.c.b16 %v6064, %v6063
        %v6080 = vpack.c.b16 %v6066, %v6065
        %v6081 = vpack.c.b16 %v6068, %v6067
        %v6082 = vpack.c.b16 %v6070, %v6069
        %v6083 = vpack.c.b16 %v6072, %v6071
        %v6084 = vpack.c.b16 %v6074, %v6073
        %v6085 = vpack.c.b16 %v6076, %v6075
        %v6086 = vpack.c.b16 %v6078, %v6077
        %6095 = vmatpush.bf16.msra.mxu0 %v6086
        %6096 = vmatpush.bf16.msra.mxu0 %v6085
        %6097 = vmatpush.bf16.msra.mxu0 %v6084
        %6098 = vmatpush.bf16.msra.mxu0 %v6083
        %6099 = vmatpush.bf16.msra.mxu0 %v6082
        %6100 = vmatpush.bf16.msra.mxu0 %v6081
        %6101 = vmatpush.bf16.msra.mxu0 %v6080
        %6102 = vmatpush.bf16.msra.mxu0 %v6079
        %6103 = vmatmul.bf16.gmra.mxu0 %v5338
        %v6104 = vpop.f32.mrf.mxu0
        %v6105 = vadd.f32 0.0, %v6104
        %v6106 = vpop.f32.mrf.mxu0
        %v6107 = vadd.f32 0.0, %v6106
        %6108 = vmatmul.bf16.gmra.mxu0 %v5339
        %v6109 = vpop.f32.mrf.mxu0
        %v6110 = vadd.f32 0.0, %v6109
        %v6111 = vpop.f32.mrf.mxu0
        %v6112 = vadd.f32 0.0, %v6111
        %6113 = vmatmul.bf16.gmra.mxu0 %v5340
        %v6114 = vpop.f32.mrf.mxu0
        %v6115 = vadd.f32 0.0, %v6114
        %v6116 = vpop.f32.mrf.mxu0
        %v6117 = vadd.f32 0.0, %v6116
        %6118 = vmatmul.bf16.gmra.mxu0 %v5341
        %v6119 = vpop.f32.mrf.mxu0
        %v6120 = vadd.f32 0.0, %v6119
        %v6121 = vpop.f32.mrf.mxu0
        %v6122 = vadd.f32 0.0, %v6121
        %6123 = vmatmul.bf16.gmra.mxu0 %v5342
        %v6124 = vpop.f32.mrf.mxu0
        %v6125 = vpop.f32.mrf.mxu0
        %6126 = vmatmul.bf16.gmra.mxu0 %v5343
        %v6127 = vpop.f32.mrf.mxu0
        %v6128 = vpop.f32.mrf.mxu0
        %6129 = vmatmul.bf16.gmra.mxu0 %v5344
        %v6130 = vpop.f32.mrf.mxu0
        %v6131 = vadd.f32 0.0, %v6130
        %v6132 = vpop.f32.mrf.mxu0
        %v6133 = vadd.f32 0.0, %v6132
        %6134 = vmatmul.bf16.gmra.mxu0 %v5345
        %v6135 = vpop.f32.mrf.mxu0
        %v6136 = vadd.f32 0.0, %v6135
        %v6137 = vpop.f32.mrf.mxu0
        %v6138 = vadd.f32 0.0, %v6137
        %6139 = vmatmul.bf16.gmra.mxu0 %v5346
        %v6140 = vpop.f32.mrf.mxu0
        %v6141 = vadd.f32 0.0, %v6140
        %v6142 = vpop.f32.mrf.mxu0
        %v6143 = vadd.f32 0.0, %v6142
        %6144 = vmatmul.bf16.gmra.mxu0 %v5347
        %v6145 = vpop.f32.mrf.mxu0
        %v6146 = vadd.f32 0.0, %v6145
        %v6147 = vpop.f32.mrf.mxu0
        %v6148 = vadd.f32 0.0, %v6147
        %6149 = vmatmul.bf16.gmra.mxu0 %v5348
        %v6150 = vpop.f32.mrf.mxu0
        %v6151 = vpop.f32.mrf.mxu0
        %6152 = vmatmul.bf16.gmra.mxu0 %v5349
        %v6153 = vpop.f32.mrf.mxu0
        %v6154 = vpop.f32.mrf.mxu0
        %6155 = vmatmul.bf16.gmra.mxu0 %v5350
        %v6156 = vpop.f32.mrf.mxu0
        %v6157 = vadd.f32 0.0, %v6156
        %v6158 = vpop.f32.mrf.mxu0
        %v6159 = vadd.f32 0.0, %v6158
        %6160 = vmatmul.bf16.gmra.mxu0 %v5351
        %v6161 = vpop.f32.mrf.mxu0
        %v6162 = vadd.f32 0.0, %v6161
        %v6163 = vpop.f32.mrf.mxu0
        %v6164 = vadd.f32 0.0, %v6163
        %6165 = vmatmul.bf16.gmra.mxu0 %v5352
        %v6166 = vpop.f32.mrf.mxu0
        %v6167 = vadd.f32 0.0, %v6166
        %v6168 = vpop.f32.mrf.mxu0
        %v6169 = vadd.f32 0.0, %v6168
        %6170 = vmatmul.bf16.gmra.mxu0 %v5353
        %v6171 = vpop.f32.mrf.mxu0
        %v6172 = vadd.f32 0.0, %v6171
        %v6173 = vpop.f32.mrf.mxu0
        %v6174 = vadd.f32 0.0, %v6173
        %6175 = vmatmul.bf16.gmra.mxu0 %v5354
        %v6176 = vpop.f32.mrf.mxu0
        %v6177 = vpop.f32.mrf.mxu0
        %6178 = vmatmul.bf16.gmra.mxu0 %v5355
        %v6179 = vpop.f32.mrf.mxu0
        %v6180 = vpop.f32.mrf.mxu0
        %6181 = vmatmul.bf16.gmra.mxu0 %v5356
        %v6182 = vpop.f32.mrf.mxu0
        %v6183 = vadd.f32 0.0, %v6182
        %v6184 = vpop.f32.mrf.mxu0
        %v6185 = vadd.f32 0.0, %v6184
        %6186 = vmatmul.bf16.gmra.mxu0 %v5357
        %v6187 = vpop.f32.mrf.mxu0
        %v6188 = vadd.f32 0.0, %v6187
        %v6189 = vpop.f32.mrf.mxu0
        %v6190 = vadd.f32 0.0, %v6189
        %6191 = vmatmul.bf16.gmra.mxu0 %v5358
        %v6192 = vpop.f32.mrf.mxu0
        %v6193 = vadd.f32 0.0, %v6192
        %v6194 = vpop.f32.mrf.mxu0
        %v6195 = vadd.f32 0.0, %v6194
        %6196 = vmatmul.bf16.gmra.mxu0 %v5359
        %v6197 = vpop.f32.mrf.mxu0
        %v6198 = vadd.f32 0.0, %v6197
        %v6199 = vpop.f32.mrf.mxu0
        %v6200 = vadd.f32 0.0, %v6199
        %6201 = vmatmul.bf16.gmra.mxu0 %v5360
        %v6202 = vpop.f32.mrf.mxu0
        %v6203 = vpop.f32.mrf.mxu0
        %6204 = vmatmul.bf16.gmra.mxu0 %v5361
        %v6205 = vpop.f32.mrf.mxu0
        %v6206 = vpop.f32.mrf.mxu0
        %6207 = vmatmul.bf16.gmra.mxu0 %v5362
        %v6208 = vpop.f32.mrf.mxu0
        %v6209 = vadd.f32 0.0, %v6208
        %v6210 = vpop.f32.mrf.mxu0
        %v6211 = vadd.f32 0.0, %v6210
        %6212 = vmatmul.bf16.gmra.mxu0 %v5363
        %v6213 = vpop.f32.mrf.mxu0
        %v6214 = vadd.f32 0.0, %v6213
        %v6215 = vpop.f32.mrf.mxu0
        %v6216 = vadd.f32 0.0, %v6215
        %6217 = vmatmul.bf16.gmra.mxu0 %v5364
        %v6218 = vpop.f32.mrf.mxu0
        %v6219 = vadd.f32 0.0, %v6218
        %v6220 = vpop.f32.mrf.mxu0
        %v6221 = vadd.f32 0.0, %v6220
        %6222 = vmatmul.bf16.gmra.mxu0 %v5365
        %v6223 = vpop.f32.mrf.mxu0
        %v6224 = vadd.f32 0.0, %v6223
        %v6225 = vpop.f32.mrf.mxu0
        %v6226 = vadd.f32 0.0, %v6225
        %6227 = vmatmul.bf16.gmra.mxu0 %v5366
        %v6228 = vpop.f32.mrf.mxu0
        %v6229 = vpop.f32.mrf.mxu0
        %6230 = vmatmul.bf16.gmra.mxu0 %v5367
        %v6231 = vpop.f32.mrf.mxu0
        %v6232 = vpop.f32.mrf.mxu0
        %6233 = vmatmul.bf16.gmra.mxu0 %v5368
        %v6234 = vpop.f32.mrf.mxu0
        %v6235 = vadd.f32 0.0, %v6234
        %v6236 = vpop.f32.mrf.mxu0
        %v6237 = vadd.f32 0.0, %v6236
        %6238 = vmatmul.bf16.gmra.mxu0 %v5369
        %v6239 = vpop.f32.mrf.mxu0
        %v6240 = vadd.f32 0.0, %v6239
        %v6241 = vpop.f32.mrf.mxu0
        %v6242 = vadd.f32 0.0, %v6241
        %6243 = vmatmul.bf16.gmra.mxu0 %v5370
        %v6244 = vpop.f32.mrf.mxu0
        %v6245 = vadd.f32 0.0, %v6244
        %v6246 = vpop.f32.mrf.mxu0
        %v6247 = vadd.f32 0.0, %v6246
        %6248 = vmatmul.bf16.gmra.mxu0 %v5371
        %v6249 = vpop.f32.mrf.mxu0
        %v6250 = vadd.f32 0.0, %v6249
        %v6251 = vpop.f32.mrf.mxu0
        %v6252 = vadd.f32 0.0, %v6251
        %6253 = vmatmul.bf16.gmra.mxu0 %v5372
        %v6254 = vpop.f32.mrf.mxu0
        %v6255 = vpop.f32.mrf.mxu0
        %6256 = vmatmul.bf16.gmra.mxu0 %v5373
        %v6257 = vpop.f32.mrf.mxu0
        %v6258 = vpop.f32.mrf.mxu0
        %6259 = vmatmul.bf16.gmra.mxu0 %v5374
        %v6260 = vpop.f32.mrf.mxu0
        %v6261 = vadd.f32 0.0, %v6260
        %v6262 = vpop.f32.mrf.mxu0
        %v6263 = vadd.f32 0.0, %v6262
        %6264 = vmatmul.bf16.gmra.mxu0 %v5375
        %v6265 = vpop.f32.mrf.mxu0
        %v6266 = vadd.f32 0.0, %v6265
        %v6267 = vpop.f32.mrf.mxu0
        %v6268 = vadd.f32 0.0, %v6267
        %6269 = vmatmul.bf16.gmra.mxu0 %v5376
        %v6270 = vpop.f32.mrf.mxu0
        %v6271 = vadd.f32 0.0, %v6270
        %v6272 = vpop.f32.mrf.mxu0
        %v6273 = vadd.f32 0.0, %v6272
        %6274 = vmatmul.bf16.gmra.mxu0 %v5377
        %v6275 = vpop.f32.mrf.mxu0
        %v6276 = vadd.f32 0.0, %v6275
        %v6277 = vpop.f32.mrf.mxu0
        %v6278 = vadd.f32 0.0, %v6277
        %6279 = vmatmul.bf16.gmra.mxu0 %v5378
        %v6280 = vpop.f32.mrf.mxu0
        %v6281 = vpop.f32.mrf.mxu0
        %6282 = vmatmul.bf16.gmra.mxu0 %v5379
        %v6283 = vpop.f32.mrf.mxu0
        %v6284 = vpop.f32.mrf.mxu0
        %6285 = vmatmul.bf16.gmra.mxu0 %v6035
        %v6286 = vpop.f32.mrf.mxu0
        %v6287 = vadd.f32 0.0, %v6286
        %v6288 = vpop.f32.mrf.mxu0
        %v6289 = vadd.f32 0.0, %v6288
        %6290 = vmatmul.bf16.gmra.mxu0 %v6036
        %v6291 = vpop.f32.mrf.mxu0
        %v6292 = vadd.f32 0.0, %v6291
        %v6293 = vpop.f32.mrf.mxu0
        %v6294 = vadd.f32 0.0, %v6293
        %6295 = vmatmul.bf16.gmra.mxu0 %v6037
        %v6296 = vpop.f32.mrf.mxu0
        %v6297 = vadd.f32 0.0, %v6296
        %v6298 = vpop.f32.mrf.mxu0
        %v6299 = vadd.f32 0.0, %v6298
        %6300 = vmatmul.bf16.gmra.mxu0 %v6038
        %v6301 = vpop.f32.mrf.mxu0
        %v6302 = vadd.f32 0.0, %v6301
        %v6303 = vpop.f32.mrf.mxu0
        %v6304 = vadd.f32 0.0, %v6303
        %6305 = vmatmul.bf16.gmra.mxu0 %v6039
        %v6306 = vpop.f32.mrf.mxu0
        %v6307 = vpop.f32.mrf.mxu0
        %6308 = vmatmul.bf16.gmra.mxu0 %v6040
        %v6309 = vpop.f32.mrf.mxu0
        %v6310 = vpop.f32.mrf.mxu0
        %6311 = vdwg.mxu0
        %v6312 = vadd.f32 %v5787, %v6105
        %v6313 = vadd.f32 %v5789, %v6107
        %v6314 = vadd.f32 %v5792, %v6110
        %v6315 = vadd.f32 %v5794, %v6112
        %v6316 = vadd.f32 %v5797, %v6115
        %v6317 = vadd.f32 %v5799, %v6117
        %v6318 = vadd.f32 %v5802, %v6120
        %v6319 = vadd.f32 %v5804, %v6122
        %v6320 = vadd.f32 %v5813, %v6131
        %v6321 = vadd.f32 %v5815, %v6133
        %v6322 = vadd.f32 %v5818, %v6136
        %v6323 = vadd.f32 %v5820, %v6138
        %v6324 = vadd.f32 %v5823, %v6141
        %v6325 = vadd.f32 %v5825, %v6143
        %v6326 = vadd.f32 %v5828, %v6146
        %v6327 = vadd.f32 %v5830, %v6148
        %v6328 = vadd.f32 %v5839, %v6157
        %v6329 = vadd.f32 %v5841, %v6159
        %v6330 = vadd.f32 %v5844, %v6162
        %v6331 = vadd.f32 %v5846, %v6164
        %v6332 = vadd.f32 %v5849, %v6167
        %v6333 = vadd.f32 %v5851, %v6169
        %v6334 = vadd.f32 %v5854, %v6172
        %v6335 = vadd.f32 %v5856, %v6174
        %v6336 = vadd.f32 %v5865, %v6183
        %v6337 = vadd.f32 %v5867, %v6185
        %v6338 = vadd.f32 %v5870, %v6188
        %v6339 = vadd.f32 %v5872, %v6190
        %v6340 = vadd.f32 %v5875, %v6193
        %v6341 = vadd.f32 %v5877, %v6195
        %v6342 = vadd.f32 %v5880, %v6198
        %v6343 = vadd.f32 %v5882, %v6200
        %v6344 = vadd.f32 %v5891, %v6209
        %v6345 = vadd.f32 %v5893, %v6211
        %v6346 = vadd.f32 %v5896, %v6214
        %v6347 = vadd.f32 %v5898, %v6216
        %v6348 = vadd.f32 %v5901, %v6219
        %v6349 = vadd.f32 %v5903, %v6221
        %v6350 = vadd.f32 %v5906, %v6224
        %v6351 = vadd.f32 %v5908, %v6226
        %v6352 = vadd.f32 %v5917, %v6235
        %v6353 = vadd.f32 %v5919, %v6237
        %v6354 = vadd.f32 %v5922, %v6240
        %v6355 = vadd.f32 %v5924, %v6242
        %v6356 = vadd.f32 %v5927, %v6245
        %v6357 = vadd.f32 %v5929, %v6247
        %v6358 = vadd.f32 %v5932, %v6250
        %v6359 = vadd.f32 %v5934, %v6252
        %v6360 = vadd.f32 %v5943, %v6261
        %v6361 = vadd.f32 %v5945, %v6263
        %v6362 = vadd.f32 %v5948, %v6266
        %v6363 = vadd.f32 %v5950, %v6268
        %v6364 = vadd.f32 %v5953, %v6271
        %v6365 = vadd.f32 %v5955, %v6273
        %v6366 = vadd.f32 %v5958, %v6276
        %v6367 = vadd.f32 %v5960, %v6278
        %v6368 = vadd.f32 %v5969, %v6287
        %v6369 = vadd.f32 %v5971, %v6289
        %v6370 = vadd.f32 %v5974, %v6292
        %v6371 = vadd.f32 %v5976, %v6294
        %v6372 = vadd.f32 %v5979, %v6297
        %v6373 = vadd.f32 %v5981, %v6299
        %v6374 = vadd.f32 %v5984, %v6302
        %v6375 = vadd.f32 %v5986, %v6304
        %s6376 = scalar_lea.vmem %s3, 192
        %v6377 = vld [vmem:[%s6376] sm:$0xf]
        %v6378 = vld [vmem:[%s6376 + $0x4] sm:$0xf]
        %v6379 = vld [vmem:[%s6376 + $0x8] sm:$0xf]
        %v6380 = vld [vmem:[%s6376 + $0xc] sm:$0xf]
        %v6381 = vld [vmem:[%s6376 + $0x10] sm:$0xf]
        %v6382 = vld [vmem:[%s6376 + $0x14] sm:$0xf]
        %v6383 = vld [vmem:[%s6376 + $0x18] sm:$0xf]
        %v6384 = vld [vmem:[%s6376 + $0x1c] sm:$0xf]
        %v6385 = vld [vmem:[%s6376 + $0x20] sm:$0xf]
        %v6386 = vld [vmem:[%s6376 + $0x24] sm:$0xf]
        %v6387 = vld [vmem:[%s6376 + $0x28] sm:$0xf]
        %v6388 = vld [vmem:[%s6376 + $0x2c] sm:$0xf]
        %v6389 = vld [vmem:[%s6376 + $0x30] sm:$0xf]
        %v6390 = vld [vmem:[%s6376 + $0x34] sm:$0xf]
        %v6391 = vld [vmem:[%s6376 + $0x38] sm:$0xf]
        %v6392 = vld [vmem:[%s6376 + $0x3c] sm:$0xf]
        %v6405 = vunpack.c.l.b16 %v5083
        %v6406 = vunpack.c.l.b16 %v5084
        %v6407 = vunpack.c.l.b16 %v5085
        %v6408 = vunpack.c.l.b16 %v5086
        %v6409 = vunpack.c.l.b16 %v5087
        %v6410 = vunpack.c.l.b16 %v5088
        %v6411 = vunpack.c.l.b16 %v5089
        %v6412 = vunpack.c.l.b16 %v5090
        %v6413 = vunpack.c.l.b16 %v5091
        %v6414 = vunpack.c.l.b16 %v5092
        %v6415 = vunpack.c.l.b16 %v5093
        %v6416 = vunpack.c.l.b16 %v5094
        %v6417 = vpack.c.b16 %v6406, %v6405
        %v6418 = vpack.c.b16 %v6408, %v6407
        %v6419 = vpack.c.b16 %v6410, %v6409
        %v6420 = vpack.c.b16 %v6412, %v6411
        %v6421 = vpack.c.b16 %v6414, %v6413
        %v6422 = vpack.c.b16 %v6416, %v6415
        %v6445 = vunpack.c.l.b16 %v6377
        %v6446 = vunpack.c.l.b16 %v6378
        %v6447 = vunpack.c.l.b16 %v6379
        %v6448 = vunpack.c.l.b16 %v6380
        %v6449 = vunpack.c.l.b16 %v6381
        %v6450 = vunpack.c.l.b16 %v6382
        %v6451 = vunpack.c.l.b16 %v6383
        %v6452 = vunpack.c.l.b16 %v6384
        %v6453 = vunpack.c.l.b16 %v6385
        %v6454 = vunpack.c.l.b16 %v6386
        %v6455 = vunpack.c.l.b16 %v6387
        %v6456 = vunpack.c.l.b16 %v6388
        %v6457 = vunpack.c.l.b16 %v6389
        %v6458 = vunpack.c.l.b16 %v6390
        %v6459 = vunpack.c.l.b16 %v6391
        %v6460 = vunpack.c.l.b16 %v6392
        %v6461 = vpack.c.b16 %v6446, %v6445
        %v6462 = vpack.c.b16 %v6448, %v6447
        %v6463 = vpack.c.b16 %v6450, %v6449
        %v6464 = vpack.c.b16 %v6452, %v6451
        %v6465 = vpack.c.b16 %v6454, %v6453
        %v6466 = vpack.c.b16 %v6456, %v6455
        %v6467 = vpack.c.b16 %v6458, %v6457
        %v6468 = vpack.c.b16 %v6460, %v6459
        %6477 = vmatpush.bf16.msra.mxu0 %v6468
        %6478 = vmatpush.bf16.msra.mxu0 %v6467
        %6479 = vmatpush.bf16.msra.mxu0 %v6466
        %6480 = vmatpush.bf16.msra.mxu0 %v6465
        %6481 = vmatpush.bf16.msra.mxu0 %v6464
        %6482 = vmatpush.bf16.msra.mxu0 %v6463
        %6483 = vmatpush.bf16.msra.mxu0 %v6462
        %6484 = vmatpush.bf16.msra.mxu0 %v6461
        %6485 = vmatmul.bf16.gmra.mxu0 %v5344
        %v6486 = vpop.f32.mrf.mxu0
        %v6487 = vadd.f32 0.0, %v6486
        %v6488 = vpop.f32.mrf.mxu0
        %v6489 = vadd.f32 0.0, %v6488
        %6490 = vmatmul.bf16.gmra.mxu0 %v5345
        %v6491 = vpop.f32.mrf.mxu0
        %v6492 = vadd.f32 0.0, %v6491
        %v6493 = vpop.f32.mrf.mxu0
        %v6494 = vadd.f32 0.0, %v6493
        %6495 = vmatmul.bf16.gmra.mxu0 %v5346
        %v6496 = vpop.f32.mrf.mxu0
        %v6497 = vadd.f32 0.0, %v6496
        %v6498 = vpop.f32.mrf.mxu0
        %v6499 = vadd.f32 0.0, %v6498
        %6500 = vmatmul.bf16.gmra.mxu0 %v5347
        %v6501 = vpop.f32.mrf.mxu0
        %v6502 = vadd.f32 0.0, %v6501
        %v6503 = vpop.f32.mrf.mxu0
        %v6504 = vadd.f32 0.0, %v6503
        %6505 = vmatmul.bf16.gmra.mxu0 %v5348
        %v6506 = vpop.f32.mrf.mxu0
        %v6507 = vpop.f32.mrf.mxu0
        %6508 = vmatmul.bf16.gmra.mxu0 %v5349
        %v6509 = vpop.f32.mrf.mxu0
        %v6510 = vpop.f32.mrf.mxu0
        %6511 = vmatmul.bf16.gmra.mxu0 %v5350
        %v6512 = vpop.f32.mrf.mxu0
        %v6513 = vadd.f32 0.0, %v6512
        %v6514 = vpop.f32.mrf.mxu0
        %v6515 = vadd.f32 0.0, %v6514
        %6516 = vmatmul.bf16.gmra.mxu0 %v5351
        %v6517 = vpop.f32.mrf.mxu0
        %v6518 = vadd.f32 0.0, %v6517
        %v6519 = vpop.f32.mrf.mxu0
        %v6520 = vadd.f32 0.0, %v6519
        %6521 = vmatmul.bf16.gmra.mxu0 %v5352
        %v6522 = vpop.f32.mrf.mxu0
        %v6523 = vadd.f32 0.0, %v6522
        %v6524 = vpop.f32.mrf.mxu0
        %v6525 = vadd.f32 0.0, %v6524
        %6526 = vmatmul.bf16.gmra.mxu0 %v5353
        %v6527 = vpop.f32.mrf.mxu0
        %v6528 = vadd.f32 0.0, %v6527
        %v6529 = vpop.f32.mrf.mxu0
        %v6530 = vadd.f32 0.0, %v6529
        %6531 = vmatmul.bf16.gmra.mxu0 %v5354
        %v6532 = vpop.f32.mrf.mxu0
        %v6533 = vpop.f32.mrf.mxu0
        %6534 = vmatmul.bf16.gmra.mxu0 %v5355
        %v6535 = vpop.f32.mrf.mxu0
        %v6536 = vpop.f32.mrf.mxu0
        %6537 = vmatmul.bf16.gmra.mxu0 %v5356
        %v6538 = vpop.f32.mrf.mxu0
        %v6539 = vadd.f32 0.0, %v6538
        %v6540 = vpop.f32.mrf.mxu0
        %v6541 = vadd.f32 0.0, %v6540
        %6542 = vmatmul.bf16.gmra.mxu0 %v5357
        %v6543 = vpop.f32.mrf.mxu0
        %v6544 = vadd.f32 0.0, %v6543
        %v6545 = vpop.f32.mrf.mxu0
        %v6546 = vadd.f32 0.0, %v6545
        %6547 = vmatmul.bf16.gmra.mxu0 %v5358
        %v6548 = vpop.f32.mrf.mxu0
        %v6549 = vadd.f32 0.0, %v6548
        %v6550 = vpop.f32.mrf.mxu0
        %v6551 = vadd.f32 0.0, %v6550
        %6552 = vmatmul.bf16.gmra.mxu0 %v5359
        %v6553 = vpop.f32.mrf.mxu0
        %v6554 = vadd.f32 0.0, %v6553
        %v6555 = vpop.f32.mrf.mxu0
        %v6556 = vadd.f32 0.0, %v6555
        %6557 = vmatmul.bf16.gmra.mxu0 %v5360
        %v6558 = vpop.f32.mrf.mxu0
        %v6559 = vpop.f32.mrf.mxu0
        %6560 = vmatmul.bf16.gmra.mxu0 %v5361
        %v6561 = vpop.f32.mrf.mxu0
        %v6562 = vpop.f32.mrf.mxu0
        %6563 = vmatmul.bf16.gmra.mxu0 %v5362
        %v6564 = vpop.f32.mrf.mxu0
        %v6565 = vadd.f32 0.0, %v6564
        %v6566 = vpop.f32.mrf.mxu0
        %v6567 = vadd.f32 0.0, %v6566
        %6568 = vmatmul.bf16.gmra.mxu0 %v5363
        %v6569 = vpop.f32.mrf.mxu0
        %v6570 = vadd.f32 0.0, %v6569
        %v6571 = vpop.f32.mrf.mxu0
        %v6572 = vadd.f32 0.0, %v6571
        %6573 = vmatmul.bf16.gmra.mxu0 %v5364
        %v6574 = vpop.f32.mrf.mxu0
        %v6575 = vadd.f32 0.0, %v6574
        %v6576 = vpop.f32.mrf.mxu0
        %v6577 = vadd.f32 0.0, %v6576
        %6578 = vmatmul.bf16.gmra.mxu0 %v5365
        %v6579 = vpop.f32.mrf.mxu0
        %v6580 = vadd.f32 0.0, %v6579
        %v6581 = vpop.f32.mrf.mxu0
        %v6582 = vadd.f32 0.0, %v6581
        %6583 = vmatmul.bf16.gmra.mxu0 %v5366
        %v6584 = vpop.f32.mrf.mxu0
        %v6585 = vpop.f32.mrf.mxu0
        %6586 = vmatmul.bf16.gmra.mxu0 %v5367
        %v6587 = vpop.f32.mrf.mxu0
        %v6588 = vpop.f32.mrf.mxu0
        %6589 = vmatmul.bf16.gmra.mxu0 %v5368
        %v6590 = vpop.f32.mrf.mxu0
        %v6591 = vadd.f32 0.0, %v6590
        %v6592 = vpop.f32.mrf.mxu0
        %v6593 = vadd.f32 0.0, %v6592
        %6594 = vmatmul.bf16.gmra.mxu0 %v5369
        %v6595 = vpop.f32.mrf.mxu0
        %v6596 = vadd.f32 0.0, %v6595
        %v6597 = vpop.f32.mrf.mxu0
        %v6598 = vadd.f32 0.0, %v6597
        %6599 = vmatmul.bf16.gmra.mxu0 %v5370
        %v6600 = vpop.f32.mrf.mxu0
        %v6601 = vadd.f32 0.0, %v6600
        %v6602 = vpop.f32.mrf.mxu0
        %v6603 = vadd.f32 0.0, %v6602
        %6604 = vmatmul.bf16.gmra.mxu0 %v5371
        %v6605 = vpop.f32.mrf.mxu0
        %v6606 = vadd.f32 0.0, %v6605
        %v6607 = vpop.f32.mrf.mxu0
        %v6608 = vadd.f32 0.0, %v6607
        %6609 = vmatmul.bf16.gmra.mxu0 %v5372
        %v6610 = vpop.f32.mrf.mxu0
        %v6611 = vpop.f32.mrf.mxu0
        %6612 = vmatmul.bf16.gmra.mxu0 %v5373
        %v6613 = vpop.f32.mrf.mxu0
        %v6614 = vpop.f32.mrf.mxu0
        %6615 = vmatmul.bf16.gmra.mxu0 %v5374
        %v6616 = vpop.f32.mrf.mxu0
        %v6617 = vadd.f32 0.0, %v6616
        %v6618 = vpop.f32.mrf.mxu0
        %v6619 = vadd.f32 0.0, %v6618
        %6620 = vmatmul.bf16.gmra.mxu0 %v5375
        %v6621 = vpop.f32.mrf.mxu0
        %v6622 = vadd.f32 0.0, %v6621
        %v6623 = vpop.f32.mrf.mxu0
        %v6624 = vadd.f32 0.0, %v6623
        %6625 = vmatmul.bf16.gmra.mxu0 %v5376
        %v6626 = vpop.f32.mrf.mxu0
        %v6627 = vadd.f32 0.0, %v6626
        %v6628 = vpop.f32.mrf.mxu0
        %v6629 = vadd.f32 0.0, %v6628
        %6630 = vmatmul.bf16.gmra.mxu0 %v5377
        %v6631 = vpop.f32.mrf.mxu0
        %v6632 = vadd.f32 0.0, %v6631
        %v6633 = vpop.f32.mrf.mxu0
        %v6634 = vadd.f32 0.0, %v6633
        %6635 = vmatmul.bf16.gmra.mxu0 %v5378
        %v6636 = vpop.f32.mrf.mxu0
        %v6637 = vpop.f32.mrf.mxu0
        %6638 = vmatmul.bf16.gmra.mxu0 %v5379
        %v6639 = vpop.f32.mrf.mxu0
        %v6640 = vpop.f32.mrf.mxu0
        %6641 = vmatmul.bf16.gmra.mxu0 %v6035
        %v6642 = vpop.f32.mrf.mxu0
        %v6643 = vadd.f32 0.0, %v6642
        %v6644 = vpop.f32.mrf.mxu0
        %v6645 = vadd.f32 0.0, %v6644
        %6646 = vmatmul.bf16.gmra.mxu0 %v6036
        %v6647 = vpop.f32.mrf.mxu0
        %v6648 = vadd.f32 0.0, %v6647
        %v6649 = vpop.f32.mrf.mxu0
        %v6650 = vadd.f32 0.0, %v6649
        %6651 = vmatmul.bf16.gmra.mxu0 %v6037
        %v6652 = vpop.f32.mrf.mxu0
        %v6653 = vadd.f32 0.0, %v6652
        %v6654 = vpop.f32.mrf.mxu0
        %v6655 = vadd.f32 0.0, %v6654
        %6656 = vmatmul.bf16.gmra.mxu0 %v6038
        %v6657 = vpop.f32.mrf.mxu0
        %v6658 = vadd.f32 0.0, %v6657
        %v6659 = vpop.f32.mrf.mxu0
        %v6660 = vadd.f32 0.0, %v6659
        %6661 = vmatmul.bf16.gmra.mxu0 %v6039
        %v6662 = vpop.f32.mrf.mxu0
        %v6663 = vpop.f32.mrf.mxu0
        %6664 = vmatmul.bf16.gmra.mxu0 %v6040
        %v6665 = vpop.f32.mrf.mxu0
        %v6666 = vpop.f32.mrf.mxu0
        %6667 = vmatmul.bf16.gmra.mxu0 %v6417
        %v6668 = vpop.f32.mrf.mxu0
        %v6669 = vadd.f32 0.0, %v6668
        %v6670 = vpop.f32.mrf.mxu0
        %v6671 = vadd.f32 0.0, %v6670
        %6672 = vmatmul.bf16.gmra.mxu0 %v6418
        %v6673 = vpop.f32.mrf.mxu0
        %v6674 = vadd.f32 0.0, %v6673
        %v6675 = vpop.f32.mrf.mxu0
        %v6676 = vadd.f32 0.0, %v6675
        %6677 = vmatmul.bf16.gmra.mxu0 %v6419
        %v6678 = vpop.f32.mrf.mxu0
        %v6679 = vadd.f32 0.0, %v6678
        %v6680 = vpop.f32.mrf.mxu0
        %v6681 = vadd.f32 0.0, %v6680
        %6682 = vmatmul.bf16.gmra.mxu0 %v6420
        %v6683 = vpop.f32.mrf.mxu0
        %v6684 = vadd.f32 0.0, %v6683
        %v6685 = vpop.f32.mrf.mxu0
        %v6686 = vadd.f32 0.0, %v6685
        %6687 = vmatmul.bf16.gmra.mxu0 %v6421
        %v6688 = vpop.f32.mrf.mxu0
        %v6689 = vpop.f32.mrf.mxu0
        %6690 = vmatmul.bf16.gmra.mxu0 %v6422
        %v6691 = vpop.f32.mrf.mxu0
        %v6692 = vpop.f32.mrf.mxu0
        %6693 = vdwg.mxu0
        %v6694 = vadd.f32 %v6312, %v6487
        %v6695 = vadd.f32 %v6313, %v6489
        %v6696 = vadd.f32 %v6314, %v6492
        %v6697 = vadd.f32 %v6315, %v6494
        %v6698 = vadd.f32 %v6316, %v6497
        %v6699 = vadd.f32 %v6317, %v6499
        %v6700 = vadd.f32 %v6318, %v6502
        %v6701 = vadd.f32 %v6319, %v6504
        %v6702 = vadd.f32 %v6320, %v6513
        %v6703 = vadd.f32 %v6321, %v6515
        %v6704 = vadd.f32 %v6322, %v6518
        %v6705 = vadd.f32 %v6323, %v6520
        %v6706 = vadd.f32 %v6324, %v6523
        %v6707 = vadd.f32 %v6325, %v6525
        %v6708 = vadd.f32 %v6326, %v6528
        %v6709 = vadd.f32 %v6327, %v6530
        %v6710 = vadd.f32 %v6328, %v6539
        %v6711 = vadd.f32 %v6329, %v6541
        %v6712 = vadd.f32 %v6330, %v6544
        %v6713 = vadd.f32 %v6331, %v6546
        %v6714 = vadd.f32 %v6332, %v6549
        %v6715 = vadd.f32 %v6333, %v6551
        %v6716 = vadd.f32 %v6334, %v6554
        %v6717 = vadd.f32 %v6335, %v6556
        %v6718 = vadd.f32 %v6336, %v6565
        %v6719 = vadd.f32 %v6337, %v6567
        %v6720 = vadd.f32 %v6338, %v6570
        %v6721 = vadd.f32 %v6339, %v6572
        %v6722 = vadd.f32 %v6340, %v6575
        %v6723 = vadd.f32 %v6341, %v6577
        %v6724 = vadd.f32 %v6342, %v6580
        %v6725 = vadd.f32 %v6343, %v6582
        %v6726 = vadd.f32 %v6344, %v6591
        %v6727 = vadd.f32 %v6345, %v6593
        %v6728 = vadd.f32 %v6346, %v6596
        %v6729 = vadd.f32 %v6347, %v6598
        %v6730 = vadd.f32 %v6348, %v6601
        %v6731 = vadd.f32 %v6349, %v6603
        %v6732 = vadd.f32 %v6350, %v6606
        %v6733 = vadd.f32 %v6351, %v6608
        %v6734 = vadd.f32 %v6352, %v6617
        %v6735 = vadd.f32 %v6353, %v6619
        %v6736 = vadd.f32 %v6354, %v6622
        %v6737 = vadd.f32 %v6355, %v6624
        %v6738 = vadd.f32 %v6356, %v6627
        %v6739 = vadd.f32 %v6357, %v6629
        %v6740 = vadd.f32 %v6358, %v6632
        %v6741 = vadd.f32 %v6359, %v6634
        %v6742 = vadd.f32 %v6360, %v6643
        %v6743 = vadd.f32 %v6361, %v6645
        %v6744 = vadd.f32 %v6362, %v6648
        %v6745 = vadd.f32 %v6363, %v6650
        %v6746 = vadd.f32 %v6364, %v6653
        %v6747 = vadd.f32 %v6365, %v6655
        %v6748 = vadd.f32 %v6366, %v6658
        %v6749 = vadd.f32 %v6367, %v6660
        %v6750 = vadd.f32 %v6368, %v6669
        %v6751 = vadd.f32 %v6369, %v6671
        %v6752 = vadd.f32 %v6370, %v6674
        %v6753 = vadd.f32 %v6371, %v6676
        %v6754 = vadd.f32 %v6372, %v6679
        %v6755 = vadd.f32 %v6373, %v6681
        %v6756 = vadd.f32 %v6374, %v6684
        %v6757 = vadd.f32 %v6375, %v6686
        %s6758 = scalar_lea.vmem %s3, 256
        %v6759 = vld [vmem:[%s6758] sm:$0xf]
        %v6760 = vld [vmem:[%s6758 + $0x4] sm:$0xf]
        %v6761 = vld [vmem:[%s6758 + $0x8] sm:$0xf]
        %v6762 = vld [vmem:[%s6758 + $0xc] sm:$0xf]
        %v6763 = vld [vmem:[%s6758 + $0x10] sm:$0xf]
        %v6764 = vld [vmem:[%s6758 + $0x14] sm:$0xf]
        %v6765 = vld [vmem:[%s6758 + $0x18] sm:$0xf]
        %v6766 = vld [vmem:[%s6758 + $0x1c] sm:$0xf]
        %v6767 = vld [vmem:[%s6758 + $0x20] sm:$0xf]
        %v6768 = vld [vmem:[%s6758 + $0x24] sm:$0xf]
        %v6769 = vld [vmem:[%s6758 + $0x28] sm:$0xf]
        %v6770 = vld [vmem:[%s6758 + $0x2c] sm:$0xf]
        %v6771 = vld [vmem:[%s6758 + $0x30] sm:$0xf]
        %v6772 = vld [vmem:[%s6758 + $0x34] sm:$0xf]
        %v6773 = vld [vmem:[%s6758 + $0x38] sm:$0xf]
        %v6774 = vld [vmem:[%s6758 + $0x3c] sm:$0xf]
        %v6787 = vunpack.c.l.b16 %v5095
        %v6788 = vunpack.c.l.b16 %v5096
        %v6789 = vunpack.c.l.b16 %v5097
        %v6790 = vunpack.c.l.b16 %v5098
        %v6791 = vunpack.c.l.b16 %v5099
        %v6792 = vunpack.c.l.b16 %v5100
        %v6793 = vunpack.c.l.b16 %v5101
        %v6794 = vunpack.c.l.b16 %v5102
        %v6795 = vunpack.c.l.b16 %v5103
        %v6796 = vunpack.c.l.b16 %v5104
        %v6797 = vunpack.c.l.b16 %v5105
        %v6798 = vunpack.c.l.b16 %v5106
        %v6799 = vpack.c.b16 %v6788, %v6787
        %v6800 = vpack.c.b16 %v6790, %v6789
        %v6801 = vpack.c.b16 %v6792, %v6791
        %v6802 = vpack.c.b16 %v6794, %v6793
        %v6803 = vpack.c.b16 %v6796, %v6795
        %v6804 = vpack.c.b16 %v6798, %v6797
        %v6827 = vunpack.c.l.b16 %v6759
        %v6828 = vunpack.c.l.b16 %v6760
        %v6829 = vunpack.c.l.b16 %v6761
        %v6830 = vunpack.c.l.b16 %v6762
        %v6831 = vunpack.c.l.b16 %v6763
        %v6832 = vunpack.c.l.b16 %v6764
        %v6833 = vunpack.c.l.b16 %v6765
        %v6834 = vunpack.c.l.b16 %v6766
        %v6835 = vunpack.c.l.b16 %v6767
        %v6836 = vunpack.c.l.b16 %v6768
        %v6837 = vunpack.c.l.b16 %v6769
        %v6838 = vunpack.c.l.b16 %v6770
        %v6839 = vunpack.c.l.b16 %v6771
        %v6840 = vunpack.c.l.b16 %v6772
        %v6841 = vunpack.c.l.b16 %v6773
        %v6842 = vunpack.c.l.b16 %v6774
        %v6843 = vpack.c.b16 %v6828, %v6827
        %v6844 = vpack.c.b16 %v6830, %v6829
        %v6845 = vpack.c.b16 %v6832, %v6831
        %v6846 = vpack.c.b16 %v6834, %v6833
        %v6847 = vpack.c.b16 %v6836, %v6835
        %v6848 = vpack.c.b16 %v6838, %v6837
        %v6849 = vpack.c.b16 %v6840, %v6839
        %v6850 = vpack.c.b16 %v6842, %v6841
        %6859 = vmatpush.bf16.msra.mxu0 %v6850
        %6860 = vmatpush.bf16.msra.mxu0 %v6849
        %6861 = vmatpush.bf16.msra.mxu0 %v6848
        %6862 = vmatpush.bf16.msra.mxu0 %v6847
        %6863 = vmatpush.bf16.msra.mxu0 %v6846
        %6864 = vmatpush.bf16.msra.mxu0 %v6845
        %6865 = vmatpush.bf16.msra.mxu0 %v6844
        %6866 = vmatpush.bf16.msra.mxu0 %v6843
        %6867 = vmatmul.bf16.gmra.mxu0 %v5350
        %v6868 = vpop.f32.mrf.mxu0
        %v6869 = vadd.f32 0.0, %v6868
        %v6870 = vpop.f32.mrf.mxu0
        %v6871 = vadd.f32 0.0, %v6870
        %6872 = vmatmul.bf16.gmra.mxu0 %v5351
        %v6873 = vpop.f32.mrf.mxu0
        %v6874 = vadd.f32 0.0, %v6873
        %v6875 = vpop.f32.mrf.mxu0
        %v6876 = vadd.f32 0.0, %v6875
        %6877 = vmatmul.bf16.gmra.mxu0 %v5352
        %v6878 = vpop.f32.mrf.mxu0
        %v6879 = vadd.f32 0.0, %v6878
        %v6880 = vpop.f32.mrf.mxu0
        %v6881 = vadd.f32 0.0, %v6880
        %6882 = vmatmul.bf16.gmra.mxu0 %v5353
        %v6883 = vpop.f32.mrf.mxu0
        %v6884 = vadd.f32 0.0, %v6883
        %v6885 = vpop.f32.mrf.mxu0
        %v6886 = vadd.f32 0.0, %v6885
        %6887 = vmatmul.bf16.gmra.mxu0 %v5354
        %v6888 = vpop.f32.mrf.mxu0
        %v6889 = vpop.f32.mrf.mxu0
        %6890 = vmatmul.bf16.gmra.mxu0 %v5355
        %v6891 = vpop.f32.mrf.mxu0
        %v6892 = vpop.f32.mrf.mxu0
        %6893 = vmatmul.bf16.gmra.mxu0 %v5356
        %v6894 = vpop.f32.mrf.mxu0
        %v6895 = vadd.f32 0.0, %v6894
        %v6896 = vpop.f32.mrf.mxu0
        %v6897 = vadd.f32 0.0, %v6896
        %6898 = vmatmul.bf16.gmra.mxu0 %v5357
        %v6899 = vpop.f32.mrf.mxu0
        %v6900 = vadd.f32 0.0, %v6899
        %v6901 = vpop.f32.mrf.mxu0
        %v6902 = vadd.f32 0.0, %v6901
        %6903 = vmatmul.bf16.gmra.mxu0 %v5358
        %v6904 = vpop.f32.mrf.mxu0
        %v6905 = vadd.f32 0.0, %v6904
        %v6906 = vpop.f32.mrf.mxu0
        %v6907 = vadd.f32 0.0, %v6906
        %6908 = vmatmul.bf16.gmra.mxu0 %v5359
        %v6909 = vpop.f32.mrf.mxu0
        %v6910 = vadd.f32 0.0, %v6909
        %v6911 = vpop.f32.mrf.mxu0
        %v6912 = vadd.f32 0.0, %v6911
        %6913 = vmatmul.bf16.gmra.mxu0 %v5360
        %v6914 = vpop.f32.mrf.mxu0
        %v6915 = vpop.f32.mrf.mxu0
        %6916 = vmatmul.bf16.gmra.mxu0 %v5361
        %v6917 = vpop.f32.mrf.mxu0
        %v6918 = vpop.f32.mrf.mxu0
        %6919 = vmatmul.bf16.gmra.mxu0 %v5362
        %v6920 = vpop.f32.mrf.mxu0
        %v6921 = vadd.f32 0.0, %v6920
        %v6922 = vpop.f32.mrf.mxu0
        %v6923 = vadd.f32 0.0, %v6922
        %6924 = vmatmul.bf16.gmra.mxu0 %v5363
        %v6925 = vpop.f32.mrf.mxu0
        %v6926 = vadd.f32 0.0, %v6925
        %v6927 = vpop.f32.mrf.mxu0
        %v6928 = vadd.f32 0.0, %v6927
        %6929 = vmatmul.bf16.gmra.mxu0 %v5364
        %v6930 = vpop.f32.mrf.mxu0
        %v6931 = vadd.f32 0.0, %v6930
        %v6932 = vpop.f32.mrf.mxu0
        %v6933 = vadd.f32 0.0, %v6932
        %6934 = vmatmul.bf16.gmra.mxu0 %v5365
        %v6935 = vpop.f32.mrf.mxu0
        %v6936 = vadd.f32 0.0, %v6935
        %v6937 = vpop.f32.mrf.mxu0
        %v6938 = vadd.f32 0.0, %v6937
        %6939 = vmatmul.bf16.gmra.mxu0 %v5366
        %v6940 = vpop.f32.mrf.mxu0
        %v6941 = vpop.f32.mrf.mxu0
        %6942 = vmatmul.bf16.gmra.mxu0 %v5367
        %v6943 = vpop.f32.mrf.mxu0
        %v6944 = vpop.f32.mrf.mxu0
        %6945 = vmatmul.bf16.gmra.mxu0 %v5368
        %v6946 = vpop.f32.mrf.mxu0
        %v6947 = vadd.f32 0.0, %v6946
        %v6948 = vpop.f32.mrf.mxu0
        %v6949 = vadd.f32 0.0, %v6948
        %6950 = vmatmul.bf16.gmra.mxu0 %v5369
        %v6951 = vpop.f32.mrf.mxu0
        %v6952 = vadd.f32 0.0, %v6951
        %v6953 = vpop.f32.mrf.mxu0
        %v6954 = vadd.f32 0.0, %v6953
        %6955 = vmatmul.bf16.gmra.mxu0 %v5370
        %v6956 = vpop.f32.mrf.mxu0
        %v6957 = vadd.f32 0.0, %v6956
        %v6958 = vpop.f32.mrf.mxu0
        %v6959 = vadd.f32 0.0, %v6958
        %6960 = vmatmul.bf16.gmra.mxu0 %v5371
        %v6961 = vpop.f32.mrf.mxu0
        %v6962 = vadd.f32 0.0, %v6961
        %v6963 = vpop.f32.mrf.mxu0
        %v6964 = vadd.f32 0.0, %v6963
        %6965 = vmatmul.bf16.gmra.mxu0 %v5372
        %v6966 = vpop.f32.mrf.mxu0
        %v6967 = vpop.f32.mrf.mxu0
        %6968 = vmatmul.bf16.gmra.mxu0 %v5373
        %v6969 = vpop.f32.mrf.mxu0
        %v6970 = vpop.f32.mrf.mxu0
        %6971 = vmatmul.bf16.gmra.mxu0 %v5374
        %v6972 = vpop.f32.mrf.mxu0
        %v6973 = vadd.f32 0.0, %v6972
        %v6974 = vpop.f32.mrf.mxu0
        %v6975 = vadd.f32 0.0, %v6974
        %6976 = vmatmul.bf16.gmra.mxu0 %v5375
        %v6977 = vpop.f32.mrf.mxu0
        %v6978 = vadd.f32 0.0, %v6977
        %v6979 = vpop.f32.mrf.mxu0
        %v6980 = vadd.f32 0.0, %v6979
        %6981 = vmatmul.bf16.gmra.mxu0 %v5376
        %v6982 = vpop.f32.mrf.mxu0
        %v6983 = vadd.f32 0.0, %v6982
        %v6984 = vpop.f32.mrf.mxu0
        %v6985 = vadd.f32 0.0, %v6984
        %6986 = vmatmul.bf16.gmra.mxu0 %v5377
        %v6987 = vpop.f32.mrf.mxu0
        %v6988 = vadd.f32 0.0, %v6987
        %v6989 = vpop.f32.mrf.mxu0
        %v6990 = vadd.f32 0.0, %v6989
        %6991 = vmatmul.bf16.gmra.mxu0 %v5378
        %v6992 = vpop.f32.mrf.mxu0
        %v6993 = vpop.f32.mrf.mxu0
        %6994 = vmatmul.bf16.gmra.mxu0 %v5379
        %v6995 = vpop.f32.mrf.mxu0
        %v6996 = vpop.f32.mrf.mxu0
        %6997 = vmatmul.bf16.gmra.mxu0 %v6035
        %v6998 = vpop.f32.mrf.mxu0
        %v6999 = vadd.f32 0.0, %v6998
        %v7000 = vpop.f32.mrf.mxu0
        %v7001 = vadd.f32 0.0, %v7000
        %7002 = vmatmul.bf16.gmra.mxu0 %v6036
        %v7003 = vpop.f32.mrf.mxu0
        %v7004 = vadd.f32 0.0, %v7003
        %v7005 = vpop.f32.mrf.mxu0
        %v7006 = vadd.f32 0.0, %v7005
        %7007 = vmatmul.bf16.gmra.mxu0 %v6037
        %v7008 = vpop.f32.mrf.mxu0
        %v7009 = vadd.f32 0.0, %v7008
        %v7010 = vpop.f32.mrf.mxu0
        %v7011 = vadd.f32 0.0, %v7010
        %7012 = vmatmul.bf16.gmra.mxu0 %v6038
        %v7013 = vpop.f32.mrf.mxu0
        %v7014 = vadd.f32 0.0, %v7013
        %v7015 = vpop.f32.mrf.mxu0
        %v7016 = vadd.f32 0.0, %v7015
        %7017 = vmatmul.bf16.gmra.mxu0 %v6039
        %v7018 = vpop.f32.mrf.mxu0
        %v7019 = vpop.f32.mrf.mxu0
        %7020 = vmatmul.bf16.gmra.mxu0 %v6040
        %v7021 = vpop.f32.mrf.mxu0
        %v7022 = vpop.f32.mrf.mxu0
        %7023 = vmatmul.bf16.gmra.mxu0 %v6417
        %v7024 = vpop.f32.mrf.mxu0
        %v7025 = vadd.f32 0.0, %v7024
        %v7026 = vpop.f32.mrf.mxu0
        %v7027 = vadd.f32 0.0, %v7026
        %7028 = vmatmul.bf16.gmra.mxu0 %v6418
        %v7029 = vpop.f32.mrf.mxu0
        %v7030 = vadd.f32 0.0, %v7029
        %v7031 = vpop.f32.mrf.mxu0
        %v7032 = vadd.f32 0.0, %v7031
        %7033 = vmatmul.bf16.gmra.mxu0 %v6419
        %v7034 = vpop.f32.mrf.mxu0
        %v7035 = vadd.f32 0.0, %v7034
        %v7036 = vpop.f32.mrf.mxu0
        %v7037 = vadd.f32 0.0, %v7036
        %7038 = vmatmul.bf16.gmra.mxu0 %v6420
        %v7039 = vpop.f32.mrf.mxu0
        %v7040 = vadd.f32 0.0, %v7039
        %v7041 = vpop.f32.mrf.mxu0
        %v7042 = vadd.f32 0.0, %v7041
        %7043 = vmatmul.bf16.gmra.mxu0 %v6421
        %v7044 = vpop.f32.mrf.mxu0
        %v7045 = vpop.f32.mrf.mxu0
        %7046 = vmatmul.bf16.gmra.mxu0 %v6422
        %v7047 = vpop.f32.mrf.mxu0
        %v7048 = vpop.f32.mrf.mxu0
        %7049 = vmatmul.bf16.gmra.mxu0 %v6799
        %v7050 = vpop.f32.mrf.mxu0
        %v7051 = vadd.f32 0.0, %v7050
        %v7052 = vpop.f32.mrf.mxu0
        %v7053 = vadd.f32 0.0, %v7052
        %7054 = vmatmul.bf16.gmra.mxu0 %v6800
        %v7055 = vpop.f32.mrf.mxu0
        %v7056 = vadd.f32 0.0, %v7055
        %v7057 = vpop.f32.mrf.mxu0
        %v7058 = vadd.f32 0.0, %v7057
        %7059 = vmatmul.bf16.gmra.mxu0 %v6801
        %v7060 = vpop.f32.mrf.mxu0
        %v7061 = vadd.f32 0.0, %v7060
        %v7062 = vpop.f32.mrf.mxu0
        %v7063 = vadd.f32 0.0, %v7062
        %7064 = vmatmul.bf16.gmra.mxu0 %v6802
        %v7065 = vpop.f32.mrf.mxu0
        %v7066 = vadd.f32 0.0, %v7065
        %v7067 = vpop.f32.mrf.mxu0
        %v7068 = vadd.f32 0.0, %v7067
        %7069 = vmatmul.bf16.gmra.mxu0 %v6803
        %v7070 = vpop.f32.mrf.mxu0
        %v7071 = vpop.f32.mrf.mxu0
        %7072 = vmatmul.bf16.gmra.mxu0 %v6804
        %v7073 = vpop.f32.mrf.mxu0
        %v7074 = vpop.f32.mrf.mxu0
        %7075 = vdwg.mxu0
        %v7076 = vadd.f32 %v6694, %v6869
        %v7077 = vadd.f32 %v6695, %v6871
        %v7078 = vadd.f32 %v6696, %v6874
        %v7079 = vadd.f32 %v6697, %v6876
        %v7080 = vadd.f32 %v6698, %v6879
        %v7081 = vadd.f32 %v6699, %v6881
        %v7082 = vadd.f32 %v6700, %v6884
        %v7083 = vadd.f32 %v6701, %v6886
        %v7084 = vadd.f32 %v6702, %v6895
        %v7085 = vadd.f32 %v6703, %v6897
        %v7086 = vadd.f32 %v6704, %v6900
        %v7087 = vadd.f32 %v6705, %v6902
        %v7088 = vadd.f32 %v6706, %v6905
        %v7089 = vadd.f32 %v6707, %v6907
        %v7090 = vadd.f32 %v6708, %v6910
        %v7091 = vadd.f32 %v6709, %v6912
        %v7092 = vadd.f32 %v6710, %v6921
        %v7093 = vadd.f32 %v6711, %v6923
        %v7094 = vadd.f32 %v6712, %v6926
        %v7095 = vadd.f32 %v6713, %v6928
        %v7096 = vadd.f32 %v6714, %v6931
        %v7097 = vadd.f32 %v6715, %v6933
        %v7098 = vadd.f32 %v6716, %v6936
        %v7099 = vadd.f32 %v6717, %v6938
        %v7100 = vadd.f32 %v6718, %v6947
        %v7101 = vadd.f32 %v6719, %v6949
        %v7102 = vadd.f32 %v6720, %v6952
        %v7103 = vadd.f32 %v6721, %v6954
        %v7104 = vadd.f32 %v6722, %v6957
        %v7105 = vadd.f32 %v6723, %v6959
        %v7106 = vadd.f32 %v6724, %v6962
        %v7107 = vadd.f32 %v6725, %v6964
        %v7108 = vadd.f32 %v6726, %v6973
        %v7109 = vadd.f32 %v6727, %v6975
        %v7110 = vadd.f32 %v6728, %v6978
        %v7111 = vadd.f32 %v6729, %v6980
        %v7112 = vadd.f32 %v6730, %v6983
        %v7113 = vadd.f32 %v6731, %v6985
        %v7114 = vadd.f32 %v6732, %v6988
        %v7115 = vadd.f32 %v6733, %v6990
        %v7116 = vadd.f32 %v6734, %v6999
        %v7117 = vadd.f32 %v6735, %v7001
        %v7118 = vadd.f32 %v6736, %v7004
        %v7119 = vadd.f32 %v6737, %v7006
        %v7120 = vadd.f32 %v6738, %v7009
        %v7121 = vadd.f32 %v6739, %v7011
        %v7122 = vadd.f32 %v6740, %v7014
        %v7123 = vadd.f32 %v6741, %v7016
        %v7124 = vadd.f32 %v6742, %v7025
        %v7125 = vadd.f32 %v6743, %v7027
        %v7126 = vadd.f32 %v6744, %v7030
        %v7127 = vadd.f32 %v6745, %v7032
        %v7128 = vadd.f32 %v6746, %v7035
        %v7129 = vadd.f32 %v6747, %v7037
        %v7130 = vadd.f32 %v6748, %v7040
        %v7131 = vadd.f32 %v6749, %v7042
        %v7132 = vadd.f32 %v6750, %v7051
        %v7133 = vadd.f32 %v6751, %v7053
        %v7134 = vadd.f32 %v6752, %v7056
        %v7135 = vadd.f32 %v6753, %v7058
        %v7136 = vadd.f32 %v6754, %v7061
        %v7137 = vadd.f32 %v6755, %v7063
        %v7138 = vadd.f32 %v6756, %v7066
        %v7139 = vadd.f32 %v6757, %v7068
        %v7140 = vld [vmem:[%s4] sm:$0x1]
        %v7142 = vperm.slane %v7140, 0
        %v7144 = vadd.f32 %v7076, %v7142
        %v7145 = vadd.f32 %v7077, %v7142
        %v7146 = vadd.f32 %v7078, %v7142
        %v7147 = vadd.f32 %v7079, %v7142
        %v7148 = vadd.f32 %v7080, %v7142
        %v7149 = vadd.f32 %v7081, %v7142
        %v7150 = vadd.f32 %v7082, %v7142
        %v7151 = vadd.f32 %v7083, %v7142
        %v7152 = vadd.f32 %v7084, %v7142
        %v7153 = vadd.f32 %v7085, %v7142
        %v7154 = vadd.f32 %v7086, %v7142
        %v7155 = vadd.f32 %v7087, %v7142
        %v7156 = vadd.f32 %v7088, %v7142
        %v7157 = vadd.f32 %v7089, %v7142
        %v7158 = vadd.f32 %v7090, %v7142
        %v7159 = vadd.f32 %v7091, %v7142
        %v7160 = vadd.f32 %v7092, %v7142
        %v7161 = vadd.f32 %v7093, %v7142
        %v7162 = vadd.f32 %v7094, %v7142
        %v7163 = vadd.f32 %v7095, %v7142
        %v7164 = vadd.f32 %v7096, %v7142
        %v7165 = vadd.f32 %v7097, %v7142
        %v7166 = vadd.f32 %v7098, %v7142
        %v7167 = vadd.f32 %v7099, %v7142
        %v7168 = vadd.f32 %v7100, %v7142
        %v7169 = vadd.f32 %v7101, %v7142
        %v7170 = vadd.f32 %v7102, %v7142
        %v7171 = vadd.f32 %v7103, %v7142
        %v7172 = vadd.f32 %v7104, %v7142
        %v7173 = vadd.f32 %v7105, %v7142
        %v7174 = vadd.f32 %v7106, %v7142
        %v7175 = vadd.f32 %v7107, %v7142
        %v7176 = vadd.f32 %v7108, %v7142
        %v7177 = vadd.f32 %v7109, %v7142
        %v7178 = vadd.f32 %v7110, %v7142
        %v7179 = vadd.f32 %v7111, %v7142
        %v7180 = vadd.f32 %v7112, %v7142
        %v7181 = vadd.f32 %v7113, %v7142
        %v7182 = vadd.f32 %v7114, %v7142
        %v7183 = vadd.f32 %v7115, %v7142
        %v7184 = vadd.f32 %v7116, %v7142
        %v7185 = vadd.f32 %v7117, %v7142
        %v7186 = vadd.f32 %v7118, %v7142
        %v7187 = vadd.f32 %v7119, %v7142
        %v7188 = vadd.f32 %v7120, %v7142
        %v7189 = vadd.f32 %v7121, %v7142
        %v7190 = vadd.f32 %v7122, %v7142
        %v7191 = vadd.f32 %v7123, %v7142
        %v7192 = vadd.f32 %v7124, %v7142
        %v7193 = vadd.f32 %v7125, %v7142
        %v7194 = vadd.f32 %v7126, %v7142
        %v7195 = vadd.f32 %v7127, %v7142
        %v7196 = vadd.f32 %v7128, %v7142
        %v7197 = vadd.f32 %v7129, %v7142
        %v7198 = vadd.f32 %v7130, %v7142
        %v7199 = vadd.f32 %v7131, %v7142
        %v7200 = vadd.f32 %v7132, %v7142
        %v7201 = vadd.f32 %v7133, %v7142
        %v7202 = vadd.f32 %v7134, %v7142
        %v7203 = vadd.f32 %v7135, %v7142
        %v7204 = vadd.f32 %v7136, %v7142
        %v7205 = vadd.f32 %v7137, %v7142
        %v7206 = vadd.f32 %v7138, %v7142
        %v7207 = vadd.f32 %v7139, %v7142
        %v7208 = vmax.f32 %v7144, 0.0
        %v7209 = vmax.f32 %v7145, 0.0
        %v7210 = vmax.f32 %v7146, 0.0
        %v7211 = vmax.f32 %v7147, 0.0
        %v7212 = vmax.f32 %v7148, 0.0
        %v7213 = vmax.f32 %v7149, 0.0
        %v7214 = vmax.f32 %v7150, 0.0
        %v7215 = vmax.f32 %v7151, 0.0
        %v7216 = vmax.f32 %v7152, 0.0
        %v7217 = vmax.f32 %v7153, 0.0
        %v7218 = vmax.f32 %v7154, 0.0
        %v7219 = vmax.f32 %v7155, 0.0
        %v7220 = vmax.f32 %v7156, 0.0
        %v7221 = vmax.f32 %v7157, 0.0
        %v7222 = vmax.f32 %v7158, 0.0
        %v7223 = vmax.f32 %v7159, 0.0
        %v7224 = vmax.f32 %v7160, 0.0
        %v7225 = vmax.f32 %v7161, 0.0
        %v7226 = vmax.f32 %v7162, 0.0
        %v7227 = vmax.f32 %v7163, 0.0
        %v7228 = vmax.f32 %v7164, 0.0
        %v7229 = vmax.f32 %v7165, 0.0
        %v7230 = vmax.f32 %v7166, 0.0
        %v7231 = vmax.f32 %v7167, 0.0
        %v7232 = vmax.f32 %v7168, 0.0
        %v7233 = vmax.f32 %v7169, 0.0
        %v7234 = vmax.f32 %v7170, 0.0
        %v7235 = vmax.f32 %v7171, 0.0
        %v7236 = vmax.f32 %v7172, 0.0
        %v7237 = vmax.f32 %v7173, 0.0
        %v7238 = vmax.f32 %v7174, 0.0
        %v7239 = vmax.f32 %v7175, 0.0
        %v7240 = vmax.f32 %v7176, 0.0
        %v7241 = vmax.f32 %v7177, 0.0
        %v7242 = vmax.f32 %v7178, 0.0
        %v7243 = vmax.f32 %v7179, 0.0
        %v7244 = vmax.f32 %v7180, 0.0
        %v7245 = vmax.f32 %v7181, 0.0
        %v7246 = vmax.f32 %v7182, 0.0
        %v7247 = vmax.f32 %v7183, 0.0
        %v7248 = vmax.f32 %v7184, 0.0
        %v7249 = vmax.f32 %v7185, 0.0
        %v7250 = vmax.f32 %v7186, 0.0
        %v7251 = vmax.f32 %v7187, 0.0
        %v7252 = vmax.f32 %v7188, 0.0
        %v7253 = vmax.f32 %v7189, 0.0
        %v7254 = vmax.f32 %v7190, 0.0
        %v7255 = vmax.f32 %v7191, 0.0
        %v7256 = vmax.f32 %v7192, 0.0
        %v7257 = vmax.f32 %v7193, 0.0
        %v7258 = vmax.f32 %v7194, 0.0
        %v7259 = vmax.f32 %v7195, 0.0
        %v7260 = vmax.f32 %v7196, 0.0
        %v7261 = vmax.f32 %v7197, 0.0
        %v7262 = vmax.f32 %v7198, 0.0
        %v7263 = vmax.f32 %v7199, 0.0
        %v7264 = vmax.f32 %v7200, 0.0
        %v7265 = vmax.f32 %v7201, 0.0
        %v7266 = vmax.f32 %v7202, 0.0
        %v7267 = vmax.f32 %v7203, 0.0
        %v7268 = vmax.f32 %v7204, 0.0
        %v7269 = vmax.f32 %v7205, 0.0
        %v7270 = vmax.f32 %v7206, 0.0
        %v7271 = vmax.f32 %v7207, 0.0
        %v7272 = vmax.f32 %v7208, %v7209
        %v7273 = vmax.f32 %v7210, %v7211
        %v7274 = vmax.f32 %v7212, %v7213
        %v7275 = vmax.f32 %v7214, %v7215
        %v7276 = vmax.f32 %v7216, %v7217
        %v7277 = vmax.f32 %v7218, %v7219
        %v7278 = vmax.f32 %v7220, %v7221
        %v7279 = vmax.f32 %v7222, %v7223
        %v7280 = vmax.f32 %v7224, %v7225
        %v7281 = vmax.f32 %v7226, %v7227
        %v7282 = vmax.f32 %v7228, %v7229
        %v7283 = vmax.f32 %v7230, %v7231
        %v7284 = vmax.f32 %v7232, %v7233
        %v7285 = vmax.f32 %v7234, %v7235
        %v7286 = vmax.f32 %v7236, %v7237
        %v7287 = vmax.f32 %v7238, %v7239
        %v7288 = vmax.f32 %v7240, %v7241
        %v7289 = vmax.f32 %v7242, %v7243
        %v7290 = vmax.f32 %v7244, %v7245
        %v7291 = vmax.f32 %v7246, %v7247
        %v7292 = vmax.f32 %v7248, %v7249
        %v7293 = vmax.f32 %v7250, %v7251
        %v7294 = vmax.f32 %v7252, %v7253
        %v7295 = vmax.f32 %v7254, %v7255
        %v7296 = vmax.f32 %v7256, %v7257
        %v7297 = vmax.f32 %v7258, %v7259
        %v7298 = vmax.f32 %v7260, %v7261
        %v7299 = vmax.f32 %v7262, %v7263
        %v7300 = vmax.f32 %v7264, %v7265
        %v7301 = vmax.f32 %v7266, %v7267
        %v7302 = vmax.f32 %v7268, %v7269
        %v7303 = vmax.f32 %v7270, %v7271
        %v7304 = vmax.f32 %v7272, %v7276
        %v7305 = vmax.f32 %v7273, %v7277
        %v7306 = vmax.f32 %v7274, %v7278
        %v7307 = vmax.f32 %v7275, %v7279
        %v7308 = vmax.f32 %v7280, %v7284
        %v7309 = vmax.f32 %v7281, %v7285
        %v7310 = vmax.f32 %v7282, %v7286
        %v7311 = vmax.f32 %v7283, %v7287
        %v7312 = vmax.f32 %v7288, %v7292
        %v7313 = vmax.f32 %v7289, %v7293
        %v7314 = vmax.f32 %v7290, %v7294
        %v7315 = vmax.f32 %v7291, %v7295
        %v7316 = vmax.f32 %v7296, %v7300
        %v7317 = vmax.f32 %v7297, %v7301
        %v7318 = vmax.f32 %v7298, %v7302
        %v7319 = vmax.f32 %v7299, %v7303
        %7320 = vrot.lane.b32.xlu0 %v7305, 16
        %v7321 = vpop.permute.xlu0 %7320
        %v7322 = vadd.f32 %v7304, %v7321
        %7323 = vrot.lane.b32.xlu0 %v7306, 32
        %v7324 = vpop.permute.xlu0 %7323
        %v7325 = vadd.f32 %v7322, %v7324
        %7326 = vrot.lane.b32.xlu0 %v7307, 48
        %v7327 = vpop.permute.xlu0 %7326
        %v7328 = vadd.f32 %v7325, %v7327
        %7329 = vrot.lane.b32.xlu0 %v7308, 64
        %v7330 = vpop.permute.xlu0 %7329
        %v7331 = vadd.f32 %v7328, %v7330
        %7332 = vrot.lane.b32.xlu0 %v7309, 80
        %v7333 = vpop.permute.xlu0 %7332
        %v7334 = vadd.f32 %v7331, %v7333
        %7335 = vrot.lane.b32.xlu0 %v7310, 96
        %v7336 = vpop.permute.xlu0 %7335
        %v7337 = vadd.f32 %v7334, %v7336
        %7338 = vrot.lane.b32.xlu0 %v7311, 112
        %v7339 = vpop.permute.xlu0 %7338
        %v7340 = vadd.f32 %v7337, %v7339
        %v7341 = vpack.c.bf16 %v7340, %v7340
        %v7342 = vld [vmem:[%s5] sm:$0xf]
        %v7343 = vld [vmem:[%s5 + $0x4] sm:$0xf]
        %v7344 = vld [vmem:[%s5 + $0x8] sm:$0xf]
        %v7345 = vld [vmem:[%s5 + $0xc] sm:$0xf]
        %v7346 = vld [vmem:[%s5 + $0x10] sm:$0xf]
        %v7347 = vld [vmem:[%s5 + $0x14] sm:$0xf]
        %v7348 = vld [vmem:[%s5 + $0x18] sm:$0xf]
        %v7349 = vld [vmem:[%s5 + $0x1c] sm:$0xf]
        %v7350 = vld [vmem:[%s5 + $0x20] sm:$0xf]
        %v7351 = vld [vmem:[%s5 + $0x24] sm:$0xf]
        %v7352 = vld [vmem:[%s5 + $0x28] sm:$0xf]
        %v7353 = vld [vmem:[%s5 + $0x2c] sm:$0xf]
        %v7354 = vld [vmem:[%s5 + $0x30] sm:$0xf]
        %v7355 = vld [vmem:[%s5 + $0x34] sm:$0xf]
        %v7356 = vld [vmem:[%s5 + $0x38] sm:$0xf]
        %v7357 = vld [vmem:[%s5 + $0x3c] sm:$0xf]
        %7358 = vrot.lane.b32.xlu0 %v7313, 16
        %v7359 = vpop.permute.xlu0 %7358
        %v7360 = vadd.f32 %v7312, %v7359
        %7361 = vrot.lane.b32.xlu0 %v7314, 32
        %v7362 = vpop.permute.xlu0 %7361
        %v7363 = vadd.f32 %v7360, %v7362
        %7364 = vrot.lane.b32.xlu0 %v7315, 48
        %v7365 = vpop.permute.xlu0 %7364
        %v7366 = vadd.f32 %v7363, %v7365
        %7367 = vrot.lane.b32.xlu0 %v7316, 64
        %v7368 = vpop.permute.xlu0 %7367
        %v7369 = vadd.f32 %v7366, %v7368
        %7370 = vrot.lane.b32.xlu0 %v7317, 80
        %v7371 = vpop.permute.xlu0 %7370
        %v7372 = vadd.f32 %v7369, %v7371
        %7373 = vrot.lane.b32.xlu0 %v7318, 96
        %v7374 = vpop.permute.xlu0 %7373
        %v7375 = vadd.f32 %v7372, %v7374
        %7376 = vrot.lane.b32.xlu0 %v7319, 112
        %v7377 = vpop.permute.xlu0 %7376
        %v7378 = vadd.f32 %v7375, %v7377
        %v7379 = vpack.c.bf16 %v7378, %v7378
        %s7380 = scalar_lea.vmem %s5, 64
        %v7381 = vld [vmem:[%s7380] sm:$0xf]
        %v7382 = vld [vmem:[%s7380 + $0x4] sm:$0xf]
        %v7383 = vld [vmem:[%s7380 + $0x8] sm:$0xf]
        %v7384 = vld [vmem:[%s7380 + $0xc] sm:$0xf]
        %v7385 = vld [vmem:[%s7380 + $0x10] sm:$0xf]
        %v7386 = vld [vmem:[%s7380 + $0x14] sm:$0xf]
        %v7387 = vld [vmem:[%s7380 + $0x18] sm:$0xf]
        %v7388 = vld [vmem:[%s7380 + $0x1c] sm:$0xf]
        %v7389 = vld [vmem:[%s7380 + $0x20] sm:$0xf]
        %v7390 = vld [vmem:[%s7380 + $0x24] sm:$0xf]
        %v7391 = vld [vmem:[%s7380 + $0x28] sm:$0xf]
        %v7392 = vld [vmem:[%s7380 + $0x2c] sm:$0xf]
        %v7393 = vld [vmem:[%s7380 + $0x30] sm:$0xf]
        %v7394 = vld [vmem:[%s7380 + $0x34] sm:$0xf]
        %v7395 = vld [vmem:[%s7380 + $0x38] sm:$0xf]
        %v7396 = vld [vmem:[%s7380 + $0x3c] sm:$0xf]
        %v7413 = vunpack.c.l.b16 %v7381
        %v7414 = vunpack.c.l.b16 %v7382
        %v7415 = vunpack.c.l.b16 %v7383
        %v7416 = vunpack.c.l.b16 %v7384
        %v7417 = vunpack.c.l.b16 %v7385
        %v7418 = vunpack.c.l.b16 %v7386
        %v7419 = vunpack.c.l.b16 %v7387
        %v7420 = vunpack.c.l.b16 %v7388
        %v7421 = vunpack.c.l.b16 %v7389
        %v7422 = vunpack.c.l.b16 %v7390
        %v7423 = vunpack.c.l.b16 %v7391
        %v7424 = vunpack.c.l.b16 %v7392
        %v7425 = vunpack.c.l.b16 %v7393
        %v7426 = vunpack.c.l.b16 %v7394
        %v7427 = vunpack.c.l.b16 %v7395
        %v7428 = vunpack.c.l.b16 %v7396
        %v7429 = vpack.c.b16 %v7414, %v7413
        %v7430 = vpack.c.b16 %v7416, %v7415
        %v7431 = vpack.c.b16 %v7418, %v7417
        %v7432 = vpack.c.b16 %v7420, %v7419
        %v7433 = vpack.c.b16 %v7422, %v7421
        %v7434 = vpack.c.b16 %v7424, %v7423
        %v7435 = vpack.c.b16 %v7426, %v7425
        %v7436 = vpack.c.b16 %v7428, %v7427
        %7445 = vmatpush.bf16.msra.mxu0 %v7436
        %7446 = vmatpush.bf16.msra.mxu0 %v7435
        %7447 = vmatpush.bf16.msra.mxu0 %v7434
        %7448 = vmatpush.bf16.msra.mxu0 %v7433
        %7449 = vmatpush.bf16.msra.mxu0 %v7432
        %7450 = vmatpush.bf16.msra.mxu0 %v7431
        %7451 = vmatpush.bf16.msra.mxu0 %v7430
        %7452 = vmatpush.bf16.msra.mxu0 %v7429
        %7453 = vmatmul.bf16.gmra.mxu0 %v7379
        %v7454 = vpop.f32.mrf.mxu0
        %v7455 = vadd.f32 0.0, %v7454
        %v7456 = vpop.f32.mrf.mxu0
        %7457 = vdwg.mxu0
        %v7474 = vunpack.c.l.b16 %v7342
        %v7475 = vunpack.c.l.b16 %v7343
        %v7476 = vunpack.c.l.b16 %v7344
        %v7477 = vunpack.c.l.b16 %v7345
        %v7478 = vunpack.c.l.b16 %v7346
        %v7479 = vunpack.c.l.b16 %v7347
        %v7480 = vunpack.c.l.b16 %v7348
        %v7481 = vunpack.c.l.b16 %v7349
        %v7482 = vunpack.c.l.b16 %v7350
        %v7483 = vunpack.c.l.b16 %v7351
        %v7484 = vunpack.c.l.b16 %v7352
        %v7485 = vunpack.c.l.b16 %v7353
        %v7486 = vunpack.c.l.b16 %v7354
        %v7487 = vunpack.c.l.b16 %v7355
        %v7488 = vunpack.c.l.b16 %v7356
        %v7489 = vunpack.c.l.b16 %v7357
        %v7490 = vpack.c.b16 %v7475, %v7474
        %v7491 = vpack.c.b16 %v7477, %v7476
        %v7492 = vpack.c.b16 %v7479, %v7478
        %v7493 = vpack.c.b16 %v7481, %v7480
        %v7494 = vpack.c.b16 %v7483, %v7482
        %v7495 = vpack.c.b16 %v7485, %v7484
        %v7496 = vpack.c.b16 %v7487, %v7486
        %v7497 = vpack.c.b16 %v7489, %v7488
        %7506 = vmatpush.bf16.msra.mxu0 %v7497
        %7507 = vmatpush.bf16.msra.mxu0 %v7496
        %7508 = vmatpush.bf16.msra.mxu0 %v7495
        %7509 = vmatpush.bf16.msra.mxu0 %v7494
        %7510 = vmatpush.bf16.msra.mxu0 %v7493
        %7511 = vmatpush.bf16.msra.mxu0 %v7492
        %7512 = vmatpush.bf16.msra.mxu0 %v7491
        %7513 = vmatpush.bf16.msra.mxu0 %v7490
        %7514 = vmatmul.bf16.gmra.mxu0 %v7341
        %v7515 = vpop.f32.mrf.mxu0
        %v7516 = vadd.f32 %v7455, %v7515
        %v7517 = vpop.f32.mrf.mxu0
        %7518 = vdwg.mxu0
        %v7519 = vld [vmem:[%s6] sm:$0x1]
        %v7521 = vperm.slane %v7519, 0
        %v7523 = vadd.f32 %v7516, %v7521
        %7524 = vst [vmem:[%s272] sm:$0xff] %v7523
        %s7525 = sand.u32 %s181, 1
        %s7526 = scalar_lea.sflag [#allocation3], %s7525
        %s7527 = sand.u32 %s181, 1
        %s7528 = smul.addr %s7527, 8
        %s7529 = scalar_lea.vmem [#allocation2], %s7528
        // Predicated region
        $region49: #{my_model_forward.1} parent=47 // pred_check
          %p7530 = pneg %p191
        $region50: #{my_model_forward.1} parent=47 // pred_check_branch
          %7532 = sbr.rel (%p7530) target = $region52
        $region51: #{my_model_forward.1} parent=47 // pred_region
          %7534 = vsyncadd %s7526, 0
          %s7535 = smul.addr %s21, 8
          %s7536 = scalar_lea.hbm %s7, %s7535
          %s7538 = sshll.u32 %s7529, 4
          %s7539 = int_to_ptr.vmem [resolvable:$true] %s7538
          %s7540 = sshll.u32 %s7536, 4
          %s7541 = int_to_ptr.hbm [resolvable:$true] %s7540
          %7543 = dma.vmem_to_hbm [thread:$0]  %s7539, 128, %s7541, %s7526
        $region52: #{my_model_forward.1} parent=47 // pred_fallthru
          _
      $region48: #{my_model_forward.1} parent=5 // pred_fallthru
        _
      %p7544 = scmp.le.s32.totalorder 2, %s16
      // Predicated region
      $region53: #{my_model_forward.1} parent=5 // pred_check
        %p7545 = pneg %p7544
      $region54: #{my_model_forward.1} parent=5 // pred_check_branch
        %7547 = sbr.rel (%p7545) target = $region56
      $region55: #{my_model_forward.1} parent=5 // pred_region
        %s7548 = ssub.s32 %s16, 2
        // Predicated region
        $region57: #{my_model_forward.1} parent=55 // pred_check
          %p7549 = pneg %p197
        $region58: #{my_model_forward.1} parent=55 // pred_check_branch
          %7551 = sbr.rel (%p7549) target = $region60
        $region59: #{my_model_forward.1} parent=55 // pred_region
          %s7552 = sand.u32 %s182, 1
          %s7553 = scalar_lea.sflag [#allocation3], %s7552
          %s7554 = sand.u32 %s182, 1
          %s7555 = smul.addr %s7554, 8
          %s7556 = scalar_lea.vmem [#allocation2], %s7555
          %7558 = dma.done %s7553, 128
        $region60: #{my_model_forward.1} parent=55 // pred_fallthru
          _
      $region56: #{my_model_forward.1} parent=5 // pred_fallthru
        _
    $region6: #{my_model_forward.1} parent=1 // loop_footer
      %s20 = sadd.s32 1, %s16
    $region7: #{my_model_forward.1} parent=1 // loop_footer_branch
      %15 = sbr.rel target = $region3
    $region8: #{my_model_forward.1} parent=1 // loop_exit
      _
    %7559 = vsyncpa [#allocation3], 1
    %s7560 = scalar_lea.sflag [#allocation3], 1
    %7561 = vsyncpa %s7560, 1

</llo_original>
